<compile_context>
chip_gen: v7x
topology: tpu7x:2x2x1
jax: 0.10.0
libtpu: 0.0.40
codegen_flags: <defaults>
</compile_context>

<pallas_src>
import math
import functools

import jax
import jax.numpy as jnp
from jax import lax
from jax.experimental import pallas as pl
from jax.experimental.pallas import tpu as pltpu


# ----------------------------------------------------------------------------
# Pallas kernels
# ----------------------------------------------------------------------------

def _round_up(x, m):
    return (x + m - 1) // m * m


# ---- fused matmul + bias ----------------------------------------------------

def _mm_bias_kernel(a_ref, b_ref, bias_ref, o_ref):
    o_ref[...] = (jnp.dot(a_ref[...], b_ref[...],
                          preferred_element_type=jnp.float32) + bias_ref[...])


def pallas_matmul_bias(a, w, bias):
    """[M,K] @ [K,N] + bias[N] -> [M,N] in f32.  Single VMEM block for small M
    (no padding, no K-loop, no scratch); M-tiled otherwise."""
    M, K = a.shape
    N = w.shape[1]
    a = a.astype(jnp.float32)
    w = w.astype(jnp.float32)
    bias2 = bias.reshape(1, N).astype(jnp.float32)
    if M <= 1024:                                   # whole problem in one block
        return pl.pallas_call(
            _mm_bias_kernel,
            out_shape=jax.ShapeDtypeStruct((M, N), jnp.float32),
        )(a, w, bias2)
    tm = 512
    Mp = _round_up(M, tm)
    a_p = jnp.pad(a, ((0, Mp - M), (0, 0)))
    out = pl.pallas_call(
        _mm_bias_kernel,
        out_shape=jax.ShapeDtypeStruct((Mp, N), jnp.float32),
        grid=(Mp // tm,),
        in_specs=[pl.BlockSpec((tm, K), lambda i: (i, 0)),
                  pl.BlockSpec((K, N), lambda i: (0, 0)),
                  pl.BlockSpec((1, N), lambda i: (0, 0))],
        out_specs=pl.BlockSpec((tm, N), lambda i: (i, 0)),
        compiler_params=pltpu.CompilerParams(
            dimension_semantics=("parallel",)),
    )(a_p, w, bias2)
    return out[:M]


# ---- LayerNormalization4D (normalize over channel axis) ----------------------
# x is laid out as [C, M] with M = B*T*F columns (lane-dense); stats over C.

def _ln_c_kernel(x_ref, g_ref, b_ref, o_ref, *, eps):
    x = x_ref[...]
    mu = jnp.mean(x, axis=0, keepdims=True)
    var = jnp.mean((x - mu) ** 2, axis=0, keepdims=True)       # unbiased=False
    std = jnp.sqrt(var + eps)
    # NOTE: the PyTorch module divides by (std + eps): eps appears twice on purpose.
    o_ref[...] = (x - mu) / (std + eps) * g_ref[...] + b_ref[...]


def pallas_layernorm_channels(x_cm, gamma, beta, eps=1e-5):
    C, M = x_cm.shape
    return pl.pallas_call(
        functools.partial(_ln_c_kernel, eps=eps),
        out_shape=jax.ShapeDtypeStruct((C, M), jnp.float32),
    )(x_cm.astype(jnp.float32),
      gamma.reshape(C, 1).astype(jnp.float32),
      beta.reshape(C, 1).astype(jnp.float32))


# ---- fused 1x1-conv + PReLU + LayerNormalization4DCF -------------------------
# x laid out as [Cin, M] (cols = (b, t, f), f fastest).  All heads' conv
# weights are concatenated along the output-channel axis; per-(head, b, t)
# LayerNorm statistics over (row_group x n_freqs) groups are produced with
# indicator-matrix matmuls (pure MXU work, no in-kernel reshapes).

def _conv_prelu_lncf_kernel(x_ref, w_ref, b_ref, a_ref, gr_ref, grT_ref,
                            gc_ref, gcT_ref, lng_ref, lnb_ref, o_ref,
                            *, inv_n, eps):
    y = jnp.dot(w_ref[...], x_ref[...],
                preferred_element_type=jnp.float32) + b_ref[...]
    y = jnp.where(y >= 0.0, y, a_ref[...] * y)                  # PReLU
    gr, grT = gr_ref[...], grT_ref[...]
    gc, gcT = gc_ref[...], gcT_ref[...]
    sums = jnp.dot(jnp.dot(gr, y, preferred_element_type=jnp.float32),
                   gcT, preferred_element_type=jnp.float32)
    mu_g = sums * inv_n
    mu = jnp.dot(jnp.dot(grT, mu_g, preferred_element_type=jnp.float32),
                 gc, preferred_element_type=jnp.float32)
    d = y - mu
    var_g = jnp.dot(jnp.dot(gr, d * d, preferred_element_type=jnp.float32),
                    gcT, preferred_element_type=jnp.float32) * inv_n
    var = jnp.dot(jnp.dot(grT, var_g, preferred_element_type=jnp.float32),
                  gc, preferred_element_type=jnp.float32)
    std = jnp.sqrt(var + eps)
    o_ref[...] = d / (std + eps) * lng_ref[...] + lnb_ref[...]


def _group_indicator(n_groups, group_size):
    return jnp.repeat(jnp.eye(n_groups, dtype=jnp.float32), group_size, axis=1)


def pallas_conv_prelu_lncf(x_cm, w, b, alpha, ln_g, ln_b, *, row_group, eps=1e-5):
    """x_cm [Cin, M]; w [R, Cin]; b/alpha [R, 1]; ln_g/ln_b [R, n_freqs].
    Columns of x_cm are (b, t, f) with f fastest; LN stats are taken over each
    (row_group rows) x (one (b,t) block of n_freqs columns) group."""
    Cin, M = x_cm.shape
    R = w.shape[0]
    n_freqs = ln_g.shape[1]
    assert M % n_freqs == 0 and R % row_group == 0
    gr = _group_indicator(R // row_group, row_group)            # [Rg, R]
    gc = _group_indicator(M // n_freqs, n_freqs)                # [Cg, M]
    lng = jnp.tile(ln_g.astype(jnp.float32), (1, M // n_freqs))
    lnb = jnp.tile(ln_b.astype(jnp.float32), (1, M // n_freqs))
    inv_n = 1.0 / float(row_group * n_freqs)
    return pl.pallas_call(
        functools.partial(_conv_prelu_lncf_kernel, inv_n=inv_n, eps=eps),
        out_shape=jax.ShapeDtypeStruct((R, M), jnp.float32),
    )(x_cm.astype(jnp.float32), w.astype(jnp.float32),
      b.astype(jnp.float32), alpha.astype(jnp.float32),
      gr, gr.T, gc, gc.T, lng, lnb)


# ---- GRU: full recurrence inside one kernel invocation ------------------------
# gi  : [T, N, 3*DH] input-side gate pre-activations, gate order (r, z, n),
#       DH = n_directions * hidden (directions interleaved inside each gate block).
# whh : [DH, 3*DH] block-diagonal hidden weights; bhh [1, 3*DH]; h0 [N, DH].

def _gru_scan_kernel(gi_ref, whh_ref, bhh_ref, h0_ref, out_ref, hlast_ref,
                     *, hidden):
    nsteps = gi_ref.shape[0]

    def body(t, h):
        gh = jnp.dot(h, whh_ref[...],
                     preferred_element_type=jnp.float32) + bhh_ref[...]
        g = gi_ref[t]
        r = jax.nn.sigmoid(g[:, :hidden] + gh[:, :hidden])
        z = jax.nn.sigmoid(g[:, hidden:2 * hidden] + gh[:, hidden:2 * hidden])
        n = jnp.tanh(g[:, 2 * hidden:] + r * gh[:, 2 * hidden:])
        h_new = (1.0 - z) * n + z * h
        out_ref[t] = h_new
        return h_new

    h_last = lax.fori_loop(0, nsteps, body, h0_ref[...], unroll=True)
    hlast_ref[...] = h_last


def pallas_gru_scan(gi, whh, bhh, h0):
    T, N, three_dh = gi.shape
    DH = three_dh // 3
    return pl.pallas_call(
        functools.partial(_gru_scan_kernel, hidden=DH),
        out_shape=(jax.ShapeDtypeStruct((T, N, DH), jnp.float32),
                   jax.ShapeDtypeStruct((N, DH), jnp.float32)),
    )(gi.astype(jnp.float32), whh.astype(jnp.float32),
      bhh.astype(jnp.float32), h0.astype(jnp.float32))


# ---- batched attention (all heads, 2 parallel grid steps) ---------------------

def _attn_kernel(q_ref, k_ref, v_ref, o_ref, *, scale):
    s = jnp.einsum('btd,bdk->btk', q_ref[...], k_ref[...],
                   preferred_element_type=jnp.float32) * scale
    m = jnp.max(s, axis=-1, keepdims=True)
    p = jnp.exp(s - m)
    denom = jnp.sum(p, axis=-1, keepdims=True)
    p = p * pl.reciprocal(denom, approx=True)
    o_ref[...] = jnp.einsum('btk,bkd->btd', p, v_ref[...],
                            preferred_element_type=jnp.float32)


def pallas_attention(q, k, v):
    """softmax(q @ k / sqrt(D)) @ v ; q [NB,T,D], k [NB,D,Tk], v [NB,Tk,D]."""
    NB, T, D = q.shape
    Tk = k.shape[2]
    scale = 1.0 / math.sqrt(D)
    nblk = 2 if NB % 2 == 0 else 1     # >=2 parallel steps so v7x's 2nd core helps
    nb = NB // nblk
    return pl.pallas_call(
        functools.partial(_attn_kernel, scale=scale),
        out_shape=jax.ShapeDtypeStruct((NB, T, D), jnp.float32),
        grid=(nblk,),
        in_specs=[pl.BlockSpec((nb, T, D), lambda i: (i, 0, 0)),
                  pl.BlockSpec((nb, D, Tk), lambda i: (i, 0, 0)),
                  pl.BlockSpec((nb, Tk, D), lambda i: (i, 0, 0))],
        out_specs=pl.BlockSpec((nb, T, D), lambda i: (i, 0, 0)),
        compiler_params=pltpu.CompilerParams(
            dimension_semantics=("parallel",)),
    )(q.astype(jnp.float32), k.astype(jnp.float32), v.astype(jnp.float32))


# ----------------------------------------------------------------------------
# Parameters (PyTorch-layout) and one-time fusion into kernel-friendly layouts
# ----------------------------------------------------------------------------

def _rand(key, shape, scale=0.1):
    return scale * jax.random.normal(key, shape, dtype=jnp.float32)


def init_params(seed, *, C, emb_ks, H, n_head, E, n_freqs):
    keys = iter(jax.random.split(jax.random.PRNGKey(seed), 128))
    I = C * emb_ks
    p = {}
    p['intra_norm_g'] = jnp.ones((C,), jnp.float32)
    p['intra_norm_b'] = jnp.zeros((C,), jnp.float32)
    for d in ('fwd', 'bwd'):
        p[f'intra_gru_{d}'] = dict(
            w_ih=_rand(next(keys), (3 * H, I)),
            w_hh=_rand(next(keys), (3 * H, H)),
            b_ih=_rand(next(keys), (3 * H,)),
            b_hh=_rand(next(keys), (3 * H,)))
    p['intra_lin_w'] = _rand(next(keys), (2 * H, C, emb_ks))   # ConvTranspose1d weight
    p['intra_lin_b'] = _rand(next(keys), (C,))
    p['inter_norm_g'] = jnp.ones((C,), jnp.float32)
    p['inter_norm_b'] = jnp.zeros((C,), jnp.float32)
    p['inter_gru'] = dict(
        w_ih=_rand(next(keys), (3 * H, C)),
        w_hh=_rand(next(keys), (3 * H, H)),
        b_ih=_rand(next(keys), (3 * H,)),
        b_hh=_rand(next(keys), (3 * H,)))
    p['inter_lin_w'] = _rand(next(keys), (C, H))               # Conv1d k=1 weight
    p['inter_lin_b'] = _rand(next(keys), (C,))
    for name in ('Q', 'K', 'V'):
        for ii in range(n_head):
            p[f'attn_{name}_{ii}'] = dict(
                w=_rand(next(keys), (E, C)),
                b=_rand(next(keys), (E,)),
                prelu=jnp.float32(0.25),
                ln_g=jnp.ones((E, n_freqs), jnp.float32),
                ln_b=jnp.zeros((E, n_freqs), jnp.float32))
    p['attn_proj'] = dict(
        w=_rand(next(keys), (C, n_head * E)),
        b=_rand(next(keys), (C,)),
        prelu=jnp.float32(0.25),
        ln_g=jnp.ones((C, n_freqs), jnp.float32),
        ln_b=jnp.zeros((C, n_freqs), jnp.float32))
    return p


def _build_hidden_weights(whh_list, bhh_list, H):
    """Block-diagonal, gate-major hidden weights for a multi-direction GRU scan.
    Returns W [D*H, 3*D*H] and b [1, 3*D*H]; gate order (r, z, n), directions
    interleaved inside each gate block (matching _gru_scan_kernel)."""
    D = len(whh_list)
    DH = D * H
    W = jnp.zeros((DH, 3 * DH), jnp.float32)
    b = jnp.zeros((3 * DH,), jnp.float32)
    for d, (whh, bhh) in enumerate(zip(whh_list, bhh_list)):
        for g in range(3):
            W = W.at[d * H:(d + 1) * H,
                     g * DH + d * H: g * DH + (d + 1) * H].set(
                         whh[g * H:(g + 1) * H].T)
            b = b.at[g * DH + d * H: g * DH + (d + 1) * H].set(
                bhh[g * H:(g + 1) * H])
    return W, b.reshape(1, 3 * DH)


def fuse_params(p, *, C, emb_ks, H, n_head, E):
    fp = {}
    fp['intra_norm_g'] = p['intra_norm_g']
    fp['intra_norm_b'] = p['intra_norm_b']
    pf, pb = p['intra_gru_fwd'], p['intra_gru_bwd']
    fp['intra_wih_cat'] = jnp.concatenate([pf['w_ih'].T, pb['w_ih'].T], axis=1)
    fp['intra_bih_cat'] = jnp.concatenate([pf['b_ih'], pb['b_ih']], axis=0)
    W, b = _build_hidden_weights([pf['w_hh'], pb['w_hh']],
                                 [pf['b_hh'], pb['b_hh']], H)
    fp['intra_whh'], fp['intra_bhh'] = W, b
    fp['intra_lin_w'] = p['intra_lin_w'].reshape(2 * H, C * emb_ks)
    fp['intra_lin_b'] = jnp.repeat(p['intra_lin_b'], emb_ks)
    fp['inter_norm_g'] = p['inter_norm_g']
    fp['inter_norm_b'] = p['inter_norm_b']
    pg = p['inter_gru']
    fp['inter_wih'] = pg['w_ih'].T
    fp['inter_bih'] = pg['b_ih']
    W, b = _build_hidden_weights([pg['w_hh']], [pg['b_hh']], H)
    fp['inter_whh'], fp['inter_bhh'] = W, b
    fp['inter_lin_w'] = p['inter_lin_w'].T
    fp['inter_lin_b'] = p['inter_lin_b']
    # fused QKV: rows ordered (Q heads | K heads | V heads), E rows per head
    w_l, b_l, a_l, g_l, bt_l = [], [], [], [], []
    for name in ('Q', 'K', 'V'):
        for ii in range(n_head):
            pp = p[f'attn_{name}_{ii}']
            w_l.append(pp['w'])
            b_l.append(pp['b'])
            a_l.append(pp['prelu'] * jnp.ones((E,), jnp.float32))
            g_l.append(pp['ln_g'])
            bt_l.append(pp['ln_b'])
    fp['qkv_w'] = jnp.concatenate(w_l, axis=0)                 # [3*n_head*E, C]
    fp['qkv_b'] = jnp.concatenate(b_l).reshape(-1, 1)
    fp['qkv_alpha'] = jnp.concatenate(a_l).reshape(-1, 1)
    fp['qkv_ln_g'] = jnp.concatenate(g_l, axis=0)              # [3*n_head*E, n_freqs]
    fp['qkv_ln_b'] = jnp.concatenate(bt_l, axis=0)
    pp = p['attn_proj']
    fp['proj_w'] = pp['w']
    fp['proj_b'] = pp['b'].reshape(-1, 1)
    fp['proj_alpha'] = pp['prelu'] * jnp.ones((C, 1), jnp.float32)
    fp['proj_ln_g'] = pp['ln_g']
    fp['proj_ln_b'] = pp['ln_b']
    return fp


# ----------------------------------------------------------------------------
# Forward pass
# ----------------------------------------------------------------------------

@functools.partial(jax.jit, static_argnames=('emb_ks', 'emb_hs', 'n_head',
                                             'chunk_size', 'eps'))
def stream_gridnet_block(fp, x, gru_h0, attn_cache_K, attn_cache_V, *,
                         emb_ks, emb_hs, n_head, chunk_size, eps=1e-5):
    B, C, old_T, old_F = x.shape
    T = math.ceil((old_T - emb_ks) / emb_hs) * emb_hs + emb_ks
    F = math.ceil((old_F - emb_ks) / emb_hs) * emb_hs + emb_ks
    x = jnp.pad(x, ((0, 0), (0, 0), (0, T - old_T), (0, F - old_F)))
    input_ = x
    H = fp['inter_whh'].shape[0]

    # ------------------------------- intra path -------------------------------
    # TODO(synk): overlapped unfold / ConvTranspose1d (emb_hs != emb_ks) not
    # implemented; this script exercises the non-overlapping emb_ks == emb_hs case.
    assert emb_ks == emb_hs and F % emb_ks == 0
    L = (F - emb_ks) // emb_hs + 1
    M_tf = B * T * F

    x_cm = jnp.transpose(x, (1, 0, 2, 3)).reshape(C, M_tf)
    xn_cm = pallas_layernorm_channels(x_cm, fp['intra_norm_g'],
                                      fp['intra_norm_b'], eps)
    # unfold over F -> [B*T, L, C*emb_ks]  (feature index = c*emb_ks + k)
    u = xn_cm.reshape(C, B * T, L, emb_ks)
    u = jnp.transpose(u, (1, 2, 0, 3)).reshape(B * T, L, C * emb_ks)

    # both GRU directions' input gates from a single fused matmul
    gi = pallas_matmul_bias(u.reshape(B * T * L, C * emb_ks),
                            fp['intra_wih_cat'], fp['intra_bih_cat'])
    gi = gi.reshape(B * T, L, 6 * H)
    gi_f = gi[:, :, :3 * H]
    gi_b = gi[:, :, 3 * H:][:, ::-1, :]        # backward direction scans reversed time
    # interleave directions inside each gate block: (r_f r_b z_f z_b n_f n_b)
    gi_big = jnp.concatenate(
        [gi_f[..., 0:H], gi_b[..., 0:H],
         gi_f[..., H:2 * H], gi_b[..., H:2 * H],
         gi_f[..., 2 * H:], gi_b[..., 2 * H:]], axis=-1)
    gi_big = jnp.transpose(gi_big, (1, 0, 2))  # [L, B*T, 6H]
    h0 = jnp.zeros((B * T, 2 * H), jnp.float32)
    out_bi, _ = pallas_gru_scan(gi_big, fp['intra_whh'], fp['intra_bhh'], h0)
    out_bi = jnp.transpose(out_bi, (1, 0, 2))  # [B*T, L, 2H]  cols = [fwd | bwd]
    rnn = jnp.concatenate([out_bi[:, :, :H], out_bi[:, :, H:][:, ::-1, :]],
                          axis=-1)

    # ConvTranspose1d(2H -> C, kernel emb_ks, stride emb_hs), non-overlapping fold
    y = pallas_matmul_bias(rnn.reshape(B * T * L, 2 * H),
                           fp['intra_lin_w'], fp['intra_lin_b'])
    y = y.reshape(B, T, L, C, emb_ks)
    y = jnp.transpose(y, (0, 3, 1, 2, 4)).reshape(B, C, T, F)
    intra = y + input_

    # ------------------------------- inter path -------------------------------
    intra_cm = jnp.transpose(intra, (1, 0, 2, 3)).reshape(C, M_tf)
    xn2_cm = pallas_layernorm_channels(intra_cm, fp['inter_norm_g'],
                                       fp['inter_norm_b'], eps)
    seq = jnp.transpose(xn2_cm.reshape(C, B, T, F), (1, 3, 2, 0))   # [B, F, T, C]
    gi2 = pallas_matmul_bias(seq.reshape(B * F * T, C),
                             fp['inter_wih'], fp['inter_bih'])
    gi2 = jnp.transpose(gi2.reshape(B * F, T, 3 * H), (1, 0, 2))    # [T, B*F, 3H]
    out_i, h_last = pallas_gru_scan(gi2, fp['inter_whh'], fp['inter_bhh'],
                                    gru_h0[0])
    gru_h0_new = h_last[None]                                       # [1, B*F, H]
    out_i = jnp.transpose(out_i, (1, 0, 2))                         # [B*F, T, H]
    lin = pallas_matmul_bias(out_i.reshape(B * F * T, H),
                             fp['inter_lin_w'], fp['inter_lin_b'])
    lin = jnp.transpose(lin.reshape(B, F, T, C), (0, 3, 2, 1))
    inter = lin + intra
    inter = inter[:, :, :old_T, :old_F]                             # [B, C, oT, oF]

    # ------------------------------- attention --------------------------------
    E = fp['qkv_ln_g'].shape[0] // (3 * n_head)
    Mt = B * old_T * old_F
    batch_cm = jnp.transpose(inter, (1, 0, 2, 3)).reshape(C, Mt)
    # all 3*n_head 1x1-conv heads + PReLU + per-head LayerNorm4DCF in one kernel
    Y = pallas_conv_prelu_lncf(batch_cm, fp['qkv_w'], fp['qkv_b'],
                               fp['qkv_alpha'], fp['qkv_ln_g'], fp['qkv_ln_b'],
                               row_group=E, eps=eps)

    HE = n_head * E

    def to_heads(block):                     # [n_head*E, Mt] -> [n_head*B, oT, E*oF]
        h = block.reshape(n_head, E, B, old_T, old_F)
        return jnp.transpose(h, (0, 2, 3, 1, 4)).reshape(
            n_head * B, old_T, E * old_F)

    Qf = to_heads(Y[:HE])
    Kf = to_heads(Y[HE:2 * HE])
    Vf = to_heads(Y[2 * HE:])
    Kt = jnp.transpose(Kf, (0, 2, 1))                               # [NB, D, oT]

    K_padded = jnp.concatenate([attn_cache_K, Kt], axis=2)
    attn_cache_K_new = jnp.concatenate([attn_cache_K[:, :, chunk_size:], Kt],
                                       axis=2)
    V_padded = jnp.concatenate([attn_cache_V, Vf], axis=1)
    attn_cache_V_new = jnp.concatenate([attn_cache_V[:, chunk_size:, :], Vf],
                                       axis=1)

    attn_out = pallas_attention(Qf, K_padded, V_padded)             # [NB, oT, D]
    proj_in = attn_out.reshape(n_head, B, old_T, E, old_F)
    proj_in = jnp.transpose(proj_in, (0, 3, 1, 2, 4)).reshape(HE, Mt)

    P = pallas_conv_prelu_lncf(proj_in, fp['proj_w'], fp['proj_b'],
                               fp['proj_alpha'], fp['proj_ln_g'],
                               fp['proj_ln_b'], row_group=C, eps=eps)
    proj = jnp.transpose(P.reshape(C, B, old_T, old_F), (1, 0, 2, 3))

    out = proj + inter
    return out, gru_h0_new, attn_cache_K_new, attn_cache_V_new


# ----------------------------------------------------------------------------
# Main
# ----------------------------------------------------------------------------

if __name__ == "__main__":
    B, C = 2, 16
    old_T, old_F = 8, 8              # chunk_size = old_T, n_freqs = old_F
    emb_ks = emb_hs = 2
    H = 32                           # hidden_channels
    n_head = 4
    n_freqs = old_F
    approx_qk_dim = 32
    E = math.ceil(approx_qk_dim / n_freqs)   # = 4
    chunk_size = old_T
    left_context = 16
    D = E * old_F

    params = init_params(0, C=C, emb_ks=emb_ks, H=H, n_head=n_head, E=E,
                         n_freqs=n_freqs)
    fp = fuse_params(params, C=C, emb_ks=emb_ks, H=H, n_head=n_head, E=E)

    key = jax.random.PRNGKey(0)
    k1, k2, k3, k4 = jax.random.split(key, 4)
    x = jax.random.normal(k1, (B, C, old_T, old_F), jnp.float32)
    gru_h0 = 0.1 * jax.random.normal(k2, (1, B * old_F, H), jnp.float32)
    attn_cache_K = 0.1 * jax.random.normal(k3, (n_head * B, D, left_context),
                                           jnp.float32)
    attn_cache_V = 0.1 * jax.random.normal(k4, (n_head * B, left_context, D),
                                           jnp.float32)

    out, h0_new, cK, cV = stream_gridnet_block(
        fp, x, gru_h0, attn_cache_K, attn_cache_V,
        emb_ks=emb_ks, emb_hs=emb_hs, n_head=n_head, chunk_size=chunk_size,
        eps=1e-5)
    jax.block_until_ready((out, h0_new, cK, cV))

    assert out.shape == (B, C, old_T, old_F)
    assert h0_new.shape == (1, B * old_F, H)
    assert cK.shape == (n_head * B, D, left_context)
    assert cV.shape == (n_head * B, left_context, D)
    print("KERNEL_OK")
</pallas_src>

<mosaic_0001>
module attributes {stable_mosaic.version = 11 : i64} {
  func.func @_ln_c_kernel(%arg0: memref<16x128xf32, #tpu.memory_space<vmem>>, %arg1: memref<16x1xf32, #tpu.memory_space<vmem>>, %arg2: memref<16x1xf32, #tpu.memory_space<vmem>>, %arg3: memref<16x128xf32, #tpu.memory_space<vmem>>) attributes {dimension_semantics = [], scalar_prefetch = 0 : i64, scratch_operands = 0 : i64, tpu.core_type = #tpu.core_type<tc>} {
    %c0 = arith.constant 0 : index
    %c0_0 = arith.constant 0 : index
    %0 = vector.load %arg0[%c0, %c0_0] : memref<16x128xf32, #tpu.memory_space<vmem>>, vector<16x128xf32>
    %cst = arith.constant dense<0.000000e+00> : vector<128xf32>
    %1 = vector.multi_reduction <add>, %0, %cst [0] : vector<16x128xf32> to vector<128xf32>
    %2 = vector.shape_cast %1 : vector<128xf32> to vector<1x128xf32>
    %cst_1 = arith.constant 1.600000e+01 : f32
    %3 = vector.broadcast %cst_1 : f32 to vector<1x128xf32>
    %4 = arith.divf %2, %3 : vector<1x128xf32>
    %5 = vector.broadcast %4 : vector<1x128xf32> to vector<16x128xf32>
    %6 = arith.subf %0, %5 : vector<16x128xf32>
    %7 = arith.mulf %6, %6 : vector<16x128xf32>
    %cst_2 = arith.constant dense<0.000000e+00> : vector<128xf32>
    %8 = vector.multi_reduction <add>, %7, %cst_2 [0] : vector<16x128xf32> to vector<128xf32>
    %9 = vector.shape_cast %8 : vector<128xf32> to vector<1x128xf32>
    %cst_3 = arith.constant 1.600000e+01 : f32
    %10 = vector.broadcast %cst_3 : f32 to vector<1x128xf32>
    %11 = arith.divf %9, %10 : vector<1x128xf32>
    %cst_4 = arith.constant 9.99999974E-6 : f32
    %12 = vector.broadcast %cst_4 : f32 to vector<1x128xf32>
    %13 = arith.addf %11, %12 : vector<1x128xf32>
    %14 = math.sqrt %13 : vector<1x128xf32>
    %15 = vector.broadcast %4 : vector<1x128xf32> to vector<16x128xf32>
    %16 = arith.subf %0, %15 : vector<16x128xf32>
    %cst_5 = arith.constant 9.99999974E-6 : f32
    %17 = vector.broadcast %cst_5 : f32 to vector<1x128xf32>
    %18 = arith.addf %14, %17 : vector<1x128xf32>
    %19 = vector.broadcast %18 : vector<1x128xf32> to vector<16x128xf32>
    %20 = arith.divf %16, %19 : vector<16x128xf32>
    %c0_6 = arith.constant 0 : index
    %c0_7 = arith.constant 0 : index
    %21 = vector.load %arg1[%c0_6, %c0_7] : memref<16x1xf32, #tpu.memory_space<vmem>>, vector<16x1xf32>
    %22 = vector.broadcast %21 : vector<16x1xf32> to vector<16x128xf32>
    %23 = arith.mulf %20, %22 : vector<16x128xf32>
    %c0_8 = arith.constant 0 : index
    %c0_9 = arith.constant 0 : index
    %24 = vector.load %arg2[%c0_8, %c0_9] : memref<16x1xf32, #tpu.memory_space<vmem>>, vector<16x1xf32>
    %25 = vector.broadcast %24 : vector<16x1xf32> to vector<16x128xf32>
    %26 = arith.addf %23, %25 : vector<16x128xf32>
    %c0_10 = arith.constant 0 : index
    %c0_11 = arith.constant 0 : index
    %27 = vector.load %arg3[%c0_10, %c0_11] : memref<16x128xf32, #tpu.memory_space<vmem>>, vector<16x128xf32>
    tpu.vector_store %arg3[%c0_10, %c0_11], %26 {strides = array<i32>} : memref<16x128xf32, #tpu.memory_space<vmem>>, vector<16x128xf32>,
    return
  }
}

module attributes {stable_mosaic.version = 11 : i64} {
  func.func @_mm_bias_kernel(%arg0: memref<64x32xf32, #tpu.memory_space<vmem>>, %arg1: memref<32x192xf32, #tpu.memory_space<vmem>>, %arg2: memref<1x192xf32, #tpu.memory_space<vmem>>, %arg3: memref<64x192xf32, #tpu.memory_space<vmem>>) attributes {dimension_semantics = [], scalar_prefetch = 0 : i64, scratch_operands = 0 : i64, tpu.core_type = #tpu.core_type<tc>} {
    %c0 = arith.constant 0 : index
    %c0_0 = arith.constant 0 : index
    %0 = vector.load %arg0[%c0, %c0_0] : memref<64x32xf32, #tpu.memory_space<vmem>>, vector<64x32xf32>
    %c0_1 = arith.constant 0 : index
    %c0_2 = arith.constant 0 : index
    %1 = vector.load %arg1[%c0_1, %c0_2] : memref<32x192xf32, #tpu.memory_space<vmem>>, vector<32x192xf32>
    %cst = arith.constant dense<0.000000e+00> : vector<64x192xf32>
    %2 = tpu.matmul %0, %1, %cst {dimension_numbers = #tpu.dot_dimension_numbers<[1], [0], [0], [1], [0, 0, 1, 1], [], []>} : vector<64x32xf32>, vector<32x192xf32>, vector<64x192xf32> -> vector<64x192xf32>
    %c0_3 = arith.constant 0 : index
    %c0_4 = arith.constant 0 : index
    %3 = vector.load %arg2[%c0_3, %c0_4] : memref<1x192xf32, #tpu.memory_space<vmem>>, vector<1x192xf32>
    %4 = vector.broadcast %3 : vector<1x192xf32> to vector<64x192xf32>
    %5 = arith.addf %2, %4 : vector<64x192xf32>
    %c0_5 = arith.constant 0 : index
    %c0_6 = arith.constant 0 : index
    %6 = vector.load %arg3[%c0_5, %c0_6] : memref<64x192xf32, #tpu.memory_space<vmem>>, vector<64x192xf32>
    tpu.vector_store %arg3[%c0_5, %c0_6], %5 {strides = array<i32>} : memref<64x192xf32, #tpu.memory_space<vmem>>, vector<64x192xf32>,
    return
  }
}

module attributes {stable_mosaic.version = 11 : i64} {
  func.func @_gru_scan_kernel(%arg0: memref<4x16x192xf32, #tpu.memory_space<vmem>>, %arg1: memref<64x192xf32, #tpu.memory_space<vmem>>, %arg2: memref<1x192xf32, #tpu.memory_space<vmem>>, %arg3: memref<16x64xf32, #tpu.memory_space<vmem>>, %arg4: memref<4x16x64xf32, #tpu.memory_space<vmem>>, %arg5: memref<16x64xf32, #tpu.memory_space<vmem>>) attributes {dimension_semantics = [], scalar_prefetch = 0 : i64, scratch_operands = 0 : i64, tpu.core_type = #tpu.core_type<tc>} {
    %c0 = arith.constant 0 : index
    %c0_0 = arith.constant 0 : index
    %0 = vector.load %arg3[%c0, %c0_0] : memref<16x64xf32, #tpu.memory_space<vmem>>, vector<16x64xf32>
    %c0_i32 = arith.constant 0 : i32
    %c0_1 = arith.constant 0 : index
    %c0_2 = arith.constant 0 : index
    %1 = vector.load %arg1[%c0_1, %c0_2] : memref<64x192xf32, #tpu.memory_space<vmem>>, vector<64x192xf32>
    %cst = arith.constant dense<0.000000e+00> : vector<16x192xf32>
    %2 = tpu.matmul %0, %1, %cst {dimension_numbers = #tpu.dot_dimension_numbers<[1], [0], [0], [1], [0, 0, 1, 1], [], []>} : vector<16x64xf32>, vector<64x192xf32>, vector<16x192xf32> -> vector<16x192xf32>
    %c0_3 = arith.constant 0 : index
    %c0_4 = arith.constant 0 : index
    %3 = vector.load %arg2[%c0_3, %c0_4] : memref<1x192xf32, #tpu.memory_space<vmem>>, vector<1x192xf32>
    %4 = vector.broadcast %3 : vector<1x192xf32> to vector<16x192xf32>
    %5 = arith.addf %2, %4 : vector<16x192xf32>
    %6 = arith.index_cast %c0_i32 : i32 to index
    %c0_5 = arith.constant 0 : index
    %c0_6 = arith.constant 0 : index
    %7 = vector.load %arg0[%6, %c0_5, %c0_6] : memref<4x16x192xf32, #tpu.memory_space<vmem>>, vector<1x16x192xf32>
    %8 = vector.shape_cast %7 : vector<1x16x192xf32> to vector<16x192xf32>
    %9 = vector.extract_strided_slice %8 {offsets = [0, 0], sizes = [16, 64], strides = [1, 1]} : vector<16x192xf32> to vector<16x64xf32>
    %10 = vector.extract_strided_slice %5 {offsets = [0, 0], sizes = [16, 64], strides = [1, 1]} : vector<16x192xf32> to vector<16x64xf32>
    %11 = arith.addf %9, %10 : vector<16x64xf32>
    %12 = arith.negf %11 : vector<16x64xf32>
    %13 = math.exp %12 : vector<16x64xf32>
    %cst_7 = arith.constant 1.000000e+00 : f32
    %14 = vector.broadcast %cst_7 : f32 to vector<16x64xf32>
    %15 = arith.addf %14, %13 : vector<16x64xf32>
    %16 = arith.divf %14, %15 : vector<16x64xf32>
    %17 = vector.extract_strided_slice %8 {offsets = [0, 64], sizes = [16, 64], strides = [1, 1]} : vector<16x192xf32> to vector<16x64xf32>
    %18 = vector.extract_strided_slice %5 {offsets = [0, 64], sizes = [16, 64], strides = [1, 1]} : vector<16x192xf32> to vector<16x64xf32>
    %19 = arith.addf %17, %18 : vector<16x64xf32>
    %20 = arith.negf %19 : vector<16x64xf32>
    %21 = math.exp %20 : vector<16x64xf32>
    %cst_8 = arith.constant 1.000000e+00 : f32
    %22 = vector.broadcast %cst_8 : f32 to vector<16x64xf32>
    %23 = arith.addf %22, %21 : vector<16x64xf32>
    %24 = arith.divf %22, %23 : vector<16x64xf32>
    %25 = vector.extract_strided_slice %8 {offsets = [0, 128], sizes = [16, 64], strides = [1, 1]} : vector<16x192xf32> to vector<16x64xf32>
    %26 = vector.extract_strided_slice %5 {offsets = [0, 128], sizes = [16, 64], strides = [1, 1]} : vector<16x192xf32> to vector<16x64xf32>
    %27 = arith.mulf %16, %26 : vector<16x64xf32>
    %28 = arith.addf %25, %27 : vector<16x64xf32>
    %29 = math.tanh %28 : vector<16x64xf32>
    %cst_9 = arith.constant 1.000000e+00 : f32
    %30 = vector.broadcast %cst_9 : f32 to vector<16x64xf32>
    %31 = arith.subf %30, %24 : vector<16x64xf32>
    %32 = arith.mulf %31, %29 : vector<16x64xf32>
    %33 = arith.mulf %24, %0 : vector<16x64xf32>
    %34 = arith.addf %32, %33 : vector<16x64xf32>
    %35 = arith.index_cast %c0_i32 : i32 to index
    %c0_10 = arith.constant 0 : index
    %c0_11 = arith.constant 0 : index
    %36 = vector.load %arg4[%35, %c0_10, %c0_11] : memref<4x16x64xf32, #tpu.memory_space<vmem>>, vector<1x16x64xf32>
    %37 = vector.shape_cast %36 : vector<1x16x64xf32> to vector<16x64xf32>
    %38 = vector.shape_cast %34 : vector<16x64xf32> to vector<1x16x64xf32>
    tpu.vector_store %arg4[%35, %c0_10, %c0_11], %38 {strides = array<i32>} : memref<4x16x64xf32, #tpu.memory_space<vmem>>, vector<1x16x64xf32>,
    %c1_i32 = arith.constant 1 : i32
    %c0_12 = arith.constant 0 : index
    %c0_13 = arith.constant 0 : index
    %39 = vector.load %arg1[%c0_12, %c0_13] : memref<64x192xf32, #tpu.memory_space<vmem>>, vector<64x192xf32>
    %cst_14 = arith.constant dense<0.000000e+00> : vector<16x192xf32>
    %40 = tpu.matmul %34, %39, %cst_14 {dimension_numbers = #tpu.dot_dimension_numbers<[1], [0], [0], [1], [0, 0, 1, 1], [], []>} : vector<16x64xf32>, vector<64x192xf32>, vector<16x192xf32> -> vector<16x192xf32>
    %c0_15 = arith.constant 0 : index
    %c0_16 = arith.constant 0 : index
    %41 = vector.load %arg2[%c0_15, %c0_16] : memref<1x192xf32, #tpu.memory_space<vmem>>, vector<1x192xf32>
    %42 = vector.broadcast %41 : vector<1x192xf32> to vector<16x192xf32>
    %43 = arith.addf %40, %42 : vector<16x192xf32>
    %44 = arith.index_cast %c1_i32 : i32 to index
    %c0_17 = arith.constant 0 : index
    %c0_18 = arith.constant 0 : index
    %45 = vector.load %arg0[%44, %c0_17, %c0_18] : memref<4x16x192xf32, #tpu.memory_space<vmem>>, vector<1x16x192xf32>
    %46 = vector.shape_cast %45 : vector<1x16x192xf32> to vector<16x192xf32>
    %47 = vector.extract_strided_slice %46 {offsets = [0, 0], sizes = [16, 64], strides = [1, 1]} : vector<16x192xf32> to vector<16x64xf32>
    %48 = vector.extract_strided_slice %43 {offsets = [0, 0], sizes = [16, 64], strides = [1, 1]} : vector<16x192xf32> to vector<16x64xf32>
    %49 = arith.addf %47, %48 : vector<16x64xf32>
    %50 = arith.negf %49 : vector<16x64xf32>
    %51 = math.exp %50 : vector<16x64xf32>
    %cst_19 = arith.constant 1.000000e+00 : f32
    %52 = vector.broadcast %cst_19 : f32 to vector<16x64xf32>
    %53 = arith.addf %52, %51 : vector<16x64xf32>
    %54 = arith.divf %52, %53 : vector<16x64xf32>
    %55 = vector.extract_strided_slice %46 {offsets = [0, 64], sizes = [16, 64], strides = [1, 1]} : vector<16x192xf32> to vector<16x64xf32>
    %56 = vector.extract_strided_slice %43 {offsets = [0, 64], sizes = [16, 64], strides = [1, 1]} : vector<16x192xf32> to vector<16x64xf32>
    %57 = arith.addf %55, %56 : vector<16x64xf32>
    %58 = arith.negf %57 : vector<16x64xf32>
    %59 = math.exp %58 : vector<16x64xf32>
    %cst_20 = arith.constant 1.000000e+00 : f32
    %60 = vector.broadcast %cst_20 : f32 to vector<16x64xf32>
    %61 = arith.addf %60, %59 : vector<16x64xf32>
    %62 = arith.divf %60, %61 : vector<16x64xf32>
    %63 = vector.extract_strided_slice %46 {offsets = [0, 128], sizes = [16, 64], strides = [1, 1]} : vector<16x192xf32> to vector<16x64xf32>
    %64 = vector.extract_strided_slice %43 {offsets = [0, 128], sizes = [16, 64], strides = [1, 1]} : vector<16x192xf32> to vector<16x64xf32>
    %65 = arith.mulf %54, %64 : vector<16x64xf32>
    %66 = arith.addf %63, %65 : vector<16x64xf32>
    %67 = math.tanh %66 : vector<16x64xf32>
    %cst_21 = arith.constant 1.000000e+00 : f32
    %68 = vector.broadcast %cst_21 : f32 to vector<16x64xf32>
    %69 = arith.subf %68, %62 : vector<16x64xf32>
    %70 = arith.mulf %69, %67 : vector<16x64xf32>
    %71 = arith.mulf %62, %34 : vector<16x64xf32>
    %72 = arith.addf %70, %71 : vector<16x64xf32>
    %73 = arith.index_cast %c1_i32 : i32 to index
    %c0_22 = arith.constant 0 : index
    %c0_23 = arith.constant 0 : index
    %74 = vector.load %arg4[%73, %c0_22, %c0_23] : memref<4x16x64xf32, #tpu.memory_space<vmem>>, vector<1x16x64xf32>
    %75 = vector.shape_cast %74 : vector<1x16x64xf32> to vector<16x64xf32>
    %76 = vector.shape_cast %72 : vector<16x64xf32> to vector<1x16x64xf32>
    tpu.vector_store %arg4[%73, %c0_22, %c0_23], %76 {strides = array<i32>} : memref<4x16x64xf32, #tpu.memory_space<vmem>>, vector<1x16x64xf32>,
    %c2_i32 = arith.constant 2 : i32
    %c0_24 = arith.constant 0 : index
    %c0_25 = arith.constant 0 : index
    %77 = vector.load %arg1[%c0_24, %c0_25] : memref<64x192xf32, #tpu.memory_space<vmem>>, vector<64x192xf32>
    %cst_26 = arith.constant dense<0.000000e+00> : vector<16x192xf32>
    %78 = tpu.matmul %72, %77, %cst_26 {dimension_numbers = #tpu.dot_dimension_numbers<[1], [0], [0], [1], [0, 0, 1, 1], [], []>} : vector<16x64xf32>, vector<64x192xf32>, vector<16x192xf32> -> vector<16x192xf32>
    %c0_27 = arith.constant 0 : index
    %c0_28 = arith.constant 0 : index
    %79 = vector.load %arg2[%c0_27, %c0_28] : memref<1x192xf32, #tpu.memory_space<vmem>>, vector<1x192xf32>
    %80 = vector.broadcast %79 : vector<1x192xf32> to vector<16x192xf32>
    %81 = arith.addf %78, %80 : vector<16x192xf32>
    %82 = arith.index_cast %c2_i32 : i32 to index
    %c0_29 = arith.constant 0 : index
    %c0_30 = arith.constant 0 : index
    %83 = vector.load %arg0[%82, %c0_29, %c0_30] : memref<4x16x192xf32, #tpu.memory_space<vmem>>, vector<1x16x192xf32>
    %84 = vector.shape_cast %83 : vector<1x16x192xf32> to vector<16x192xf32>
    %85 = vector.extract_strided_slice %84 {offsets = [0, 0], sizes = [16, 64], strides = [1, 1]} : vector<16x192xf32> to vector<16x64xf32>
    %86 = vector.extract_strided_slice %81 {offsets = [0, 0], sizes = [16, 64], strides = [1, 1]} : vector<16x192xf32> to vector<16x64xf32>
    %87 = arith.addf %85, %86 : vector<16x64xf32>
    %88 = arith.negf %87 : vector<16x64xf32>
    %89 = math.exp %88 : vector<16x64xf32>
    %cst_31 = arith.constant 1.000000e+00 : f32
    %90 = vector.broadcast %cst_31 : f32 to vector<16x64xf32>
    %91 = arith.addf %90, %89 : vector<16x64xf32>
    %92 = arith.divf %90, %91 : vector<16x64xf32>
    %93 = vector.extract_strided_slice %84 {offsets = [0, 64], sizes = [16, 64], strides = [1, 1]} : vector<16x192xf32> to vector<16x64xf32>
    %94 = vector.extract_strided_slice %81 {offsets = [0, 64], sizes = [16, 64], strides = [1, 1]} : vector<16x192xf32> to vector<16x64xf32>
    %95 = arith.addf %93, %94 : vector<16x64xf32>
    %96 = arith.negf %95 : vector<16x64xf32>
    %97 = math.exp %96 : vector<16x64xf32>
    %cst_32 = arith.constant 1.000000e+00 : f32
    %98 = vector.broadcast %cst_32 : f32 to vector<16x64xf32>
    %99 = arith.addf %98, %97 : vector<16x64xf32>
    %100 = arith.divf %98, %99 : vector<16x64xf32>
    %101 = vector.extract_strided_slice %84 {offsets = [0, 128], sizes = [16, 64], strides = [1, 1]} : vector<16x192xf32> to vector<16x64xf32>
    %102 = vector.extract_strided_slice %81 {offsets = [0, 128], sizes = [16, 64], strides = [1, 1]} : vector<16x192xf32> to vector<16x64xf32>
    %103 = arith.mulf %92, %102 : vector<16x64xf32>
    %104 = arith.addf %101, %103 : vector<16x64xf32>
    %105 = math.tanh %104 : vector<16x64xf32>
    %cst_33 = arith.constant 1.000000e+00 : f32
    %106 = vector.broadcast %cst_33 : f32 to vector<16x64xf32>
    %107 = arith.subf %106, %100 : vector<16x64xf32>
    %108 = arith.mulf %107, %105 : vector<16x64xf32>
    %109 = arith.mulf %100, %72 : vector<16x64xf32>
    %110 = arith.addf %108, %109 : vector<16x64xf32>
    %111 = arith.index_cast %c2_i32 : i32 to index
    %c0_34 = arith.constant 0 : index
    %c0_35 = arith.constant 0 : index
    %112 = vector.load %arg4[%111, %c0_34, %c0_35] : memref<4x16x64xf32, #tpu.memory_space<vmem>>, vector<1x16x64xf32>
    %113 = vector.shape_cast %112 : vector<1x16x64xf32> to vector<16x64xf32>
    %114 = vector.shape_cast %110 : vector<16x64xf32> to vector<1x16x64xf32>
    tpu.vector_store %arg4[%111, %c0_34, %c0_35], %114 {strides = array<i32>} : memref<4x16x64xf32, #tpu.memory_space<vmem>>, vector<1x16x64xf32>,
    %c3_i32 = arith.constant 3 : i32
    %c0_36 = arith.constant 0 : index
    %c0_37 = arith.constant 0 : index
    %115 = vector.load %arg1[%c0_36, %c0_37] : memref<64x192xf32, #tpu.memory_space<vmem>>, vector<64x192xf32>
    %cst_38 = arith.constant dense<0.000000e+00> : vector<16x192xf32>
    %116 = tpu.matmul %110, %115, %cst_38 {dimension_numbers = #tpu.dot_dimension_numbers<[1], [0], [0], [1], [0, 0, 1, 1], [], []>} : vector<16x64xf32>, vector<64x192xf32>, vector<16x192xf32> -> vector<16x192xf32>
    %c0_39 = arith.constant 0 : index
    %c0_40 = arith.constant 0 : index
    %117 = vector.load %arg2[%c0_39, %c0_40] : memref<1x192xf32, #tpu.memory_space<vmem>>, vector<1x192xf32>
    %118 = vector.broadcast %117 : vector<1x192xf32> to vector<16x192xf32>
    %119 = arith.addf %116, %118 : vector<16x192xf32>
    %120 = arith.index_cast %c3_i32 : i32 to index
    %c0_41 = arith.constant 0 : index
    %c0_42 = arith.constant 0 : index
    %121 = vector.load %arg0[%120, %c0_41, %c0_42] : memref<4x16x192xf32, #tpu.memory_space<vmem>>, vector<1x16x192xf32>
    %122 = vector.shape_cast %121 : vector<1x16x192xf32> to vector<16x192xf32>
    %123 = vector.extract_strided_slice %122 {offsets = [0, 0], sizes = [16, 64], strides = [1, 1]} : vector<16x192xf32> to vector<16x64xf32>
    %124 = vector.extract_strided_slice %119 {offsets = [0, 0], sizes = [16, 64], strides = [1, 1]} : vector<16x192xf32> to vector<16x64xf32>
    %125 = arith.addf %123, %124 : vector<16x64xf32>
    %126 = arith.negf %125 : vector<16x64xf32>
    %127 = math.exp %126 : vector<16x64xf32>
    %cst_43 = arith.constant 1.000000e+00 : f32
    %128 = vector.broadcast %cst_43 : f32 to vector<16x64xf32>
    %129 = arith.addf %128, %127 : vector<16x64xf32>
    %130 = arith.divf %128, %129 : vector<16x64xf32>
    %131 = vector.extract_strided_slice %122 {offsets = [0, 64], sizes = [16, 64], strides = [1, 1]} : vector<16x192xf32> to vector<16x64xf32>
    %132 = vector.extract_strided_slice %119 {offsets = [0, 64], sizes = [16, 64], strides = [1, 1]} : vector<16x192xf32> to vector<16x64xf32>
    %133 = arith.addf %131, %132 : vector<16x64xf32>
    %134 = arith.negf %133 : vector<16x64xf32>
    %135 = math.exp %134 : vector<16x64xf32>
    %cst_44 = arith.constant 1.000000e+00 : f32
    %136 = vector.broadcast %cst_44 : f32 to vector<16x64xf32>
    %137 = arith.addf %136, %135 : vector<16x64xf32>
    %138 = arith.divf %136, %137 : vector<16x64xf32>
    %139 = vector.extract_strided_slice %122 {offsets = [0, 128], sizes = [16, 64], strides = [1, 1]} : vector<16x192xf32> to vector<16x64xf32>
    %140 = vector.extract_strided_slice %119 {offsets = [0, 128], sizes = [16, 64], strides = [1, 1]} : vector<16x192xf32> to vector<16x64xf32>
    %141 = arith.mulf %130, %140 : vector<16x64xf32>
    %142 = arith.addf %139, %141 : vector<16x64xf32>
    %143 = math.tanh %142 : vector<16x64xf32>
    %cst_45 = arith.constant 1.000000e+00 : f32
    %144 = vector.broadcast %cst_45 : f32 to vector<16x64xf32>
    %145 = arith.subf %144, %138 : vector<16x64xf32>
    %146 = arith.mulf %145, %143 : vector<16x64xf32>
    %147 = arith.mulf %138, %110 : vector<16x64xf32>
    %148 = arith.addf %146, %147 : vector<16x64xf32>
    %149 = arith.index_cast %c3_i32 : i32 to index
    %c0_46 = arith.constant 0 : index
    %c0_47 = arith.constant 0 : index
    %150 = vector.load %arg4[%149, %c0_46, %c0_47] : memref<4x16x64xf32, #tpu.memory_space<vmem>>, vector<1x16x64xf32>
    %151 = vector.shape_cast %150 : vector<1x16x64xf32> to vector<16x64xf32>
    %152 = vector.shape_cast %148 : vector<16x64xf32> to vector<1x16x64xf32>
    tpu.vector_store %arg4[%149, %c0_46, %c0_47], %152 {strides = array<i32>} : memref<4x16x64xf32, #tpu.memory_space<vmem>>, vector<1x16x64xf32>,
    %c4_i32 = arith.constant 4 : i32
    %c0_48 = arith.constant 0 : index
    %c0_49 = arith.constant 0 : index
    %153 = vector.load %arg5[%c0_48, %c0_49] : memref<16x64xf32, #tpu.memory_space<vmem>>, vector<16x64xf32>
    tpu.vector_store %arg5[%c0_48, %c0_49], %148 {strides = array<i32>} : memref<16x64xf32, #tpu.memory_space<vmem>>, vector<16x64xf32>,
    return
  }
}

module attributes {stable_mosaic.version = 11 : i64} {
  func.func @_mm_bias_kernel(%arg0: memref<64x64xf32, #tpu.memory_space<vmem>>, %arg1: memref<64x32xf32, #tpu.memory_space<vmem>>, %arg2: memref<1x32xf32, #tpu.memory_space<vmem>>, %arg3: memref<64x32xf32, #tpu.memory_space<vmem>>) attributes {dimension_semantics = [], scalar_prefetch = 0 : i64, scratch_operands = 0 : i64, tpu.core_type = #tpu.core_type<tc>} {
    %c0 = arith.constant 0 : index
    %c0_0 = arith.constant 0 : index
    %0 = vector.load %arg0[%c0, %c0_0] : memref<64x64xf32, #tpu.memory_space<vmem>>, vector<64x64xf32>
    %c0_1 = arith.constant 0 : index
    %c0_2 = arith.constant 0 : index
    %1 = vector.load %arg1[%c0_1, %c0_2] : memref<64x32xf32, #tpu.memory_space<vmem>>, vector<64x32xf32>
    %cst = arith.constant dense<0.000000e+00> : vector<64x32xf32>
    %2 = tpu.matmul %0, %1, %cst {dimension_numbers = #tpu.dot_dimension_numbers<[1], [0], [0], [1], [0, 0, 1, 1], [], []>} : vector<64x64xf32>, vector<64x32xf32>, vector<64x32xf32> -> vector<64x32xf32>
    %c0_3 = arith.constant 0 : index
    %c0_4 = arith.constant 0 : index
    %3 = vector.load %arg2[%c0_3, %c0_4] : memref<1x32xf32, #tpu.memory_space<vmem>>, vector<1x32xf32>
    %4 = vector.broadcast %3 : vector<1x32xf32> to vector<64x32xf32>
    %5 = arith.addf %2, %4 : vector<64x32xf32>
    %c0_5 = arith.constant 0 : index
    %c0_6 = arith.constant 0 : index
    %6 = vector.load %arg3[%c0_5, %c0_6] : memref<64x32xf32, #tpu.memory_space<vmem>>, vector<64x32xf32>
    tpu.vector_store %arg3[%c0_5, %c0_6], %5 {strides = array<i32>} : memref<64x32xf32, #tpu.memory_space<vmem>>, vector<64x32xf32>,
    return
  }
}

module attributes {stable_mosaic.version = 11 : i64} {
  func.func @_mm_bias_kernel(%arg0: memref<128x16xf32, #tpu.memory_space<vmem>>, %arg1: memref<16x96xf32, #tpu.memory_space<vmem>>, %arg2: memref<1x96xf32, #tpu.memory_space<vmem>>, %arg3: memref<128x96xf32, #tpu.memory_space<vmem>>) attributes {dimension_semantics = [], scalar_prefetch = 0 : i64, scratch_operands = 0 : i64, tpu.core_type = #tpu.core_type<tc>} {
    %c0 = arith.constant 0 : index
    %c0_0 = arith.constant 0 : index
    %0 = vector.load %arg0[%c0, %c0_0] : memref<128x16xf32, #tpu.memory_space<vmem>>, vector<128x16xf32>
    %c0_1 = arith.constant 0 : index
    %c0_2 = arith.constant 0 : index
    %1 = vector.load %arg1[%c0_1, %c0_2] : memref<16x96xf32, #tpu.memory_space<vmem>>, vector<16x96xf32>
    %cst = arith.constant dense<0.000000e+00> : vector<128x96xf32>
    %2 = tpu.matmul %0, %1, %cst {dimension_numbers = #tpu.dot_dimension_numbers<[1], [0], [0], [1], [0, 0, 1, 1], [], []>} : vector<128x16xf32>, vector<16x96xf32>, vector<128x96xf32> -> vector<128x96xf32>
    %c0_3 = arith.constant 0 : index
    %c0_4 = arith.constant 0 : index
    %3 = vector.load %arg2[%c0_3, %c0_4] : memref<1x96xf32, #tpu.memory_space<vmem>>, vector<1x96xf32>
    %4 = vector.broadcast %3 : vector<1x96xf32> to vector<128x96xf32>
    %5 = arith.addf %2, %4 : vector<128x96xf32>
    %c0_5 = arith.constant 0 : index
    %c0_6 = arith.constant 0 : index
    %6 = vector.load %arg3[%c0_5, %c0_6] : memref<128x96xf32, #tpu.memory_space<vmem>>, vector<128x96xf32>
    tpu.vector_store %arg3[%c0_5, %c0_6], %5 {strides = array<i32>} : memref<128x96xf32, #tpu.memory_space<vmem>>, vector<128x96xf32>,
    return
  }
}

module attributes {stable_mosaic.version = 11 : i64} {
  func.func @_gru_scan_kernel(%arg0: memref<8x16x96xf32, #tpu.memory_space<vmem>>, %arg1: memref<32x96xf32, #tpu.memory_space<vmem>>, %arg2: memref<1x96xf32, #tpu.memory_space<vmem>>, %arg3: memref<16x32xf32, #tpu.memory_space<vmem>>, %arg4: memref<8x16x32xf32, #tpu.memory_space<vmem>>, %arg5: memref<16x32xf32, #tpu.memory_space<vmem>>) attributes {dimension_semantics = [], scalar_prefetch = 0 : i64, scratch_operands = 0 : i64, tpu.core_type = #tpu.core_type<tc>} {
    %c0 = arith.constant 0 : index
    %c0_0 = arith.constant 0 : index
    %0 = vector.load %arg3[%c0, %c0_0] : memref<16x32xf32, #tpu.memory_space<vmem>>, vector<16x32xf32>
    %c0_i32 = arith.constant 0 : i32
    %c0_1 = arith.constant 0 : index
    %c0_2 = arith.constant 0 : index
    %1 = vector.load %arg1[%c0_1, %c0_2] : memref<32x96xf32, #tpu.memory_space<vmem>>, vector<32x96xf32>
    %cst = arith.constant dense<0.000000e+00> : vector<16x96xf32>
    %2 = tpu.matmul %0, %1, %cst {dimension_numbers = #tpu.dot_dimension_numbers<[1], [0], [0], [1], [0, 0, 1, 1], [], []>} : vector<16x32xf32>, vector<32x96xf32>, vector<16x96xf32> -> vector<16x96xf32>
    %c0_3 = arith.constant 0 : index
    %c0_4 = arith.constant 0 : index
    %3 = vector.load %arg2[%c0_3, %c0_4] : memref<1x96xf32, #tpu.memory_space<vmem>>, vector<1x96xf32>
    %4 = vector.broadcast %3 : vector<1x96xf32> to vector<16x96xf32>
    %5 = arith.addf %2, %4 : vector<16x96xf32>
    %6 = arith.index_cast %c0_i32 : i32 to index
    %c0_5 = arith.constant 0 : index
    %c0_6 = arith.constant 0 : index
    %7 = vector.load %arg0[%6, %c0_5, %c0_6] : memref<8x16x96xf32, #tpu.memory_space<vmem>>, vector<1x16x96xf32>
    %8 = vector.shape_cast %7 : vector<1x16x96xf32> to vector<16x96xf32>
    %9 = vector.extract_strided_slice %8 {offsets = [0, 0], sizes = [16, 32], strides = [1, 1]} : vector<16x96xf32> to vector<16x32xf32>
    %10 = vector.extract_strided_slice %5 {offsets = [0, 0], sizes = [16, 32], strides = [1, 1]} : vector<16x96xf32> to vector<16x32xf32>
    %11 = arith.addf %9, %10 : vector<16x32xf32>
    %12 = arith.negf %11 : vector<16x32xf32>
    %13 = math.exp %12 : vector<16x32xf32>
    %cst_7 = arith.constant 1.000000e+00 : f32
    %14 = vector.broadcast %cst_7 : f32 to vector<16x32xf32>
    %15 = arith.addf %14, %13 : vector<16x32xf32>
    %16 = arith.divf %14, %15 : vector<16x32xf32>
    %17 = vector.extract_strided_slice %8 {offsets = [0, 32], sizes = [16, 32], strides = [1, 1]} : vector<16x96xf32> to vector<16x32xf32>
    %18 = vector.extract_strided_slice %5 {offsets = [0, 32], sizes = [16, 32], strides = [1, 1]} : vector<16x96xf32> to vector<16x32xf32>
    %19 = arith.addf %17, %18 : vector<16x32xf32>
    %20 = arith.negf %19 : vector<16x32xf32>
    %21 = math.exp %20 : vector<16x32xf32>
    %cst_8 = arith.constant 1.000000e+00 : f32
    %22 = vector.broadcast %cst_8 : f32 to vector<16x32xf32>
    %23 = arith.addf %22, %21 : vector<16x32xf32>
    %24 = arith.divf %22, %23 : vector<16x32xf32>
    %25 = vector.extract_strided_slice %8 {offsets = [0, 64], sizes = [16, 32], strides = [1, 1]} : vector<16x96xf32> to vector<16x32xf32>
    %26 = vector.extract_strided_slice %5 {offsets = [0, 64], sizes = [16, 32], strides = [1, 1]} : vector<16x96xf32> to vector<16x32xf32>
    %27 = arith.mulf %16, %26 : vector<16x32xf32>
    %28 = arith.addf %25, %27 : vector<16x32xf32>
    %29 = math.tanh %28 : vector<16x32xf32>
    %cst_9 = arith.constant 1.000000e+00 : f32
    %30 = vector.broadcast %cst_9 : f32 to vector<16x32xf32>
    %31 = arith.subf %30, %24 : vector<16x32xf32>
    %32 = arith.mulf %31, %29 : vector<16x32xf32>
    %33 = arith.mulf %24, %0 : vector<16x32xf32>
    %34 = arith.addf %32, %33 : vector<16x32xf32>
    %35 = arith.index_cast %c0_i32 : i32 to index
    %c0_10 = arith.constant 0 : index
    %c0_11 = arith.constant 0 : index
    %36 = vector.load %arg4[%35, %c0_10, %c0_11] : memref<8x16x32xf32, #tpu.memory_space<vmem>>, vector<1x16x32xf32>
    %37 = vector.shape_cast %36 : vector<1x16x32xf32> to vector<16x32xf32>
    %38 = vector.shape_cast %34 : vector<16x32xf32> to vector<1x16x32xf32>
    tpu.vector_store %arg4[%35, %c0_10, %c0_11], %38 {strides = array<i32>} : memref<8x16x32xf32, #tpu.memory_space<vmem>>, vector<1x16x32xf32>,
    %c1_i32 = arith.constant 1 : i32
    %c0_12 = arith.constant 0 : index
    %c0_13 = arith.constant 0 : index
    %39 = vector.load %arg1[%c0_12, %c0_13] : memref<32x96xf32, #tpu.memory_space<vmem>>, vector<32x96xf32>
    %cst_14 = arith.constant dense<0.000000e+00> : vector<16x96xf32>
    %40 = tpu.matmul %34, %39, %cst_14 {dimension_numbers = #tpu.dot_dimension_numbers<[1], [0], [0], [1], [0, 0, 1, 1], [], []>} : vector<16x32xf32>, vector<32x96xf32>, vector<16x96xf32> -> vector<16x96xf32>
    %c0_15 = arith.constant 0 : index
    %c0_16 = arith.constant 0 : index
    %41 = vector.load %arg2[%c0_15, %c0_16] : memref<1x96xf32, #tpu.memory_space<vmem>>, vector<1x96xf32>
    %42 = vector.broadcast %41 : vector<1x96xf32> to vector<16x96xf32>
    %43 = arith.addf %40, %42 : vector<16x96xf32>
    %44 = arith.index_cast %c1_i32 : i32 to index
    %c0_17 = arith.constant 0 : index
    %c0_18 = arith.constant 0 : index
    %45 = vector.load %arg0[%44, %c0_17, %c0_18] : memref<8x16x96xf32, #tpu.memory_space<vmem>>, vector<1x16x96xf32>
    %46 = vector.shape_cast %45 : vector<1x16x96xf32> to vector<16x96xf32>
    %47 = vector.extract_strided_slice %46 {offsets = [0, 0], sizes = [16, 32], strides = [1, 1]} : vector<16x96xf32> to vector<16x32xf32>
    %48 = vector.extract_strided_slice %43 {offsets = [0, 0], sizes = [16, 32], strides = [1, 1]} : vector<16x96xf32> to vector<16x32xf32>
    %49 = arith.addf %47, %48 : vector<16x32xf32>
    %50 = arith.negf %49 : vector<16x32xf32>
    %51 = math.exp %50 : vector<16x32xf32>
    %cst_19 = arith.constant 1.000000e+00 : f32
    %52 = vector.broadcast %cst_19 : f32 to vector<16x32xf32>
    %53 = arith.addf %52, %51 : vector<16x32xf32>
    %54 = arith.divf %52, %53 : vector<16x32xf32>
    %55 = vector.extract_strided_slice %46 {offsets = [0, 32], sizes = [16, 32], strides = [1, 1]} : vector<16x96xf32> to vector<16x32xf32>
    %56 = vector.extract_strided_slice %43 {offsets = [0, 32], sizes = [16, 32], strides = [1, 1]} : vector<16x96xf32> to vector<16x32xf32>
    %57 = arith.addf %55, %56 : vector<16x32xf32>
    %58 = arith.negf %57 : vector<16x32xf32>
    %59 = math.exp %58 : vector<16x32xf32>
    %cst_20 = arith.constant 1.000000e+00 : f32
    %60 = vector.broadcast %cst_20 : f32 to vector<16x32xf32>
    %61 = arith.addf %60, %59 : vector<16x32xf32>
    %62 = arith.divf %60, %61 : vector<16x32xf32>
    %63 = vector.extract_strided_slice %46 {offsets = [0, 64], sizes = [16, 32], strides = [1, 1]} : vector<16x96xf32> to vector<16x32xf32>
    %64 = vector.extract_strided_slice %43 {offsets = [0, 64], sizes = [16, 32], strides = [1, 1]} : vector<16x96xf32> to vector<16x32xf32>
    %65 = arith.mulf %54, %64 : vector<16x32xf32>
    %66 = arith.addf %63, %65 : vector<16x32xf32>
    %67 = math.tanh %66 : vector<16x32xf32>
    %cst_21 = arith.constant 1.000000e+00 : f32
    %68 = vector.broadcast %cst_21 : f32 to vector<16x32xf32>
    %69 = arith.subf %68, %62 : vector<16x32xf32>
    %70 = arith.mulf %69, %67 : vector<16x32xf32>
    %71 = arith.mulf %62, %34 : vector<16x32xf32>
    %72 = arith.addf %70, %71 : vector<16x32xf32>
    %73 = arith.index_cast %c1_i32 : i32 to index
    %c0_22 = arith.constant 0 : index
    %c0_23 = arith.constant 0 : index
    %74 = vector.load %arg4[%73, %c0_22, %c0_23] : memref<8x16x32xf32, #tpu.memory_space<vmem>>, vector<1x16x32xf32>
    %75 = vector.shape_cast %74 : vector<1x16x32xf32> to vector<16x32xf32>
    %76 = vector.shape_cast %72 : vector<16x32xf32> to vector<1x16x32xf32>
    tpu.vector_store %arg4[%73, %c0_22, %c0_23], %76 {strides = array<i32>} : memref<8x16x32xf32, #tpu.memory_space<vmem>>, vector<1x16x32xf32>,
    %c2_i32 = arith.constant 2 : i32
    %c0_24 = arith.constant 0 : index
    %c0_25 = arith.constant 0 : index
    %77 = vector.load %arg1[%c0_24, %c0_25] : memref<32x96xf32, #tpu.memory_space<vmem>>, vector<32x96xf32>
    %cst_26 = arith.constant dense<0.000000e+00> : vector<16x96xf32>
    %78 = tpu.matmul %72, %77, %cst_26 {dimension_numbers = #tpu.dot_dimension_numbers<[1], [0], [0], [1], [0, 0, 1, 1], [], []>} : vector<16x32xf32>, vector<32x96xf32>, vector<16x96xf32> -> vector<16x96xf32>
    %c0_27 = arith.constant 0 : index
    %c0_28 = arith.constant 0 : index
    %79 = vector.load %arg2[%c0_27, %c0_28] : memref<1x96xf32, #tpu.memory_space<vmem>>, vector<1x96xf32>
    %80 = vector.broadcast %79 : vector<1x96xf32> to vector<16x96xf32>
    %81 = arith.addf %78, %80 : vector<16x96xf32>
    %82 = arith.index_cast %c2_i32 : i32 to index
    %c0_29 = arith.constant 0 : index
    %c0_30 = arith.constant 0 : index
    %83 = vector.load %arg0[%82, %c0_29, %c0_30] : memref<8x16x96xf32, #tpu.memory_space<vmem>>, vector<1x16x96xf32>
    %84 = vector.shape_cast %83 : vector<1x16x96xf32> to vector<16x96xf32>
    %85 = vector.extract_strided_slice %84 {offsets = [0, 0], sizes = [16, 32], strides = [1, 1]} : vector<16x96xf32> to vector<16x32xf32>
    %86 = vector.extract_strided_slice %81 {offsets = [0, 0], sizes = [16, 32], strides = [1, 1]} : vector<16x96xf32> to vector<16x32xf32>
    %87 = arith.addf %85, %86 : vector<16x32xf32>
    %88 = arith.negf %87 : vector<16x32xf32>
    %89 = math.exp %88 : vector<16x32xf32>
    %cst_31 = arith.constant 1.000000e+00 : f32
    %90 = vector.broadcast %cst_31 : f32 to vector<16x32xf32>
    %91 = arith.addf %90, %89 : vector<16x32xf32>
    %92 = arith.divf %90, %91 : vector<16x32xf32>
    %93 = vector.extract_strided_slice %84 {offsets = [0, 32], sizes = [16, 32], strides = [1, 1]} : vector<16x96xf32> to vector<16x32xf32>
    %94 = vector.extract_strided_slice %81 {offsets = [0, 32], sizes = [16, 32], strides = [1, 1]} : vector<16x96xf32> to vector<16x32xf32>
    %95 = arith.addf %93, %94 : vector<16x32xf32>
    %96 = arith.negf %95 : vector<16x32xf32>
    %97 = math.exp %96 : vector<16x32xf32>
    %cst_32 = arith.constant 1.000000e+00 : f32
    %98 = vector.broadcast %cst_32 : f32 to vector<16x32xf32>
    %99 = arith.addf %98, %97 : vector<16x32xf32>
    %100 = arith.divf %98, %99 : vector<16x32xf32>
    %101 = vector.extract_strided_slice %84 {offsets = [0, 64], sizes = [16, 32], strides = [1, 1]} : vector<16x96xf32> to vector<16x32xf32>
    %102 = vector.extract_strided_slice %81 {offsets = [0, 64], sizes = [16, 32], strides = [1, 1]} : vector<16x96xf32> to vector<16x32xf32>
    %103 = arith.mulf %92, %102 : vector<16x32xf32>
    %104 = arith.addf %101, %103 : vector<16x32xf32>
    %105 = math.tanh %104 : vector<16x32xf32>
    %cst_33 = arith.constant 1.000000e+00 : f32
    %106 = vector.broadcast %cst_33 : f32 to vector<16x32xf32>
    %107 = arith.subf %106, %100 : vector<16x32xf32>
    %108 = arith.mulf %107, %105 : vector<16x32xf32>
    %109 = arith.mulf %100, %72 : vector<16x32xf32>
    %110 = arith.addf %108, %109 : vector<16x32xf32>
    %111 = arith.index_cast %c2_i32 : i32 to index
    %c0_34 = arith.constant 0 : index
    %c0_35 = arith.constant 0 : index
    %112 = vector.load %arg4[%111, %c0_34, %c0_35] : memref<8x16x32xf32, #tpu.memory_space<vmem>>, vector<1x16x32xf32>
    %113 = vector.shape_cast %112 : vector<1x16x32xf32> to vector<16x32xf32>
    %114 = vector.shape_cast %110 : vector<16x32xf32> to vector<1x16x32xf32>
    tpu.vector_store %arg4[%111, %c0_34, %c0_35], %114 {strides = array<i32>} : memref<8x16x32xf32, #tpu.memory_space<vmem>>, vector<1x16x32xf32>,
    %c3_i32 = arith.constant 3 : i32
    %c0_36 = arith.constant 0 : index
    %c0_37 = arith.constant 0 : index
    %115 = vector.load %arg1[%c0_36, %c0_37] : memref<32x96xf32, #tpu.memory_space<vmem>>, vector<32x96xf32>
    %cst_38 = arith.constant dense<0.000000e+00> : vector<16x96xf32>
    %116 = tpu.matmul %110, %115, %cst_38 {dimension_numbers = #tpu.dot_dimension_numbers<[1], [0], [0], [1], [0, 0, 1, 1], [], []>} : vector<16x32xf32>, vector<32x96xf32>, vector<16x96xf32> -> vector<16x96xf32>
    %c0_39 = arith.constant 0 : index
    %c0_40 = arith.constant 0 : index
    %117 = vector.load %arg2[%c0_39, %c0_40] : memref<1x96xf32, #tpu.memory_space<vmem>>, vector<1x96xf32>
    %118 = vector.broadcast %117 : vector<1x96xf32> to vector<16x96xf32>
    %119 = arith.addf %116, %118 : vector<16x96xf32>
    %120 = arith.index_cast %c3_i32 : i32 to index
    %c0_41 = arith.constant 0 : index
    %c0_42 = arith.constant 0 : index
    %121 = vector.load %arg0[%120, %c0_41, %c0_42] : memref<8x16x96xf32, #tpu.memory_space<vmem>>, vector<1x16x96xf32>
    %122 = vector.shape_cast %121 : vector<1x16x96xf32> to vector<16x96xf32>
    %123 = vector.extract_strided_slice %122 {offsets = [0, 0], sizes = [16, 32], strides = [1, 1]} : vector<16x96xf32> to vector<16x32xf32>
    %124 = vector.extract_strided_slice %119 {offsets = [0, 0], sizes = [16, 32], strides = [1, 1]} : vector<16x96xf32> to vector<16x32xf32>
    %125 = arith.addf %123, %124 : vector<16x32xf32>
    %126 = arith.negf %125 : vector<16x32xf32>
    %127 = math.exp %126 : vector<16x32xf32>
    %cst_43 = arith.constant 1.000000e+00 : f32
    %128 = vector.broadcast %cst_43 : f32 to vector<16x32xf32>
    %129 = arith.addf %128, %127 : vector<16x32xf32>
    %130 = arith.divf %128, %129 : vector<16x32xf32>
    %131 = vector.extract_strided_slice %122 {offsets = [0, 32], sizes = [16, 32], strides = [1, 1]} : vector<16x96xf32> to vector<16x32xf32>
    %132 = vector.extract_strided_slice %119 {offsets = [0, 32], sizes = [16, 32], strides = [1, 1]} : vector<16x96xf32> to vector<16x32xf32>
    %133 = arith.addf %131, %132 : vector<16x32xf32>
    %134 = arith.negf %133 : vector<16x32xf32>
    %135 = math.exp %134 : vector<16x32xf32>
    %cst_44 = arith.constant 1.000000e+00 : f32
    %136 = vector.broadcast %cst_44 : f32 to vector<16x32xf32>
    %137 = arith.addf %136, %135 : vector<16x32xf32>
    %138 = arith.divf %136, %137 : vector<16x32xf32>
    %139 = vector.extract_strided_slice %122 {offsets = [0, 64], sizes = [16, 32], strides = [1, 1]} : vector<16x96xf32> to vector<16x32xf32>
    %140 = vector.extract_strided_slice %119 {offsets = [0, 64], sizes = [16, 32], strides = [1, 1]} : vector<16x96xf32> to vector<16x32xf32>
    %141 = arith.mulf %130, %140 : vector<16x32xf32>
    %142 = arith.addf %139, %141 : vector<16x32xf32>
    %143 = math.tanh %142 : vector<16x32xf32>
    %cst_45 = arith.constant 1.000000e+00 : f32
    %144 = vector.broadcast %cst_45 : f32 to vector<16x32xf32>
    %145 = arith.subf %144, %138 : vector<16x32xf32>
    %146 = arith.mulf %145, %143 : vector<16x32xf32>
    %147 = arith.mulf %138, %110 : vector<16x32xf32>
    %148 = arith.addf %146, %147 : vector<16x32xf32>
    %149 = arith.index_cast %c3_i32 : i32 to index
    %c0_46 = arith.constant 0 : index
    %c0_47 = arith.constant 0 : index
    %150 = vector.load %arg4[%149, %c0_46, %c0_47] : memref<8x16x32xf32, #tpu.memory_space<vmem>>, vector<1x16x32xf32>
    %151 = vector.shape_cast %150 : vector<1x16x32xf32> to vector<16x32xf32>
    %152 = vector.shape_cast %148 : vector<16x32xf32> to vector<1x16x32xf32>
    tpu.vector_store %arg4[%149, %c0_46, %c0_47], %152 {strides = array<i32>} : memref<8x16x32xf32, #tpu.memory_space<vmem>>, vector<1x16x32xf32>,
    %c4_i32 = arith.constant 4 : i32
    %c0_48 = arith.constant 0 : index
    %c0_49 = arith.constant 0 : index
    %153 = vector.load %arg1[%c0_48, %c0_49] : memref<32x96xf32, #tpu.memory_space<vmem>>, vector<32x96xf32>
    %cst_50 = arith.constant dense<0.000000e+00> : vector<16x96xf32>
    %154 = tpu.matmul %148, %153, %cst_50 {dimension_numbers = #tpu.dot_dimension_numbers<[1], [0], [0], [1], [0, 0, 1, 1], [], []>} : vector<16x32xf32>, vector<32x96xf32>, vector<16x96xf32> -> vector<16x96xf32>
    %c0_51 = arith.constant 0 : index
    %c0_52 = arith.constant 0 : index
    %155 = vector.load %arg2[%c0_51, %c0_52] : memref<1x96xf32, #tpu.memory_space<vmem>>, vector<1x96xf32>
    %156 = vector.broadcast %155 : vector<1x96xf32> to vector<16x96xf32>
    %157 = arith.addf %154, %156 : vector<16x96xf32>
    %158 = arith.index_cast %c4_i32 : i32 to index
    %c0_53 = arith.constant 0 : index
    %c0_54 = arith.constant 0 : index
    %159 = vector.load %arg0[%158, %c0_53, %c0_54] : memref<8x16x96xf32, #tpu.memory_space<vmem>>, vector<1x16x96xf32>
    %160 = vector.shape_cast %159 : vector<1x16x96xf32> to vector<16x96xf32>
    %161 = vector.extract_strided_slice %160 {offsets = [0, 0], sizes = [16, 32], strides = [1, 1]} : vector<16x96xf32> to vector<16x32xf32>
    %162 = vector.extract_strided_slice %157 {offsets = [0, 0], sizes = [16, 32], strides = [1, 1]} : vector<16x96xf32> to vector<16x32xf32>
    %163 = arith.addf %161, %162 : vector<16x32xf32>
    %164 = arith.negf %163 : vector<16x32xf32>
    %165 = math.exp %164 : vector<16x32xf32>
    %cst_55 = arith.constant 1.000000e+00 : f32
    %166 = vector.broadcast %cst_55 : f32 to vector<16x32xf32>
    %167 = arith.addf %166, %165 : vector<16x32xf32>
    %168 = arith.divf %166, %167 : vector<16x32xf32>
    %169 = vector.extract_strided_slice %160 {offsets = [0, 32], sizes = [16, 32], strides = [1, 1]} : vector<16x96xf32> to vector<16x32xf32>
    %170 = vector.extract_strided_slice %157 {offsets = [0, 32], sizes = [16, 32], strides = [1, 1]} : vector<16x96xf32> to vector<16x32xf32>
    %171 = arith.addf %169, %170 : vector<16x32xf32>
    %172 = arith.negf %171 : vector<16x32xf32>
    %173 = math.exp %172 : vector<16x32xf32>
    %cst_56 = arith.constant 1.000000e+00 : f32
    %174 = vector.broadcast %cst_56 : f32 to vector<16x32xf32>
    %175 = arith.addf %174, %173 : vector<16x32xf32>
    %176 = arith.divf %174, %175 : vector<16x32xf32>
    %177 = vector.extract_strided_slice %160 {offsets = [0, 64], sizes = [16, 32], strides = [1, 1]} : vector<16x96xf32> to vector<16x32xf32>
    %178 = vector.extract_strided_slice %157 {offsets = [0, 64], sizes = [16, 32], strides = [1, 1]} : vector<16x96xf32> to vector<16x32xf32>
    %179 = arith.mulf %168, %178 : vector<16x32xf32>
    %180 = arith.addf %177, %179 : vector<16x32xf32>
    %181 = math.tanh %180 : vector<16x32xf32>
    %cst_57 = arith.constant 1.000000e+00 : f32
    %182 = vector.broadcast %cst_57 : f32 to vector<16x32xf32>
    %183 = arith.subf %182, %176 : vector<16x32xf32>
    %184 = arith.mulf %183, %181 : vector<16x32xf32>
    %185 = arith.mulf %176, %148 : vector<16x32xf32>
    %186 = arith.addf %184, %185 : vector<16x32xf32>
    %187 = arith.index_cast %c4_i32 : i32 to index
    %c0_58 = arith.constant 0 : index
    %c0_59 = arith.constant 0 : index
    %188 = vector.load %arg4[%187, %c0_58, %c0_59] : memref<8x16x32xf32, #tpu.memory_space<vmem>>, vector<1x16x32xf32>
    %189 = vector.shape_cast %188 : vector<1x16x32xf32> to vector<16x32xf32>
    %190 = vector.shape_cast %186 : vector<16x32xf32> to vector<1x16x32xf32>
    tpu.vector_store %arg4[%187, %c0_58, %c0_59], %190 {strides = array<i32>} : memref<8x16x32xf32, #tpu.memory_space<vmem>>, vector<1x16x32xf32>,
    %c5_i32 = arith.constant 5 : i32
    %c0_60 = arith.constant 0 : index
    %c0_61 = arith.constant 0 : index
    %191 = vector.load %arg1[%c0_60, %c0_61] : memref<32x96xf32, #tpu.memory_space<vmem>>, vector<32x96xf32>
    %cst_62 = arith.constant dense<0.000000e+00> : vector<16x96xf32>
    %192 = tpu.matmul %186, %191, %cst_62 {dimension_numbers = #tpu.dot_dimension_numbers<[1], [0], [0], [1], [0, 0, 1, 1], [], []>} : vector<16x32xf32>, vector<32x96xf32>, vector<16x96xf32> -> vector<16x96xf32>
    %c0_63 = arith.constant 0 : index
    %c0_64 = arith.constant 0 : index
    %193 = vector.load %arg2[%c0_63, %c0_64] : memref<1x96xf32, #tpu.memory_space<vmem>>, vector<1x96xf32>
    %194 = vector.broadcast %193 : vector<1x96xf32> to vector<16x96xf32>
    %195 = arith.addf %192, %194 : vector<16x96xf32>
    %196 = arith.index_cast %c5_i32 : i32 to index
    %c0_65 = arith.constant 0 : index
    %c0_66 = arith.constant 0 : index
    %197 = vector.load %arg0[%196, %c0_65, %c0_66] : memref<8x16x96xf32, #tpu.memory_space<vmem>>, vector<1x16x96xf32>
    %198 = vector.shape_cast %197 : vector<1x16x96xf32> to vector<16x96xf32>
    %199 = vector.extract_strided_slice %198 {offsets = [0, 0], sizes = [16, 32], strides = [1, 1]} : vector<16x96xf32> to vector<16x32xf32>
    %200 = vector.extract_strided_slice %195 {offsets = [0, 0], sizes = [16, 32], strides = [1, 1]} : vector<16x96xf32> to vector<16x32xf32>
    %201 = arith.addf %199, %200 : vector<16x32xf32>
    %202 = arith.negf %201 : vector<16x32xf32>
    %203 = math.exp %202 : vector<16x32xf32>
    %cst_67 = arith.constant 1.000000e+00 : f32
    %204 = vector.broadcast %cst_67 : f32 to vector<16x32xf32>
    %205 = arith.addf %204, %203 : vector<16x32xf32>
    %206 = arith.divf %204, %205 : vector<16x32xf32>
    %207 = vector.extract_strided_slice %198 {offsets = [0, 32], sizes = [16, 32], strides = [1, 1]} : vector<16x96xf32> to vector<16x32xf32>
    %208 = vector.extract_strided_slice %195 {offsets = [0, 32], sizes = [16, 32], strides = [1, 1]} : vector<16x96xf32> to vector<16x32xf32>
    %209 = arith.addf %207, %208 : vector<16x32xf32>
    %210 = arith.negf %209 : vector<16x32xf32>
    %211 = math.exp %210 : vector<16x32xf32>
    %cst_68 = arith.constant 1.000000e+00 : f32
    %212 = vector.broadcast %cst_68 : f32 to vector<16x32xf32>
    %213 = arith.addf %212, %211 : vector<16x32xf32>
    %214 = arith.divf %212, %213 : vector<16x32xf32>
    %215 = vector.extract_strided_slice %198 {offsets = [0, 64], sizes = [16, 32], strides = [1, 1]} : vector<16x96xf32> to vector<16x32xf32>
    %216 = vector.extract_strided_slice %195 {offsets = [0, 64], sizes = [16, 32], strides = [1, 1]} : vector<16x96xf32> to vector<16x32xf32>
    %217 = arith.mulf %206, %216 : vector<16x32xf32>
    %218 = arith.addf %215, %217 : vector<16x32xf32>
    %219 = math.tanh %218 : vector<16x32xf32>
    %cst_69 = arith.constant 1.000000e+00 : f32
    %220 = vector.broadcast %cst_69 : f32 to vector<16x32xf32>
    %221 = arith.subf %220, %214 : vector<16x32xf32>
    %222 = arith.mulf %221, %219 : vector<16x32xf32>
    %223 = arith.mulf %214, %186 : vector<16x32xf32>
    %224 = arith.addf %222, %223 : vector<16x32xf32>
    %225 = arith.index_cast %c5_i32 : i32 to index
    %c0_70 = arith.constant 0 : index
    %c0_71 = arith.constant 0 : index
    %226 = vector.load %arg4[%225, %c0_70, %c0_71] : memref<8x16x32xf32, #tpu.memory_space<vmem>>, vector<1x16x32xf32>
    %227 = vector.shape_cast %226 : vector<1x16x32xf32> to vector<16x32xf32>
    %228 = vector.shape_cast %224 : vector<16x32xf32> to vector<1x16x32xf32>
    tpu.vector_store %arg4[%225, %c0_70, %c0_71], %228 {strides = array<i32>} : memref<8x16x32xf32, #tpu.memory_space<vmem>>, vector<1x16x32xf32>,
    %c6_i32 = arith.constant 6 : i32
    %c0_72 = arith.constant 0 : index
    %c0_73 = arith.constant 0 : index
    %229 = vector.load %arg1[%c0_72, %c0_73] : memref<32x96xf32, #tpu.memory_space<vmem>>, vector<32x96xf32>
    %cst_74 = arith.constant dense<0.000000e+00> : vector<16x96xf32>
    %230 = tpu.matmul %224, %229, %cst_74 {dimension_numbers = #tpu.dot_dimension_numbers<[1], [0], [0], [1], [0, 0, 1, 1], [], []>} : vector<16x32xf32>, vector<32x96xf32>, vector<16x96xf32> -> vector<16x96xf32>
    %c0_75 = arith.constant 0 : index
    %c0_76 = arith.constant 0 : index
    %231 = vector.load %arg2[%c0_75, %c0_76] : memref<1x96xf32, #tpu.memory_space<vmem>>, vector<1x96xf32>
    %232 = vector.broadcast %231 : vector<1x96xf32> to vector<16x96xf32>
    %233 = arith.addf %230, %232 : vector<16x96xf32>
    %234 = arith.index_cast %c6_i32 : i32 to index
    %c0_77 = arith.constant 0 : index
    %c0_78 = arith.constant 0 : index
    %235 = vector.load %arg0[%234, %c0_77, %c0_78] : memref<8x16x96xf32, #tpu.memory_space<vmem>>, vector<1x16x96xf32>
    %236 = vector.shape_cast %235 : vector<1x16x96xf32> to vector<16x96xf32>
    %237 = vector.extract_strided_slice %236 {offsets = [0, 0], sizes = [16, 32], strides = [1, 1]} : vector<16x96xf32> to vector<16x32xf32>
    %238 = vector.extract_strided_slice %233 {offsets = [0, 0], sizes = [16, 32], strides = [1, 1]} : vector<16x96xf32> to vector<16x32xf32>
    %239 = arith.addf %237, %238 : vector<16x32xf32>
    %240 = arith.negf %239 : vector<16x32xf32>
    %241 = math.exp %240 : vector<16x32xf32>
    %cst_79 = arith.constant 1.000000e+00 : f32
    %242 = vector.broadcast %cst_79 : f32 to vector<16x32xf32>
    %243 = arith.addf %242, %241 : vector<16x32xf32>
    %244 = arith.divf %242, %243 : vector<16x32xf32>
    %245 = vector.extract_strided_slice %236 {offsets = [0, 32], sizes = [16, 32], strides = [1, 1]} : vector<16x96xf32> to vector<16x32xf32>
    %246 = vector.extract_strided_slice %233 {offsets = [0, 32], sizes = [16, 32], strides = [1, 1]} : vector<16x96xf32> to vector<16x32xf32>
    %247 = arith.addf %245, %246 : vector<16x32xf32>
    %248 = arith.negf %247 : vector<16x32xf32>
    %249 = math.exp %248 : vector<16x32xf32>
    %cst_80 = arith.constant 1.000000e+00 : f32
    %250 = vector.broadcast %cst_80 : f32 to vector<16x32xf32>
    %251 = arith.addf %250, %249 : vector<16x32xf32>
    %252 = arith.divf %250, %251 : vector<16x32xf32>
    %253 = vector.extract_strided_slice %236 {offsets = [0, 64], sizes = [16, 32], strides = [1, 1]} : vector<16x96xf32> to vector<16x32xf32>
    %254 = vector.extract_strided_slice %233 {offsets = [0, 64], sizes = [16, 32], strides = [1, 1]} : vector<16x96xf32> to vector<16x32xf32>
    %255 = arith.mulf %244, %254 : vector<16x32xf32>
    %256 = arith.addf %253, %255 : vector<16x32xf32>
    %257 = math.tanh %256 : vector<16x32xf32>
    %cst_81 = arith.constant 1.000000e+00 : f32
    %258 = vector.broadcast %cst_81 : f32 to vector<16x32xf32>
    %259 = arith.subf %258, %252 : vector<16x32xf32>
    %260 = arith.mulf %259, %257 : vector<16x32xf32>
    %261 = arith.mulf %252, %224 : vector<16x32xf32>
    %262 = arith.addf %260, %261 : vector<16x32xf32>
    %263 = arith.index_cast %c6_i32 : i32 to index
    %c0_82 = arith.constant 0 : index
    %c0_83 = arith.constant 0 : index
    %264 = vector.load %arg4[%263, %c0_82, %c0_83] : memref<8x16x32xf32, #tpu.memory_space<vmem>>, vector<1x16x32xf32>
    %265 = vector.shape_cast %264 : vector<1x16x32xf32> to vector<16x32xf32>
    %266 = vector.shape_cast %262 : vector<16x32xf32> to vector<1x16x32xf32>
    tpu.vector_store %arg4[%263, %c0_82, %c0_83], %266 {strides = array<i32>} : memref<8x16x32xf32, #tpu.memory_space<vmem>>, vector<1x16x32xf32>,
    %c7_i32 = arith.constant 7 : i32
    %c0_84 = arith.constant 0 : index
    %c0_85 = arith.constant 0 : index
    %267 = vector.load %arg1[%c0_84, %c0_85] : memref<32x96xf32, #tpu.memory_space<vmem>>, vector<32x96xf32>
    %cst_86 = arith.constant dense<0.000000e+00> : vector<16x96xf32>
    %268 = tpu.matmul %262, %267, %cst_86 {dimension_numbers = #tpu.dot_dimension_numbers<[1], [0], [0], [1], [0, 0, 1, 1], [], []>} : vector<16x32xf32>, vector<32x96xf32>, vector<16x96xf32> -> vector<16x96xf32>
    %c0_87 = arith.constant 0 : index
    %c0_88 = arith.constant 0 : index
    %269 = vector.load %arg2[%c0_87, %c0_88] : memref<1x96xf32, #tpu.memory_space<vmem>>, vector<1x96xf32>
    %270 = vector.broadcast %269 : vector<1x96xf32> to vector<16x96xf32>
    %271 = arith.addf %268, %270 : vector<16x96xf32>
    %272 = arith.index_cast %c7_i32 : i32 to index
    %c0_89 = arith.constant 0 : index
    %c0_90 = arith.constant 0 : index
    %273 = vector.load %arg0[%272, %c0_89, %c0_90] : memref<8x16x96xf32, #tpu.memory_space<vmem>>, vector<1x16x96xf32>
    %274 = vector.shape_cast %273 : vector<1x16x96xf32> to vector<16x96xf32>
    %275 = vector.extract_strided_slice %274 {offsets = [0, 0], sizes = [16, 32], strides = [1, 1]} : vector<16x96xf32> to vector<16x32xf32>
    %276 = vector.extract_strided_slice %271 {offsets = [0, 0], sizes = [16, 32], strides = [1, 1]} : vector<16x96xf32> to vector<16x32xf32>
    %277 = arith.addf %275, %276 : vector<16x32xf32>
    %278 = arith.negf %277 : vector<16x32xf32>
    %279 = math.exp %278 : vector<16x32xf32>
    %cst_91 = arith.constant 1.000000e+00 : f32
    %280 = vector.broadcast %cst_91 : f32 to vector<16x32xf32>
    %281 = arith.addf %280, %279 : vector<16x32xf32>
    %282 = arith.divf %280, %281 : vector<16x32xf32>
    %283 = vector.extract_strided_slice %274 {offsets = [0, 32], sizes = [16, 32], strides = [1, 1]} : vector<16x96xf32> to vector<16x32xf32>
    %284 = vector.extract_strided_slice %271 {offsets = [0, 32], sizes = [16, 32], strides = [1, 1]} : vector<16x96xf32> to vector<16x32xf32>
    %285 = arith.addf %283, %284 : vector<16x32xf32>
    %286 = arith.negf %285 : vector<16x32xf32>
    %287 = math.exp %286 : vector<16x32xf32>
    %cst_92 = arith.constant 1.000000e+00 : f32
    %288 = vector.broadcast %cst_92 : f32 to vector<16x32xf32>
    %289 = arith.addf %288, %287 : vector<16x32xf32>
    %290 = arith.divf %288, %289 : vector<16x32xf32>
    %291 = vector.extract_strided_slice %274 {offsets = [0, 64], sizes = [16, 32], strides = [1, 1]} : vector<16x96xf32> to vector<16x32xf32>
    %292 = vector.extract_strided_slice %271 {offsets = [0, 64], sizes = [16, 32], strides = [1, 1]} : vector<16x96xf32> to vector<16x32xf32>
    %293 = arith.mulf %282, %292 : vector<16x32xf32>
    %294 = arith.addf %291, %293 : vector<16x32xf32>
    %295 = math.tanh %294 : vector<16x32xf32>
    %cst_93 = arith.constant 1.000000e+00 : f32
    %296 = vector.broadcast %cst_93 : f32 to vector<16x32xf32>
    %297 = arith.subf %296, %290 : vector<16x32xf32>
    %298 = arith.mulf %297, %295 : vector<16x32xf32>
    %299 = arith.mulf %290, %262 : vector<16x32xf32>
    %300 = arith.addf %298, %299 : vector<16x32xf32>
    %301 = arith.index_cast %c7_i32 : i32 to index
    %c0_94 = arith.constant 0 : index
    %c0_95 = arith.constant 0 : index
    %302 = vector.load %arg4[%301, %c0_94, %c0_95] : memref<8x16x32xf32, #tpu.memory_space<vmem>>, vector<1x16x32xf32>
    %303 = vector.shape_cast %302 : vector<1x16x32xf32> to vector<16x32xf32>
    %304 = vector.shape_cast %300 : vector<16x32xf32> to vector<1x16x32xf32>
    tpu.vector_store %arg4[%301, %c0_94, %c0_95], %304 {strides = array<i32>} : memref<8x16x32xf32, #tpu.memory_space<vmem>>, vector<1x16x32xf32>,
    %c8_i32 = arith.constant 8 : i32
    %c0_96 = arith.constant 0 : index
    %c0_97 = arith.constant 0 : index
    %305 = vector.load %arg5[%c0_96, %c0_97] : memref<16x32xf32, #tpu.memory_space<vmem>>, vector<16x32xf32>
    tpu.vector_store %arg5[%c0_96, %c0_97], %300 {strides = array<i32>} : memref<16x32xf32, #tpu.memory_space<vmem>>, vector<16x32xf32>,
    return
  }
}

module attributes {stable_mosaic.version = 11 : i64} {
  func.func @_mm_bias_kernel(%arg0: memref<128x32xf32, #tpu.memory_space<vmem>>, %arg1: memref<32x16xf32, #tpu.memory_space<vmem>>, %arg2: memref<1x16xf32, #tpu.memory_space<vmem>>, %arg3: memref<128x16xf32, #tpu.memory_space<vmem>>) attributes {dimension_semantics = [], scalar_prefetch = 0 : i64, scratch_operands = 0 : i64, tpu.core_type = #tpu.core_type<tc>} {
    %c0 = arith.constant 0 : index
    %c0_0 = arith.constant 0 : index
    %0 = vector.load %arg0[%c0, %c0_0] : memref<128x32xf32, #tpu.memory_space<vmem>>, vector<128x32xf32>
    %c0_1 = arith.constant 0 : index
    %c0_2 = arith.constant 0 : index
    %1 = vector.load %arg1[%c0_1, %c0_2] : memref<32x16xf32, #tpu.memory_space<vmem>>, vector<32x16xf32>
    %cst = arith.constant dense<0.000000e+00> : vector<128x16xf32>
    %2 = tpu.matmul %0, %1, %cst {dimension_numbers = #tpu.dot_dimension_numbers<[1], [0], [0], [1], [0, 0, 1, 1], [], []>} : vector<128x32xf32>, vector<32x16xf32>, vector<128x16xf32> -> vector<128x16xf32>
    %c0_3 = arith.constant 0 : index
    %c0_4 = arith.constant 0 : index
    %3 = vector.load %arg2[%c0_3, %c0_4] : memref<1x16xf32, #tpu.memory_space<vmem>>, vector<1x16xf32>
    %4 = vector.broadcast %3 : vector<1x16xf32> to vector<128x16xf32>
    %5 = arith.addf %2, %4 : vector<128x16xf32>
    %c0_5 = arith.constant 0 : index
    %c0_6 = arith.constant 0 : index
    %6 = vector.load %arg3[%c0_5, %c0_6] : memref<128x16xf32, #tpu.memory_space<vmem>>, vector<128x16xf32>
    tpu.vector_store %arg3[%c0_5, %c0_6], %5 {strides = array<i32>} : memref<128x16xf32, #tpu.memory_space<vmem>>, vector<128x16xf32>,
    return
  }
}

module attributes {stable_mosaic.version = 11 : i64} {
  func.func @_conv_prelu_lncf_kernel(%arg0: memref<16x128xf32, #tpu.memory_space<vmem>>, %arg1: memref<48x16xf32, #tpu.memory_space<vmem>>, %arg2: memref<48x1xf32, #tpu.memory_space<vmem>>, %arg3: memref<48x1xf32, #tpu.memory_space<vmem>>, %arg4: memref<12x48xf32, #tpu.memory_space<vmem>>, %arg5: memref<48x12xf32, #tpu.memory_space<vmem>>, %arg6: memref<16x128xf32, #tpu.memory_space<vmem>>, %arg7: memref<128x16xf32, #tpu.memory_space<vmem>>, %arg8: memref<48x128xf32, #tpu.memory_space<vmem>>, %arg9: memref<48x128xf32, #tpu.memory_space<vmem>>, %arg10: memref<48x128xf32, #tpu.memory_space<vmem>>) attributes {dimension_semantics = [], scalar_prefetch = 0 : i64, scratch_operands = 0 : i64, tpu.core_type = #tpu.core_type<tc>} {
    %c0 = arith.constant 0 : index
    %c0_0 = arith.constant 0 : index
    %0 = vector.load %arg1[%c0, %c0_0] : memref<48x16xf32, #tpu.memory_space<vmem>>, vector<48x16xf32>
    %c0_1 = arith.constant 0 : index
    %c0_2 = arith.constant 0 : index
    %1 = vector.load %arg0[%c0_1, %c0_2] : memref<16x128xf32, #tpu.memory_space<vmem>>, vector<16x128xf32>
    %cst = arith.constant dense<0.000000e+00> : vector<48x128xf32>
    %2 = tpu.matmul %0, %1, %cst {dimension_numbers = #tpu.dot_dimension_numbers<[1], [0], [0], [1], [0, 0, 1, 1], [], []>} : vector<48x16xf32>, vector<16x128xf32>, vector<48x128xf32> -> vector<48x128xf32>
    %c0_3 = arith.constant 0 : index
    %c0_4 = arith.constant 0 : index
    %3 = vector.load %arg2[%c0_3, %c0_4] : memref<48x1xf32, #tpu.memory_space<vmem>>, vector<48x1xf32>
    %4 = vector.broadcast %3 : vector<48x1xf32> to vector<48x128xf32>
    %5 = arith.addf %2, %4 : vector<48x128xf32>
    %cst_5 = arith.constant 0.000000e+00 : f32
    %6 = vector.broadcast %cst_5 : f32 to vector<48x128xf32>
    %7 = arith.cmpf oge, %5, %6 : vector<48x128xf32>
    %c0_6 = arith.constant 0 : index
    %c0_7 = arith.constant 0 : index
    %8 = vector.load %arg3[%c0_6, %c0_7] : memref<48x1xf32, #tpu.memory_space<vmem>>, vector<48x1xf32>
    %9 = vector.broadcast %8 : vector<48x1xf32> to vector<48x128xf32>
    %10 = arith.mulf %9, %5 : vector<48x128xf32>
    %11 = arith.select %7, %5, %10 : vector<48x128xi1>, vector<48x128xf32>
    %c0_8 = arith.constant 0 : index
    %c0_9 = arith.constant 0 : index
    %12 = vector.load %arg4[%c0_8, %c0_9] : memref<12x48xf32, #tpu.memory_space<vmem>>, vector<12x48xf32>
    %c0_10 = arith.constant 0 : index
    %c0_11 = arith.constant 0 : index
    %13 = vector.load %arg5[%c0_10, %c0_11] : memref<48x12xf32, #tpu.memory_space<vmem>>, vector<48x12xf32>
    %c0_12 = arith.constant 0 : index
    %c0_13 = arith.constant 0 : index
    %14 = vector.load %arg6[%c0_12, %c0_13] : memref<16x128xf32, #tpu.memory_space<vmem>>, vector<16x128xf32>
    %c0_14 = arith.constant 0 : index
    %c0_15 = arith.constant 0 : index
    %15 = vector.load %arg7[%c0_14, %c0_15] : memref<128x16xf32, #tpu.memory_space<vmem>>, vector<128x16xf32>
    %cst_16 = arith.constant dense<0.000000e+00> : vector<12x128xf32>
    %16 = tpu.matmul %12, %11, %cst_16 {dimension_numbers = #tpu.dot_dimension_numbers<[1], [0], [0], [1], [0, 0, 1, 1], [], []>} : vector<12x48xf32>, vector<48x128xf32>, vector<12x128xf32> -> vector<12x128xf32>
    %cst_17 = arith.constant dense<0.000000e+00> : vector<12x16xf32>
    %17 = tpu.matmul %16, %15, %cst_17 {dimension_numbers = #tpu.dot_dimension_numbers<[1], [0], [0], [1], [0, 0, 1, 1], [], []>} : vector<12x128xf32>, vector<128x16xf32>, vector<12x16xf32> -> vector<12x16xf32>
    %cst_18 = arith.constant 3.125000e-02 : f32
    %18 = vector.broadcast %cst_18 : f32 to vector<12x16xf32>
    %19 = arith.mulf %17, %18 : vector<12x16xf32>
    %cst_19 = arith.constant dense<0.000000e+00> : vector<48x16xf32>
    %20 = tpu.matmul %13, %19, %cst_19 {dimension_numbers = #tpu.dot_dimension_numbers<[1], [0], [0], [1], [0, 0, 1, 1], [], []>} : vector<48x12xf32>, vector<12x16xf32>, vector<48x16xf32> -> vector<48x16xf32>
    %cst_20 = arith.constant dense<0.000000e+00> : vector<48x128xf32>
    %21 = tpu.matmul %20, %14, %cst_20 {dimension_numbers = #tpu.dot_dimension_numbers<[1], [0], [0], [1], [0, 0, 1, 1], [], []>} : vector<48x16xf32>, vector<16x128xf32>, vector<48x128xf32> -> vector<48x128xf32>
    %22 = arith.subf %11, %21 : vector<48x128xf32>
    %23 = arith.mulf %22, %22 : vector<48x128xf32>
    %cst_21 = arith.constant dense<0.000000e+00> : vector<12x128xf32>
    %24 = tpu.matmul %12, %23, %cst_21 {dimension_numbers = #tpu.dot_dimension_numbers<[1], [0], [0], [1], [0, 0, 1, 1], [], []>} : vector<12x48xf32>, vector<48x128xf32>, vector<12x128xf32> -> vector<12x128xf32>
    %cst_22 = arith.constant dense<0.000000e+00> : vector<12x16xf32>
    %25 = tpu.matmul %24, %15, %cst_22 {dimension_numbers = #tpu.dot_dimension_numbers<[1], [0], [0], [1], [0, 0, 1, 1], [], []>} : vector<12x128xf32>, vector<128x16xf32>, vector<12x16xf32> -> vector<12x16xf32>
    %cst_23 = arith.constant 3.125000e-02 : f32
    %26 = vector.broadcast %cst_23 : f32 to vector<12x16xf32>
    %27 = arith.mulf %25, %26 : vector<12x16xf32>
    %cst_24 = arith.constant dense<0.000000e+00> : vector<48x16xf32>
    %28 = tpu.matmul %13, %27, %cst_24 {dimension_numbers = #tpu.dot_dimension_numbers<[1], [0], [0], [1], [0, 0, 1, 1], [], []>} : vector<48x12xf32>, vector<12x16xf32>, vector<48x16xf32> -> vector<48x16xf32>
    %cst_25 = arith.constant dense<0.000000e+00> : vector<48x128xf32>
    %29 = tpu.matmul %28, %14, %cst_25 {dimension_numbers = #tpu.dot_dimension_numbers<[1], [0], [0], [1], [0, 0, 1, 1], [], []>} : vector<48x16xf32>, vector<16x128xf32>, vector<48x128xf32> -> vector<48x128xf32>
    %cst_26 = arith.constant 9.99999974E-6 : f32
    %30 = vector.broadcast %cst_26 : f32 to vector<48x128xf32>
    %31 = arith.addf %29, %30 : vector<48x128xf32>
    %32 = math.sqrt %31 : vector<48x128xf32>
    %cst_27 = arith.constant 9.99999974E-6 : f32
    %33 = vector.broadcast %cst_27 : f32 to vector<48x128xf32>
    %34 = arith.addf %32, %33 : vector<48x128xf32>
    %35 = arith.divf %22, %34 : vector<48x128xf32>
    %c0_28 = arith.constant 0 : index
    %c0_29 = arith.constant 0 : index
    %36 = vector.load %arg8[%c0_28, %c0_29] : memref<48x128xf32, #tpu.memory_space<vmem>>, vector<48x128xf32>
    %37 = arith.mulf %35, %36 : vector<48x128xf32>
    %c0_30 = arith.constant 0 : index
    %c0_31 = arith.constant 0 : index
    %38 = vector.load %arg9[%c0_30, %c0_31] : memref<48x128xf32, #tpu.memory_space<vmem>>, vector<48x128xf32>
    %39 = arith.addf %37, %38 : vector<48x128xf32>
    %c0_32 = arith.constant 0 : index
    %c0_33 = arith.constant 0 : index
    %40 = vector.load %arg10[%c0_32, %c0_33] : memref<48x128xf32, #tpu.memory_space<vmem>>, vector<48x128xf32>
    tpu.vector_store %arg10[%c0_32, %c0_33], %39 {strides = array<i32>} : memref<48x128xf32, #tpu.memory_space<vmem>>, vector<48x128xf32>,
    return
  }
}

module attributes {stable_mosaic.version = 11 : i64} {
  func.func @_attn_kernel(%arg0: i32, %arg1: memref<4x8x32xf32, #tpu.memory_space<vmem>>, %arg2: memref<4x32x24xf32, #tpu.memory_space<vmem>>, %arg3: memref<4x24x32xf32, #tpu.memory_space<vmem>>, %arg4: memref<4x8x32xf32, #tpu.memory_space<vmem>>) attributes {dimension_semantics = [#tpu.dimension_semantics<parallel>], iteration_bounds = array<i64: 2>, scalar_prefetch = 0 : i64, scratch_operands = 0 : i64, tpu.core_type = #tpu.core_type<tc>, window_params = [{transform_indices = @transform_0, window_bounds = array<i64: 4, 8, 32>}, {transform_indices = @transform_1, window_bounds = array<i64: 4, 32, 24>}, {transform_indices = @transform_2, window_bounds = array<i64: 4, 24, 32>}, {transform_indices = @transform_3, window_bounds = array<i64: 4, 8, 32>}]} {
    %c0 = arith.constant 0 : index
    %c0_0 = arith.constant 0 : index
    %c0_1 = arith.constant 0 : index
    %0 = vector.load %arg1[%c0, %c0_0, %c0_1] : memref<4x8x32xf32, #tpu.memory_space<vmem>>, vector<4x8x32xf32>
    %c0_2 = arith.constant 0 : index
    %c0_3 = arith.constant 0 : index
    %c0_4 = arith.constant 0 : index
    %1 = vector.load %arg2[%c0_2, %c0_3, %c0_4] : memref<4x32x24xf32, #tpu.memory_space<vmem>>, vector<4x32x24xf32>
    "tpu.trace_start"() <{level = 10 : i32, message = "btd,bdk->btk"}> : () -> ()
    %cst = arith.constant dense<0.000000e+00> : vector<4x8x24xf32>
    %2 = tpu.matmul %0, %1, %cst {dimension_numbers = #tpu.dot_dimension_numbers<[2], [1], [1], [2], [0, 0, 0, 1, 1, 2], [0], [0]>} : vector<4x8x32xf32>, vector<4x32x24xf32>, vector<4x8x24xf32> -> vector<4x8x24xf32>
    "tpu.trace_stop"() : () -> ()
    %cst_5 = arith.constant 0.176776692 : f32
    %3 = vector.broadcast %cst_5 : f32 to vector<4x8x24xf32>
    %4 = arith.mulf %2, %3 : vector<4x8x24xf32>
    %cst_6 = arith.constant dense<0xFF800000> : vector<4x8xf32>
    %5 = vector.multi_reduction <maximumf>, %4, %cst_6 [2] : vector<4x8x24xf32> to vector<4x8xf32>
    %6 = vector.shape_cast %5 : vector<4x8xf32> to vector<4x8x1xf32>
    %7 = vector.broadcast %6 : vector<4x8x1xf32> to vector<4x8x24xf32>
    %8 = arith.subf %4, %7 : vector<4x8x24xf32>
    %9 = math.exp %8 : vector<4x8x24xf32>
    %cst_7 = arith.constant dense<0.000000e+00> : vector<4x8xf32>
    %10 = vector.multi_reduction <add>, %9, %cst_7 [2] : vector<4x8x24xf32> to vector<4x8xf32>
    %11 = vector.shape_cast %10 : vector<4x8xf32> to vector<4x8x1xf32>
    %12 = tpu.reciprocal %11 {approx = true} : vector<4x8x1xf32> -> vector<4x8x1xf32>
    %13 = vector.broadcast %12 : vector<4x8x1xf32> to vector<4x8x24xf32>
    %14 = arith.mulf %9, %13 : vector<4x8x24xf32>
    %c0_8 = arith.constant 0 : index
    %c0_9 = arith.constant 0 : index
    %c0_10 = arith.constant 0 : index
    %15 = vector.load %arg3[%c0_8, %c0_9, %c0_10] : memref<4x24x32xf32, #tpu.memory_space<vmem>>, vector<4x24x32xf32>
    "tpu.trace_start"() <{level = 10 : i32, message = "btk,bkd->btd"}> : () -> ()
    %cst_11 = arith.constant dense<0.000000e+00> : vector<4x8x32xf32>
    %16 = tpu.matmul %14, %15, %cst_11 {dimension_numbers = #tpu.dot_dimension_numbers<[2], [1], [1], [2], [0, 0, 0, 1, 1, 2], [0], [0]>} : vector<4x8x24xf32>, vector<4x24x32xf32>, vector<4x8x32xf32> -> vector<4x8x32xf32>
    "tpu.trace_stop"() : () -> ()
    %c0_12 = arith.constant 0 : index
    %c0_13 = arith.constant 0 : index
    %c0_14 = arith.constant 0 : index
    %17 = vector.load %arg4[%c0_12, %c0_13, %c0_14] : memref<4x8x32xf32, #tpu.memory_space<vmem>>, vector<4x8x32xf32>
    tpu.vector_store %arg4[%c0_12, %c0_13, %c0_14], %16 {strides = array<i32>} : memref<4x8x32xf32, #tpu.memory_space<vmem>>, vector<4x8x32xf32>,
    return
  }
  func.func @transform_0(%arg0: i32) -> (i32, i32, i32) {
    %c0_i32 = arith.constant 0 : i32
    %c0_i32_0 = arith.constant 0 : i32
    %c0_i32_1 = arith.constant 0 : i32
    return %arg0, %c0_i32, %c0_i32_0 : i32, i32, i32
  }
  func.func @transform_1(%arg0: i32) -> (i32, i32, i32) {
    %c0_i32 = arith.constant 0 : i32
    %c0_i32_0 = arith.constant 0 : i32
    %c0_i32_1 = arith.constant 0 : i32
    return %arg0, %c0_i32, %c0_i32_0 : i32, i32, i32
  }
  func.func @transform_2(%arg0: i32) -> (i32, i32, i32) {
    %c0_i32 = arith.constant 0 : i32
    %c0_i32_0 = arith.constant 0 : i32
    %c0_i32_1 = arith.constant 0 : i32
    return %arg0, %c0_i32, %c0_i32_0 : i32, i32, i32
  }
  func.func @transform_3(%arg0: i32) -> (i32, i32, i32) {
    %c0_i32 = arith.constant 0 : i32
    %c0_i32_0 = arith.constant 0 : i32
    %c0_i32_1 = arith.constant 0 : i32
    return %arg0, %c0_i32, %c0_i32_0 : i32, i32, i32
  }
}

module attributes {stable_mosaic.version = 11 : i64} {
  func.func @_conv_prelu_lncf_kernel(%arg0: memref<16x128xf32, #tpu.memory_space<vmem>>, %arg1: memref<16x16xf32, #tpu.memory_space<vmem>>, %arg2: memref<16x1xf32, #tpu.memory_space<vmem>>, %arg3: memref<16x1xf32, #tpu.memory_space<vmem>>, %arg4: memref<1x16xf32, #tpu.memory_space<vmem>>, %arg5: memref<16x1xf32, #tpu.memory_space<vmem>>, %arg6: memref<16x128xf32, #tpu.memory_space<vmem>>, %arg7: memref<128x16xf32, #tpu.memory_space<vmem>>, %arg8: memref<16x128xf32, #tpu.memory_space<vmem>>, %arg9: memref<16x128xf32, #tpu.memory_space<vmem>>, %arg10: memref<16x128xf32, #tpu.memory_space<vmem>>) attributes {dimension_semantics = [], scalar_prefetch = 0 : i64, scratch_operands = 0 : i64, tpu.core_type = #tpu.core_type<tc>} {
    %c0 = arith.constant 0 : index
    %c0_0 = arith.constant 0 : index
    %0 = vector.load %arg1[%c0, %c0_0] : memref<16x16xf32, #tpu.memory_space<vmem>>, vector<16x16xf32>
    %c0_1 = arith.constant 0 : index
    %c0_2 = arith.constant 0 : index
    %1 = vector.load %arg0[%c0_1, %c0_2] : memref<16x128xf32, #tpu.memory_space<vmem>>, vector<16x128xf32>
    %cst = arith.constant dense<0.000000e+00> : vector<16x128xf32>
    %2 = tpu.matmul %0, %1, %cst {dimension_numbers = #tpu.dot_dimension_numbers<[1], [0], [0], [1], [0, 0, 1, 1], [], []>} : vector<16x16xf32>, vector<16x128xf32>, vector<16x128xf32> -> vector<16x128xf32>
    %c0_3 = arith.constant 0 : index
    %c0_4 = arith.constant 0 : index
    %3 = vector.load %arg2[%c0_3, %c0_4] : memref<16x1xf32, #tpu.memory_space<vmem>>, vector<16x1xf32>
    %4 = vector.broadcast %3 : vector<16x1xf32> to vector<16x128xf32>
    %5 = arith.addf %2, %4 : vector<16x128xf32>
    %cst_5 = arith.constant 0.000000e+00 : f32
    %6 = vector.broadcast %cst_5 : f32 to vector<16x128xf32>
    %7 = arith.cmpf oge, %5, %6 : vector<16x128xf32>
    %c0_6 = arith.constant 0 : index
    %c0_7 = arith.constant 0 : index
    %8 = vector.load %arg3[%c0_6, %c0_7] : memref<16x1xf32, #tpu.memory_space<vmem>>, vector<16x1xf32>
    %9 = vector.broadcast %8 : vector<16x1xf32> to vector<16x128xf32>
    %10 = arith.mulf %9, %5 : vector<16x128xf32>
    %11 = arith.select %7, %5, %10 : vector<16x128xi1>, vector<16x128xf32>
    %c0_8 = arith.constant 0 : index
    %c0_9 = arith.constant 0 : index
    %12 = vector.load %arg4[%c0_8, %c0_9] : memref<1x16xf32, #tpu.memory_space<vmem>>, vector<1x16xf32>
    %c0_10 = arith.constant 0 : index
    %c0_11 = arith.constant 0 : index
    %13 = vector.load %arg5[%c0_10, %c0_11] : memref<16x1xf32, #tpu.memory_space<vmem>>, vector<16x1xf32>
    %c0_12 = arith.constant 0 : index
    %c0_13 = arith.constant 0 : index
    %14 = vector.load %arg6[%c0_12, %c0_13] : memref<16x128xf32, #tpu.memory_space<vmem>>, vector<16x128xf32>
    %c0_14 = arith.constant 0 : index
    %c0_15 = arith.constant 0 : index
    %15 = vector.load %arg7[%c0_14, %c0_15] : memref<128x16xf32, #tpu.memory_space<vmem>>, vector<128x16xf32>
    %cst_16 = arith.constant dense<0.000000e+00> : vector<1x128xf32>
    %16 = tpu.matmul %12, %11, %cst_16 {dimension_numbers = #tpu.dot_dimension_numbers<[1], [0], [0], [1], [0, 0, 1, 1], [], []>} : vector<1x16xf32>, vector<16x128xf32>, vector<1x128xf32> -> vector<1x128xf32>
    %cst_17 = arith.constant dense<0.000000e+00> : vector<1x16xf32>
    %17 = tpu.matmul %16, %15, %cst_17 {dimension_numbers = #tpu.dot_dimension_numbers<[1], [0], [0], [1], [0, 0, 1, 1], [], []>} : vector<1x128xf32>, vector<128x16xf32>, vector<1x16xf32> -> vector<1x16xf32>
    %cst_18 = arith.constant 7.812500e-03 : f32
    %18 = vector.broadcast %cst_18 : f32 to vector<1x16xf32>
    %19 = arith.mulf %17, %18 : vector<1x16xf32>
    %cst_19 = arith.constant dense<0.000000e+00> : vector<16x16xf32>
    %20 = tpu.matmul %13, %19, %cst_19 {dimension_numbers = #tpu.dot_dimension_numbers<[1], [0], [0], [1], [0, 0, 1, 1], [], []>} : vector<16x1xf32>, vector<1x16xf32>, vector<16x16xf32> -> vector<16x16xf32>
    %cst_20 = arith.constant dense<0.000000e+00> : vector<16x128xf32>
    %21 = tpu.matmul %20, %14, %cst_20 {dimension_numbers = #tpu.dot_dimension_numbers<[1], [0], [0], [1], [0, 0, 1, 1], [], []>} : vector<16x16xf32>, vector<16x128xf32>, vector<16x128xf32> -> vector<16x128xf32>
    %22 = arith.subf %11, %21 : vector<16x128xf32>
    %23 = arith.mulf %22, %22 : vector<16x128xf32>
    %cst_21 = arith.constant dense<0.000000e+00> : vector<1x128xf32>
    %24 = tpu.matmul %12, %23, %cst_21 {dimension_numbers = #tpu.dot_dimension_numbers<[1], [0], [0], [1], [0, 0, 1, 1], [], []>} : vector<1x16xf32>, vector<16x128xf32>, vector<1x128xf32> -> vector<1x128xf32>
    %cst_22 = arith.constant dense<0.000000e+00> : vector<1x16xf32>
    %25 = tpu.matmul %24, %15, %cst_22 {dimension_numbers = #tpu.dot_dimension_numbers<[1], [0], [0], [1], [0, 0, 1, 1], [], []>} : vector<1x128xf32>, vector<128x16xf32>, vector<1x16xf32> -> vector<1x16xf32>
    %cst_23 = arith.constant 7.812500e-03 : f32
    %26 = vector.broadcast %cst_23 : f32 to vector<1x16xf32>
    %27 = arith.mulf %25, %26 : vector<1x16xf32>
    %cst_24 = arith.constant dense<0.000000e+00> : vector<16x16xf32>
    %28 = tpu.matmul %13, %27, %cst_24 {dimension_numbers = #tpu.dot_dimension_numbers<[1], [0], [0], [1], [0, 0, 1, 1], [], []>} : vector<16x1xf32>, vector<1x16xf32>, vector<16x16xf32> -> vector<16x16xf32>
    %cst_25 = arith.constant dense<0.000000e+00> : vector<16x128xf32>
    %29 = tpu.matmul %28, %14, %cst_25 {dimension_numbers = #tpu.dot_dimension_numbers<[1], [0], [0], [1], [0, 0, 1, 1], [], []>} : vector<16x16xf32>, vector<16x128xf32>, vector<16x128xf32> -> vector<16x128xf32>
    %cst_26 = arith.constant 9.99999974E-6 : f32
    %30 = vector.broadcast %cst_26 : f32 to vector<16x128xf32>
    %31 = arith.addf %29, %30 : vector<16x128xf32>
    %32 = math.sqrt %31 : vector<16x128xf32>
    %cst_27 = arith.constant 9.99999974E-6 : f32
    %33 = vector.broadcast %cst_27 : f32 to vector<16x128xf32>
    %34 = arith.addf %32, %33 : vector<16x128xf32>
    %35 = arith.divf %22, %34 : vector<16x128xf32>
    %c0_28 = arith.constant 0 : index
    %c0_29 = arith.constant 0 : index
    %36 = vector.load %arg8[%c0_28, %c0_29] : memref<16x128xf32, #tpu.memory_space<vmem>>, vector<16x128xf32>
    %37 = arith.mulf %35, %36 : vector<16x128xf32>
    %c0_30 = arith.constant 0 : index
    %c0_31 = arith.constant 0 : index
    %38 = vector.load %arg9[%c0_30, %c0_31] : memref<16x128xf32, #tpu.memory_space<vmem>>, vector<16x128xf32>
    %39 = arith.addf %37, %38 : vector<16x128xf32>
    %c0_32 = arith.constant 0 : index
    %c0_33 = arith.constant 0 : index
    %40 = vector.load %arg10[%c0_32, %c0_33] : memref<16x128xf32, #tpu.memory_space<vmem>>, vector<16x128xf32>
    tpu.vector_store %arg10[%c0_32, %c0_33], %39 {strides = array<i32>} : memref<16x128xf32, #tpu.memory_space<vmem>>, vector<16x128xf32>,
    return
  }
}

</mosaic_0001>

<llo_original>
// kernel: stream_gridnet_block.11
$region0: #{stream_gridnet_block.11}
  #allocation0 [shape = 'u32[]', space=smem, size = 0x4, offset = 0x4, fixed_abs, tag = 'smem constant byte address 0x4 - core index']
  #allocation1 [shape = 'u32[144,128]{1,0:T(1,128)}', space=vmem, size = 0x12000, scoped, tag = 'internal scratch']
  %s0 = inlined_call_operand.vmem [shape: f32[16,128], index: 0, kind: input, shape index: {}]
  %s1 = inlined_call_operand.vmem [shape: f32[16,1], index: 1, kind: input, shape index: {}]
  %s2 = inlined_call_operand.vmem [shape: f32[16,1], index: 2, kind: input, shape index: {}]
  %s3 = inlined_call_operand.vmem [shape: f32[16,128], index: 3, kind: output, shape index: {}]
  %s4 = sld [smem:[#allocation0]]
  $region22: #{stream_gridnet_block.11} parent=0
    _
  %s6 = ssub.s32 1, %s4
  %s7 = scalar_select 0, %s6, %s4
  // Predicated region
  $region2: #{stream_gridnet_block.11} parent=0 // pred_check
    _
  $region3: #{stream_gridnet_block.11} parent=0 // pred_check_branch
    %9 = sbr.rel (0) target = $region5
  $region4: #{stream_gridnet_block.11} parent=0 // pred_region
    _
  $region5: #{stream_gridnet_block.11} parent=0 // pred_fallthru
    _
  // Predicated region
  $region6: #{stream_gridnet_block.11} parent=0 // pred_check
    _
  $region7: #{stream_gridnet_block.11} parent=0 // pred_check_branch
    %11 = sbr.rel (0) target = $region9
  $region8: #{stream_gridnet_block.11} parent=0 // pred_region
    _
  $region9: #{stream_gridnet_block.11} parent=0 // pred_fallthru
    _
  // Predicated region
  $region10: #{stream_gridnet_block.11} parent=0 // pred_check
    _
  $region11: #{stream_gridnet_block.11} parent=0 // pred_check_branch
    %13 = sbr.rel (0) target = $region13
  $region12: #{stream_gridnet_block.11} parent=0 // pred_region
    _
  $region13: #{stream_gridnet_block.11} parent=0 // pred_fallthru
    _
  %v14 = vld [vmem:[%s0] sm:$0xff]
  %v15 = vld [vmem:[%s0 + $0x8] sm:$0xff]
  %v16 = vadd.f32 %v14, %v15
  %v17 = vrot.slane %v16, 4
  %v18 = vadd.f32 %v16, %v17
  %v19 = vrot.slane %v18, 2
  %v20 = vadd.f32 %v18, %v19
  %v21 = vrot.slane %v20, 1
  %v22 = vadd.f32 %v20, %v21
  %v23 = vrcp.pop 16.0
  %v24 = vmul.f32 %v22, %v23
  %v25 = vsub.f32 %v14, %v24
  %v26 = vsub.f32 %v15, %v24
  %v27 = vmul.f32 %v25, %v25
  %v28 = vmul.f32 %v26, %v26
  %v29 = vadd.f32 %v27, %v28
  %v30 = vrot.slane %v29, 4
  %v31 = vadd.f32 %v29, %v30
  %v32 = vrot.slane %v31, 2
  %v33 = vadd.f32 %v31, %v32
  %v34 = vrot.slane %v33, 1
  %v35 = vadd.f32 %v33, %v34
  %v36 = vmul.f32 %v35, %v23
  %v37 = vadd.f32 %v36, 1e-05
  %v38 = vrsqrt.pop %v37
  %v39 = vmul.f32 %v37, %v38
  %vm40 = vcmp.eq.f32.partialorder %v37, inf
  %v41 = vsel %vm40, %v37, %v39
  %vm42 = vcmp.eq.f32.partialorder %v37, 0.0
  %v43 = vand.u32 %v37, 2147483648
  %v44 = vsel %vm42, %v43, %v41
  %v45 = vadd.f32 %v44, 1e-05
  %v46 = vrcp.pop %v45
  %v47 = vmul.f32 %v25, %v46
  %v48 = vmul.f32 %v26, %v46
  %v49 = vld [vmem:[%s1] sm:$0xff]
  %v50 = vld [vmem:[%s1 + $0x8] sm:$0xff]
  %52 = vset.pattern.permute.xlu0 0
  %53 = vperm.xlu0 %52, %v49
  %v54 = vpop.permute.xlu0 %53
  %57 = vset.pattern.permute.xlu0 0
  %58 = vperm.xlu0 %57, %v50
  %v59 = vpop.permute.xlu0 %58
  %v61 = vmul.f32 %v47, %v54
  %v62 = vmul.f32 %v48, %v59
  %v63 = vld [vmem:[%s2] sm:$0xff]
  %v64 = vld [vmem:[%s2 + $0x8] sm:$0xff]
  %66 = vset.pattern.permute.xlu0 0
  %67 = vperm.xlu0 %66, %v63
  %v68 = vpop.permute.xlu0 %67
  %71 = vset.pattern.permute.xlu0 0
  %72 = vperm.xlu0 %71, %v64
  %v73 = vpop.permute.xlu0 %72
  %v75 = vadd.f32 %v61, %v68
  %v76 = vadd.f32 %v62, %v73
  %77 = vst [vmem:[%s3] sm:$0xff] %v75
  %78 = vst [vmem:[%s3 + $0x8] sm:$0xff] %v76
  // Predicated region
  $region14: #{stream_gridnet_block.11} parent=0 // pred_check
    _
  $region15: #{stream_gridnet_block.11} parent=0 // pred_check_branch
    %80 = sbr.rel (0) target = $region17
  $region16: #{stream_gridnet_block.11} parent=0 // pred_region
    _
  $region17: #{stream_gridnet_block.11} parent=0 // pred_fallthru
    _
  // Predicated region
  $region18: #{stream_gridnet_block.11} parent=0 // pred_check
    _
  $region19: #{stream_gridnet_block.11} parent=0 // pred_check_branch
    %82 = sbr.rel (0) target = $region21
  $region20: #{stream_gridnet_block.11} parent=0 // pred_region
    _
  $region21: #{stream_gridnet_block.11} parent=0 // pred_fallthru
    _

// kernel: reverse
$region0: #{reverse}
  #allocation0 [shape = 's32[1]{0}', space=sflag, size = 0x4, scoped, tag = 'scoped memory for reverse']
  %s0 = inlined_call_operand.vmem [shape: f32[16,4,32], index: 0, kind: input, shape index: {}]
  %s1 = inlined_call_operand.vmem [shape: f32[16,4,32], index: 1, kind: output, shape index: {}]
  %s2 = scalar_lea.vmem %s0, 48
  %v3 = vld [vmem:[%s2] sm:$0xff]
  %4 = vst [vmem:[%s1] sm:$0xff] %v3
  %s5 = scalar_lea.vmem %s0, 32
  %v6 = vld [vmem:[%s5] sm:$0xff]
  %s7 = scalar_lea.vmem %s1, 16
  %8 = vst [vmem:[%s7] sm:$0xff] %v6
  %s9 = scalar_lea.vmem %s0, 16
  %v10 = vld [vmem:[%s9] sm:$0xff]
  %s11 = scalar_lea.vmem %s1, 32
  %12 = vst [vmem:[%s11] sm:$0xff] %v10
  %v13 = vld [vmem:[%s0] sm:$0xff]
  %s14 = scalar_lea.vmem %s1, 48
  %15 = vst [vmem:[%s14] sm:$0xff] %v13
  %s16 = scalar_lea.vmem %s0, 56
  %v17 = vld [vmem:[%s16] sm:$0xff]
  %s18 = scalar_lea.vmem %s1, 8
  %19 = vst [vmem:[%s18] sm:$0xff] %v17
  %s20 = scalar_lea.vmem %s0, 40
  %v21 = vld [vmem:[%s20] sm:$0xff]
  %s22 = scalar_lea.vmem %s1, 24
  %23 = vst [vmem:[%s22] sm:$0xff] %v21
  %s24 = scalar_lea.vmem %s0, 24
  %v25 = vld [vmem:[%s24] sm:$0xff]
  %s26 = scalar_lea.vmem %s1, 40
  %27 = vst [vmem:[%s26] sm:$0xff] %v25
  %s28 = scalar_lea.vmem %s0, 8
  %v29 = vld [vmem:[%s28] sm:$0xff]
  %s30 = scalar_lea.vmem %s1, 56
  %31 = vst [vmem:[%s30] sm:$0xff] %v29

// kernel: stream_gridnet_block.12
$region0: #{stream_gridnet_block.12}
  #allocation0 [shape = 'u32[]', space=smem, size = 0x4, offset = 0x4, fixed_abs, tag = 'smem constant byte address 0x4 - core index']
  #allocation1 [shape = 'u32[144,128]{1,0:T(1,128)}', space=vmem, size = 0x12000, scoped, tag = 'internal scratch']
  %s0 = inlined_call_operand.vmem [shape: f32[64,32], index: 0, kind: input, shape index: {}]
  %s1 = inlined_call_operand.vmem [shape: f32[32,192], index: 1, kind: input, shape index: {}]
  %s2 = inlined_call_operand.vmem [shape: f32[1,192], index: 2, kind: input, shape index: {}]
  %s3 = inlined_call_operand.vmem [shape: f32[64,192], index: 3, kind: output, shape index: {}]
  %s4 = sld [smem:[#allocation0]]
  $region22: #{stream_gridnet_block.12} parent=0
    _
  %s6 = ssub.s32 1, %s4
  %s7 = scalar_select 0, %s6, %s4
  // Predicated region
  $region2: #{stream_gridnet_block.12} parent=0 // pred_check
    _
  $region3: #{stream_gridnet_block.12} parent=0 // pred_check_branch
    %9 = sbr.rel (0) target = $region5
  $region4: #{stream_gridnet_block.12} parent=0 // pred_region
    _
  $region5: #{stream_gridnet_block.12} parent=0 // pred_fallthru
    _
  // Predicated region
  $region6: #{stream_gridnet_block.12} parent=0 // pred_check
    _
  $region7: #{stream_gridnet_block.12} parent=0 // pred_check_branch
    %11 = sbr.rel (0) target = $region9
  $region8: #{stream_gridnet_block.12} parent=0 // pred_region
    _
  $region9: #{stream_gridnet_block.12} parent=0 // pred_fallthru
    _
  // Predicated region
  $region10: #{stream_gridnet_block.12} parent=0 // pred_check
    _
  $region11: #{stream_gridnet_block.12} parent=0 // pred_check_branch
    %13 = sbr.rel (0) target = $region13
  $region12: #{stream_gridnet_block.12} parent=0 // pred_region
    _
  $region13: #{stream_gridnet_block.12} parent=0 // pred_fallthru
    _
  %v14 = vld [vmem:[%s0] sm:$0xff]
  %v15 = vld [vmem:[%s0 + $0x8] sm:$0xff]
  %v16 = vld [vmem:[%s0 + $0x10] sm:$0xff]
  %v17 = vld [vmem:[%s0 + $0x18] sm:$0xff]
  %v18 = vld [vmem:[%s0 + $0x20] sm:$0xff]
  %v19 = vld [vmem:[%s0 + $0x28] sm:$0xff]
  %v20 = vld [vmem:[%s0 + $0x30] sm:$0xff]
  %v21 = vld [vmem:[%s0 + $0x38] sm:$0xff]
  %v22 = vld [vmem:[%s1] sm:$0xff]
  %v23 = vld [vmem:[%s1 + $0x8] sm:$0xff]
  %v24 = vld [vmem:[%s1 + $0x10] sm:$0xff]
  %v25 = vld [vmem:[%s1 + $0x18] sm:$0xff]
  %v26 = vld [vmem:[%s1 + $0x20] sm:$0xff]
  %v27 = vld [vmem:[%s1 + $0x28] sm:$0xff]
  %v28 = vld [vmem:[%s1 + $0x30] sm:$0xff]
  %v29 = vld [vmem:[%s1 + $0x38] sm:$0xff]
  %v30 = vld [vmem:[%s2] sm:$0x3]
  %v32 = vlaneseq
  %v33 = vshrl.u32 %v32, 7
  %v34 = vsub.s32 0, %v33
  %v35 = vrot.slane %v30, %v34
  %v36 = vlaneseq
  %v37 = vshrl.u32 %v36, 7
  %v38 = vsub.s32 1, %v37
  %v39 = vrot.slane %v30, %v38
  %vm42 = vcmask 261120
  %v44 = vsel %vm42, %v14, 0
  %v47 = vsel %vm42, %v15, 0
  %v50 = vsel %vm42, %v16, 0
  %v53 = vsel %vm42, %v17, 0
  %v56 = vsel %vm42, %v18, 0
  %v59 = vsel %vm42, %v19, 0
  %v62 = vsel %vm42, %v20, 0
  %v65 = vsel %vm42, %v21, 0
  %67 = vmatprep.subr.mxu0 %v23
  %68 = vmatpush1.msra.mxu0 %v22
  %69 = vmatprep.subr.mxu0 %v25
  %70 = vmatpush1.msra.mxu0 %v24
  %71 = vmatprep.subr.mxu0 %v27
  %72 = vmatpush1.msra.mxu0 %v26
  %73 = vmatprep.subr.mxu0 %v29
  %74 = vmatpush1.msra.mxu0 %v28
  %75 = vmatprep.subr.mxu0 0.0
  %76 = vmatpush1.msra.mxu0 0.0
  %77 = vmatprep.subr.mxu0 0.0
  %78 = vmatpush1.msra.mxu0 0.0
  %79 = vmatprep.subr.mxu0 0.0
  %80 = vmatpush1.msra.mxu0 0.0
  %81 = vmatprep.subr.mxu0 0.0
  %82 = vmatpush1.msra.mxu0 0.0
  %83 = vmatprep.subr.mxu0 0.0
  %84 = vmatpush1.msra.mxu0 0.0
  %85 = vmatprep.subr.mxu0 0.0
  %86 = vmatpush1.msra.mxu0 0.0
  %87 = vmatprep.subr.mxu0 0.0
  %88 = vmatpush1.msra.mxu0 0.0
  %89 = vmatprep.subr.mxu0 0.0
  %90 = vmatpush1.msra.mxu0 0.0
  %91 = vmatprep.subr.mxu0 0.0
  %92 = vmatpush1.msra.mxu0 0.0
  %93 = vmatprep.subr.mxu0 0.0
  %94 = vmatpush1.msra.mxu0 0.0
  %95 = vmatprep.subr.mxu0 0.0
  %96 = vmatpush1.msra.mxu0 0.0
  %97 = vmatprep.subr.mxu0 0.0
  %98 = vmatpush1.msra.mxu0 0.0
  %99 = vmatprep.subr.mxu0 0.0
  %100 = vmatpush1.msra.mxu0 0.0
  %101 = vmatprep.subr.mxu0 0.0
  %102 = vmatpush1.msra.mxu0 0.0
  %103 = vmatprep.subr.mxu0 0.0
  %104 = vmatpush1.msra.mxu0 0.0
  %105 = vmatprep.subr.mxu0 0.0
  %106 = vmatpush1.msra.mxu0 0.0
  %107 = vmatprep.subr.mxu0 0.0
  %108 = vmatpush1.msra.mxu0 0.0
  %109 = vmatprep.subr.mxu0 0.0
  %110 = vmatpush1.msra.mxu0 0.0
  %111 = vmatprep.subr.mxu0 0.0
  %112 = vmatpush1.msra.mxu0 0.0
  %113 = vmatprep.subr.mxu0 0.0
  %114 = vmatpush1.msra.mxu0 0.0
  %115 = vmatprep.subr.mxu0 0.0
  %116 = vmatpush1.msra.mxu0 0.0
  %117 = vmatprep.subr.mxu0 0.0
  %118 = vmatpush1.msra.mxu0 0.0
  %119 = vmatprep.subr.mxu0 0.0
  %120 = vmatpush1.msra.mxu0 0.0
  %121 = vmatprep.subr.mxu0 0.0
  %122 = vmatpush1.msra.mxu0 0.0
  %123 = vmatprep.subr.mxu0 0.0
  %124 = vmatpush1.msra.mxu0 0.0
  %125 = vmatprep.subr.mxu0 0.0
  %126 = vmatpush1.msra.mxu0 0.0
  %127 = vmatprep.subr.mxu0 0.0
  %128 = vmatpush1.msra.mxu0 0.0
  %129 = vmatprep.subr.mxu0 0.0
  %130 = vmatpush1.msra.mxu0 0.0
  %131 = vmatprep.mubr.f32.mxu0 0.0
  %132 = vmatmul.mubr.f32.gmra.mrb[0].mxu0 %v44
  %v133 = vpop.f32.mrb[0].mxu0
  %v134 = vadd.f32 %v35, %v133
  %v135 = vpop.f32.mrb[0].mxu0
  %v136 = vadd.f32 %v39, %v135
  %137 = vmatprep.mubr.f32.mxu0 0.0
  %138 = vmatmul.mubr.f32.gmra.mrb[0].mxu0 %v47
  %v139 = vpop.f32.mrb[0].mxu0
  %v140 = vadd.f32 %v35, %v139
  %v141 = vpop.f32.mrb[0].mxu0
  %v142 = vadd.f32 %v39, %v141
  %143 = vmatprep.mubr.f32.mxu0 0.0
  %144 = vmatmul.mubr.f32.gmra.mrb[0].mxu0 %v50
  %v145 = vpop.f32.mrb[0].mxu0
  %v146 = vadd.f32 %v35, %v145
  %v147 = vpop.f32.mrb[0].mxu0
  %v148 = vadd.f32 %v39, %v147
  %149 = vmatprep.mubr.f32.mxu0 0.0
  %150 = vmatmul.mubr.f32.gmra.mrb[0].mxu0 %v53
  %v151 = vpop.f32.mrb[0].mxu0
  %v152 = vadd.f32 %v35, %v151
  %v153 = vpop.f32.mrb[0].mxu0
  %v154 = vadd.f32 %v39, %v153
  %155 = vmatprep.mubr.f32.mxu0 0.0
  %156 = vmatmul.mubr.f32.gmra.mrb[0].mxu0 %v56
  %v157 = vpop.f32.mrb[0].mxu0
  %v158 = vadd.f32 %v35, %v157
  %v159 = vpop.f32.mrb[0].mxu0
  %v160 = vadd.f32 %v39, %v159
  %161 = vmatprep.mubr.f32.mxu0 0.0
  %162 = vmatmul.mubr.f32.gmra.mrb[0].mxu0 %v59
  %v163 = vpop.f32.mrb[0].mxu0
  %v164 = vadd.f32 %v35, %v163
  %v165 = vpop.f32.mrb[0].mxu0
  %v166 = vadd.f32 %v39, %v165
  %167 = vmatprep.mubr.f32.mxu0 0.0
  %168 = vmatmul.mubr.f32.gmra.mrb[0].mxu0 %v62
  %v169 = vpop.f32.mrb[0].mxu0
  %v170 = vadd.f32 %v35, %v169
  %v171 = vpop.f32.mrb[0].mxu0
  %v172 = vadd.f32 %v39, %v171
  %173 = vmatprep.mubr.f32.mxu0 0.0
  %174 = vmatmul.mubr.f32.gmra.mrb[0].mxu0 %v65
  %v175 = vpop.f32.mrb[0].mxu0
  %v176 = vadd.f32 %v35, %v175
  %v177 = vpop.f32.mrb[0].mxu0
  %v178 = vadd.f32 %v39, %v177
  %179 = vdwg.mxu0
  %180 = vst [vmem:[%s3] sm:$0xff] %v134
  %vm181 = vcmask 523264
  %182 = vst.msk [vmem:[%s3 + $0x8] sm:$0xff] %vm181, %v136
  %183 = vst [vmem:[%s3 + $0x10] sm:$0xff] %v140
  %184 = vst.msk [vmem:[%s3 + $0x18] sm:$0xff] %vm181, %v142
  %185 = vst [vmem:[%s3 + $0x20] sm:$0xff] %v146
  %186 = vst.msk [vmem:[%s3 + $0x28] sm:$0xff] %vm181, %v148
  %187 = vst [vmem:[%s3 + $0x30] sm:$0xff] %v152
  %188 = vst.msk [vmem:[%s3 + $0x38] sm:$0xff] %vm181, %v154
  %189 = vst [vmem:[%s3 + $0x40] sm:$0xff] %v158
  %190 = vst.msk [vmem:[%s3 + $0x48] sm:$0xff] %vm181, %v160
  %191 = vst [vmem:[%s3 + $0x50] sm:$0xff] %v164
  %192 = vst.msk [vmem:[%s3 + $0x58] sm:$0xff] %vm181, %v166
  %193 = vst [vmem:[%s3 + $0x60] sm:$0xff] %v170
  %194 = vst.msk [vmem:[%s3 + $0x68] sm:$0xff] %vm181, %v172
  %195 = vst [vmem:[%s3 + $0x70] sm:$0xff] %v176
  %196 = vst.msk [vmem:[%s3 + $0x78] sm:$0xff] %vm181, %v178
  // Predicated region
  $region14: #{stream_gridnet_block.12} parent=0 // pred_check
    _
  $region15: #{stream_gridnet_block.12} parent=0 // pred_check_branch
    %198 = sbr.rel (0) target = $region17
  $region16: #{stream_gridnet_block.12} parent=0 // pred_region
    _
  $region17: #{stream_gridnet_block.12} parent=0 // pred_fallthru
    _
  // Predicated region
  $region18: #{stream_gridnet_block.12} parent=0 // pred_check
    _
  $region19: #{stream_gridnet_block.12} parent=0 // pred_check_branch
    %200 = sbr.rel (0) target = $region21
  $region20: #{stream_gridnet_block.12} parent=0 // pred_region
    _
  $region21: #{stream_gridnet_block.12} parent=0 // pred_fallthru
    _

// kernel: stream_gridnet_block.14
$region0: #{stream_gridnet_block.14}
  #allocation0 [shape = 'u32[]', space=smem, size = 0x4, offset = 0x4, fixed_abs, tag = 'smem constant byte address 0x4 - core index']
  #allocation1 [shape = 'u32[144,128]{1,0:T(1,128)}', space=vmem, size = 0x12000, scoped, tag = 'internal scratch']
  %s0 = inlined_call_operand.vmem [shape: f32[64,64], index: 0, kind: input, shape index: {}]
  %s1 = inlined_call_operand.vmem [shape: f32[64,32], index: 1, kind: input, shape index: {}]
  %s2 = inlined_call_operand.vmem [shape: f32[1,32], index: 2, kind: input, shape index: {}]
  %s3 = inlined_call_operand.vmem [shape: f32[64,32], index: 3, kind: output, shape index: {}]
  %s4 = sld [smem:[#allocation0]]
  $region22: #{stream_gridnet_block.14} parent=0
    _
  %s6 = ssub.s32 1, %s4
  %s7 = scalar_select 0, %s6, %s4
  // Predicated region
  $region2: #{stream_gridnet_block.14} parent=0 // pred_check
    _
  $region3: #{stream_gridnet_block.14} parent=0 // pred_check_branch
    %9 = sbr.rel (0) target = $region5
  $region4: #{stream_gridnet_block.14} parent=0 // pred_region
    _
  $region5: #{stream_gridnet_block.14} parent=0 // pred_fallthru
    _
  // Predicated region
  $region6: #{stream_gridnet_block.14} parent=0 // pred_check
    _
  $region7: #{stream_gridnet_block.14} parent=0 // pred_check_branch
    %11 = sbr.rel (0) target = $region9
  $region8: #{stream_gridnet_block.14} parent=0 // pred_region
    _
  $region9: #{stream_gridnet_block.14} parent=0 // pred_fallthru
    _
  // Predicated region
  $region10: #{stream_gridnet_block.14} parent=0 // pred_check
    _
  $region11: #{stream_gridnet_block.14} parent=0 // pred_check_branch
    %13 = sbr.rel (0) target = $region13
  $region12: #{stream_gridnet_block.14} parent=0 // pred_region
    _
  $region13: #{stream_gridnet_block.14} parent=0 // pred_fallthru
    _
  %v14 = vld [vmem:[%s0] sm:$0xff]
  %v15 = vld [vmem:[%s0 + $0x8] sm:$0xff]
  %v16 = vld [vmem:[%s0 + $0x10] sm:$0xff]
  %v17 = vld [vmem:[%s0 + $0x18] sm:$0xff]
  %v18 = vld [vmem:[%s0 + $0x20] sm:$0xff]
  %v19 = vld [vmem:[%s0 + $0x28] sm:$0xff]
  %v20 = vld [vmem:[%s0 + $0x30] sm:$0xff]
  %v21 = vld [vmem:[%s0 + $0x38] sm:$0xff]
  %v22 = vld [vmem:[%s1] sm:$0xff]
  %v23 = vld [vmem:[%s1 + $0x8] sm:$0xff]
  %v24 = vld [vmem:[%s1 + $0x10] sm:$0xff]
  %v25 = vld [vmem:[%s1 + $0x18] sm:$0xff]
  %v26 = vld [vmem:[%s1 + $0x20] sm:$0xff]
  %v27 = vld [vmem:[%s1 + $0x28] sm:$0xff]
  %v28 = vld [vmem:[%s1 + $0x30] sm:$0xff]
  %v29 = vld [vmem:[%s1 + $0x38] sm:$0xff]
  %v30 = vld [vmem:[%s2] sm:$0x1]
  %v32 = vlaneseq
  %v33 = vshrl.u32 %v32, 7
  %v34 = vsub.s32 0, %v33
  %v35 = vrot.slane %v30, %v34
  %vm37 = vcmask 523264
  %v39 = vsel %vm37, %v14, 0
  %v42 = vsel %vm37, %v15, 0
  %v45 = vsel %vm37, %v16, 0
  %v48 = vsel %vm37, %v17, 0
  %v51 = vsel %vm37, %v18, 0
  %v54 = vsel %vm37, %v19, 0
  %v57 = vsel %vm37, %v20, 0
  %v60 = vsel %vm37, %v21, 0
  %62 = vmatprep.subr.mxu0 0.0
  %63 = vmatpush1.msra.mxu0 %v22
  %64 = vmatprep.subr.mxu0 0.0
  %65 = vmatpush1.msra.mxu0 %v23
  %66 = vmatprep.subr.mxu0 0.0
  %67 = vmatpush1.msra.mxu0 %v24
  %68 = vmatprep.subr.mxu0 0.0
  %69 = vmatpush1.msra.mxu0 %v25
  %70 = vmatprep.subr.mxu0 0.0
  %71 = vmatpush1.msra.mxu0 %v26
  %72 = vmatprep.subr.mxu0 0.0
  %73 = vmatpush1.msra.mxu0 %v27
  %74 = vmatprep.subr.mxu0 0.0
  %75 = vmatpush1.msra.mxu0 %v28
  %76 = vmatprep.subr.mxu0 0.0
  %77 = vmatpush1.msra.mxu0 %v29
  %78 = vmatprep.subr.mxu0 0.0
  %79 = vmatpush1.msra.mxu0 0.0
  %80 = vmatprep.subr.mxu0 0.0
  %81 = vmatpush1.msra.mxu0 0.0
  %82 = vmatprep.subr.mxu0 0.0
  %83 = vmatpush1.msra.mxu0 0.0
  %84 = vmatprep.subr.mxu0 0.0
  %85 = vmatpush1.msra.mxu0 0.0
  %86 = vmatprep.subr.mxu0 0.0
  %87 = vmatpush1.msra.mxu0 0.0
  %88 = vmatprep.subr.mxu0 0.0
  %89 = vmatpush1.msra.mxu0 0.0
  %90 = vmatprep.subr.mxu0 0.0
  %91 = vmatpush1.msra.mxu0 0.0
  %92 = vmatprep.subr.mxu0 0.0
  %93 = vmatpush1.msra.mxu0 0.0
  %94 = vmatprep.subr.mxu0 0.0
  %95 = vmatpush1.msra.mxu0 0.0
  %96 = vmatprep.subr.mxu0 0.0
  %97 = vmatpush1.msra.mxu0 0.0
  %98 = vmatprep.subr.mxu0 0.0
  %99 = vmatpush1.msra.mxu0 0.0
  %100 = vmatprep.subr.mxu0 0.0
  %101 = vmatpush1.msra.mxu0 0.0
  %102 = vmatprep.subr.mxu0 0.0
  %103 = vmatpush1.msra.mxu0 0.0
  %104 = vmatprep.subr.mxu0 0.0
  %105 = vmatpush1.msra.mxu0 0.0
  %106 = vmatprep.subr.mxu0 0.0
  %107 = vmatpush1.msra.mxu0 0.0
  %108 = vmatprep.subr.mxu0 0.0
  %109 = vmatpush1.msra.mxu0 0.0
  %110 = vmatprep.subr.mxu0 0.0
  %111 = vmatpush1.msra.mxu0 0.0
  %112 = vmatprep.subr.mxu0 0.0
  %113 = vmatpush1.msra.mxu0 0.0
  %114 = vmatprep.subr.mxu0 0.0
  %115 = vmatpush1.msra.mxu0 0.0
  %116 = vmatprep.subr.mxu0 0.0
  %117 = vmatpush1.msra.mxu0 0.0
  %118 = vmatprep.subr.mxu0 0.0
  %119 = vmatpush1.msra.mxu0 0.0
  %120 = vmatprep.subr.mxu0 0.0
  %121 = vmatpush1.msra.mxu0 0.0
  %122 = vmatprep.subr.mxu0 0.0
  %123 = vmatpush1.msra.mxu0 0.0
  %124 = vmatprep.subr.mxu0 0.0
  %125 = vmatpush1.msra.mxu0 0.0
  %126 = vmatprep.mubr.f32.mxu0 0.0
  %127 = vmatmul.mubr.f32.gmra.mrb[0].mxu0 %v39
  %v128 = vpop.f32.mrb[0].mxu0
  %v129 = vadd.f32 %v35, %v128
  %v130 = vpop.f32.mrb[0].mxu0
  %131 = vmatprep.mubr.f32.mxu0 0.0
  %132 = vmatmul.mubr.f32.gmra.mrb[0].mxu0 %v42
  %v133 = vpop.f32.mrb[0].mxu0
  %v134 = vadd.f32 %v35, %v133
  %v135 = vpop.f32.mrb[0].mxu0
  %136 = vmatprep.mubr.f32.mxu0 0.0
  %137 = vmatmul.mubr.f32.gmra.mrb[0].mxu0 %v45
  %v138 = vpop.f32.mrb[0].mxu0
  %v139 = vadd.f32 %v35, %v138
  %v140 = vpop.f32.mrb[0].mxu0
  %141 = vmatprep.mubr.f32.mxu0 0.0
  %142 = vmatmul.mubr.f32.gmra.mrb[0].mxu0 %v48
  %v143 = vpop.f32.mrb[0].mxu0
  %v144 = vadd.f32 %v35, %v143
  %v145 = vpop.f32.mrb[0].mxu0
  %146 = vmatprep.mubr.f32.mxu0 0.0
  %147 = vmatmul.mubr.f32.gmra.mrb[0].mxu0 %v51
  %v148 = vpop.f32.mrb[0].mxu0
  %v149 = vadd.f32 %v35, %v148
  %v150 = vpop.f32.mrb[0].mxu0
  %151 = vmatprep.mubr.f32.mxu0 0.0
  %152 = vmatmul.mubr.f32.gmra.mrb[0].mxu0 %v54
  %v153 = vpop.f32.mrb[0].mxu0
  %v154 = vadd.f32 %v35, %v153
  %v155 = vpop.f32.mrb[0].mxu0
  %156 = vmatprep.mubr.f32.mxu0 0.0
  %157 = vmatmul.mubr.f32.gmra.mrb[0].mxu0 %v57
  %v158 = vpop.f32.mrb[0].mxu0
  %v159 = vadd.f32 %v35, %v158
  %v160 = vpop.f32.mrb[0].mxu0
  %161 = vmatprep.mubr.f32.mxu0 0.0
  %162 = vmatmul.mubr.f32.gmra.mrb[0].mxu0 %v60
  %v163 = vpop.f32.mrb[0].mxu0
  %v164 = vadd.f32 %v35, %v163
  %v165 = vpop.f32.mrb[0].mxu0
  %166 = vdwg.mxu0
  %vm167 = vcmask 261120
  %168 = vst.msk [vmem:[%s3] sm:$0xff] %vm167, %v129
  %169 = vst.msk [vmem:[%s3 + $0x8] sm:$0xff] %vm167, %v134
  %170 = vst.msk [vmem:[%s3 + $0x10] sm:$0xff] %vm167, %v139
  %171 = vst.msk [vmem:[%s3 + $0x18] sm:$0xff] %vm167, %v144
  %172 = vst.msk [vmem:[%s3 + $0x20] sm:$0xff] %vm167, %v149
  %173 = vst.msk [vmem:[%s3 + $0x28] sm:$0xff] %vm167, %v154
  %174 = vst.msk [vmem:[%s3 + $0x30] sm:$0xff] %vm167, %v159
  %175 = vst.msk [vmem:[%s3 + $0x38] sm:$0xff] %vm167, %v164
  // Predicated region
  $region14: #{stream_gridnet_block.14} parent=0 // pred_check
    _
  $region15: #{stream_gridnet_block.14} parent=0 // pred_check_branch
    %177 = sbr.rel (0) target = $region17
  $region16: #{stream_gridnet_block.14} parent=0 // pred_region
    _
  $region17: #{stream_gridnet_block.14} parent=0 // pred_fallthru
    _
  // Predicated region
  $region18: #{stream_gridnet_block.14} parent=0 // pred_check
    _
  $region19: #{stream_gridnet_block.14} parent=0 // pred_check_branch
    %179 = sbr.rel (0) target = $region21
  $region20: #{stream_gridnet_block.14} parent=0 // pred_region
    _
  $region21: #{stream_gridnet_block.14} parent=0 // pred_fallthru
    _

// kernel: stream_gridnet_block.13
$region0: #{stream_gridnet_block.13}
  #allocation0 [shape = 'u32[]', space=smem, size = 0x4, offset = 0x4, fixed_abs, tag = 'smem constant byte address 0x4 - core index']
  #allocation1 [shape = 'u32[144,128]{1,0:T(1,128)}', space=vmem, size = 0x12000, scoped, tag = 'internal scratch']
  %s0 = inlined_call_operand.vmem [shape: f32[4,16,192], index: 0, kind: input, shape index: {}]
  %s1 = inlined_call_operand.vmem [shape: f32[64,192], index: 1, kind: input, shape index: {}]
  %s2 = inlined_call_operand.vmem [shape: f32[1,192], index: 2, kind: input, shape index: {}]
  %s3 = inlined_call_operand.vmem [shape: f32[16,64], index: 3, kind: input, shape index: {}]
  %s4 = inlined_call_operand.vmem [shape: f32[4,16,64], index: 4, kind: output, shape index: {0}]
  %s5 = inlined_call_operand.hbm [shape: f32[16,64], index: 5, kind: output, shape index: {1}]
  %6 = xla_tuple %s4, %s5
  %s7 = sld [smem:[#allocation0]]
  $region34: #{stream_gridnet_block.13} parent=0
    _
  %s9 = ssub.s32 1, %s7
  %s10 = scalar_select 0, %s9, %s7
  $region1: #{stream_gridnet_block.13} parent=0
    #allocation2 [shape = 'u8[8192]{0}', space=vmem, size = 0x2000, scoped, tag = 'output window, operand 1, single buffered']
    #allocation3 [shape = 's32[1]{0}', space=sflag, size = 0x4, scoped, tag = 'scoped memory for stream_gridnet_block.13']
    %11 = vsyncpa [#allocation3], 0
    // Predicated region
    $region2: #{stream_gridnet_block.13} parent=1 // pred_check
      _
    $region3: #{stream_gridnet_block.13} parent=1 // pred_check_branch
      %13 = sbr.rel (0) target = $region5
    $region4: #{stream_gridnet_block.13} parent=1 // pred_region
      _
    $region5: #{stream_gridnet_block.13} parent=1 // pred_fallthru
      _
    // Predicated region
    $region6: #{stream_gridnet_block.13} parent=1 // pred_check
      _
    $region7: #{stream_gridnet_block.13} parent=1 // pred_check_branch
      %15 = sbr.rel (0) target = $region9
    $region8: #{stream_gridnet_block.13} parent=1 // pred_region
      _
    $region9: #{stream_gridnet_block.13} parent=1 // pred_fallthru
      _
    // Predicated region
    $region10: #{stream_gridnet_block.13} parent=1 // pred_check
      _
    $region11: #{stream_gridnet_block.13} parent=1 // pred_check_branch
      %17 = sbr.rel (0) target = $region13
    $region12: #{stream_gridnet_block.13} parent=1 // pred_region
      _
    $region13: #{stream_gridnet_block.13} parent=1 // pred_fallthru
      _
    // Predicated region
    $region14: #{stream_gridnet_block.13} parent=1 // pred_check
      _
    $region15: #{stream_gridnet_block.13} parent=1 // pred_check_branch
      %19 = sbr.rel (0) target = $region17
    $region16: #{stream_gridnet_block.13} parent=1 // pred_region
      _
    $region17: #{stream_gridnet_block.13} parent=1 // pred_fallthru
      _
    %v20 = vld [vmem:[%s3] sm:$0xff]
    %v21 = vld [vmem:[%s3 + $0x8] sm:$0xff]
    %v22 = vld [vmem:[%s1] sm:$0xff]
    %v23 = vld [vmem:[%s1 + $0x8] sm:$0xff]
    %v24 = vld [vmem:[%s1 + $0x10] sm:$0xff]
    %v25 = vld [vmem:[%s1 + $0x18] sm:$0xff]
    %v26 = vld [vmem:[%s1 + $0x20] sm:$0xff]
    %v27 = vld [vmem:[%s1 + $0x28] sm:$0xff]
    %v28 = vld [vmem:[%s1 + $0x30] sm:$0xff]
    %v29 = vld [vmem:[%s1 + $0x38] sm:$0xff]
    %v30 = vld [vmem:[%s1 + $0x40] sm:$0xff]
    %v31 = vld [vmem:[%s1 + $0x48] sm:$0xff]
    %v32 = vld [vmem:[%s1 + $0x50] sm:$0xff]
    %v33 = vld [vmem:[%s1 + $0x58] sm:$0xff]
    %v34 = vld [vmem:[%s1 + $0x60] sm:$0xff]
    %v35 = vld [vmem:[%s1 + $0x68] sm:$0xff]
    %v36 = vld [vmem:[%s1 + $0x70] sm:$0xff]
    %v37 = vld [vmem:[%s1 + $0x78] sm:$0xff]
    %v38 = vld [vmem:[%s2] sm:$0x3]
    %v40 = vlaneseq
    %v41 = vshrl.u32 %v40, 7
    %v42 = vsub.s32 0, %v41
    %v43 = vrot.slane %v38, %v42
    %v44 = vlaneseq
    %v45 = vshrl.u32 %v44, 7
    %v46 = vsub.s32 1, %v45
    %v47 = vrot.slane %v38, %v46
    %vm50 = vcmask 523264
    %v52 = vsel %vm50, %v20, 0
    %v55 = vsel %vm50, %v21, 0
    %57 = vmatprep.subr.mxu0 %v23
    %58 = vmatpush1.msra.mxu0 %v22
    %59 = vmatprep.subr.mxu0 %v25
    %60 = vmatpush1.msra.mxu0 %v24
    %61 = vmatprep.subr.mxu0 %v27
    %62 = vmatpush1.msra.mxu0 %v26
    %63 = vmatprep.subr.mxu0 %v29
    %64 = vmatpush1.msra.mxu0 %v28
    %65 = vmatprep.subr.mxu0 %v31
    %66 = vmatpush1.msra.mxu0 %v30
    %67 = vmatprep.subr.mxu0 %v33
    %68 = vmatpush1.msra.mxu0 %v32
    %69 = vmatprep.subr.mxu0 %v35
    %70 = vmatpush1.msra.mxu0 %v34
    %71 = vmatprep.subr.mxu0 %v37
    %72 = vmatpush1.msra.mxu0 %v36
    %73 = vmatprep.subr.mxu0 0.0
    %74 = vmatpush1.msra.mxu0 0.0
    %75 = vmatprep.subr.mxu0 0.0
    %76 = vmatpush1.msra.mxu0 0.0
    %77 = vmatprep.subr.mxu0 0.0
    %78 = vmatpush1.msra.mxu0 0.0
    %79 = vmatprep.subr.mxu0 0.0
    %80 = vmatpush1.msra.mxu0 0.0
    %81 = vmatprep.subr.mxu0 0.0
    %82 = vmatpush1.msra.mxu0 0.0
    %83 = vmatprep.subr.mxu0 0.0
    %84 = vmatpush1.msra.mxu0 0.0
    %85 = vmatprep.subr.mxu0 0.0
    %86 = vmatpush1.msra.mxu0 0.0
    %87 = vmatprep.subr.mxu0 0.0
    %88 = vmatpush1.msra.mxu0 0.0
    %89 = vmatprep.subr.mxu0 0.0
    %90 = vmatpush1.msra.mxu0 0.0
    %91 = vmatprep.subr.mxu0 0.0
    %92 = vmatpush1.msra.mxu0 0.0
    %93 = vmatprep.subr.mxu0 0.0
    %94 = vmatpush1.msra.mxu0 0.0
    %95 = vmatprep.subr.mxu0 0.0
    %96 = vmatpush1.msra.mxu0 0.0
    %97 = vmatprep.subr.mxu0 0.0
    %98 = vmatpush1.msra.mxu0 0.0
    %99 = vmatprep.subr.mxu0 0.0
    %100 = vmatpush1.msra.mxu0 0.0
    %101 = vmatprep.subr.mxu0 0.0
    %102 = vmatpush1.msra.mxu0 0.0
    %103 = vmatprep.subr.mxu0 0.0
    %104 = vmatpush1.msra.mxu0 0.0
    %105 = vmatprep.subr.mxu0 0.0
    %106 = vmatpush1.msra.mxu0 0.0
    %107 = vmatprep.subr.mxu0 0.0
    %108 = vmatpush1.msra.mxu0 0.0
    %109 = vmatprep.subr.mxu0 0.0
    %110 = vmatpush1.msra.mxu0 0.0
    %111 = vmatprep.subr.mxu0 0.0
    %112 = vmatpush1.msra.mxu0 0.0
    %113 = vmatprep.subr.mxu0 0.0
    %114 = vmatpush1.msra.mxu0 0.0
    %115 = vmatprep.subr.mxu0 0.0
    %116 = vmatpush1.msra.mxu0 0.0
    %117 = vmatprep.subr.mxu0 0.0
    %118 = vmatpush1.msra.mxu0 0.0
    %119 = vmatprep.subr.mxu0 0.0
    %120 = vmatpush1.msra.mxu0 0.0
    %121 = vmatprep.mubr.f32.mxu0 0.0
    %122 = vmatmul.mubr.f32.gmra.mrb[0].mxu0 %v52
    %v123 = vpop.f32.mrb[0].mxu0
    %v124 = vadd.f32 %v43, %v123
    %v125 = vpop.f32.mrb[0].mxu0
    %v126 = vadd.f32 %v47, %v125
    %127 = vmatprep.mubr.f32.mxu0 0.0
    %128 = vmatmul.mubr.f32.gmra.mrb[0].mxu0 %v55
    %v129 = vpop.f32.mrb[0].mxu0
    %v130 = vadd.f32 %v43, %v129
    %v131 = vpop.f32.mrb[0].mxu0
    %v132 = vadd.f32 %v47, %v131
    %133 = vdwg.mxu0
    %v134 = vld [vmem:[%s0] sm:$0xff]
    %v135 = vld [vmem:[%s0 + $0x8] sm:$0xff]
    %v136 = vld [vmem:[%s0 + $0x10] sm:$0xff]
    %v137 = vld [vmem:[%s0 + $0x18] sm:$0xff]
    %v138 = vadd.f32 %v134, %v124
    %v139 = vadd.f32 %v136, %v130
    %v140 = vxor.u32 %v138, 2147483648
    %v141 = vxor.u32 %v139, 2147483648
    %v142 = vmul.f32 %v140, 1.442695
    %v143 = vpow.pop %v142
    %v144 = vmul.f32 %v141, 1.442695
    %v145 = vpow.pop %v144
    %v146 = vadd.f32 %v143, 1.0
    %v147 = vadd.f32 %v145, 1.0
    %v148 = vrcp.pop %v146
    %v149 = vmul.f32 1.0, %v148
    %v150 = vrcp.pop %v147
    %v151 = vmul.f32 1.0, %v150
    %v152 = vmul.f32 %v149, %v126
    %v153 = vmul.f32 %v151, %v132
    %v154 = vadd.f32 %v135, %v152
    %v155 = vadd.f32 %v137, %v153
    %v156 = vtanh.pop %v154
    %v157 = vtanh.pop %v155
    %v158 = vsub.f32 1.0, %v149
    %v159 = vsub.f32 1.0, %v151
    %162 = vrot.lane.b32.xlu0 %v156, 64
    %v163 = vpop.permute.xlu0 %162
    %164 = vrot.lane.b32.xlu0 %v157, 64
    %v165 = vpop.permute.xlu0 %164
    %v168 = vmul.f32 %v158, %v163
    %v169 = vmul.f32 %v159, %v165
    %170 = vrot.lane.b32.xlu0 %v20, 64
    %v171 = vpop.permute.xlu0 %170
    %172 = vrot.lane.b32.xlu0 %v21, 64
    %v173 = vpop.permute.xlu0 %172
    %v176 = vmul.f32 %v149, %v171
    %v177 = vmul.f32 %v151, %v173
    %v178 = vadd.f32 %v168, %v176
    %v179 = vadd.f32 %v169, %v177
    %182 = vrot.lane.b32.xlu0 %v178, 64
    %v183 = vpop.permute.xlu0 %182
    %184 = vrot.lane.b32.xlu0 %v179, 64
    %v185 = vpop.permute.xlu0 %184
    %188 = vst.msk [vmem:[%s4] sm:$0xff] %vm50, %v183
    %189 = vst.msk [vmem:[%s4 + $0x8] sm:$0xff] %vm50, %v185
    %v190 = vld [vmem:[%s1] sm:$0xff]
    %v191 = vld [vmem:[%s1 + $0x8] sm:$0xff]
    %v192 = vld [vmem:[%s1 + $0x10] sm:$0xff]
    %v193 = vld [vmem:[%s1 + $0x18] sm:$0xff]
    %v194 = vld [vmem:[%s1 + $0x20] sm:$0xff]
    %v195 = vld [vmem:[%s1 + $0x28] sm:$0xff]
    %v196 = vld [vmem:[%s1 + $0x30] sm:$0xff]
    %v197 = vld [vmem:[%s1 + $0x38] sm:$0xff]
    %v198 = vld [vmem:[%s1 + $0x40] sm:$0xff]
    %v199 = vld [vmem:[%s1 + $0x48] sm:$0xff]
    %v200 = vld [vmem:[%s1 + $0x50] sm:$0xff]
    %v201 = vld [vmem:[%s1 + $0x58] sm:$0xff]
    %v202 = vld [vmem:[%s1 + $0x60] sm:$0xff]
    %v203 = vld [vmem:[%s1 + $0x68] sm:$0xff]
    %v204 = vld [vmem:[%s1 + $0x70] sm:$0xff]
    %v205 = vld [vmem:[%s1 + $0x78] sm:$0xff]
    %v206 = vld [vmem:[%s2] sm:$0x3]
    %v208 = vlaneseq
    %v209 = vshrl.u32 %v208, 7
    %v210 = vsub.s32 0, %v209
    %v211 = vrot.slane %v206, %v210
    %v212 = vlaneseq
    %v213 = vshrl.u32 %v212, 7
    %v214 = vsub.s32 1, %v213
    %v215 = vrot.slane %v206, %v214
    %v218 = vsel %vm50, %v183, 0
    %v220 = vsel %vm50, %v185, 0
    %222 = vmatprep.subr.mxu0 %v191
    %223 = vmatpush1.msra.mxu0 %v190
    %224 = vmatprep.subr.mxu0 %v193
    %225 = vmatpush1.msra.mxu0 %v192
    %226 = vmatprep.subr.mxu0 %v195
    %227 = vmatpush1.msra.mxu0 %v194
    %228 = vmatprep.subr.mxu0 %v197
    %229 = vmatpush1.msra.mxu0 %v196
    %230 = vmatprep.subr.mxu0 %v199
    %231 = vmatpush1.msra.mxu0 %v198
    %232 = vmatprep.subr.mxu0 %v201
    %233 = vmatpush1.msra.mxu0 %v200
    %234 = vmatprep.subr.mxu0 %v203
    %235 = vmatpush1.msra.mxu0 %v202
    %236 = vmatprep.subr.mxu0 %v205
    %237 = vmatpush1.msra.mxu0 %v204
    %238 = vmatprep.subr.mxu0 0.0
    %239 = vmatpush1.msra.mxu0 0.0
    %240 = vmatprep.subr.mxu0 0.0
    %241 = vmatpush1.msra.mxu0 0.0
    %242 = vmatprep.subr.mxu0 0.0
    %243 = vmatpush1.msra.mxu0 0.0
    %244 = vmatprep.subr.mxu0 0.0
    %245 = vmatpush1.msra.mxu0 0.0
    %246 = vmatprep.subr.mxu0 0.0
    %247 = vmatpush1.msra.mxu0 0.0
    %248 = vmatprep.subr.mxu0 0.0
    %249 = vmatpush1.msra.mxu0 0.0
    %250 = vmatprep.subr.mxu0 0.0
    %251 = vmatpush1.msra.mxu0 0.0
    %252 = vmatprep.subr.mxu0 0.0
    %253 = vmatpush1.msra.mxu0 0.0
    %254 = vmatprep.subr.mxu0 0.0
    %255 = vmatpush1.msra.mxu0 0.0
    %256 = vmatprep.subr.mxu0 0.0
    %257 = vmatpush1.msra.mxu0 0.0
    %258 = vmatprep.subr.mxu0 0.0
    %259 = vmatpush1.msra.mxu0 0.0
    %260 = vmatprep.subr.mxu0 0.0
    %261 = vmatpush1.msra.mxu0 0.0
    %262 = vmatprep.subr.mxu0 0.0
    %263 = vmatpush1.msra.mxu0 0.0
    %264 = vmatprep.subr.mxu0 0.0
    %265 = vmatpush1.msra.mxu0 0.0
    %266 = vmatprep.subr.mxu0 0.0
    %267 = vmatpush1.msra.mxu0 0.0
    %268 = vmatprep.subr.mxu0 0.0
    %269 = vmatpush1.msra.mxu0 0.0
    %270 = vmatprep.subr.mxu0 0.0
    %271 = vmatpush1.msra.mxu0 0.0
    %272 = vmatprep.subr.mxu0 0.0
    %273 = vmatpush1.msra.mxu0 0.0
    %274 = vmatprep.subr.mxu0 0.0
    %275 = vmatpush1.msra.mxu0 0.0
    %276 = vmatprep.subr.mxu0 0.0
    %277 = vmatpush1.msra.mxu0 0.0
    %278 = vmatprep.subr.mxu0 0.0
    %279 = vmatpush1.msra.mxu0 0.0
    %280 = vmatprep.subr.mxu0 0.0
    %281 = vmatpush1.msra.mxu0 0.0
    %282 = vmatprep.subr.mxu0 0.0
    %283 = vmatpush1.msra.mxu0 0.0
    %284 = vmatprep.subr.mxu0 0.0
    %285 = vmatpush1.msra.mxu0 0.0
    %286 = vmatprep.mubr.f32.mxu0 0.0
    %287 = vmatmul.mubr.f32.gmra.mrb[0].mxu0 %v218
    %v288 = vpop.f32.mrb[0].mxu0
    %v289 = vadd.f32 %v211, %v288
    %v290 = vpop.f32.mrb[0].mxu0
    %v291 = vadd.f32 %v215, %v290
    %292 = vmatprep.mubr.f32.mxu0 0.0
    %293 = vmatmul.mubr.f32.gmra.mrb[0].mxu0 %v220
    %v294 = vpop.f32.mrb[0].mxu0
    %v295 = vadd.f32 %v211, %v294
    %v296 = vpop.f32.mrb[0].mxu0
    %v297 = vadd.f32 %v215, %v296
    %298 = vdwg.mxu0
    %s299 = scalar_lea.vmem %s0, 32
    %v300 = vld [vmem:[%s299] sm:$0xff]
    %v301 = vld [vmem:[%s299 + $0x8] sm:$0xff]
    %v302 = vld [vmem:[%s299 + $0x10] sm:$0xff]
    %v303 = vld [vmem:[%s299 + $0x18] sm:$0xff]
    %v304 = vadd.f32 %v300, %v289
    %v305 = vadd.f32 %v302, %v295
    %v306 = vxor.u32 %v304, 2147483648
    %v307 = vxor.u32 %v305, 2147483648
    %v308 = vmul.f32 %v306, 1.442695
    %v309 = vpow.pop %v308
    %v310 = vmul.f32 %v307, 1.442695
    %v311 = vpow.pop %v310
    %v312 = vadd.f32 %v309, 1.0
    %v313 = vadd.f32 %v311, 1.0
    %v314 = vrcp.pop %v312
    %v315 = vmul.f32 1.0, %v314
    %v316 = vrcp.pop %v313
    %v317 = vmul.f32 1.0, %v316
    %v318 = vmul.f32 %v315, %v291
    %v319 = vmul.f32 %v317, %v297
    %v320 = vadd.f32 %v301, %v318
    %v321 = vadd.f32 %v303, %v319
    %v322 = vtanh.pop %v320
    %v323 = vtanh.pop %v321
    %v324 = vsub.f32 1.0, %v315
    %v325 = vsub.f32 1.0, %v317
    %328 = vrot.lane.b32.xlu0 %v322, 64
    %v329 = vpop.permute.xlu0 %328
    %330 = vrot.lane.b32.xlu0 %v323, 64
    %v331 = vpop.permute.xlu0 %330
    %v334 = vmul.f32 %v324, %v329
    %v335 = vmul.f32 %v325, %v331
    %v336 = vmul.f32 %v315, %v178
    %v337 = vmul.f32 %v317, %v179
    %v338 = vadd.f32 %v334, %v336
    %v339 = vadd.f32 %v335, %v337
    %342 = vrot.lane.b32.xlu0 %v338, 64
    %v343 = vpop.permute.xlu0 %342
    %344 = vrot.lane.b32.xlu0 %v339, 64
    %v345 = vpop.permute.xlu0 %344
    %s348 = scalar_lea.vmem %s4, 16
    %349 = vst.msk [vmem:[%s348] sm:$0xff] %vm50, %v343
    %350 = vst.msk [vmem:[%s348 + $0x8] sm:$0xff] %vm50, %v345
    %v351 = vld [vmem:[%s1] sm:$0xff]
    %v352 = vld [vmem:[%s1 + $0x8] sm:$0xff]
    %v353 = vld [vmem:[%s1 + $0x10] sm:$0xff]
    %v354 = vld [vmem:[%s1 + $0x18] sm:$0xff]
    %v355 = vld [vmem:[%s1 + $0x20] sm:$0xff]
    %v356 = vld [vmem:[%s1 + $0x28] sm:$0xff]
    %v357 = vld [vmem:[%s1 + $0x30] sm:$0xff]
    %v358 = vld [vmem:[%s1 + $0x38] sm:$0xff]
    %v359 = vld [vmem:[%s1 + $0x40] sm:$0xff]
    %v360 = vld [vmem:[%s1 + $0x48] sm:$0xff]
    %v361 = vld [vmem:[%s1 + $0x50] sm:$0xff]
    %v362 = vld [vmem:[%s1 + $0x58] sm:$0xff]
    %v363 = vld [vmem:[%s1 + $0x60] sm:$0xff]
    %v364 = vld [vmem:[%s1 + $0x68] sm:$0xff]
    %v365 = vld [vmem:[%s1 + $0x70] sm:$0xff]
    %v366 = vld [vmem:[%s1 + $0x78] sm:$0xff]
    %v367 = vld [vmem:[%s2] sm:$0x3]
    %v369 = vlaneseq
    %v370 = vshrl.u32 %v369, 7
    %v371 = vsub.s32 0, %v370
    %v372 = vrot.slane %v367, %v371
    %v373 = vlaneseq
    %v374 = vshrl.u32 %v373, 7
    %v375 = vsub.s32 1, %v374
    %v376 = vrot.slane %v367, %v375
    %v379 = vsel %vm50, %v343, 0
    %v381 = vsel %vm50, %v345, 0
    %383 = vmatprep.subr.mxu0 %v352
    %384 = vmatpush1.msra.mxu0 %v351
    %385 = vmatprep.subr.mxu0 %v354
    %386 = vmatpush1.msra.mxu0 %v353
    %387 = vmatprep.subr.mxu0 %v356
    %388 = vmatpush1.msra.mxu0 %v355
    %389 = vmatprep.subr.mxu0 %v358
    %390 = vmatpush1.msra.mxu0 %v357
    %391 = vmatprep.subr.mxu0 %v360
    %392 = vmatpush1.msra.mxu0 %v359
    %393 = vmatprep.subr.mxu0 %v362
    %394 = vmatpush1.msra.mxu0 %v361
    %395 = vmatprep.subr.mxu0 %v364
    %396 = vmatpush1.msra.mxu0 %v363
    %397 = vmatprep.subr.mxu0 %v366
    %398 = vmatpush1.msra.mxu0 %v365
    %399 = vmatprep.subr.mxu0 0.0
    %400 = vmatpush1.msra.mxu0 0.0
    %401 = vmatprep.subr.mxu0 0.0
    %402 = vmatpush1.msra.mxu0 0.0
    %403 = vmatprep.subr.mxu0 0.0
    %404 = vmatpush1.msra.mxu0 0.0
    %405 = vmatprep.subr.mxu0 0.0
    %406 = vmatpush1.msra.mxu0 0.0
    %407 = vmatprep.subr.mxu0 0.0
    %408 = vmatpush1.msra.mxu0 0.0
    %409 = vmatprep.subr.mxu0 0.0
    %410 = vmatpush1.msra.mxu0 0.0
    %411 = vmatprep.subr.mxu0 0.0
    %412 = vmatpush1.msra.mxu0 0.0
    %413 = vmatprep.subr.mxu0 0.0
    %414 = vmatpush1.msra.mxu0 0.0
    %415 = vmatprep.subr.mxu0 0.0
    %416 = vmatpush1.msra.mxu0 0.0
    %417 = vmatprep.subr.mxu0 0.0
    %418 = vmatpush1.msra.mxu0 0.0
    %419 = vmatprep.subr.mxu0 0.0
    %420 = vmatpush1.msra.mxu0 0.0
    %421 = vmatprep.subr.mxu0 0.0
    %422 = vmatpush1.msra.mxu0 0.0
    %423 = vmatprep.subr.mxu0 0.0
    %424 = vmatpush1.msra.mxu0 0.0
    %425 = vmatprep.subr.mxu0 0.0
    %426 = vmatpush1.msra.mxu0 0.0
    %427 = vmatprep.subr.mxu0 0.0
    %428 = vmatpush1.msra.mxu0 0.0
    %429 = vmatprep.subr.mxu0 0.0
    %430 = vmatpush1.msra.mxu0 0.0
    %431 = vmatprep.subr.mxu0 0.0
    %432 = vmatpush1.msra.mxu0 0.0
    %433 = vmatprep.subr.mxu0 0.0
    %434 = vmatpush1.msra.mxu0 0.0
    %435 = vmatprep.subr.mxu0 0.0
    %436 = vmatpush1.msra.mxu0 0.0
    %437 = vmatprep.subr.mxu0 0.0
    %438 = vmatpush1.msra.mxu0 0.0
    %439 = vmatprep.subr.mxu0 0.0
    %440 = vmatpush1.msra.mxu0 0.0
    %441 = vmatprep.subr.mxu0 0.0
    %442 = vmatpush1.msra.mxu0 0.0
    %443 = vmatprep.subr.mxu0 0.0
    %444 = vmatpush1.msra.mxu0 0.0
    %445 = vmatprep.subr.mxu0 0.0
    %446 = vmatpush1.msra.mxu0 0.0
    %447 = vmatprep.mubr.f32.mxu0 0.0
    %448 = vmatmul.mubr.f32.gmra.mrb[0].mxu0 %v379
    %v449 = vpop.f32.mrb[0].mxu0
    %v450 = vadd.f32 %v372, %v449
    %v451 = vpop.f32.mrb[0].mxu0
    %v452 = vadd.f32 %v376, %v451
    %453 = vmatprep.mubr.f32.mxu0 0.0
    %454 = vmatmul.mubr.f32.gmra.mrb[0].mxu0 %v381
    %v455 = vpop.f32.mrb[0].mxu0
    %v456 = vadd.f32 %v372, %v455
    %v457 = vpop.f32.mrb[0].mxu0
    %v458 = vadd.f32 %v376, %v457
    %459 = vdwg.mxu0
    %s460 = scalar_lea.vmem %s0, 64
    %v461 = vld [vmem:[%s460] sm:$0xff]
    %v462 = vld [vmem:[%s460 + $0x8] sm:$0xff]
    %v463 = vld [vmem:[%s460 + $0x10] sm:$0xff]
    %v464 = vld [vmem:[%s460 + $0x18] sm:$0xff]
    %v465 = vadd.f32 %v461, %v450
    %v466 = vadd.f32 %v463, %v456
    %v467 = vxor.u32 %v465, 2147483648
    %v468 = vxor.u32 %v466, 2147483648
    %v469 = vmul.f32 %v467, 1.442695
    %v470 = vpow.pop %v469
    %v471 = vmul.f32 %v468, 1.442695
    %v472 = vpow.pop %v471
    %v473 = vadd.f32 %v470, 1.0
    %v474 = vadd.f32 %v472, 1.0
    %v475 = vrcp.pop %v473
    %v476 = vmul.f32 1.0, %v475
    %v477 = vrcp.pop %v474
    %v478 = vmul.f32 1.0, %v477
    %v479 = vmul.f32 %v476, %v452
    %v480 = vmul.f32 %v478, %v458
    %v481 = vadd.f32 %v462, %v479
    %v482 = vadd.f32 %v464, %v480
    %v483 = vtanh.pop %v481
    %v484 = vtanh.pop %v482
    %v485 = vsub.f32 1.0, %v476
    %v486 = vsub.f32 1.0, %v478
    %489 = vrot.lane.b32.xlu0 %v483, 64
    %v490 = vpop.permute.xlu0 %489
    %491 = vrot.lane.b32.xlu0 %v484, 64
    %v492 = vpop.permute.xlu0 %491
    %v495 = vmul.f32 %v485, %v490
    %v496 = vmul.f32 %v486, %v492
    %v497 = vmul.f32 %v476, %v338
    %v498 = vmul.f32 %v478, %v339
    %v499 = vadd.f32 %v495, %v497
    %v500 = vadd.f32 %v496, %v498
    %503 = vrot.lane.b32.xlu0 %v499, 64
    %v504 = vpop.permute.xlu0 %503
    %505 = vrot.lane.b32.xlu0 %v500, 64
    %v506 = vpop.permute.xlu0 %505
    %s509 = scalar_lea.vmem %s4, 32
    %510 = vst.msk [vmem:[%s509] sm:$0xff] %vm50, %v504
    %511 = vst.msk [vmem:[%s509 + $0x8] sm:$0xff] %vm50, %v506
    %v512 = vld [vmem:[%s1] sm:$0xff]
    %v513 = vld [vmem:[%s1 + $0x8] sm:$0xff]
    %v514 = vld [vmem:[%s1 + $0x10] sm:$0xff]
    %v515 = vld [vmem:[%s1 + $0x18] sm:$0xff]
    %v516 = vld [vmem:[%s1 + $0x20] sm:$0xff]
    %v517 = vld [vmem:[%s1 + $0x28] sm:$0xff]
    %v518 = vld [vmem:[%s1 + $0x30] sm:$0xff]
    %v519 = vld [vmem:[%s1 + $0x38] sm:$0xff]
    %v520 = vld [vmem:[%s1 + $0x40] sm:$0xff]
    %v521 = vld [vmem:[%s1 + $0x48] sm:$0xff]
    %v522 = vld [vmem:[%s1 + $0x50] sm:$0xff]
    %v523 = vld [vmem:[%s1 + $0x58] sm:$0xff]
    %v524 = vld [vmem:[%s1 + $0x60] sm:$0xff]
    %v525 = vld [vmem:[%s1 + $0x68] sm:$0xff]
    %v526 = vld [vmem:[%s1 + $0x70] sm:$0xff]
    %v527 = vld [vmem:[%s1 + $0x78] sm:$0xff]
    %v528 = vld [vmem:[%s2] sm:$0x3]
    %v530 = vlaneseq
    %v531 = vshrl.u32 %v530, 7
    %v532 = vsub.s32 0, %v531
    %v533 = vrot.slane %v528, %v532
    %v534 = vlaneseq
    %v535 = vshrl.u32 %v534, 7
    %v536 = vsub.s32 1, %v535
    %v537 = vrot.slane %v528, %v536
    %v540 = vsel %vm50, %v504, 0
    %v542 = vsel %vm50, %v506, 0
    %544 = vmatprep.subr.mxu0 %v513
    %545 = vmatpush1.msra.mxu0 %v512
    %546 = vmatprep.subr.mxu0 %v515
    %547 = vmatpush1.msra.mxu0 %v514
    %548 = vmatprep.subr.mxu0 %v517
    %549 = vmatpush1.msra.mxu0 %v516
    %550 = vmatprep.subr.mxu0 %v519
    %551 = vmatpush1.msra.mxu0 %v518
    %552 = vmatprep.subr.mxu0 %v521
    %553 = vmatpush1.msra.mxu0 %v520
    %554 = vmatprep.subr.mxu0 %v523
    %555 = vmatpush1.msra.mxu0 %v522
    %556 = vmatprep.subr.mxu0 %v525
    %557 = vmatpush1.msra.mxu0 %v524
    %558 = vmatprep.subr.mxu0 %v527
    %559 = vmatpush1.msra.mxu0 %v526
    %560 = vmatprep.subr.mxu0 0.0
    %561 = vmatpush1.msra.mxu0 0.0
    %562 = vmatprep.subr.mxu0 0.0
    %563 = vmatpush1.msra.mxu0 0.0
    %564 = vmatprep.subr.mxu0 0.0
    %565 = vmatpush1.msra.mxu0 0.0
    %566 = vmatprep.subr.mxu0 0.0
    %567 = vmatpush1.msra.mxu0 0.0
    %568 = vmatprep.subr.mxu0 0.0
    %569 = vmatpush1.msra.mxu0 0.0
    %570 = vmatprep.subr.mxu0 0.0
    %571 = vmatpush1.msra.mxu0 0.0
    %572 = vmatprep.subr.mxu0 0.0
    %573 = vmatpush1.msra.mxu0 0.0
    %574 = vmatprep.subr.mxu0 0.0
    %575 = vmatpush1.msra.mxu0 0.0
    %576 = vmatprep.subr.mxu0 0.0
    %577 = vmatpush1.msra.mxu0 0.0
    %578 = vmatprep.subr.mxu0 0.0
    %579 = vmatpush1.msra.mxu0 0.0
    %580 = vmatprep.subr.mxu0 0.0
    %581 = vmatpush1.msra.mxu0 0.0
    %582 = vmatprep.subr.mxu0 0.0
    %583 = vmatpush1.msra.mxu0 0.0
    %584 = vmatprep.subr.mxu0 0.0
    %585 = vmatpush1.msra.mxu0 0.0
    %586 = vmatprep.subr.mxu0 0.0
    %587 = vmatpush1.msra.mxu0 0.0
    %588 = vmatprep.subr.mxu0 0.0
    %589 = vmatpush1.msra.mxu0 0.0
    %590 = vmatprep.subr.mxu0 0.0
    %591 = vmatpush1.msra.mxu0 0.0
    %592 = vmatprep.subr.mxu0 0.0
    %593 = vmatpush1.msra.mxu0 0.0
    %594 = vmatprep.subr.mxu0 0.0
    %595 = vmatpush1.msra.mxu0 0.0
    %596 = vmatprep.subr.mxu0 0.0
    %597 = vmatpush1.msra.mxu0 0.0
    %598 = vmatprep.subr.mxu0 0.0
    %599 = vmatpush1.msra.mxu0 0.0
    %600 = vmatprep.subr.mxu0 0.0
    %601 = vmatpush1.msra.mxu0 0.0
    %602 = vmatprep.subr.mxu0 0.0
    %603 = vmatpush1.msra.mxu0 0.0
    %604 = vmatprep.subr.mxu0 0.0
    %605 = vmatpush1.msra.mxu0 0.0
    %606 = vmatprep.subr.mxu0 0.0
    %607 = vmatpush1.msra.mxu0 0.0
    %608 = vmatprep.mubr.f32.mxu0 0.0
    %609 = vmatmul.mubr.f32.gmra.mrb[0].mxu0 %v540
    %v610 = vpop.f32.mrb[0].mxu0
    %v611 = vadd.f32 %v533, %v610
    %v612 = vpop.f32.mrb[0].mxu0
    %v613 = vadd.f32 %v537, %v612
    %614 = vmatprep.mubr.f32.mxu0 0.0
    %615 = vmatmul.mubr.f32.gmra.mrb[0].mxu0 %v542
    %v616 = vpop.f32.mrb[0].mxu0
    %v617 = vadd.f32 %v533, %v616
    %v618 = vpop.f32.mrb[0].mxu0
    %v619 = vadd.f32 %v537, %v618
    %620 = vdwg.mxu0
    %s621 = scalar_lea.vmem %s0, 96
    %v622 = vld [vmem:[%s621] sm:$0xff]
    %v623 = vld [vmem:[%s621 + $0x8] sm:$0xff]
    %v624 = vld [vmem:[%s621 + $0x10] sm:$0xff]
    %v625 = vld [vmem:[%s621 + $0x18] sm:$0xff]
    %v626 = vadd.f32 %v622, %v611
    %v627 = vadd.f32 %v624, %v617
    %v628 = vxor.u32 %v626, 2147483648
    %v629 = vxor.u32 %v627, 2147483648
    %v630 = vmul.f32 %v628, 1.442695
    %v631 = vpow.pop %v630
    %v632 = vmul.f32 %v629, 1.442695
    %v633 = vpow.pop %v632
    %v634 = vadd.f32 %v631, 1.0
    %v635 = vadd.f32 %v633, 1.0
    %v636 = vrcp.pop %v634
    %v637 = vmul.f32 1.0, %v636
    %v638 = vrcp.pop %v635
    %v639 = vmul.f32 1.0, %v638
    %v640 = vmul.f32 %v637, %v613
    %v641 = vmul.f32 %v639, %v619
    %v642 = vadd.f32 %v623, %v640
    %v643 = vadd.f32 %v625, %v641
    %v644 = vtanh.pop %v642
    %v645 = vtanh.pop %v643
    %v646 = vsub.f32 1.0, %v637
    %v647 = vsub.f32 1.0, %v639
    %650 = vrot.lane.b32.xlu0 %v644, 64
    %v651 = vpop.permute.xlu0 %650
    %652 = vrot.lane.b32.xlu0 %v645, 64
    %v653 = vpop.permute.xlu0 %652
    %v656 = vmul.f32 %v646, %v651
    %v657 = vmul.f32 %v647, %v653
    %v658 = vmul.f32 %v637, %v499
    %v659 = vmul.f32 %v639, %v500
    %v660 = vadd.f32 %v656, %v658
    %v661 = vadd.f32 %v657, %v659
    %664 = vrot.lane.b32.xlu0 %v660, 64
    %v665 = vpop.permute.xlu0 %664
    %666 = vrot.lane.b32.xlu0 %v661, 64
    %v667 = vpop.permute.xlu0 %666
    %s670 = scalar_lea.vmem %s4, 48
    %671 = vst.msk [vmem:[%s670] sm:$0xff] %vm50, %v665
    %672 = vst.msk [vmem:[%s670 + $0x8] sm:$0xff] %vm50, %v667
    %673 = vst.msk [vmem:[#allocation2] sm:$0xff] %vm50, %v665
    %674 = vst.msk [vmem:[#allocation2 + $0x8] sm:$0xff] %vm50, %v667
    // Predicated region
    $region18: #{stream_gridnet_block.13} parent=1 // pred_check
      _
    $region19: #{stream_gridnet_block.13} parent=1 // pred_check_branch
      %676 = sbr.rel (0) target = $region21
    $region20: #{stream_gridnet_block.13} parent=1 // pred_region
      _
    $region21: #{stream_gridnet_block.13} parent=1 // pred_fallthru
      _
    // Predicated region
    $region22: #{stream_gridnet_block.13} parent=1 // pred_check
      _
    $region23: #{stream_gridnet_block.13} parent=1 // pred_check_branch
      %678 = sbr.rel (0) target = $region25
    $region24: #{stream_gridnet_block.13} parent=1 // pred_region
      %s680 = ssub.s32 256, 256
      %681 = vsyncadd [#allocation3], %s680
      %s682 = sshll.u32 [#allocation2], 4
      %s683 = int_to_ptr.vmem [resolvable:$true] %s682
      %688 = dma.vmem_to_hbm [thread:$0]  %s683, 256, %s5, [#allocation3], 128, 128, 8
    $region25: #{stream_gridnet_block.13} parent=1 // pred_fallthru
      _
    // Predicated region
    $region26: #{stream_gridnet_block.13} parent=1 // pred_check
      _
    $region27: #{stream_gridnet_block.13} parent=1 // pred_check_branch
      %690 = sbr.rel (0) target = $region29
    $region28: #{stream_gridnet_block.13} parent=1 // pred_region
      _
    $region29: #{stream_gridnet_block.13} parent=1 // pred_fallthru
      _
    // Predicated region
    $region30: #{stream_gridnet_block.13} parent=1 // pred_check
      _
    $region31: #{stream_gridnet_block.13} parent=1 // pred_check_branch
      %692 = sbr.rel (0) target = $region33
    $region32: #{stream_gridnet_block.13} parent=1 // pred_region
      %693 = dma.done [#allocation3], 256
    $region33: #{stream_gridnet_block.13} parent=1 // pred_fallthru
      _
    %694 = vsyncpa [#allocation3], 1

// kernel: stream_gridnet_block.16
$region0: #{stream_gridnet_block.16}
  #allocation0 [shape = 'u32[]', space=smem, size = 0x4, offset = 0x4, fixed_abs, tag = 'smem constant byte address 0x4 - core index']
  #allocation1 [shape = 'u32[144,128]{1,0:T(1,128)}', space=vmem, size = 0x12000, scoped, tag = 'internal scratch']
  %s0 = inlined_call_operand.vmem [shape: f32[128,16], index: 0, kind: input, shape index: {}]
  %s1 = inlined_call_operand.vmem [shape: f32[16,96], index: 1, kind: input, shape index: {}]
  %s2 = inlined_call_operand.vmem [shape: f32[1,96], index: 2, kind: input, shape index: {}]
  %s3 = inlined_call_operand.vmem [shape: f32[128,96], index: 3, kind: output, shape index: {}]
  %s4 = sld [smem:[#allocation0]]
  $region22: #{stream_gridnet_block.16} parent=0
    _
  %s6 = ssub.s32 1, %s4
  %s7 = scalar_select 0, %s6, %s4
  // Predicated region
  $region2: #{stream_gridnet_block.16} parent=0 // pred_check
    _
  $region3: #{stream_gridnet_block.16} parent=0 // pred_check_branch
    %9 = sbr.rel (0) target = $region5
  $region4: #{stream_gridnet_block.16} parent=0 // pred_region
    _
  $region5: #{stream_gridnet_block.16} parent=0 // pred_fallthru
    _
  // Predicated region
  $region6: #{stream_gridnet_block.16} parent=0 // pred_check
    _
  $region7: #{stream_gridnet_block.16} parent=0 // pred_check_branch
    %11 = sbr.rel (0) target = $region9
  $region8: #{stream_gridnet_block.16} parent=0 // pred_region
    _
  $region9: #{stream_gridnet_block.16} parent=0 // pred_fallthru
    _
  // Predicated region
  $region10: #{stream_gridnet_block.16} parent=0 // pred_check
    _
  $region11: #{stream_gridnet_block.16} parent=0 // pred_check_branch
    %13 = sbr.rel (0) target = $region13
  $region12: #{stream_gridnet_block.16} parent=0 // pred_region
    _
  $region13: #{stream_gridnet_block.16} parent=0 // pred_fallthru
    _
  %v14 = vld [vmem:[%s0] sm:$0xff]
  %v15 = vld [vmem:[%s0 + $0x8] sm:$0xff]
  %v16 = vld [vmem:[%s0 + $0x10] sm:$0xff]
  %v17 = vld [vmem:[%s0 + $0x18] sm:$0xff]
  %v18 = vld [vmem:[%s0 + $0x20] sm:$0xff]
  %v19 = vld [vmem:[%s0 + $0x28] sm:$0xff]
  %v20 = vld [vmem:[%s0 + $0x30] sm:$0xff]
  %v21 = vld [vmem:[%s0 + $0x38] sm:$0xff]
  %v22 = vld [vmem:[%s0 + $0x40] sm:$0xff]
  %v23 = vld [vmem:[%s0 + $0x48] sm:$0xff]
  %v24 = vld [vmem:[%s0 + $0x50] sm:$0xff]
  %v25 = vld [vmem:[%s0 + $0x58] sm:$0xff]
  %v26 = vld [vmem:[%s0 + $0x60] sm:$0xff]
  %v27 = vld [vmem:[%s0 + $0x68] sm:$0xff]
  %v28 = vld [vmem:[%s0 + $0x70] sm:$0xff]
  %v29 = vld [vmem:[%s0 + $0x78] sm:$0xff]
  %v30 = vld [vmem:[%s1] sm:$0xff]
  %v31 = vld [vmem:[%s1 + $0x8] sm:$0xff]
  %v32 = vld [vmem:[%s2] sm:$0x1]
  %v34 = vlaneseq
  %v35 = vshrl.u32 %v34, 7
  %v36 = vsub.s32 0, %v35
  %v37 = vrot.slane %v32, %v36
  %vm39 = vcmask 130048
  %v41 = vsel %vm39, %v14, 0
  %v44 = vsel %vm39, %v15, 0
  %v47 = vsel %vm39, %v16, 0
  %v50 = vsel %vm39, %v17, 0
  %v53 = vsel %vm39, %v18, 0
  %v56 = vsel %vm39, %v19, 0
  %v59 = vsel %vm39, %v20, 0
  %v62 = vsel %vm39, %v21, 0
  %v65 = vsel %vm39, %v22, 0
  %v68 = vsel %vm39, %v23, 0
  %v71 = vsel %vm39, %v24, 0
  %v74 = vsel %vm39, %v25, 0
  %v77 = vsel %vm39, %v26, 0
  %v80 = vsel %vm39, %v27, 0
  %v83 = vsel %vm39, %v28, 0
  %v86 = vsel %vm39, %v29, 0
  %88 = vmatprep.subr.mxu0 0.0
  %89 = vmatpush1.msra.mxu0 %v30
  %90 = vmatprep.subr.mxu0 0.0
  %91 = vmatpush1.msra.mxu0 %v31
  %92 = vmatprep.subr.mxu0 0.0
  %93 = vmatpush1.msra.mxu0 0.0
  %94 = vmatprep.subr.mxu0 0.0
  %95 = vmatpush1.msra.mxu0 0.0
  %96 = vmatprep.subr.mxu0 0.0
  %97 = vmatpush1.msra.mxu0 0.0
  %98 = vmatprep.subr.mxu0 0.0
  %99 = vmatpush1.msra.mxu0 0.0
  %100 = vmatprep.subr.mxu0 0.0
  %101 = vmatpush1.msra.mxu0 0.0
  %102 = vmatprep.subr.mxu0 0.0
  %103 = vmatpush1.msra.mxu0 0.0
  %104 = vmatprep.subr.mxu0 0.0
  %105 = vmatpush1.msra.mxu0 0.0
  %106 = vmatprep.subr.mxu0 0.0
  %107 = vmatpush1.msra.mxu0 0.0
  %108 = vmatprep.subr.mxu0 0.0
  %109 = vmatpush1.msra.mxu0 0.0
  %110 = vmatprep.subr.mxu0 0.0
  %111 = vmatpush1.msra.mxu0 0.0
  %112 = vmatprep.subr.mxu0 0.0
  %113 = vmatpush1.msra.mxu0 0.0
  %114 = vmatprep.subr.mxu0 0.0
  %115 = vmatpush1.msra.mxu0 0.0
  %116 = vmatprep.subr.mxu0 0.0
  %117 = vmatpush1.msra.mxu0 0.0
  %118 = vmatprep.subr.mxu0 0.0
  %119 = vmatpush1.msra.mxu0 0.0
  %120 = vmatprep.subr.mxu0 0.0
  %121 = vmatpush1.msra.mxu0 0.0
  %122 = vmatprep.subr.mxu0 0.0
  %123 = vmatpush1.msra.mxu0 0.0
  %124 = vmatprep.subr.mxu0 0.0
  %125 = vmatpush1.msra.mxu0 0.0
  %126 = vmatprep.subr.mxu0 0.0
  %127 = vmatpush1.msra.mxu0 0.0
  %128 = vmatprep.subr.mxu0 0.0
  %129 = vmatpush1.msra.mxu0 0.0
  %130 = vmatprep.subr.mxu0 0.0
  %131 = vmatpush1.msra.mxu0 0.0
  %132 = vmatprep.subr.mxu0 0.0
  %133 = vmatpush1.msra.mxu0 0.0
  %134 = vmatprep.subr.mxu0 0.0
  %135 = vmatpush1.msra.mxu0 0.0
  %136 = vmatprep.subr.mxu0 0.0
  %137 = vmatpush1.msra.mxu0 0.0
  %138 = vmatprep.subr.mxu0 0.0
  %139 = vmatpush1.msra.mxu0 0.0
  %140 = vmatprep.subr.mxu0 0.0
  %141 = vmatpush1.msra.mxu0 0.0
  %142 = vmatprep.subr.mxu0 0.0
  %143 = vmatpush1.msra.mxu0 0.0
  %144 = vmatprep.subr.mxu0 0.0
  %145 = vmatpush1.msra.mxu0 0.0
  %146 = vmatprep.subr.mxu0 0.0
  %147 = vmatpush1.msra.mxu0 0.0
  %148 = vmatprep.subr.mxu0 0.0
  %149 = vmatpush1.msra.mxu0 0.0
  %150 = vmatprep.subr.mxu0 0.0
  %151 = vmatpush1.msra.mxu0 0.0
  %152 = vmatprep.mubr.f32.mxu0 0.0
  %153 = vmatmul.mubr.f32.gmra.mrb[0].mxu0 %v41
  %v154 = vpop.f32.mrb[0].mxu0
  %v155 = vadd.f32 %v37, %v154
  %v156 = vpop.f32.mrb[0].mxu0
  %157 = vmatprep.mubr.f32.mxu0 0.0
  %158 = vmatmul.mubr.f32.gmra.mrb[0].mxu0 %v44
  %v159 = vpop.f32.mrb[0].mxu0
  %v160 = vadd.f32 %v37, %v159
  %v161 = vpop.f32.mrb[0].mxu0
  %162 = vmatprep.mubr.f32.mxu0 0.0
  %163 = vmatmul.mubr.f32.gmra.mrb[0].mxu0 %v47
  %v164 = vpop.f32.mrb[0].mxu0
  %v165 = vadd.f32 %v37, %v164
  %v166 = vpop.f32.mrb[0].mxu0
  %167 = vmatprep.mubr.f32.mxu0 0.0
  %168 = vmatmul.mubr.f32.gmra.mrb[0].mxu0 %v50
  %v169 = vpop.f32.mrb[0].mxu0
  %v170 = vadd.f32 %v37, %v169
  %v171 = vpop.f32.mrb[0].mxu0
  %172 = vmatprep.mubr.f32.mxu0 0.0
  %173 = vmatmul.mubr.f32.gmra.mrb[0].mxu0 %v53
  %v174 = vpop.f32.mrb[0].mxu0
  %v175 = vadd.f32 %v37, %v174
  %v176 = vpop.f32.mrb[0].mxu0
  %177 = vmatprep.mubr.f32.mxu0 0.0
  %178 = vmatmul.mubr.f32.gmra.mrb[0].mxu0 %v56
  %v179 = vpop.f32.mrb[0].mxu0
  %v180 = vadd.f32 %v37, %v179
  %v181 = vpop.f32.mrb[0].mxu0
  %182 = vmatprep.mubr.f32.mxu0 0.0
  %183 = vmatmul.mubr.f32.gmra.mrb[0].mxu0 %v59
  %v184 = vpop.f32.mrb[0].mxu0
  %v185 = vadd.f32 %v37, %v184
  %v186 = vpop.f32.mrb[0].mxu0
  %187 = vmatprep.mubr.f32.mxu0 0.0
  %188 = vmatmul.mubr.f32.gmra.mrb[0].mxu0 %v62
  %v189 = vpop.f32.mrb[0].mxu0
  %v190 = vadd.f32 %v37, %v189
  %v191 = vpop.f32.mrb[0].mxu0
  %192 = vmatprep.mubr.f32.mxu0 0.0
  %193 = vmatmul.mubr.f32.gmra.mrb[0].mxu0 %v65
  %v194 = vpop.f32.mrb[0].mxu0
  %v195 = vadd.f32 %v37, %v194
  %v196 = vpop.f32.mrb[0].mxu0
  %197 = vmatprep.mubr.f32.mxu0 0.0
  %198 = vmatmul.mubr.f32.gmra.mrb[0].mxu0 %v68
  %v199 = vpop.f32.mrb[0].mxu0
  %v200 = vadd.f32 %v37, %v199
  %v201 = vpop.f32.mrb[0].mxu0
  %202 = vmatprep.mubr.f32.mxu0 0.0
  %203 = vmatmul.mubr.f32.gmra.mrb[0].mxu0 %v71
  %v204 = vpop.f32.mrb[0].mxu0
  %v205 = vadd.f32 %v37, %v204
  %v206 = vpop.f32.mrb[0].mxu0
  %207 = vmatprep.mubr.f32.mxu0 0.0
  %208 = vmatmul.mubr.f32.gmra.mrb[0].mxu0 %v74
  %v209 = vpop.f32.mrb[0].mxu0
  %v210 = vadd.f32 %v37, %v209
  %v211 = vpop.f32.mrb[0].mxu0
  %212 = vmatprep.mubr.f32.mxu0 0.0
  %213 = vmatmul.mubr.f32.gmra.mrb[0].mxu0 %v77
  %v214 = vpop.f32.mrb[0].mxu0
  %v215 = vadd.f32 %v37, %v214
  %v216 = vpop.f32.mrb[0].mxu0
  %217 = vmatprep.mubr.f32.mxu0 0.0
  %218 = vmatmul.mubr.f32.gmra.mrb[0].mxu0 %v80
  %v219 = vpop.f32.mrb[0].mxu0
  %v220 = vadd.f32 %v37, %v219
  %v221 = vpop.f32.mrb[0].mxu0
  %222 = vmatprep.mubr.f32.mxu0 0.0
  %223 = vmatmul.mubr.f32.gmra.mrb[0].mxu0 %v83
  %v224 = vpop.f32.mrb[0].mxu0
  %v225 = vadd.f32 %v37, %v224
  %v226 = vpop.f32.mrb[0].mxu0
  %227 = vmatprep.mubr.f32.mxu0 0.0
  %228 = vmatmul.mubr.f32.gmra.mrb[0].mxu0 %v86
  %v229 = vpop.f32.mrb[0].mxu0
  %v230 = vadd.f32 %v37, %v229
  %v231 = vpop.f32.mrb[0].mxu0
  %232 = vdwg.mxu0
  %vm233 = vcmask 785408
  %234 = vst.msk [vmem:[%s3] sm:$0xff] %vm233, %v155
  %235 = vst.msk [vmem:[%s3 + $0x8] sm:$0xff] %vm233, %v160
  %236 = vst.msk [vmem:[%s3 + $0x10] sm:$0xff] %vm233, %v165
  %237 = vst.msk [vmem:[%s3 + $0x18] sm:$0xff] %vm233, %v170
  %238 = vst.msk [vmem:[%s3 + $0x20] sm:$0xff] %vm233, %v175
  %239 = vst.msk [vmem:[%s3 + $0x28] sm:$0xff] %vm233, %v180
  %240 = vst.msk [vmem:[%s3 + $0x30] sm:$0xff] %vm233, %v185
  %241 = vst.msk [vmem:[%s3 + $0x38] sm:$0xff] %vm233, %v190
  %242 = vst.msk [vmem:[%s3 + $0x40] sm:$0xff] %vm233, %v195
  %243 = vst.msk [vmem:[%s3 + $0x48] sm:$0xff] %vm233, %v200
  %244 = vst.msk [vmem:[%s3 + $0x50] sm:$0xff] %vm233, %v205
  %245 = vst.msk [vmem:[%s3 + $0x58] sm:$0xff] %vm233, %v210
  %246 = vst.msk [vmem:[%s3 + $0x60] sm:$0xff] %vm233, %v215
  %247 = vst.msk [vmem:[%s3 + $0x68] sm:$0xff] %vm233, %v220
  %248 = vst.msk [vmem:[%s3 + $0x70] sm:$0xff] %vm233, %v225
  %249 = vst.msk [vmem:[%s3 + $0x78] sm:$0xff] %vm233, %v230
  // Predicated region
  $region14: #{stream_gridnet_block.16} parent=0 // pred_check
    _
  $region15: #{stream_gridnet_block.16} parent=0 // pred_check_branch
    %251 = sbr.rel (0) target = $region17
  $region16: #{stream_gridnet_block.16} parent=0 // pred_region
    _
  $region17: #{stream_gridnet_block.16} parent=0 // pred_fallthru
    _
  // Predicated region
  $region18: #{stream_gridnet_block.16} parent=0 // pred_check
    _
  $region19: #{stream_gridnet_block.16} parent=0 // pred_check_branch
    %253 = sbr.rel (0) target = $region21
  $region20: #{stream_gridnet_block.16} parent=0 // pred_region
    _
  $region21: #{stream_gridnet_block.16} parent=0 // pred_fallthru
    _

// kernel: stream_gridnet_block.18
$region0: #{stream_gridnet_block.18}
  #allocation0 [shape = 'u32[]', space=smem, size = 0x4, offset = 0x4, fixed_abs, tag = 'smem constant byte address 0x4 - core index']
  #allocation1 [shape = 'u32[144,128]{1,0:T(1,128)}', space=vmem, size = 0x12000, scoped, tag = 'internal scratch']
  %s0 = inlined_call_operand.vmem [shape: f32[128,32], index: 0, kind: input, shape index: {}]
  %s1 = inlined_call_operand.vmem [shape: f32[32,16], index: 1, kind: input, shape index: {}]
  %s2 = inlined_call_operand.vmem [shape: f32[1,16], index: 2, kind: input, shape index: {}]
  %s3 = inlined_call_operand.vmem [shape: f32[128,16], index: 3, kind: output, shape index: {}]
  %s4 = sld [smem:[#allocation0]]
  $region22: #{stream_gridnet_block.18} parent=0
    _
  %s6 = ssub.s32 1, %s4
  %s7 = scalar_select 0, %s6, %s4
  // Predicated region
  $region2: #{stream_gridnet_block.18} parent=0 // pred_check
    _
  $region3: #{stream_gridnet_block.18} parent=0 // pred_check_branch
    %9 = sbr.rel (0) target = $region5
  $region4: #{stream_gridnet_block.18} parent=0 // pred_region
    _
  $region5: #{stream_gridnet_block.18} parent=0 // pred_fallthru
    _
  // Predicated region
  $region6: #{stream_gridnet_block.18} parent=0 // pred_check
    _
  $region7: #{stream_gridnet_block.18} parent=0 // pred_check_branch
    %11 = sbr.rel (0) target = $region9
  $region8: #{stream_gridnet_block.18} parent=0 // pred_region
    _
  $region9: #{stream_gridnet_block.18} parent=0 // pred_fallthru
    _
  // Predicated region
  $region10: #{stream_gridnet_block.18} parent=0 // pred_check
    _
  $region11: #{stream_gridnet_block.18} parent=0 // pred_check_branch
    %13 = sbr.rel (0) target = $region13
  $region12: #{stream_gridnet_block.18} parent=0 // pred_region
    _
  $region13: #{stream_gridnet_block.18} parent=0 // pred_fallthru
    _
  %v14 = vld [vmem:[%s0] sm:$0xff]
  %v15 = vld [vmem:[%s0 + $0x8] sm:$0xff]
  %v16 = vld [vmem:[%s0 + $0x10] sm:$0xff]
  %v17 = vld [vmem:[%s0 + $0x18] sm:$0xff]
  %v18 = vld [vmem:[%s0 + $0x20] sm:$0xff]
  %v19 = vld [vmem:[%s0 + $0x28] sm:$0xff]
  %v20 = vld [vmem:[%s0 + $0x30] sm:$0xff]
  %v21 = vld [vmem:[%s0 + $0x38] sm:$0xff]
  %v22 = vld [vmem:[%s0 + $0x40] sm:$0xff]
  %v23 = vld [vmem:[%s0 + $0x48] sm:$0xff]
  %v24 = vld [vmem:[%s0 + $0x50] sm:$0xff]
  %v25 = vld [vmem:[%s0 + $0x58] sm:$0xff]
  %v26 = vld [vmem:[%s0 + $0x60] sm:$0xff]
  %v27 = vld [vmem:[%s0 + $0x68] sm:$0xff]
  %v28 = vld [vmem:[%s0 + $0x70] sm:$0xff]
  %v29 = vld [vmem:[%s0 + $0x78] sm:$0xff]
  %v30 = vld [vmem:[%s1] sm:$0xff]
  %v31 = vld [vmem:[%s1 + $0x8] sm:$0xff]
  %v32 = vld [vmem:[%s1 + $0x10] sm:$0xff]
  %v33 = vld [vmem:[%s1 + $0x18] sm:$0xff]
  %v34 = vld [vmem:[%s2] sm:$0x1]
  %v36 = vlaneseq
  %v37 = vshrl.u32 %v36, 7
  %v38 = vsub.s32 0, %v37
  %v39 = vrot.slane %v34, %v38
  %vm41 = vcmask 261120
  %v43 = vsel %vm41, %v14, 0
  %v46 = vsel %vm41, %v15, 0
  %v49 = vsel %vm41, %v16, 0
  %v52 = vsel %vm41, %v17, 0
  %v55 = vsel %vm41, %v18, 0
  %v58 = vsel %vm41, %v19, 0
  %v61 = vsel %vm41, %v20, 0
  %v64 = vsel %vm41, %v21, 0
  %v67 = vsel %vm41, %v22, 0
  %v70 = vsel %vm41, %v23, 0
  %v73 = vsel %vm41, %v24, 0
  %v76 = vsel %vm41, %v25, 0
  %v79 = vsel %vm41, %v26, 0
  %v82 = vsel %vm41, %v27, 0
  %v85 = vsel %vm41, %v28, 0
  %v88 = vsel %vm41, %v29, 0
  %90 = vmatprep.subr.mxu0 0.0
  %91 = vmatpush1.msra.mxu0 %v30
  %92 = vmatprep.subr.mxu0 0.0
  %93 = vmatpush1.msra.mxu0 %v31
  %94 = vmatprep.subr.mxu0 0.0
  %95 = vmatpush1.msra.mxu0 %v32
  %96 = vmatprep.subr.mxu0 0.0
  %97 = vmatpush1.msra.mxu0 %v33
  %98 = vmatprep.subr.mxu0 0.0
  %99 = vmatpush1.msra.mxu0 0.0
  %100 = vmatprep.subr.mxu0 0.0
  %101 = vmatpush1.msra.mxu0 0.0
  %102 = vmatprep.subr.mxu0 0.0
  %103 = vmatpush1.msra.mxu0 0.0
  %104 = vmatprep.subr.mxu0 0.0
  %105 = vmatpush1.msra.mxu0 0.0
  %106 = vmatprep.subr.mxu0 0.0
  %107 = vmatpush1.msra.mxu0 0.0
  %108 = vmatprep.subr.mxu0 0.0
  %109 = vmatpush1.msra.mxu0 0.0
  %110 = vmatprep.subr.mxu0 0.0
  %111 = vmatpush1.msra.mxu0 0.0
  %112 = vmatprep.subr.mxu0 0.0
  %113 = vmatpush1.msra.mxu0 0.0
  %114 = vmatprep.subr.mxu0 0.0
  %115 = vmatpush1.msra.mxu0 0.0
  %116 = vmatprep.subr.mxu0 0.0
  %117 = vmatpush1.msra.mxu0 0.0
  %118 = vmatprep.subr.mxu0 0.0
  %119 = vmatpush1.msra.mxu0 0.0
  %120 = vmatprep.subr.mxu0 0.0
  %121 = vmatpush1.msra.mxu0 0.0
  %122 = vmatprep.subr.mxu0 0.0
  %123 = vmatpush1.msra.mxu0 0.0
  %124 = vmatprep.subr.mxu0 0.0
  %125 = vmatpush1.msra.mxu0 0.0
  %126 = vmatprep.subr.mxu0 0.0
  %127 = vmatpush1.msra.mxu0 0.0
  %128 = vmatprep.subr.mxu0 0.0
  %129 = vmatpush1.msra.mxu0 0.0
  %130 = vmatprep.subr.mxu0 0.0
  %131 = vmatpush1.msra.mxu0 0.0
  %132 = vmatprep.subr.mxu0 0.0
  %133 = vmatpush1.msra.mxu0 0.0
  %134 = vmatprep.subr.mxu0 0.0
  %135 = vmatpush1.msra.mxu0 0.0
  %136 = vmatprep.subr.mxu0 0.0
  %137 = vmatpush1.msra.mxu0 0.0
  %138 = vmatprep.subr.mxu0 0.0
  %139 = vmatpush1.msra.mxu0 0.0
  %140 = vmatprep.subr.mxu0 0.0
  %141 = vmatpush1.msra.mxu0 0.0
  %142 = vmatprep.subr.mxu0 0.0
  %143 = vmatpush1.msra.mxu0 0.0
  %144 = vmatprep.subr.mxu0 0.0
  %145 = vmatpush1.msra.mxu0 0.0
  %146 = vmatprep.subr.mxu0 0.0
  %147 = vmatpush1.msra.mxu0 0.0
  %148 = vmatprep.subr.mxu0 0.0
  %149 = vmatpush1.msra.mxu0 0.0
  %150 = vmatprep.subr.mxu0 0.0
  %151 = vmatpush1.msra.mxu0 0.0
  %152 = vmatprep.subr.mxu0 0.0
  %153 = vmatpush1.msra.mxu0 0.0
  %154 = vmatprep.mubr.f32.mxu0 0.0
  %155 = vmatmul.mubr.f32.gmra.mrb[0].mxu0 %v43
  %v156 = vpop.f32.mrb[0].mxu0
  %v157 = vadd.f32 %v39, %v156
  %v158 = vpop.f32.mrb[0].mxu0
  %159 = vmatprep.mubr.f32.mxu0 0.0
  %160 = vmatmul.mubr.f32.gmra.mrb[0].mxu0 %v46
  %v161 = vpop.f32.mrb[0].mxu0
  %v162 = vadd.f32 %v39, %v161
  %v163 = vpop.f32.mrb[0].mxu0
  %164 = vmatprep.mubr.f32.mxu0 0.0
  %165 = vmatmul.mubr.f32.gmra.mrb[0].mxu0 %v49
  %v166 = vpop.f32.mrb[0].mxu0
  %v167 = vadd.f32 %v39, %v166
  %v168 = vpop.f32.mrb[0].mxu0
  %169 = vmatprep.mubr.f32.mxu0 0.0
  %170 = vmatmul.mubr.f32.gmra.mrb[0].mxu0 %v52
  %v171 = vpop.f32.mrb[0].mxu0
  %v172 = vadd.f32 %v39, %v171
  %v173 = vpop.f32.mrb[0].mxu0
  %174 = vmatprep.mubr.f32.mxu0 0.0
  %175 = vmatmul.mubr.f32.gmra.mrb[0].mxu0 %v55
  %v176 = vpop.f32.mrb[0].mxu0
  %v177 = vadd.f32 %v39, %v176
  %v178 = vpop.f32.mrb[0].mxu0
  %179 = vmatprep.mubr.f32.mxu0 0.0
  %180 = vmatmul.mubr.f32.gmra.mrb[0].mxu0 %v58
  %v181 = vpop.f32.mrb[0].mxu0
  %v182 = vadd.f32 %v39, %v181
  %v183 = vpop.f32.mrb[0].mxu0
  %184 = vmatprep.mubr.f32.mxu0 0.0
  %185 = vmatmul.mubr.f32.gmra.mrb[0].mxu0 %v61
  %v186 = vpop.f32.mrb[0].mxu0
  %v187 = vadd.f32 %v39, %v186
  %v188 = vpop.f32.mrb[0].mxu0
  %189 = vmatprep.mubr.f32.mxu0 0.0
  %190 = vmatmul.mubr.f32.gmra.mrb[0].mxu0 %v64
  %v191 = vpop.f32.mrb[0].mxu0
  %v192 = vadd.f32 %v39, %v191
  %v193 = vpop.f32.mrb[0].mxu0
  %194 = vmatprep.mubr.f32.mxu0 0.0
  %195 = vmatmul.mubr.f32.gmra.mrb[0].mxu0 %v67
  %v196 = vpop.f32.mrb[0].mxu0
  %v197 = vadd.f32 %v39, %v196
  %v198 = vpop.f32.mrb[0].mxu0
  %199 = vmatprep.mubr.f32.mxu0 0.0
  %200 = vmatmul.mubr.f32.gmra.mrb[0].mxu0 %v70
  %v201 = vpop.f32.mrb[0].mxu0
  %v202 = vadd.f32 %v39, %v201
  %v203 = vpop.f32.mrb[0].mxu0
  %204 = vmatprep.mubr.f32.mxu0 0.0
  %205 = vmatmul.mubr.f32.gmra.mrb[0].mxu0 %v73
  %v206 = vpop.f32.mrb[0].mxu0
  %v207 = vadd.f32 %v39, %v206
  %v208 = vpop.f32.mrb[0].mxu0
  %209 = vmatprep.mubr.f32.mxu0 0.0
  %210 = vmatmul.mubr.f32.gmra.mrb[0].mxu0 %v76
  %v211 = vpop.f32.mrb[0].mxu0
  %v212 = vadd.f32 %v39, %v211
  %v213 = vpop.f32.mrb[0].mxu0
  %214 = vmatprep.mubr.f32.mxu0 0.0
  %215 = vmatmul.mubr.f32.gmra.mrb[0].mxu0 %v79
  %v216 = vpop.f32.mrb[0].mxu0
  %v217 = vadd.f32 %v39, %v216
  %v218 = vpop.f32.mrb[0].mxu0
  %219 = vmatprep.mubr.f32.mxu0 0.0
  %220 = vmatmul.mubr.f32.gmra.mrb[0].mxu0 %v82
  %v221 = vpop.f32.mrb[0].mxu0
  %v222 = vadd.f32 %v39, %v221
  %v223 = vpop.f32.mrb[0].mxu0
  %224 = vmatprep.mubr.f32.mxu0 0.0
  %225 = vmatmul.mubr.f32.gmra.mrb[0].mxu0 %v85
  %v226 = vpop.f32.mrb[0].mxu0
  %v227 = vadd.f32 %v39, %v226
  %v228 = vpop.f32.mrb[0].mxu0
  %229 = vmatprep.mubr.f32.mxu0 0.0
  %230 = vmatmul.mubr.f32.gmra.mrb[0].mxu0 %v88
  %v231 = vpop.f32.mrb[0].mxu0
  %v232 = vadd.f32 %v39, %v231
  %v233 = vpop.f32.mrb[0].mxu0
  %234 = vdwg.mxu0
  %vm235 = vcmask 130048
  %236 = vst.msk [vmem:[%s3] sm:$0xff] %vm235, %v157
  %237 = vst.msk [vmem:[%s3 + $0x8] sm:$0xff] %vm235, %v162
  %238 = vst.msk [vmem:[%s3 + $0x10] sm:$0xff] %vm235, %v167
  %239 = vst.msk [vmem:[%s3 + $0x18] sm:$0xff] %vm235, %v172
  %240 = vst.msk [vmem:[%s3 + $0x20] sm:$0xff] %vm235, %v177
  %241 = vst.msk [vmem:[%s3 + $0x28] sm:$0xff] %vm235, %v182
  %242 = vst.msk [vmem:[%s3 + $0x30] sm:$0xff] %vm235, %v187
  %243 = vst.msk [vmem:[%s3 + $0x38] sm:$0xff] %vm235, %v192
  %244 = vst.msk [vmem:[%s3 + $0x40] sm:$0xff] %vm235, %v197
  %245 = vst.msk [vmem:[%s3 + $0x48] sm:$0xff] %vm235, %v202
  %246 = vst.msk [vmem:[%s3 + $0x50] sm:$0xff] %vm235, %v207
  %247 = vst.msk [vmem:[%s3 + $0x58] sm:$0xff] %vm235, %v212
  %248 = vst.msk [vmem:[%s3 + $0x60] sm:$0xff] %vm235, %v217
  %249 = vst.msk [vmem:[%s3 + $0x68] sm:$0xff] %vm235, %v222
  %250 = vst.msk [vmem:[%s3 + $0x70] sm:$0xff] %vm235, %v227
  %251 = vst.msk [vmem:[%s3 + $0x78] sm:$0xff] %vm235, %v232
  // Predicated region
  $region14: #{stream_gridnet_block.18} parent=0 // pred_check
    _
  $region15: #{stream_gridnet_block.18} parent=0 // pred_check_branch
    %253 = sbr.rel (0) target = $region17
  $region16: #{stream_gridnet_block.18} parent=0 // pred_region
    _
  $region17: #{stream_gridnet_block.18} parent=0 // pred_fallthru
    _
  // Predicated region
  $region18: #{stream_gridnet_block.18} parent=0 // pred_check
    _
  $region19: #{stream_gridnet_block.18} parent=0 // pred_check_branch
    %255 = sbr.rel (0) target = $region21
  $region20: #{stream_gridnet_block.18} parent=0 // pred_region
    _
  $region21: #{stream_gridnet_block.18} parent=0 // pred_fallthru
    _

// kernel: stream_gridnet_block.17
$region0: #{stream_gridnet_block.17}
  #allocation0 [shape = 'u32[]', space=smem, size = 0x4, offset = 0x4, fixed_abs, tag = 'smem constant byte address 0x4 - core index']
  #allocation1 [shape = 'u32[144,128]{1,0:T(1,128)}', space=vmem, size = 0x12000, scoped, tag = 'internal scratch']
  %s0 = inlined_call_operand.vmem [shape: f32[8,16,96], index: 0, kind: input, shape index: {}]
  %s1 = inlined_call_operand.vmem [shape: f32[32,96], index: 1, kind: input, shape index: {}]
  %s2 = inlined_call_operand.vmem [shape: f32[1,96], index: 2, kind: input, shape index: {}]
  %s3 = inlined_call_operand.vmem [shape: f32[16,32], index: 3, kind: input, shape index: {}]
  %s4 = inlined_call_operand.vmem [shape: f32[8,16,32], index: 4, kind: output, shape index: {0}]
  %s5 = inlined_call_operand.hbm [shape: f32[16,32], index: 5, kind: output, shape index: {1}]
  %6 = xla_tuple %s4, %s5
  %s7 = sld [smem:[#allocation0]]
  $region34: #{stream_gridnet_block.17} parent=0
    _
  %s9 = ssub.s32 1, %s7
  %s10 = scalar_select 0, %s9, %s7
  $region1: #{stream_gridnet_block.17} parent=0
    #allocation2 [shape = 'u8[8192]{0}', space=vmem, size = 0x2000, scoped, tag = 'output window, operand 1, single buffered']
    #allocation3 [shape = 's32[1]{0}', space=sflag, size = 0x4, scoped, tag = 'scoped memory for stream_gridnet_block.17']
    %11 = vsyncpa [#allocation3], 0
    // Predicated region
    $region2: #{stream_gridnet_block.17} parent=1 // pred_check
      _
    $region3: #{stream_gridnet_block.17} parent=1 // pred_check_branch
      %13 = sbr.rel (0) target = $region5
    $region4: #{stream_gridnet_block.17} parent=1 // pred_region
      _
    $region5: #{stream_gridnet_block.17} parent=1 // pred_fallthru
      _
    // Predicated region
    $region6: #{stream_gridnet_block.17} parent=1 // pred_check
      _
    $region7: #{stream_gridnet_block.17} parent=1 // pred_check_branch
      %15 = sbr.rel (0) target = $region9
    $region8: #{stream_gridnet_block.17} parent=1 // pred_region
      _
    $region9: #{stream_gridnet_block.17} parent=1 // pred_fallthru
      _
    // Predicated region
    $region10: #{stream_gridnet_block.17} parent=1 // pred_check
      _
    $region11: #{stream_gridnet_block.17} parent=1 // pred_check_branch
      %17 = sbr.rel (0) target = $region13
    $region12: #{stream_gridnet_block.17} parent=1 // pred_region
      _
    $region13: #{stream_gridnet_block.17} parent=1 // pred_fallthru
      _
    // Predicated region
    $region14: #{stream_gridnet_block.17} parent=1 // pred_check
      _
    $region15: #{stream_gridnet_block.17} parent=1 // pred_check_branch
      %19 = sbr.rel (0) target = $region17
    $region16: #{stream_gridnet_block.17} parent=1 // pred_region
      _
    $region17: #{stream_gridnet_block.17} parent=1 // pred_fallthru
      _
    %v20 = vld [vmem:[%s3] sm:$0xff]
    %v21 = vld [vmem:[%s3 + $0x8] sm:$0xff]
    %v22 = vld [vmem:[%s1] sm:$0xff]
    %v23 = vld [vmem:[%s1 + $0x8] sm:$0xff]
    %v24 = vld [vmem:[%s1 + $0x10] sm:$0xff]
    %v25 = vld [vmem:[%s1 + $0x18] sm:$0xff]
    %v26 = vld [vmem:[%s2] sm:$0x1]
    %v28 = vlaneseq
    %v29 = vshrl.u32 %v28, 7
    %v30 = vsub.s32 0, %v29
    %v31 = vrot.slane %v26, %v30
    %vm33 = vcmask 261120
    %v35 = vsel %vm33, %v20, 0
    %v38 = vsel %vm33, %v21, 0
    %40 = vmatprep.subr.mxu0 0.0
    %41 = vmatpush1.msra.mxu0 %v22
    %42 = vmatprep.subr.mxu0 0.0
    %43 = vmatpush1.msra.mxu0 %v23
    %44 = vmatprep.subr.mxu0 0.0
    %45 = vmatpush1.msra.mxu0 %v24
    %46 = vmatprep.subr.mxu0 0.0
    %47 = vmatpush1.msra.mxu0 %v25
    %48 = vmatprep.subr.mxu0 0.0
    %49 = vmatpush1.msra.mxu0 0.0
    %50 = vmatprep.subr.mxu0 0.0
    %51 = vmatpush1.msra.mxu0 0.0
    %52 = vmatprep.subr.mxu0 0.0
    %53 = vmatpush1.msra.mxu0 0.0
    %54 = vmatprep.subr.mxu0 0.0
    %55 = vmatpush1.msra.mxu0 0.0
    %56 = vmatprep.subr.mxu0 0.0
    %57 = vmatpush1.msra.mxu0 0.0
    %58 = vmatprep.subr.mxu0 0.0
    %59 = vmatpush1.msra.mxu0 0.0
    %60 = vmatprep.subr.mxu0 0.0
    %61 = vmatpush1.msra.mxu0 0.0
    %62 = vmatprep.subr.mxu0 0.0
    %63 = vmatpush1.msra.mxu0 0.0
    %64 = vmatprep.subr.mxu0 0.0
    %65 = vmatpush1.msra.mxu0 0.0
    %66 = vmatprep.subr.mxu0 0.0
    %67 = vmatpush1.msra.mxu0 0.0
    %68 = vmatprep.subr.mxu0 0.0
    %69 = vmatpush1.msra.mxu0 0.0
    %70 = vmatprep.subr.mxu0 0.0
    %71 = vmatpush1.msra.mxu0 0.0
    %72 = vmatprep.subr.mxu0 0.0
    %73 = vmatpush1.msra.mxu0 0.0
    %74 = vmatprep.subr.mxu0 0.0
    %75 = vmatpush1.msra.mxu0 0.0
    %76 = vmatprep.subr.mxu0 0.0
    %77 = vmatpush1.msra.mxu0 0.0
    %78 = vmatprep.subr.mxu0 0.0
    %79 = vmatpush1.msra.mxu0 0.0
    %80 = vmatprep.subr.mxu0 0.0
    %81 = vmatpush1.msra.mxu0 0.0
    %82 = vmatprep.subr.mxu0 0.0
    %83 = vmatpush1.msra.mxu0 0.0
    %84 = vmatprep.subr.mxu0 0.0
    %85 = vmatpush1.msra.mxu0 0.0
    %86 = vmatprep.subr.mxu0 0.0
    %87 = vmatpush1.msra.mxu0 0.0
    %88 = vmatprep.subr.mxu0 0.0
    %89 = vmatpush1.msra.mxu0 0.0
    %90 = vmatprep.subr.mxu0 0.0
    %91 = vmatpush1.msra.mxu0 0.0
    %92 = vmatprep.subr.mxu0 0.0
    %93 = vmatpush1.msra.mxu0 0.0
    %94 = vmatprep.subr.mxu0 0.0
    %95 = vmatpush1.msra.mxu0 0.0
    %96 = vmatprep.subr.mxu0 0.0
    %97 = vmatpush1.msra.mxu0 0.0
    %98 = vmatprep.subr.mxu0 0.0
    %99 = vmatpush1.msra.mxu0 0.0
    %100 = vmatprep.subr.mxu0 0.0
    %101 = vmatpush1.msra.mxu0 0.0
    %102 = vmatprep.subr.mxu0 0.0
    %103 = vmatpush1.msra.mxu0 0.0
    %104 = vmatprep.mubr.f32.mxu0 0.0
    %105 = vmatmul.mubr.f32.gmra.mrb[0].mxu0 %v35
    %v106 = vpop.f32.mrb[0].mxu0
    %v107 = vadd.f32 %v31, %v106
    %v108 = vpop.f32.mrb[0].mxu0
    %109 = vmatprep.mubr.f32.mxu0 0.0
    %110 = vmatmul.mubr.f32.gmra.mrb[0].mxu0 %v38
    %v111 = vpop.f32.mrb[0].mxu0
    %v112 = vadd.f32 %v31, %v111
    %v113 = vpop.f32.mrb[0].mxu0
    %114 = vdwg.mxu0
    %v115 = vld [vmem:[%s0] sm:$0xff]
    %v116 = vld [vmem:[%s0 + $0x8] sm:$0xff]
    %v117 = vadd.f32 %v115, %v107
    %v118 = vadd.f32 %v116, %v112
    %v119 = vxor.u32 %v117, 2147483648
    %v120 = vxor.u32 %v118, 2147483648
    %v121 = vmul.f32 %v119, 1.442695
    %v122 = vpow.pop %v121
    %v123 = vmul.f32 %v120, 1.442695
    %v124 = vpow.pop %v123
    %v125 = vadd.f32 %v122, 1.0
    %v126 = vadd.f32 %v124, 1.0
    %v127 = vrcp.pop %v125
    %v128 = vmul.f32 1.0, %v127
    %v129 = vrcp.pop %v126
    %v130 = vmul.f32 1.0, %v129
    %133 = vrot.lane.b32.xlu0 %v107, 64
    %v134 = vpop.permute.xlu0 %133
    %135 = vrot.lane.b32.xlu0 %v112, 64
    %v136 = vpop.permute.xlu0 %135
    %v139 = vmul.f32 %v128, %v134
    %v140 = vmul.f32 %v130, %v136
    %143 = vrot.lane.b32.xlu0 %v139, 64
    %v144 = vpop.permute.xlu0 %143
    %145 = vrot.lane.b32.xlu0 %v140, 64
    %v146 = vpop.permute.xlu0 %145
    %v149 = vadd.f32 %v115, %v144
    %v150 = vadd.f32 %v116, %v146
    %v151 = vtanh.pop %v149
    %v152 = vtanh.pop %v150
    %v153 = vsub.f32 1.0, %v128
    %v154 = vsub.f32 1.0, %v130
    %157 = vrot.lane.b32.xlu0 %v151, 96
    %v158 = vpop.permute.xlu0 %157
    %159 = vrot.lane.b32.xlu0 %v152, 96
    %v160 = vpop.permute.xlu0 %159
    %v163 = vmul.f32 %v153, %v158
    %v164 = vmul.f32 %v154, %v160
    %165 = vrot.lane.b32.xlu0 %v20, 32
    %v166 = vpop.permute.xlu0 %165
    %167 = vrot.lane.b32.xlu0 %v21, 32
    %v168 = vpop.permute.xlu0 %167
    %v171 = vmul.f32 %v128, %v166
    %v172 = vmul.f32 %v130, %v168
    %v173 = vadd.f32 %v163, %v171
    %v174 = vadd.f32 %v164, %v172
    %177 = vrot.lane.b32.xlu0 %v173, 96
    %v178 = vpop.permute.xlu0 %177
    %179 = vrot.lane.b32.xlu0 %v174, 96
    %v180 = vpop.permute.xlu0 %179
    %183 = vst.msk [vmem:[%s4] sm:$0xff] %vm33, %v178
    %184 = vst.msk [vmem:[%s4 + $0x8] sm:$0xff] %vm33, %v180
    %v185 = vld [vmem:[%s1] sm:$0xff]
    %v186 = vld [vmem:[%s1 + $0x8] sm:$0xff]
    %v187 = vld [vmem:[%s1 + $0x10] sm:$0xff]
    %v188 = vld [vmem:[%s1 + $0x18] sm:$0xff]
    %v189 = vld [vmem:[%s2] sm:$0x1]
    %v191 = vlaneseq
    %v192 = vshrl.u32 %v191, 7
    %v193 = vsub.s32 0, %v192
    %v194 = vrot.slane %v189, %v193
    %v196 = vsel %vm33, %v178, 0
    %v198 = vsel %vm33, %v180, 0
    %200 = vmatprep.subr.mxu0 0.0
    %201 = vmatpush1.msra.mxu0 %v185
    %202 = vmatprep.subr.mxu0 0.0
    %203 = vmatpush1.msra.mxu0 %v186
    %204 = vmatprep.subr.mxu0 0.0
    %205 = vmatpush1.msra.mxu0 %v187
    %206 = vmatprep.subr.mxu0 0.0
    %207 = vmatpush1.msra.mxu0 %v188
    %208 = vmatprep.subr.mxu0 0.0
    %209 = vmatpush1.msra.mxu0 0.0
    %210 = vmatprep.subr.mxu0 0.0
    %211 = vmatpush1.msra.mxu0 0.0
    %212 = vmatprep.subr.mxu0 0.0
    %213 = vmatpush1.msra.mxu0 0.0
    %214 = vmatprep.subr.mxu0 0.0
    %215 = vmatpush1.msra.mxu0 0.0
    %216 = vmatprep.subr.mxu0 0.0
    %217 = vmatpush1.msra.mxu0 0.0
    %218 = vmatprep.subr.mxu0 0.0
    %219 = vmatpush1.msra.mxu0 0.0
    %220 = vmatprep.subr.mxu0 0.0
    %221 = vmatpush1.msra.mxu0 0.0
    %222 = vmatprep.subr.mxu0 0.0
    %223 = vmatpush1.msra.mxu0 0.0
    %224 = vmatprep.subr.mxu0 0.0
    %225 = vmatpush1.msra.mxu0 0.0
    %226 = vmatprep.subr.mxu0 0.0
    %227 = vmatpush1.msra.mxu0 0.0
    %228 = vmatprep.subr.mxu0 0.0
    %229 = vmatpush1.msra.mxu0 0.0
    %230 = vmatprep.subr.mxu0 0.0
    %231 = vmatpush1.msra.mxu0 0.0
    %232 = vmatprep.subr.mxu0 0.0
    %233 = vmatpush1.msra.mxu0 0.0
    %234 = vmatprep.subr.mxu0 0.0
    %235 = vmatpush1.msra.mxu0 0.0
    %236 = vmatprep.subr.mxu0 0.0
    %237 = vmatpush1.msra.mxu0 0.0
    %238 = vmatprep.subr.mxu0 0.0
    %239 = vmatpush1.msra.mxu0 0.0
    %240 = vmatprep.subr.mxu0 0.0
    %241 = vmatpush1.msra.mxu0 0.0
    %242 = vmatprep.subr.mxu0 0.0
    %243 = vmatpush1.msra.mxu0 0.0
    %244 = vmatprep.subr.mxu0 0.0
    %245 = vmatpush1.msra.mxu0 0.0
    %246 = vmatprep.subr.mxu0 0.0
    %247 = vmatpush1.msra.mxu0 0.0
    %248 = vmatprep.subr.mxu0 0.0
    %249 = vmatpush1.msra.mxu0 0.0
    %250 = vmatprep.subr.mxu0 0.0
    %251 = vmatpush1.msra.mxu0 0.0
    %252 = vmatprep.subr.mxu0 0.0
    %253 = vmatpush1.msra.mxu0 0.0
    %254 = vmatprep.subr.mxu0 0.0
    %255 = vmatpush1.msra.mxu0 0.0
    %256 = vmatprep.subr.mxu0 0.0
    %257 = vmatpush1.msra.mxu0 0.0
    %258 = vmatprep.subr.mxu0 0.0
    %259 = vmatpush1.msra.mxu0 0.0
    %260 = vmatprep.subr.mxu0 0.0
    %261 = vmatpush1.msra.mxu0 0.0
    %262 = vmatprep.subr.mxu0 0.0
    %263 = vmatpush1.msra.mxu0 0.0
    %264 = vmatprep.mubr.f32.mxu0 0.0
    %265 = vmatmul.mubr.f32.gmra.mrb[0].mxu0 %v196
    %v266 = vpop.f32.mrb[0].mxu0
    %v267 = vadd.f32 %v194, %v266
    %v268 = vpop.f32.mrb[0].mxu0
    %269 = vmatprep.mubr.f32.mxu0 0.0
    %270 = vmatmul.mubr.f32.gmra.mrb[0].mxu0 %v198
    %v271 = vpop.f32.mrb[0].mxu0
    %v272 = vadd.f32 %v194, %v271
    %v273 = vpop.f32.mrb[0].mxu0
    %274 = vdwg.mxu0
    %s275 = scalar_lea.vmem %s0, 16
    %v276 = vld [vmem:[%s275] sm:$0xff]
    %v277 = vld [vmem:[%s275 + $0x8] sm:$0xff]
    %v278 = vadd.f32 %v276, %v267
    %v279 = vadd.f32 %v277, %v272
    %v280 = vxor.u32 %v278, 2147483648
    %v281 = vxor.u32 %v279, 2147483648
    %v282 = vmul.f32 %v280, 1.442695
    %v283 = vpow.pop %v282
    %v284 = vmul.f32 %v281, 1.442695
    %v285 = vpow.pop %v284
    %v286 = vadd.f32 %v283, 1.0
    %v287 = vadd.f32 %v285, 1.0
    %v288 = vrcp.pop %v286
    %v289 = vmul.f32 1.0, %v288
    %v290 = vrcp.pop %v287
    %v291 = vmul.f32 1.0, %v290
    %294 = vrot.lane.b32.xlu0 %v267, 64
    %v295 = vpop.permute.xlu0 %294
    %296 = vrot.lane.b32.xlu0 %v272, 64
    %v297 = vpop.permute.xlu0 %296
    %v300 = vmul.f32 %v289, %v295
    %v301 = vmul.f32 %v291, %v297
    %304 = vrot.lane.b32.xlu0 %v300, 64
    %v305 = vpop.permute.xlu0 %304
    %306 = vrot.lane.b32.xlu0 %v301, 64
    %v307 = vpop.permute.xlu0 %306
    %v310 = vadd.f32 %v276, %v305
    %v311 = vadd.f32 %v277, %v307
    %v312 = vtanh.pop %v310
    %v313 = vtanh.pop %v311
    %v314 = vsub.f32 1.0, %v289
    %v315 = vsub.f32 1.0, %v291
    %318 = vrot.lane.b32.xlu0 %v312, 96
    %v319 = vpop.permute.xlu0 %318
    %320 = vrot.lane.b32.xlu0 %v313, 96
    %v321 = vpop.permute.xlu0 %320
    %v324 = vmul.f32 %v314, %v319
    %v325 = vmul.f32 %v315, %v321
    %v326 = vmul.f32 %v289, %v173
    %v327 = vmul.f32 %v291, %v174
    %v328 = vadd.f32 %v324, %v326
    %v329 = vadd.f32 %v325, %v327
    %332 = vrot.lane.b32.xlu0 %v328, 96
    %v333 = vpop.permute.xlu0 %332
    %334 = vrot.lane.b32.xlu0 %v329, 96
    %v335 = vpop.permute.xlu0 %334
    %s338 = scalar_lea.vmem %s4, 16
    %339 = vst.msk [vmem:[%s338] sm:$0xff] %vm33, %v333
    %340 = vst.msk [vmem:[%s338 + $0x8] sm:$0xff] %vm33, %v335
    %v341 = vld [vmem:[%s1] sm:$0xff]
    %v342 = vld [vmem:[%s1 + $0x8] sm:$0xff]
    %v343 = vld [vmem:[%s1 + $0x10] sm:$0xff]
    %v344 = vld [vmem:[%s1 + $0x18] sm:$0xff]
    %v345 = vld [vmem:[%s2] sm:$0x1]
    %v347 = vlaneseq
    %v348 = vshrl.u32 %v347, 7
    %v349 = vsub.s32 0, %v348
    %v350 = vrot.slane %v345, %v349
    %v352 = vsel %vm33, %v333, 0
    %v354 = vsel %vm33, %v335, 0
    %356 = vmatprep.subr.mxu0 0.0
    %357 = vmatpush1.msra.mxu0 %v341
    %358 = vmatprep.subr.mxu0 0.0
    %359 = vmatpush1.msra.mxu0 %v342
    %360 = vmatprep.subr.mxu0 0.0
    %361 = vmatpush1.msra.mxu0 %v343
    %362 = vmatprep.subr.mxu0 0.0
    %363 = vmatpush1.msra.mxu0 %v344
    %364 = vmatprep.subr.mxu0 0.0
    %365 = vmatpush1.msra.mxu0 0.0
    %366 = vmatprep.subr.mxu0 0.0
    %367 = vmatpush1.msra.mxu0 0.0
    %368 = vmatprep.subr.mxu0 0.0
    %369 = vmatpush1.msra.mxu0 0.0
    %370 = vmatprep.subr.mxu0 0.0
    %371 = vmatpush1.msra.mxu0 0.0
    %372 = vmatprep.subr.mxu0 0.0
    %373 = vmatpush1.msra.mxu0 0.0
    %374 = vmatprep.subr.mxu0 0.0
    %375 = vmatpush1.msra.mxu0 0.0
    %376 = vmatprep.subr.mxu0 0.0
    %377 = vmatpush1.msra.mxu0 0.0
    %378 = vmatprep.subr.mxu0 0.0
    %379 = vmatpush1.msra.mxu0 0.0
    %380 = vmatprep.subr.mxu0 0.0
    %381 = vmatpush1.msra.mxu0 0.0
    %382 = vmatprep.subr.mxu0 0.0
    %383 = vmatpush1.msra.mxu0 0.0
    %384 = vmatprep.subr.mxu0 0.0
    %385 = vmatpush1.msra.mxu0 0.0
    %386 = vmatprep.subr.mxu0 0.0
    %387 = vmatpush1.msra.mxu0 0.0
    %388 = vmatprep.subr.mxu0 0.0
    %389 = vmatpush1.msra.mxu0 0.0
    %390 = vmatprep.subr.mxu0 0.0
    %391 = vmatpush1.msra.mxu0 0.0
    %392 = vmatprep.subr.mxu0 0.0
    %393 = vmatpush1.msra.mxu0 0.0
    %394 = vmatprep.subr.mxu0 0.0
    %395 = vmatpush1.msra.mxu0 0.0
    %396 = vmatprep.subr.mxu0 0.0
    %397 = vmatpush1.msra.mxu0 0.0
    %398 = vmatprep.subr.mxu0 0.0
    %399 = vmatpush1.msra.mxu0 0.0
    %400 = vmatprep.subr.mxu0 0.0
    %401 = vmatpush1.msra.mxu0 0.0
    %402 = vmatprep.subr.mxu0 0.0
    %403 = vmatpush1.msra.mxu0 0.0
    %404 = vmatprep.subr.mxu0 0.0
    %405 = vmatpush1.msra.mxu0 0.0
    %406 = vmatprep.subr.mxu0 0.0
    %407 = vmatpush1.msra.mxu0 0.0
    %408 = vmatprep.subr.mxu0 0.0
    %409 = vmatpush1.msra.mxu0 0.0
    %410 = vmatprep.subr.mxu0 0.0
    %411 = vmatpush1.msra.mxu0 0.0
    %412 = vmatprep.subr.mxu0 0.0
    %413 = vmatpush1.msra.mxu0 0.0
    %414 = vmatprep.subr.mxu0 0.0
    %415 = vmatpush1.msra.mxu0 0.0
    %416 = vmatprep.subr.mxu0 0.0
    %417 = vmatpush1.msra.mxu0 0.0
    %418 = vmatprep.subr.mxu0 0.0
    %419 = vmatpush1.msra.mxu0 0.0
    %420 = vmatprep.mubr.f32.mxu0 0.0
    %421 = vmatmul.mubr.f32.gmra.mrb[0].mxu0 %v352
    %v422 = vpop.f32.mrb[0].mxu0
    %v423 = vadd.f32 %v350, %v422
    %v424 = vpop.f32.mrb[0].mxu0
    %425 = vmatprep.mubr.f32.mxu0 0.0
    %426 = vmatmul.mubr.f32.gmra.mrb[0].mxu0 %v354
    %v427 = vpop.f32.mrb[0].mxu0
    %v428 = vadd.f32 %v350, %v427
    %v429 = vpop.f32.mrb[0].mxu0
    %430 = vdwg.mxu0
    %s431 = scalar_lea.vmem %s0, 32
    %v432 = vld [vmem:[%s431] sm:$0xff]
    %v433 = vld [vmem:[%s431 + $0x8] sm:$0xff]
    %v434 = vadd.f32 %v432, %v423
    %v435 = vadd.f32 %v433, %v428
    %v436 = vxor.u32 %v434, 2147483648
    %v437 = vxor.u32 %v435, 2147483648
    %v438 = vmul.f32 %v436, 1.442695
    %v439 = vpow.pop %v438
    %v440 = vmul.f32 %v437, 1.442695
    %v441 = vpow.pop %v440
    %v442 = vadd.f32 %v439, 1.0
    %v443 = vadd.f32 %v441, 1.0
    %v444 = vrcp.pop %v442
    %v445 = vmul.f32 1.0, %v444
    %v446 = vrcp.pop %v443
    %v447 = vmul.f32 1.0, %v446
    %450 = vrot.lane.b32.xlu0 %v423, 64
    %v451 = vpop.permute.xlu0 %450
    %452 = vrot.lane.b32.xlu0 %v428, 64
    %v453 = vpop.permute.xlu0 %452
    %v456 = vmul.f32 %v445, %v451
    %v457 = vmul.f32 %v447, %v453
    %460 = vrot.lane.b32.xlu0 %v456, 64
    %v461 = vpop.permute.xlu0 %460
    %462 = vrot.lane.b32.xlu0 %v457, 64
    %v463 = vpop.permute.xlu0 %462
    %v466 = vadd.f32 %v432, %v461
    %v467 = vadd.f32 %v433, %v463
    %v468 = vtanh.pop %v466
    %v469 = vtanh.pop %v467
    %v470 = vsub.f32 1.0, %v445
    %v471 = vsub.f32 1.0, %v447
    %474 = vrot.lane.b32.xlu0 %v468, 96
    %v475 = vpop.permute.xlu0 %474
    %476 = vrot.lane.b32.xlu0 %v469, 96
    %v477 = vpop.permute.xlu0 %476
    %v480 = vmul.f32 %v470, %v475
    %v481 = vmul.f32 %v471, %v477
    %v482 = vmul.f32 %v445, %v328
    %v483 = vmul.f32 %v447, %v329
    %v484 = vadd.f32 %v480, %v482
    %v485 = vadd.f32 %v481, %v483
    %488 = vrot.lane.b32.xlu0 %v484, 96
    %v489 = vpop.permute.xlu0 %488
    %490 = vrot.lane.b32.xlu0 %v485, 96
    %v491 = vpop.permute.xlu0 %490
    %s494 = scalar_lea.vmem %s4, 32
    %495 = vst.msk [vmem:[%s494] sm:$0xff] %vm33, %v489
    %496 = vst.msk [vmem:[%s494 + $0x8] sm:$0xff] %vm33, %v491
    %v497 = vld [vmem:[%s1] sm:$0xff]
    %v498 = vld [vmem:[%s1 + $0x8] sm:$0xff]
    %v499 = vld [vmem:[%s1 + $0x10] sm:$0xff]
    %v500 = vld [vmem:[%s1 + $0x18] sm:$0xff]
    %v501 = vld [vmem:[%s2] sm:$0x1]
    %v503 = vlaneseq
    %v504 = vshrl.u32 %v503, 7
    %v505 = vsub.s32 0, %v504
    %v506 = vrot.slane %v501, %v505
    %v508 = vsel %vm33, %v489, 0
    %v510 = vsel %vm33, %v491, 0
    %512 = vmatprep.subr.mxu0 0.0
    %513 = vmatpush1.msra.mxu0 %v497
    %514 = vmatprep.subr.mxu0 0.0
    %515 = vmatpush1.msra.mxu0 %v498
    %516 = vmatprep.subr.mxu0 0.0
    %517 = vmatpush1.msra.mxu0 %v499
    %518 = vmatprep.subr.mxu0 0.0
    %519 = vmatpush1.msra.mxu0 %v500
    %520 = vmatprep.subr.mxu0 0.0
    %521 = vmatpush1.msra.mxu0 0.0
    %522 = vmatprep.subr.mxu0 0.0
    %523 = vmatpush1.msra.mxu0 0.0
    %524 = vmatprep.subr.mxu0 0.0
    %525 = vmatpush1.msra.mxu0 0.0
    %526 = vmatprep.subr.mxu0 0.0
    %527 = vmatpush1.msra.mxu0 0.0
    %528 = vmatprep.subr.mxu0 0.0
    %529 = vmatpush1.msra.mxu0 0.0
    %530 = vmatprep.subr.mxu0 0.0
    %531 = vmatpush1.msra.mxu0 0.0
    %532 = vmatprep.subr.mxu0 0.0
    %533 = vmatpush1.msra.mxu0 0.0
    %534 = vmatprep.subr.mxu0 0.0
    %535 = vmatpush1.msra.mxu0 0.0
    %536 = vmatprep.subr.mxu0 0.0
    %537 = vmatpush1.msra.mxu0 0.0
    %538 = vmatprep.subr.mxu0 0.0
    %539 = vmatpush1.msra.mxu0 0.0
    %540 = vmatprep.subr.mxu0 0.0
    %541 = vmatpush1.msra.mxu0 0.0
    %542 = vmatprep.subr.mxu0 0.0
    %543 = vmatpush1.msra.mxu0 0.0
    %544 = vmatprep.subr.mxu0 0.0
    %545 = vmatpush1.msra.mxu0 0.0
    %546 = vmatprep.subr.mxu0 0.0
    %547 = vmatpush1.msra.mxu0 0.0
    %548 = vmatprep.subr.mxu0 0.0
    %549 = vmatpush1.msra.mxu0 0.0
    %550 = vmatprep.subr.mxu0 0.0
    %551 = vmatpush1.msra.mxu0 0.0
    %552 = vmatprep.subr.mxu0 0.0
    %553 = vmatpush1.msra.mxu0 0.0
    %554 = vmatprep.subr.mxu0 0.0
    %555 = vmatpush1.msra.mxu0 0.0
    %556 = vmatprep.subr.mxu0 0.0
    %557 = vmatpush1.msra.mxu0 0.0
    %558 = vmatprep.subr.mxu0 0.0
    %559 = vmatpush1.msra.mxu0 0.0
    %560 = vmatprep.subr.mxu0 0.0
    %561 = vmatpush1.msra.mxu0 0.0
    %562 = vmatprep.subr.mxu0 0.0
    %563 = vmatpush1.msra.mxu0 0.0
    %564 = vmatprep.subr.mxu0 0.0
    %565 = vmatpush1.msra.mxu0 0.0
    %566 = vmatprep.subr.mxu0 0.0
    %567 = vmatpush1.msra.mxu0 0.0
    %568 = vmatprep.subr.mxu0 0.0
    %569 = vmatpush1.msra.mxu0 0.0
    %570 = vmatprep.subr.mxu0 0.0
    %571 = vmatpush1.msra.mxu0 0.0
    %572 = vmatprep.subr.mxu0 0.0
    %573 = vmatpush1.msra.mxu0 0.0
    %574 = vmatprep.subr.mxu0 0.0
    %575 = vmatpush1.msra.mxu0 0.0
    %576 = vmatprep.mubr.f32.mxu0 0.0
    %577 = vmatmul.mubr.f32.gmra.mrb[0].mxu0 %v508
    %v578 = vpop.f32.mrb[0].mxu0
    %v579 = vadd.f32 %v506, %v578
    %v580 = vpop.f32.mrb[0].mxu0
    %581 = vmatprep.mubr.f32.mxu0 0.0
    %582 = vmatmul.mubr.f32.gmra.mrb[0].mxu0 %v510
    %v583 = vpop.f32.mrb[0].mxu0
    %v584 = vadd.f32 %v506, %v583
    %v585 = vpop.f32.mrb[0].mxu0
    %586 = vdwg.mxu0
    %s587 = scalar_lea.vmem %s0, 48
    %v588 = vld [vmem:[%s587] sm:$0xff]
    %v589 = vld [vmem:[%s587 + $0x8] sm:$0xff]
    %v590 = vadd.f32 %v588, %v579
    %v591 = vadd.f32 %v589, %v584
    %v592 = vxor.u32 %v590, 2147483648
    %v593 = vxor.u32 %v591, 2147483648
    %v594 = vmul.f32 %v592, 1.442695
    %v595 = vpow.pop %v594
    %v596 = vmul.f32 %v593, 1.442695
    %v597 = vpow.pop %v596
    %v598 = vadd.f32 %v595, 1.0
    %v599 = vadd.f32 %v597, 1.0
    %v600 = vrcp.pop %v598
    %v601 = vmul.f32 1.0, %v600
    %v602 = vrcp.pop %v599
    %v603 = vmul.f32 1.0, %v602
    %606 = vrot.lane.b32.xlu0 %v579, 64
    %v607 = vpop.permute.xlu0 %606
    %608 = vrot.lane.b32.xlu0 %v584, 64
    %v609 = vpop.permute.xlu0 %608
    %v612 = vmul.f32 %v601, %v607
    %v613 = vmul.f32 %v603, %v609
    %616 = vrot.lane.b32.xlu0 %v612, 64
    %v617 = vpop.permute.xlu0 %616
    %618 = vrot.lane.b32.xlu0 %v613, 64
    %v619 = vpop.permute.xlu0 %618
    %v622 = vadd.f32 %v588, %v617
    %v623 = vadd.f32 %v589, %v619
    %v624 = vtanh.pop %v622
    %v625 = vtanh.pop %v623
    %v626 = vsub.f32 1.0, %v601
    %v627 = vsub.f32 1.0, %v603
    %630 = vrot.lane.b32.xlu0 %v624, 96
    %v631 = vpop.permute.xlu0 %630
    %632 = vrot.lane.b32.xlu0 %v625, 96
    %v633 = vpop.permute.xlu0 %632
    %v636 = vmul.f32 %v626, %v631
    %v637 = vmul.f32 %v627, %v633
    %v638 = vmul.f32 %v601, %v484
    %v639 = vmul.f32 %v603, %v485
    %v640 = vadd.f32 %v636, %v638
    %v641 = vadd.f32 %v637, %v639
    %644 = vrot.lane.b32.xlu0 %v640, 96
    %v645 = vpop.permute.xlu0 %644
    %646 = vrot.lane.b32.xlu0 %v641, 96
    %v647 = vpop.permute.xlu0 %646
    %s650 = scalar_lea.vmem %s4, 48
    %651 = vst.msk [vmem:[%s650] sm:$0xff] %vm33, %v645
    %652 = vst.msk [vmem:[%s650 + $0x8] sm:$0xff] %vm33, %v647
    %v653 = vld [vmem:[%s1] sm:$0xff]
    %v654 = vld [vmem:[%s1 + $0x8] sm:$0xff]
    %v655 = vld [vmem:[%s1 + $0x10] sm:$0xff]
    %v656 = vld [vmem:[%s1 + $0x18] sm:$0xff]
    %v657 = vld [vmem:[%s2] sm:$0x1]
    %v659 = vlaneseq
    %v660 = vshrl.u32 %v659, 7
    %v661 = vsub.s32 0, %v660
    %v662 = vrot.slane %v657, %v661
    %v664 = vsel %vm33, %v645, 0
    %v666 = vsel %vm33, %v647, 0
    %668 = vmatprep.subr.mxu0 0.0
    %669 = vmatpush1.msra.mxu0 %v653
    %670 = vmatprep.subr.mxu0 0.0
    %671 = vmatpush1.msra.mxu0 %v654
    %672 = vmatprep.subr.mxu0 0.0
    %673 = vmatpush1.msra.mxu0 %v655
    %674 = vmatprep.subr.mxu0 0.0
    %675 = vmatpush1.msra.mxu0 %v656
    %676 = vmatprep.subr.mxu0 0.0
    %677 = vmatpush1.msra.mxu0 0.0
    %678 = vmatprep.subr.mxu0 0.0
    %679 = vmatpush1.msra.mxu0 0.0
    %680 = vmatprep.subr.mxu0 0.0
    %681 = vmatpush1.msra.mxu0 0.0
    %682 = vmatprep.subr.mxu0 0.0
    %683 = vmatpush1.msra.mxu0 0.0
    %684 = vmatprep.subr.mxu0 0.0
    %685 = vmatpush1.msra.mxu0 0.0
    %686 = vmatprep.subr.mxu0 0.0
    %687 = vmatpush1.msra.mxu0 0.0
    %688 = vmatprep.subr.mxu0 0.0
    %689 = vmatpush1.msra.mxu0 0.0
    %690 = vmatprep.subr.mxu0 0.0
    %691 = vmatpush1.msra.mxu0 0.0
    %692 = vmatprep.subr.mxu0 0.0
    %693 = vmatpush1.msra.mxu0 0.0
    %694 = vmatprep.subr.mxu0 0.0
    %695 = vmatpush1.msra.mxu0 0.0
    %696 = vmatprep.subr.mxu0 0.0
    %697 = vmatpush1.msra.mxu0 0.0
    %698 = vmatprep.subr.mxu0 0.0
    %699 = vmatpush1.msra.mxu0 0.0
    %700 = vmatprep.subr.mxu0 0.0
    %701 = vmatpush1.msra.mxu0 0.0
    %702 = vmatprep.subr.mxu0 0.0
    %703 = vmatpush1.msra.mxu0 0.0
    %704 = vmatprep.subr.mxu0 0.0
    %705 = vmatpush1.msra.mxu0 0.0
    %706 = vmatprep.subr.mxu0 0.0
    %707 = vmatpush1.msra.mxu0 0.0
    %708 = vmatprep.subr.mxu0 0.0
    %709 = vmatpush1.msra.mxu0 0.0
    %710 = vmatprep.subr.mxu0 0.0
    %711 = vmatpush1.msra.mxu0 0.0
    %712 = vmatprep.subr.mxu0 0.0
    %713 = vmatpush1.msra.mxu0 0.0
    %714 = vmatprep.subr.mxu0 0.0
    %715 = vmatpush1.msra.mxu0 0.0
    %716 = vmatprep.subr.mxu0 0.0
    %717 = vmatpush1.msra.mxu0 0.0
    %718 = vmatprep.subr.mxu0 0.0
    %719 = vmatpush1.msra.mxu0 0.0
    %720 = vmatprep.subr.mxu0 0.0
    %721 = vmatpush1.msra.mxu0 0.0
    %722 = vmatprep.subr.mxu0 0.0
    %723 = vmatpush1.msra.mxu0 0.0
    %724 = vmatprep.subr.mxu0 0.0
    %725 = vmatpush1.msra.mxu0 0.0
    %726 = vmatprep.subr.mxu0 0.0
    %727 = vmatpush1.msra.mxu0 0.0
    %728 = vmatprep.subr.mxu0 0.0
    %729 = vmatpush1.msra.mxu0 0.0
    %730 = vmatprep.subr.mxu0 0.0
    %731 = vmatpush1.msra.mxu0 0.0
    %732 = vmatprep.mubr.f32.mxu0 0.0
    %733 = vmatmul.mubr.f32.gmra.mrb[0].mxu0 %v664
    %v734 = vpop.f32.mrb[0].mxu0
    %v735 = vadd.f32 %v662, %v734
    %v736 = vpop.f32.mrb[0].mxu0
    %737 = vmatprep.mubr.f32.mxu0 0.0
    %738 = vmatmul.mubr.f32.gmra.mrb[0].mxu0 %v666
    %v739 = vpop.f32.mrb[0].mxu0
    %v740 = vadd.f32 %v662, %v739
    %v741 = vpop.f32.mrb[0].mxu0
    %742 = vdwg.mxu0
    %s743 = scalar_lea.vmem %s0, 64
    %v744 = vld [vmem:[%s743] sm:$0xff]
    %v745 = vld [vmem:[%s743 + $0x8] sm:$0xff]
    %v746 = vadd.f32 %v744, %v735
    %v747 = vadd.f32 %v745, %v740
    %v748 = vxor.u32 %v746, 2147483648
    %v749 = vxor.u32 %v747, 2147483648
    %v750 = vmul.f32 %v748, 1.442695
    %v751 = vpow.pop %v750
    %v752 = vmul.f32 %v749, 1.442695
    %v753 = vpow.pop %v752
    %v754 = vadd.f32 %v751, 1.0
    %v755 = vadd.f32 %v753, 1.0
    %v756 = vrcp.pop %v754
    %v757 = vmul.f32 1.0, %v756
    %v758 = vrcp.pop %v755
    %v759 = vmul.f32 1.0, %v758
    %762 = vrot.lane.b32.xlu0 %v735, 64
    %v763 = vpop.permute.xlu0 %762
    %764 = vrot.lane.b32.xlu0 %v740, 64
    %v765 = vpop.permute.xlu0 %764
    %v768 = vmul.f32 %v757, %v763
    %v769 = vmul.f32 %v759, %v765
    %772 = vrot.lane.b32.xlu0 %v768, 64
    %v773 = vpop.permute.xlu0 %772
    %774 = vrot.lane.b32.xlu0 %v769, 64
    %v775 = vpop.permute.xlu0 %774
    %v778 = vadd.f32 %v744, %v773
    %v779 = vadd.f32 %v745, %v775
    %v780 = vtanh.pop %v778
    %v781 = vtanh.pop %v779
    %v782 = vsub.f32 1.0, %v757
    %v783 = vsub.f32 1.0, %v759
    %786 = vrot.lane.b32.xlu0 %v780, 96
    %v787 = vpop.permute.xlu0 %786
    %788 = vrot.lane.b32.xlu0 %v781, 96
    %v789 = vpop.permute.xlu0 %788
    %v792 = vmul.f32 %v782, %v787
    %v793 = vmul.f32 %v783, %v789
    %v794 = vmul.f32 %v757, %v640
    %v795 = vmul.f32 %v759, %v641
    %v796 = vadd.f32 %v792, %v794
    %v797 = vadd.f32 %v793, %v795
    %800 = vrot.lane.b32.xlu0 %v796, 96
    %v801 = vpop.permute.xlu0 %800
    %802 = vrot.lane.b32.xlu0 %v797, 96
    %v803 = vpop.permute.xlu0 %802
    %s806 = scalar_lea.vmem %s4, 64
    %807 = vst.msk [vmem:[%s806] sm:$0xff] %vm33, %v801
    %808 = vst.msk [vmem:[%s806 + $0x8] sm:$0xff] %vm33, %v803
    %v809 = vld [vmem:[%s1] sm:$0xff]
    %v810 = vld [vmem:[%s1 + $0x8] sm:$0xff]
    %v811 = vld [vmem:[%s1 + $0x10] sm:$0xff]
    %v812 = vld [vmem:[%s1 + $0x18] sm:$0xff]
    %v813 = vld [vmem:[%s2] sm:$0x1]
    %v815 = vlaneseq
    %v816 = vshrl.u32 %v815, 7
    %v817 = vsub.s32 0, %v816
    %v818 = vrot.slane %v813, %v817
    %v820 = vsel %vm33, %v801, 0
    %v822 = vsel %vm33, %v803, 0
    %824 = vmatprep.subr.mxu0 0.0
    %825 = vmatpush1.msra.mxu0 %v809
    %826 = vmatprep.subr.mxu0 0.0
    %827 = vmatpush1.msra.mxu0 %v810
    %828 = vmatprep.subr.mxu0 0.0
    %829 = vmatpush1.msra.mxu0 %v811
    %830 = vmatprep.subr.mxu0 0.0
    %831 = vmatpush1.msra.mxu0 %v812
    %832 = vmatprep.subr.mxu0 0.0
    %833 = vmatpush1.msra.mxu0 0.0
    %834 = vmatprep.subr.mxu0 0.0
    %835 = vmatpush1.msra.mxu0 0.0
    %836 = vmatprep.subr.mxu0 0.0
    %837 = vmatpush1.msra.mxu0 0.0
    %838 = vmatprep.subr.mxu0 0.0
    %839 = vmatpush1.msra.mxu0 0.0
    %840 = vmatprep.subr.mxu0 0.0
    %841 = vmatpush1.msra.mxu0 0.0
    %842 = vmatprep.subr.mxu0 0.0
    %843 = vmatpush1.msra.mxu0 0.0
    %844 = vmatprep.subr.mxu0 0.0
    %845 = vmatpush1.msra.mxu0 0.0
    %846 = vmatprep.subr.mxu0 0.0
    %847 = vmatpush1.msra.mxu0 0.0
    %848 = vmatprep.subr.mxu0 0.0
    %849 = vmatpush1.msra.mxu0 0.0
    %850 = vmatprep.subr.mxu0 0.0
    %851 = vmatpush1.msra.mxu0 0.0
    %852 = vmatprep.subr.mxu0 0.0
    %853 = vmatpush1.msra.mxu0 0.0
    %854 = vmatprep.subr.mxu0 0.0
    %855 = vmatpush1.msra.mxu0 0.0
    %856 = vmatprep.subr.mxu0 0.0
    %857 = vmatpush1.msra.mxu0 0.0
    %858 = vmatprep.subr.mxu0 0.0
    %859 = vmatpush1.msra.mxu0 0.0
    %860 = vmatprep.subr.mxu0 0.0
    %861 = vmatpush1.msra.mxu0 0.0
    %862 = vmatprep.subr.mxu0 0.0
    %863 = vmatpush1.msra.mxu0 0.0
    %864 = vmatprep.subr.mxu0 0.0
    %865 = vmatpush1.msra.mxu0 0.0
    %866 = vmatprep.subr.mxu0 0.0
    %867 = vmatpush1.msra.mxu0 0.0
    %868 = vmatprep.subr.mxu0 0.0
    %869 = vmatpush1.msra.mxu0 0.0
    %870 = vmatprep.subr.mxu0 0.0
    %871 = vmatpush1.msra.mxu0 0.0
    %872 = vmatprep.subr.mxu0 0.0
    %873 = vmatpush1.msra.mxu0 0.0
    %874 = vmatprep.subr.mxu0 0.0
    %875 = vmatpush1.msra.mxu0 0.0
    %876 = vmatprep.subr.mxu0 0.0
    %877 = vmatpush1.msra.mxu0 0.0
    %878 = vmatprep.subr.mxu0 0.0
    %879 = vmatpush1.msra.mxu0 0.0
    %880 = vmatprep.subr.mxu0 0.0
    %881 = vmatpush1.msra.mxu0 0.0
    %882 = vmatprep.subr.mxu0 0.0
    %883 = vmatpush1.msra.mxu0 0.0
    %884 = vmatprep.subr.mxu0 0.0
    %885 = vmatpush1.msra.mxu0 0.0
    %886 = vmatprep.subr.mxu0 0.0
    %887 = vmatpush1.msra.mxu0 0.0
    %888 = vmatprep.mubr.f32.mxu0 0.0
    %889 = vmatmul.mubr.f32.gmra.mrb[0].mxu0 %v820
    %v890 = vpop.f32.mrb[0].mxu0
    %v891 = vadd.f32 %v818, %v890
    %v892 = vpop.f32.mrb[0].mxu0
    %893 = vmatprep.mubr.f32.mxu0 0.0
    %894 = vmatmul.mubr.f32.gmra.mrb[0].mxu0 %v822
    %v895 = vpop.f32.mrb[0].mxu0
    %v896 = vadd.f32 %v818, %v895
    %v897 = vpop.f32.mrb[0].mxu0
    %898 = vdwg.mxu0
    %s899 = scalar_lea.vmem %s0, 80
    %v900 = vld [vmem:[%s899] sm:$0xff]
    %v901 = vld [vmem:[%s899 + $0x8] sm:$0xff]
    %v902 = vadd.f32 %v900, %v891
    %v903 = vadd.f32 %v901, %v896
    %v904 = vxor.u32 %v902, 2147483648
    %v905 = vxor.u32 %v903, 2147483648
    %v906 = vmul.f32 %v904, 1.442695
    %v907 = vpow.pop %v906
    %v908 = vmul.f32 %v905, 1.442695
    %v909 = vpow.pop %v908
    %v910 = vadd.f32 %v907, 1.0
    %v911 = vadd.f32 %v909, 1.0
    %v912 = vrcp.pop %v910
    %v913 = vmul.f32 1.0, %v912
    %v914 = vrcp.pop %v911
    %v915 = vmul.f32 1.0, %v914
    %918 = vrot.lane.b32.xlu0 %v891, 64
    %v919 = vpop.permute.xlu0 %918
    %920 = vrot.lane.b32.xlu0 %v896, 64
    %v921 = vpop.permute.xlu0 %920
    %v924 = vmul.f32 %v913, %v919
    %v925 = vmul.f32 %v915, %v921
    %928 = vrot.lane.b32.xlu0 %v924, 64
    %v929 = vpop.permute.xlu0 %928
    %930 = vrot.lane.b32.xlu0 %v925, 64
    %v931 = vpop.permute.xlu0 %930
    %v934 = vadd.f32 %v900, %v929
    %v935 = vadd.f32 %v901, %v931
    %v936 = vtanh.pop %v934
    %v937 = vtanh.pop %v935
    %v938 = vsub.f32 1.0, %v913
    %v939 = vsub.f32 1.0, %v915
    %942 = vrot.lane.b32.xlu0 %v936, 96
    %v943 = vpop.permute.xlu0 %942
    %944 = vrot.lane.b32.xlu0 %v937, 96
    %v945 = vpop.permute.xlu0 %944
    %v948 = vmul.f32 %v938, %v943
    %v949 = vmul.f32 %v939, %v945
    %v950 = vmul.f32 %v913, %v796
    %v951 = vmul.f32 %v915, %v797
    %v952 = vadd.f32 %v948, %v950
    %v953 = vadd.f32 %v949, %v951
    %956 = vrot.lane.b32.xlu0 %v952, 96
    %v957 = vpop.permute.xlu0 %956
    %958 = vrot.lane.b32.xlu0 %v953, 96
    %v959 = vpop.permute.xlu0 %958
    %s962 = scalar_lea.vmem %s4, 80
    %963 = vst.msk [vmem:[%s962] sm:$0xff] %vm33, %v957
    %964 = vst.msk [vmem:[%s962 + $0x8] sm:$0xff] %vm33, %v959
    %v965 = vld [vmem:[%s1] sm:$0xff]
    %v966 = vld [vmem:[%s1 + $0x8] sm:$0xff]
    %v967 = vld [vmem:[%s1 + $0x10] sm:$0xff]
    %v968 = vld [vmem:[%s1 + $0x18] sm:$0xff]
    %v969 = vld [vmem:[%s2] sm:$0x1]
    %v971 = vlaneseq
    %v972 = vshrl.u32 %v971, 7
    %v973 = vsub.s32 0, %v972
    %v974 = vrot.slane %v969, %v973
    %v976 = vsel %vm33, %v957, 0
    %v978 = vsel %vm33, %v959, 0
    %980 = vmatprep.subr.mxu0 0.0
    %981 = vmatpush1.msra.mxu0 %v965
    %982 = vmatprep.subr.mxu0 0.0
    %983 = vmatpush1.msra.mxu0 %v966
    %984 = vmatprep.subr.mxu0 0.0
    %985 = vmatpush1.msra.mxu0 %v967
    %986 = vmatprep.subr.mxu0 0.0
    %987 = vmatpush1.msra.mxu0 %v968
    %988 = vmatprep.subr.mxu0 0.0
    %989 = vmatpush1.msra.mxu0 0.0
    %990 = vmatprep.subr.mxu0 0.0
    %991 = vmatpush1.msra.mxu0 0.0
    %992 = vmatprep.subr.mxu0 0.0
    %993 = vmatpush1.msra.mxu0 0.0
    %994 = vmatprep.subr.mxu0 0.0
    %995 = vmatpush1.msra.mxu0 0.0
    %996 = vmatprep.subr.mxu0 0.0
    %997 = vmatpush1.msra.mxu0 0.0
    %998 = vmatprep.subr.mxu0 0.0
    %999 = vmatpush1.msra.mxu0 0.0
    %1000 = vmatprep.subr.mxu0 0.0
    %1001 = vmatpush1.msra.mxu0 0.0
    %1002 = vmatprep.subr.mxu0 0.0
    %1003 = vmatpush1.msra.mxu0 0.0
    %1004 = vmatprep.subr.mxu0 0.0
    %1005 = vmatpush1.msra.mxu0 0.0
    %1006 = vmatprep.subr.mxu0 0.0
    %1007 = vmatpush1.msra.mxu0 0.0
    %1008 = vmatprep.subr.mxu0 0.0
    %1009 = vmatpush1.msra.mxu0 0.0
    %1010 = vmatprep.subr.mxu0 0.0
    %1011 = vmatpush1.msra.mxu0 0.0
    %1012 = vmatprep.subr.mxu0 0.0
    %1013 = vmatpush1.msra.mxu0 0.0
    %1014 = vmatprep.subr.mxu0 0.0
    %1015 = vmatpush1.msra.mxu0 0.0
    %1016 = vmatprep.subr.mxu0 0.0
    %1017 = vmatpush1.msra.mxu0 0.0
    %1018 = vmatprep.subr.mxu0 0.0
    %1019 = vmatpush1.msra.mxu0 0.0
    %1020 = vmatprep.subr.mxu0 0.0
    %1021 = vmatpush1.msra.mxu0 0.0
    %1022 = vmatprep.subr.mxu0 0.0
    %1023 = vmatpush1.msra.mxu0 0.0
    %1024 = vmatprep.subr.mxu0 0.0
    %1025 = vmatpush1.msra.mxu0 0.0
    %1026 = vmatprep.subr.mxu0 0.0
    %1027 = vmatpush1.msra.mxu0 0.0
    %1028 = vmatprep.subr.mxu0 0.0
    %1029 = vmatpush1.msra.mxu0 0.0
    %1030 = vmatprep.subr.mxu0 0.0
    %1031 = vmatpush1.msra.mxu0 0.0
    %1032 = vmatprep.subr.mxu0 0.0
    %1033 = vmatpush1.msra.mxu0 0.0
    %1034 = vmatprep.subr.mxu0 0.0
    %1035 = vmatpush1.msra.mxu0 0.0
    %1036 = vmatprep.subr.mxu0 0.0
    %1037 = vmatpush1.msra.mxu0 0.0
    %1038 = vmatprep.subr.mxu0 0.0
    %1039 = vmatpush1.msra.mxu0 0.0
    %1040 = vmatprep.subr.mxu0 0.0
    %1041 = vmatpush1.msra.mxu0 0.0
    %1042 = vmatprep.subr.mxu0 0.0
    %1043 = vmatpush1.msra.mxu0 0.0
    %1044 = vmatprep.mubr.f32.mxu0 0.0
    %1045 = vmatmul.mubr.f32.gmra.mrb[0].mxu0 %v976
    %v1046 = vpop.f32.mrb[0].mxu0
    %v1047 = vadd.f32 %v974, %v1046
    %v1048 = vpop.f32.mrb[0].mxu0
    %1049 = vmatprep.mubr.f32.mxu0 0.0
    %1050 = vmatmul.mubr.f32.gmra.mrb[0].mxu0 %v978
    %v1051 = vpop.f32.mrb[0].mxu0
    %v1052 = vadd.f32 %v974, %v1051
    %v1053 = vpop.f32.mrb[0].mxu0
    %1054 = vdwg.mxu0
    %s1055 = scalar_lea.vmem %s0, 96
    %v1056 = vld [vmem:[%s1055] sm:$0xff]
    %v1057 = vld [vmem:[%s1055 + $0x8] sm:$0xff]
    %v1058 = vadd.f32 %v1056, %v1047
    %v1059 = vadd.f32 %v1057, %v1052
    %v1060 = vxor.u32 %v1058, 2147483648
    %v1061 = vxor.u32 %v1059, 2147483648
    %v1062 = vmul.f32 %v1060, 1.442695
    %v1063 = vpow.pop %v1062
    %v1064 = vmul.f32 %v1061, 1.442695
    %v1065 = vpow.pop %v1064
    %v1066 = vadd.f32 %v1063, 1.0
    %v1067 = vadd.f32 %v1065, 1.0
    %v1068 = vrcp.pop %v1066
    %v1069 = vmul.f32 1.0, %v1068
    %v1070 = vrcp.pop %v1067
    %v1071 = vmul.f32 1.0, %v1070
    %1074 = vrot.lane.b32.xlu0 %v1047, 64
    %v1075 = vpop.permute.xlu0 %1074
    %1076 = vrot.lane.b32.xlu0 %v1052, 64
    %v1077 = vpop.permute.xlu0 %1076
    %v1080 = vmul.f32 %v1069, %v1075
    %v1081 = vmul.f32 %v1071, %v1077
    %1084 = vrot.lane.b32.xlu0 %v1080, 64
    %v1085 = vpop.permute.xlu0 %1084
    %1086 = vrot.lane.b32.xlu0 %v1081, 64
    %v1087 = vpop.permute.xlu0 %1086
    %v1090 = vadd.f32 %v1056, %v1085
    %v1091 = vadd.f32 %v1057, %v1087
    %v1092 = vtanh.pop %v1090
    %v1093 = vtanh.pop %v1091
    %v1094 = vsub.f32 1.0, %v1069
    %v1095 = vsub.f32 1.0, %v1071
    %1098 = vrot.lane.b32.xlu0 %v1092, 96
    %v1099 = vpop.permute.xlu0 %1098
    %1100 = vrot.lane.b32.xlu0 %v1093, 96
    %v1101 = vpop.permute.xlu0 %1100
    %v1104 = vmul.f32 %v1094, %v1099
    %v1105 = vmul.f32 %v1095, %v1101
    %v1106 = vmul.f32 %v1069, %v952
    %v1107 = vmul.f32 %v1071, %v953
    %v1108 = vadd.f32 %v1104, %v1106
    %v1109 = vadd.f32 %v1105, %v1107
    %1112 = vrot.lane.b32.xlu0 %v1108, 96
    %v1113 = vpop.permute.xlu0 %1112
    %1114 = vrot.lane.b32.xlu0 %v1109, 96
    %v1115 = vpop.permute.xlu0 %1114
    %s1118 = scalar_lea.vmem %s4, 96
    %1119 = vst.msk [vmem:[%s1118] sm:$0xff] %vm33, %v1113
    %1120 = vst.msk [vmem:[%s1118 + $0x8] sm:$0xff] %vm33, %v1115
    %v1121 = vld [vmem:[%s1] sm:$0xff]
    %v1122 = vld [vmem:[%s1 + $0x8] sm:$0xff]
    %v1123 = vld [vmem:[%s1 + $0x10] sm:$0xff]
    %v1124 = vld [vmem:[%s1 + $0x18] sm:$0xff]
    %v1125 = vld [vmem:[%s2] sm:$0x1]
    %v1127 = vlaneseq
    %v1128 = vshrl.u32 %v1127, 7
    %v1129 = vsub.s32 0, %v1128
    %v1130 = vrot.slane %v1125, %v1129
    %v1132 = vsel %vm33, %v1113, 0
    %v1134 = vsel %vm33, %v1115, 0
    %1136 = vmatprep.subr.mxu0 0.0
    %1137 = vmatpush1.msra.mxu0 %v1121
    %1138 = vmatprep.subr.mxu0 0.0
    %1139 = vmatpush1.msra.mxu0 %v1122
    %1140 = vmatprep.subr.mxu0 0.0
    %1141 = vmatpush1.msra.mxu0 %v1123
    %1142 = vmatprep.subr.mxu0 0.0
    %1143 = vmatpush1.msra.mxu0 %v1124
    %1144 = vmatprep.subr.mxu0 0.0
    %1145 = vmatpush1.msra.mxu0 0.0
    %1146 = vmatprep.subr.mxu0 0.0
    %1147 = vmatpush1.msra.mxu0 0.0
    %1148 = vmatprep.subr.mxu0 0.0
    %1149 = vmatpush1.msra.mxu0 0.0
    %1150 = vmatprep.subr.mxu0 0.0
    %1151 = vmatpush1.msra.mxu0 0.0
    %1152 = vmatprep.subr.mxu0 0.0
    %1153 = vmatpush1.msra.mxu0 0.0
    %1154 = vmatprep.subr.mxu0 0.0
    %1155 = vmatpush1.msra.mxu0 0.0
    %1156 = vmatprep.subr.mxu0 0.0
    %1157 = vmatpush1.msra.mxu0 0.0
    %1158 = vmatprep.subr.mxu0 0.0
    %1159 = vmatpush1.msra.mxu0 0.0
    %1160 = vmatprep.subr.mxu0 0.0
    %1161 = vmatpush1.msra.mxu0 0.0
    %1162 = vmatprep.subr.mxu0 0.0
    %1163 = vmatpush1.msra.mxu0 0.0
    %1164 = vmatprep.subr.mxu0 0.0
    %1165 = vmatpush1.msra.mxu0 0.0
    %1166 = vmatprep.subr.mxu0 0.0
    %1167 = vmatpush1.msra.mxu0 0.0
    %1168 = vmatprep.subr.mxu0 0.0
    %1169 = vmatpush1.msra.mxu0 0.0
    %1170 = vmatprep.subr.mxu0 0.0
    %1171 = vmatpush1.msra.mxu0 0.0
    %1172 = vmatprep.subr.mxu0 0.0
    %1173 = vmatpush1.msra.mxu0 0.0
    %1174 = vmatprep.subr.mxu0 0.0
    %1175 = vmatpush1.msra.mxu0 0.0
    %1176 = vmatprep.subr.mxu0 0.0
    %1177 = vmatpush1.msra.mxu0 0.0
    %1178 = vmatprep.subr.mxu0 0.0
    %1179 = vmatpush1.msra.mxu0 0.0
    %1180 = vmatprep.subr.mxu0 0.0
    %1181 = vmatpush1.msra.mxu0 0.0
    %1182 = vmatprep.subr.mxu0 0.0
    %1183 = vmatpush1.msra.mxu0 0.0
    %1184 = vmatprep.subr.mxu0 0.0
    %1185 = vmatpush1.msra.mxu0 0.0
    %1186 = vmatprep.subr.mxu0 0.0
    %1187 = vmatpush1.msra.mxu0 0.0
    %1188 = vmatprep.subr.mxu0 0.0
    %1189 = vmatpush1.msra.mxu0 0.0
    %1190 = vmatprep.subr.mxu0 0.0
    %1191 = vmatpush1.msra.mxu0 0.0
    %1192 = vmatprep.subr.mxu0 0.0
    %1193 = vmatpush1.msra.mxu0 0.0
    %1194 = vmatprep.subr.mxu0 0.0
    %1195 = vmatpush1.msra.mxu0 0.0
    %1196 = vmatprep.subr.mxu0 0.0
    %1197 = vmatpush1.msra.mxu0 0.0
    %1198 = vmatprep.subr.mxu0 0.0
    %1199 = vmatpush1.msra.mxu0 0.0
    %1200 = vmatprep.mubr.f32.mxu0 0.0
    %1201 = vmatmul.mubr.f32.gmra.mrb[0].mxu0 %v1132
    %v1202 = vpop.f32.mrb[0].mxu0
    %v1203 = vadd.f32 %v1130, %v1202
    %v1204 = vpop.f32.mrb[0].mxu0
    %1205 = vmatprep.mubr.f32.mxu0 0.0
    %1206 = vmatmul.mubr.f32.gmra.mrb[0].mxu0 %v1134
    %v1207 = vpop.f32.mrb[0].mxu0
    %v1208 = vadd.f32 %v1130, %v1207
    %v1209 = vpop.f32.mrb[0].mxu0
    %1210 = vdwg.mxu0
    %s1211 = scalar_lea.vmem %s0, 112
    %v1212 = vld [vmem:[%s1211] sm:$0xff]
    %v1213 = vld [vmem:[%s1211 + $0x8] sm:$0xff]
    %v1214 = vadd.f32 %v1212, %v1203
    %v1215 = vadd.f32 %v1213, %v1208
    %v1216 = vxor.u32 %v1214, 2147483648
    %v1217 = vxor.u32 %v1215, 2147483648
    %v1218 = vmul.f32 %v1216, 1.442695
    %v1219 = vpow.pop %v1218
    %v1220 = vmul.f32 %v1217, 1.442695
    %v1221 = vpow.pop %v1220
    %v1222 = vadd.f32 %v1219, 1.0
    %v1223 = vadd.f32 %v1221, 1.0
    %v1224 = vrcp.pop %v1222
    %v1225 = vmul.f32 1.0, %v1224
    %v1226 = vrcp.pop %v1223
    %v1227 = vmul.f32 1.0, %v1226
    %1230 = vrot.lane.b32.xlu0 %v1203, 64
    %v1231 = vpop.permute.xlu0 %1230
    %1232 = vrot.lane.b32.xlu0 %v1208, 64
    %v1233 = vpop.permute.xlu0 %1232
    %v1236 = vmul.f32 %v1225, %v1231
    %v1237 = vmul.f32 %v1227, %v1233
    %1240 = vrot.lane.b32.xlu0 %v1236, 64
    %v1241 = vpop.permute.xlu0 %1240
    %1242 = vrot.lane.b32.xlu0 %v1237, 64
    %v1243 = vpop.permute.xlu0 %1242
    %v1246 = vadd.f32 %v1212, %v1241
    %v1247 = vadd.f32 %v1213, %v1243
    %v1248 = vtanh.pop %v1246
    %v1249 = vtanh.pop %v1247
    %v1250 = vsub.f32 1.0, %v1225
    %v1251 = vsub.f32 1.0, %v1227
    %1254 = vrot.lane.b32.xlu0 %v1248, 96
    %v1255 = vpop.permute.xlu0 %1254
    %1256 = vrot.lane.b32.xlu0 %v1249, 96
    %v1257 = vpop.permute.xlu0 %1256
    %v1260 = vmul.f32 %v1250, %v1255
    %v1261 = vmul.f32 %v1251, %v1257
    %v1262 = vmul.f32 %v1225, %v1108
    %v1263 = vmul.f32 %v1227, %v1109
    %v1264 = vadd.f32 %v1260, %v1262
    %v1265 = vadd.f32 %v1261, %v1263
    %1268 = vrot.lane.b32.xlu0 %v1264, 96
    %v1269 = vpop.permute.xlu0 %1268
    %1270 = vrot.lane.b32.xlu0 %v1265, 96
    %v1271 = vpop.permute.xlu0 %1270
    %s1274 = scalar_lea.vmem %s4, 112
    %1275 = vst.msk [vmem:[%s1274] sm:$0xff] %vm33, %v1269
    %1276 = vst.msk [vmem:[%s1274 + $0x8] sm:$0xff] %vm33, %v1271
    %1277 = vst.msk [vmem:[#allocation2] sm:$0xff] %vm33, %v1269
    %1278 = vst.msk [vmem:[#allocation2 + $0x8] sm:$0xff] %vm33, %v1271
    // Predicated region
    $region18: #{stream_gridnet_block.17} parent=1 // pred_check
      _
    $region19: #{stream_gridnet_block.17} parent=1 // pred_check_branch
      %1280 = sbr.rel (0) target = $region21
    $region20: #{stream_gridnet_block.17} parent=1 // pred_region
      _
    $region21: #{stream_gridnet_block.17} parent=1 // pred_fallthru
      _
    // Predicated region
    $region22: #{stream_gridnet_block.17} parent=1 // pred_check
      _
    $region23: #{stream_gridnet_block.17} parent=1 // pred_check_branch
      %1282 = sbr.rel (0) target = $region25
    $region24: #{stream_gridnet_block.17} parent=1 // pred_region
      %s1284 = ssub.s32 256, 256
      %1285 = vsyncadd [#allocation3], %s1284
      %s1286 = sshll.u32 [#allocation2], 4
      %s1287 = int_to_ptr.vmem [resolvable:$true] %s1286
      %1292 = dma.vmem_to_hbm [thread:$0]  %s1287, 256, %s5, [#allocation3], 128, 128, 8
    $region25: #{stream_gridnet_block.17} parent=1 // pred_fallthru
      _
    // Predicated region
    $region26: #{stream_gridnet_block.17} parent=1 // pred_check
      _
    $region27: #{stream_gridnet_block.17} parent=1 // pred_check_branch
      %1294 = sbr.rel (0) target = $region29
    $region28: #{stream_gridnet_block.17} parent=1 // pred_region
      _
    $region29: #{stream_gridnet_block.17} parent=1 // pred_fallthru
      _
    // Predicated region
    $region30: #{stream_gridnet_block.17} parent=1 // pred_check
      _
    $region31: #{stream_gridnet_block.17} parent=1 // pred_check_branch
      %1296 = sbr.rel (0) target = $region33
    $region32: #{stream_gridnet_block.17} parent=1 // pred_region
      %1297 = dma.done [#allocation3], 256
    $region33: #{stream_gridnet_block.17} parent=1 // pred_fallthru
      _
    %1298 = vsyncpa [#allocation3], 1

// kernel: stream_gridnet_block.19
$region0: #{stream_gridnet_block.19}
  #allocation0 [shape = 'u32[]', space=smem, size = 0x4, offset = 0x4, fixed_abs, tag = 'smem constant byte address 0x4 - core index']
  #allocation1 [shape = 'u32[144,128]{1,0:T(1,128)}', space=vmem, size = 0x12000, scoped, tag = 'internal scratch']
  %s0 = inlined_call_operand.vmem [shape: f32[16,128], index: 0, kind: input, shape index: {}]
  %s1 = inlined_call_operand.vmem [shape: f32[48,16], index: 1, kind: input, shape index: {}]
  %s2 = inlined_call_operand.vmem [shape: f32[48,1], index: 2, kind: input, shape index: {}]
  %s3 = inlined_call_operand.vmem [shape: f32[48,1], index: 3, kind: input, shape index: {}]
  %s4 = inlined_call_operand.vmem [shape: f32[12,48], index: 4, kind: input, shape index: {}]
  %s5 = inlined_call_operand.vmem [shape: f32[48,12], index: 5, kind: input, shape index: {}]
  %s6 = inlined_call_operand.vmem [shape: f32[16,128], index: 6, kind: input, shape index: {}]
  %s7 = inlined_call_operand.vmem [shape: f32[128,16], index: 7, kind: input, shape index: {}]
  %s8 = inlined_call_operand.vmem [shape: f32[48,128], index: 8, kind: input, shape index: {}]
  %s9 = inlined_call_operand.vmem [shape: f32[48,128], index: 9, kind: input, shape index: {}]
  %s10 = inlined_call_operand.vmem [shape: f32[48,128], index: 10, kind: output, shape index: {}]
  %s11 = sld [smem:[#allocation0]]
  $region50: #{stream_gridnet_block.19} parent=0
    _
  %s13 = ssub.s32 1, %s11
  %s14 = scalar_select 0, %s13, %s11
  // Predicated region
  $region2: #{stream_gridnet_block.19} parent=0 // pred_check
    _
  $region3: #{stream_gridnet_block.19} parent=0 // pred_check_branch
    %16 = sbr.rel (0) target = $region5
  $region4: #{stream_gridnet_block.19} parent=0 // pred_region
    _
  $region5: #{stream_gridnet_block.19} parent=0 // pred_fallthru
    _
  // Predicated region
  $region6: #{stream_gridnet_block.19} parent=0 // pred_check
    _
  $region7: #{stream_gridnet_block.19} parent=0 // pred_check_branch
    %18 = sbr.rel (0) target = $region9
  $region8: #{stream_gridnet_block.19} parent=0 // pred_region
    _
  $region9: #{stream_gridnet_block.19} parent=0 // pred_fallthru
    _
  // Predicated region
  $region10: #{stream_gridnet_block.19} parent=0 // pred_check
    _
  $region11: #{stream_gridnet_block.19} parent=0 // pred_check_branch
    %20 = sbr.rel (0) target = $region13
  $region12: #{stream_gridnet_block.19} parent=0 // pred_region
    _
  $region13: #{stream_gridnet_block.19} parent=0 // pred_fallthru
    _
  // Predicated region
  $region14: #{stream_gridnet_block.19} parent=0 // pred_check
    _
  $region15: #{stream_gridnet_block.19} parent=0 // pred_check_branch
    %22 = sbr.rel (0) target = $region17
  $region16: #{stream_gridnet_block.19} parent=0 // pred_region
    _
  $region17: #{stream_gridnet_block.19} parent=0 // pred_fallthru
    _
  // Predicated region
  $region18: #{stream_gridnet_block.19} parent=0 // pred_check
    _
  $region19: #{stream_gridnet_block.19} parent=0 // pred_check_branch
    %24 = sbr.rel (0) target = $region21
  $region20: #{stream_gridnet_block.19} parent=0 // pred_region
    _
  $region21: #{stream_gridnet_block.19} parent=0 // pred_fallthru
    _
  // Predicated region
  $region22: #{stream_gridnet_block.19} parent=0 // pred_check
    _
  $region23: #{stream_gridnet_block.19} parent=0 // pred_check_branch
    %26 = sbr.rel (0) target = $region25
  $region24: #{stream_gridnet_block.19} parent=0 // pred_region
    _
  $region25: #{stream_gridnet_block.19} parent=0 // pred_fallthru
    _
  // Predicated region
  $region26: #{stream_gridnet_block.19} parent=0 // pred_check
    _
  $region27: #{stream_gridnet_block.19} parent=0 // pred_check_branch
    %28 = sbr.rel (0) target = $region29
  $region28: #{stream_gridnet_block.19} parent=0 // pred_region
    _
  $region29: #{stream_gridnet_block.19} parent=0 // pred_fallthru
    _
  // Predicated region
  $region30: #{stream_gridnet_block.19} parent=0 // pred_check
    _
  $region31: #{stream_gridnet_block.19} parent=0 // pred_check_branch
    %30 = sbr.rel (0) target = $region33
  $region32: #{stream_gridnet_block.19} parent=0 // pred_region
    _
  $region33: #{stream_gridnet_block.19} parent=0 // pred_fallthru
    _
  // Predicated region
  $region34: #{stream_gridnet_block.19} parent=0 // pred_check
    _
  $region35: #{stream_gridnet_block.19} parent=0 // pred_check_branch
    %32 = sbr.rel (0) target = $region37
  $region36: #{stream_gridnet_block.19} parent=0 // pred_region
    _
  $region37: #{stream_gridnet_block.19} parent=0 // pred_fallthru
    _
  // Predicated region
  $region38: #{stream_gridnet_block.19} parent=0 // pred_check
    _
  $region39: #{stream_gridnet_block.19} parent=0 // pred_check_branch
    %34 = sbr.rel (0) target = $region41
  $region40: #{stream_gridnet_block.19} parent=0 // pred_region
    _
  $region41: #{stream_gridnet_block.19} parent=0 // pred_fallthru
    _
  %v35 = vld [vmem:[%s1] sm:$0xff]
  %v36 = vld [vmem:[%s1 + $0x8] sm:$0xff]
  %v37 = vld [vmem:[%s1 + $0x10] sm:$0xff]
  %v38 = vld [vmem:[%s1 + $0x18] sm:$0xff]
  %v39 = vld [vmem:[%s1 + $0x20] sm:$0xff]
  %v40 = vld [vmem:[%s1 + $0x28] sm:$0xff]
  %v41 = vld [vmem:[%s0] sm:$0xff]
  %v42 = vld [vmem:[%s0 + $0x8] sm:$0xff]
  %v43 = vld [vmem:[%s2] sm:$0xff]
  %v44 = vld [vmem:[%s2 + $0x8] sm:$0xff]
  %v45 = vld [vmem:[%s2 + $0x10] sm:$0xff]
  %v46 = vld [vmem:[%s2 + $0x18] sm:$0xff]
  %v47 = vld [vmem:[%s2 + $0x20] sm:$0xff]
  %v48 = vld [vmem:[%s2 + $0x28] sm:$0xff]
  %50 = vset.pattern.permute.xlu0 0
  %51 = vperm.xlu0 %50, %v43
  %v52 = vpop.permute.xlu0 %51
  %55 = vset.pattern.permute.xlu0 0
  %56 = vperm.xlu0 %55, %v44
  %v57 = vpop.permute.xlu0 %56
  %60 = vset.pattern.permute.xlu0 0
  %61 = vperm.xlu0 %60, %v45
  %v62 = vpop.permute.xlu0 %61
  %65 = vset.pattern.permute.xlu0 0
  %66 = vperm.xlu0 %65, %v46
  %v67 = vpop.permute.xlu0 %66
  %70 = vset.pattern.permute.xlu0 0
  %71 = vperm.xlu0 %70, %v47
  %v72 = vpop.permute.xlu0 %71
  %75 = vset.pattern.permute.xlu0 0
  %76 = vperm.xlu0 %75, %v48
  %v77 = vpop.permute.xlu0 %76
  %vm79 = vcmask 130048
  %v81 = vsel %vm79, %v35, 0
  %v84 = vsel %vm79, %v36, 0
  %v87 = vsel %vm79, %v37, 0
  %v90 = vsel %vm79, %v38, 0
  %v93 = vsel %vm79, %v39, 0
  %v96 = vsel %vm79, %v40, 0
  %98 = vmatprep.subr.mxu0 0.0
  %99 = vmatpush1.msra.mxu0 %v41
  %100 = vmatprep.subr.mxu0 0.0
  %101 = vmatpush1.msra.mxu0 %v42
  %102 = vmatprep.subr.mxu0 0.0
  %103 = vmatpush1.msra.mxu0 0.0
  %104 = vmatprep.subr.mxu0 0.0
  %105 = vmatpush1.msra.mxu0 0.0
  %106 = vmatprep.subr.mxu0 0.0
  %107 = vmatpush1.msra.mxu0 0.0
  %108 = vmatprep.subr.mxu0 0.0
  %109 = vmatpush1.msra.mxu0 0.0
  %110 = vmatprep.subr.mxu0 0.0
  %111 = vmatpush1.msra.mxu0 0.0
  %112 = vmatprep.subr.mxu0 0.0
  %113 = vmatpush1.msra.mxu0 0.0
  %114 = vmatprep.subr.mxu0 0.0
  %115 = vmatpush1.msra.mxu0 0.0
  %116 = vmatprep.subr.mxu0 0.0
  %117 = vmatpush1.msra.mxu0 0.0
  %118 = vmatprep.subr.mxu0 0.0
  %119 = vmatpush1.msra.mxu0 0.0
  %120 = vmatprep.subr.mxu0 0.0
  %121 = vmatpush1.msra.mxu0 0.0
  %122 = vmatprep.subr.mxu0 0.0
  %123 = vmatpush1.msra.mxu0 0.0
  %124 = vmatprep.subr.mxu0 0.0
  %125 = vmatpush1.msra.mxu0 0.0
  %126 = vmatprep.subr.mxu0 0.0
  %127 = vmatpush1.msra.mxu0 0.0
  %128 = vmatprep.subr.mxu0 0.0
  %129 = vmatpush1.msra.mxu0 0.0
  %130 = vmatprep.subr.mxu0 0.0
  %131 = vmatpush1.msra.mxu0 0.0
  %132 = vmatprep.subr.mxu0 0.0
  %133 = vmatpush1.msra.mxu0 0.0
  %134 = vmatprep.subr.mxu0 0.0
  %135 = vmatpush1.msra.mxu0 0.0
  %136 = vmatprep.subr.mxu0 0.0
  %137 = vmatpush1.msra.mxu0 0.0
  %138 = vmatprep.subr.mxu0 0.0
  %139 = vmatpush1.msra.mxu0 0.0
  %140 = vmatprep.subr.mxu0 0.0
  %141 = vmatpush1.msra.mxu0 0.0
  %142 = vmatprep.subr.mxu0 0.0
  %143 = vmatpush1.msra.mxu0 0.0
  %144 = vmatprep.subr.mxu0 0.0
  %145 = vmatpush1.msra.mxu0 0.0
  %146 = vmatprep.subr.mxu0 0.0
  %147 = vmatpush1.msra.mxu0 0.0
  %148 = vmatprep.subr.mxu0 0.0
  %149 = vmatpush1.msra.mxu0 0.0
  %150 = vmatprep.subr.mxu0 0.0
  %151 = vmatpush1.msra.mxu0 0.0
  %152 = vmatprep.subr.mxu0 0.0
  %153 = vmatpush1.msra.mxu0 0.0
  %154 = vmatprep.subr.mxu0 0.0
  %155 = vmatpush1.msra.mxu0 0.0
  %156 = vmatprep.subr.mxu0 0.0
  %157 = vmatpush1.msra.mxu0 0.0
  %158 = vmatprep.subr.mxu0 0.0
  %159 = vmatpush1.msra.mxu0 0.0
  %160 = vmatprep.subr.mxu0 0.0
  %161 = vmatpush1.msra.mxu0 0.0
  %162 = vmatprep.mubr.f32.mxu0 0.0
  %163 = vmatmul.mubr.f32.gmra.mrb[0].mxu0 %v81
  %v164 = vpop.f32.mrb[0].mxu0
  %v165 = vadd.f32 %v52, %v164
  %v166 = vpop.f32.mrb[0].mxu0
  %167 = vmatprep.mubr.f32.mxu0 0.0
  %168 = vmatmul.mubr.f32.gmra.mrb[0].mxu0 %v84
  %v169 = vpop.f32.mrb[0].mxu0
  %v170 = vadd.f32 %v57, %v169
  %v171 = vpop.f32.mrb[0].mxu0
  %172 = vmatprep.mubr.f32.mxu0 0.0
  %173 = vmatmul.mubr.f32.gmra.mrb[0].mxu0 %v87
  %v174 = vpop.f32.mrb[0].mxu0
  %v175 = vadd.f32 %v62, %v174
  %v176 = vpop.f32.mrb[0].mxu0
  %177 = vmatprep.mubr.f32.mxu0 0.0
  %178 = vmatmul.mubr.f32.gmra.mrb[0].mxu0 %v90
  %v179 = vpop.f32.mrb[0].mxu0
  %v180 = vadd.f32 %v67, %v179
  %v181 = vpop.f32.mrb[0].mxu0
  %182 = vmatprep.mubr.f32.mxu0 0.0
  %183 = vmatmul.mubr.f32.gmra.mrb[0].mxu0 %v93
  %v184 = vpop.f32.mrb[0].mxu0
  %v185 = vadd.f32 %v72, %v184
  %v186 = vpop.f32.mrb[0].mxu0
  %187 = vmatprep.mubr.f32.mxu0 0.0
  %188 = vmatmul.mubr.f32.gmra.mrb[0].mxu0 %v96
  %v189 = vpop.f32.mrb[0].mxu0
  %v190 = vadd.f32 %v77, %v189
  %v191 = vpop.f32.mrb[0].mxu0
  %192 = vdwg.mxu0
  %vm193 = vcmp.ge.f32.partialorder %v165, 0.0
  %vm194 = vcmp.ge.f32.partialorder %v170, 0.0
  %vm195 = vcmp.ge.f32.partialorder %v175, 0.0
  %vm196 = vcmp.ge.f32.partialorder %v180, 0.0
  %vm197 = vcmp.ge.f32.partialorder %v185, 0.0
  %vm198 = vcmp.ge.f32.partialorder %v190, 0.0
  %v199 = vld [vmem:[%s3] sm:$0xff]
  %v200 = vld [vmem:[%s3 + $0x8] sm:$0xff]
  %v201 = vld [vmem:[%s3 + $0x10] sm:$0xff]
  %v202 = vld [vmem:[%s3 + $0x18] sm:$0xff]
  %v203 = vld [vmem:[%s3 + $0x20] sm:$0xff]
  %v204 = vld [vmem:[%s3 + $0x28] sm:$0xff]
  %206 = vset.pattern.permute.xlu0 0
  %207 = vperm.xlu0 %206, %v199
  %v208 = vpop.permute.xlu0 %207
  %211 = vset.pattern.permute.xlu0 0
  %212 = vperm.xlu0 %211, %v200
  %v213 = vpop.permute.xlu0 %212
  %216 = vset.pattern.permute.xlu0 0
  %217 = vperm.xlu0 %216, %v201
  %v218 = vpop.permute.xlu0 %217
  %221 = vset.pattern.permute.xlu0 0
  %222 = vperm.xlu0 %221, %v202
  %v223 = vpop.permute.xlu0 %222
  %226 = vset.pattern.permute.xlu0 0
  %227 = vperm.xlu0 %226, %v203
  %v228 = vpop.permute.xlu0 %227
  %231 = vset.pattern.permute.xlu0 0
  %232 = vperm.xlu0 %231, %v204
  %v233 = vpop.permute.xlu0 %232
  %v235 = vmul.f32 %v208, %v165
  %v236 = vmul.f32 %v213, %v170
  %v237 = vmul.f32 %v218, %v175
  %v238 = vmul.f32 %v223, %v180
  %v239 = vmul.f32 %v228, %v185
  %v240 = vmul.f32 %v233, %v190
  %v241 = vsel %vm193, %v165, %v235
  %v242 = vsel %vm194, %v170, %v236
  %v243 = vsel %vm195, %v175, %v237
  %v244 = vsel %vm196, %v180, %v238
  %v245 = vsel %vm197, %v185, %v239
  %v246 = vsel %vm198, %v190, %v240
  %v247 = vld [vmem:[%s4] sm:$0xff]
  %v248 = vld [vmem:[%s4 + $0x8] sm:$0xf]
  %v249 = vld [vmem:[%s5] sm:$0xff]
  %v250 = vld [vmem:[%s5 + $0x8] sm:$0xff]
  %v251 = vld [vmem:[%s5 + $0x10] sm:$0xff]
  %v252 = vld [vmem:[%s5 + $0x18] sm:$0xff]
  %v253 = vld [vmem:[%s5 + $0x20] sm:$0xff]
  %v254 = vld [vmem:[%s5 + $0x28] sm:$0xff]
  %v255 = vld [vmem:[%s6] sm:$0xff]
  %v256 = vld [vmem:[%s6 + $0x8] sm:$0xff]
  %v257 = vld [vmem:[%s7] sm:$0xff]
  %v258 = vld [vmem:[%s7 + $0x8] sm:$0xff]
  %v259 = vld [vmem:[%s7 + $0x10] sm:$0xff]
  %v260 = vld [vmem:[%s7 + $0x18] sm:$0xff]
  %v261 = vld [vmem:[%s7 + $0x20] sm:$0xff]
  %v262 = vld [vmem:[%s7 + $0x28] sm:$0xff]
  %v263 = vld [vmem:[%s7 + $0x30] sm:$0xff]
  %v264 = vld [vmem:[%s7 + $0x38] sm:$0xff]
  %v265 = vld [vmem:[%s7 + $0x40] sm:$0xff]
  %v266 = vld [vmem:[%s7 + $0x48] sm:$0xff]
  %v267 = vld [vmem:[%s7 + $0x50] sm:$0xff]
  %v268 = vld [vmem:[%s7 + $0x58] sm:$0xff]
  %v269 = vld [vmem:[%s7 + $0x60] sm:$0xff]
  %v270 = vld [vmem:[%s7 + $0x68] sm:$0xff]
  %v271 = vld [vmem:[%s7 + $0x70] sm:$0xff]
  %v272 = vld [vmem:[%s7 + $0x78] sm:$0xff]
  %vm273 = vcmask 392192
  %v275 = vsel %vm273, %v247, 0
  %v278 = vsel %vm273, %v248, 0
  %280 = vmatprep.subr.mxu0 0.0
  %281 = vmatpush1.msra.mxu0 %v241
  %282 = vmatprep.subr.mxu0 0.0
  %283 = vmatpush1.msra.mxu0 %v242
  %284 = vmatprep.subr.mxu0 0.0
  %285 = vmatpush1.msra.mxu0 %v243
  %286 = vmatprep.subr.mxu0 0.0
  %287 = vmatpush1.msra.mxu0 %v244
  %288 = vmatprep.subr.mxu0 0.0
  %289 = vmatpush1.msra.mxu0 %v245
  %290 = vmatprep.subr.mxu0 0.0
  %291 = vmatpush1.msra.mxu0 %v246
  %292 = vmatprep.subr.mxu0 0.0
  %293 = vmatpush1.msra.mxu0 0.0
  %294 = vmatprep.subr.mxu0 0.0
  %295 = vmatpush1.msra.mxu0 0.0
  %296 = vmatprep.subr.mxu0 0.0
  %297 = vmatpush1.msra.mxu0 0.0
  %298 = vmatprep.subr.mxu0 0.0
  %299 = vmatpush1.msra.mxu0 0.0
  %300 = vmatprep.subr.mxu0 0.0
  %301 = vmatpush1.msra.mxu0 0.0
  %302 = vmatprep.subr.mxu0 0.0
  %303 = vmatpush1.msra.mxu0 0.0
  %304 = vmatprep.subr.mxu0 0.0
  %305 = vmatpush1.msra.mxu0 0.0
  %306 = vmatprep.subr.mxu0 0.0
  %307 = vmatpush1.msra.mxu0 0.0
  %308 = vmatprep.subr.mxu0 0.0
  %309 = vmatpush1.msra.mxu0 0.0
  %310 = vmatprep.subr.mxu0 0.0
  %311 = vmatpush1.msra.mxu0 0.0
  %312 = vmatprep.subr.mxu0 0.0
  %313 = vmatpush1.msra.mxu0 0.0
  %314 = vmatprep.subr.mxu0 0.0
  %315 = vmatpush1.msra.mxu0 0.0
  %316 = vmatprep.subr.mxu0 0.0
  %317 = vmatpush1.msra.mxu0 0.0
  %318 = vmatprep.subr.mxu0 0.0
  %319 = vmatpush1.msra.mxu0 0.0
  %320 = vmatprep.subr.mxu0 0.0
  %321 = vmatpush1.msra.mxu0 0.0
  %322 = vmatprep.subr.mxu0 0.0
  %323 = vmatpush1.msra.mxu0 0.0
  %324 = vmatprep.subr.mxu0 0.0
  %325 = vmatpush1.msra.mxu0 0.0
  %326 = vmatprep.subr.mxu0 0.0
  %327 = vmatpush1.msra.mxu0 0.0
  %328 = vmatprep.subr.mxu0 0.0
  %329 = vmatpush1.msra.mxu0 0.0
  %330 = vmatprep.subr.mxu0 0.0
  %331 = vmatpush1.msra.mxu0 0.0
  %332 = vmatprep.subr.mxu0 0.0
  %333 = vmatpush1.msra.mxu0 0.0
  %334 = vmatprep.subr.mxu0 0.0
  %335 = vmatpush1.msra.mxu0 0.0
  %336 = vmatprep.subr.mxu0 0.0
  %337 = vmatpush1.msra.mxu0 0.0
  %338 = vmatprep.subr.mxu0 0.0
  %339 = vmatpush1.msra.mxu0 0.0
  %340 = vmatprep.subr.mxu0 0.0
  %341 = vmatpush1.msra.mxu0 0.0
  %342 = vmatprep.subr.mxu0 0.0
  %343 = vmatpush1.msra.mxu0 0.0
  %344 = vmatprep.mubr.f32.mxu0 0.0
  %345 = vmatmul.mubr.f32.gmra.mrb[0].mxu0 %v275
  %v346 = vpop.f32.mrb[0].mxu0
  %v347 = vadd.f32 0.0, %v346
  %v348 = vpop.f32.mrb[0].mxu0
  %349 = vmatprep.mubr.f32.mxu0 0.0
  %350 = vmatmul.mubr.f32.gmra.mrb[0].mxu0 %v278
  %v351 = vpop.f32.mrb[0].mxu0
  %v352 = vadd.f32 0.0, %v351
  %v353 = vpop.f32.mrb[0].mxu0
  %354 = vdwg.mxu0
  %355 = vmatprep.subr.mxu0 0.0
  %356 = vmatpush1.msra.mxu0 %v257
  %357 = vmatprep.subr.mxu0 0.0
  %358 = vmatpush1.msra.mxu0 %v258
  %359 = vmatprep.subr.mxu0 0.0
  %360 = vmatpush1.msra.mxu0 %v259
  %361 = vmatprep.subr.mxu0 0.0
  %362 = vmatpush1.msra.mxu0 %v260
  %363 = vmatprep.subr.mxu0 0.0
  %364 = vmatpush1.msra.mxu0 %v261
  %365 = vmatprep.subr.mxu0 0.0
  %366 = vmatpush1.msra.mxu0 %v262
  %367 = vmatprep.subr.mxu0 0.0
  %368 = vmatpush1.msra.mxu0 %v263
  %369 = vmatprep.subr.mxu0 0.0
  %370 = vmatpush1.msra.mxu0 %v264
  %371 = vmatprep.subr.mxu0 0.0
  %372 = vmatpush1.msra.mxu0 %v265
  %373 = vmatprep.subr.mxu0 0.0
  %374 = vmatpush1.msra.mxu0 %v266
  %375 = vmatprep.subr.mxu0 0.0
  %376 = vmatpush1.msra.mxu0 %v267
  %377 = vmatprep.subr.mxu0 0.0
  %378 = vmatpush1.msra.mxu0 %v268
  %379 = vmatprep.subr.mxu0 0.0
  %380 = vmatpush1.msra.mxu0 %v269
  %381 = vmatprep.subr.mxu0 0.0
  %382 = vmatpush1.msra.mxu0 %v270
  %383 = vmatprep.subr.mxu0 0.0
  %384 = vmatpush1.msra.mxu0 %v271
  %385 = vmatprep.subr.mxu0 0.0
  %386 = vmatpush1.msra.mxu0 %v272
  %387 = vmatprep.subr.mxu0 0.0
  %388 = vmatpush1.msra.mxu0 0.0
  %389 = vmatprep.subr.mxu0 0.0
  %390 = vmatpush1.msra.mxu0 0.0
  %391 = vmatprep.subr.mxu0 0.0
  %392 = vmatpush1.msra.mxu0 0.0
  %393 = vmatprep.subr.mxu0 0.0
  %394 = vmatpush1.msra.mxu0 0.0
  %395 = vmatprep.subr.mxu0 0.0
  %396 = vmatpush1.msra.mxu0 0.0
  %397 = vmatprep.subr.mxu0 0.0
  %398 = vmatpush1.msra.mxu0 0.0
  %399 = vmatprep.subr.mxu0 0.0
  %400 = vmatpush1.msra.mxu0 0.0
  %401 = vmatprep.subr.mxu0 0.0
  %402 = vmatpush1.msra.mxu0 0.0
  %403 = vmatprep.subr.mxu0 0.0
  %404 = vmatpush1.msra.mxu0 0.0
  %405 = vmatprep.subr.mxu0 0.0
  %406 = vmatpush1.msra.mxu0 0.0
  %407 = vmatprep.subr.mxu0 0.0
  %408 = vmatpush1.msra.mxu0 0.0
  %409 = vmatprep.subr.mxu0 0.0
  %410 = vmatpush1.msra.mxu0 0.0
  %411 = vmatprep.subr.mxu0 0.0
  %412 = vmatpush1.msra.mxu0 0.0
  %413 = vmatprep.subr.mxu0 0.0
  %414 = vmatpush1.msra.mxu0 0.0
  %415 = vmatprep.subr.mxu0 0.0
  %416 = vmatpush1.msra.mxu0 0.0
  %417 = vmatprep.subr.mxu0 0.0
  %418 = vmatpush1.msra.mxu0 0.0
  %419 = vmatprep.mubr.f32.mxu0 0.0
  %420 = vmatmul.mubr.f32.gmra.mrb[0].mxu0 %v347
  %v421 = vpop.f32.mrb[0].mxu0
  %v422 = vadd.f32 0.0, %v421
  %v423 = vpop.f32.mrb[0].mxu0
  %424 = vmatprep.mubr.f32.mxu0 0.0
  %425 = vmatmul.mubr.f32.gmra.mrb[0].mxu0 %v352
  %v426 = vpop.f32.mrb[0].mxu0
  %v427 = vadd.f32 0.0, %v426
  %v428 = vpop.f32.mrb[0].mxu0
  %429 = vdwg.mxu0
  %v430 = vmul.f32 %v422, 0.03125
  %v431 = vmul.f32 %v427, 0.03125
  %vm432 = vcmask 97280
  %v434 = vsel %vm432, %v249, 0
  %v437 = vsel %vm432, %v250, 0
  %v440 = vsel %vm432, %v251, 0
  %v443 = vsel %vm432, %v252, 0
  %v446 = vsel %vm432, %v253, 0
  %v449 = vsel %vm432, %v254, 0
  %vm451 = vcmask 1043456
  %v453 = vsel %vm451, %v431, 0
  %455 = vmatprep.subr.mxu0 0.0
  %456 = vmatpush1.msra.mxu0 %v430
  %457 = vmatprep.subr.mxu0 0.0
  %458 = vmatpush1.msra.mxu0 %v453
  %459 = vmatprep.subr.mxu0 0.0
  %460 = vmatpush1.msra.mxu0 0.0
  %461 = vmatprep.subr.mxu0 0.0
  %462 = vmatpush1.msra.mxu0 0.0
  %463 = vmatprep.subr.mxu0 0.0
  %464 = vmatpush1.msra.mxu0 0.0
  %465 = vmatprep.subr.mxu0 0.0
  %466 = vmatpush1.msra.mxu0 0.0
  %467 = vmatprep.subr.mxu0 0.0
  %468 = vmatpush1.msra.mxu0 0.0
  %469 = vmatprep.subr.mxu0 0.0
  %470 = vmatpush1.msra.mxu0 0.0
  %471 = vmatprep.subr.mxu0 0.0
  %472 = vmatpush1.msra.mxu0 0.0
  %473 = vmatprep.subr.mxu0 0.0
  %474 = vmatpush1.msra.mxu0 0.0
  %475 = vmatprep.subr.mxu0 0.0
  %476 = vmatpush1.msra.mxu0 0.0
  %477 = vmatprep.subr.mxu0 0.0
  %478 = vmatpush1.msra.mxu0 0.0
  %479 = vmatprep.subr.mxu0 0.0
  %480 = vmatpush1.msra.mxu0 0.0
  %481 = vmatprep.subr.mxu0 0.0
  %482 = vmatpush1.msra.mxu0 0.0
  %483 = vmatprep.subr.mxu0 0.0
  %484 = vmatpush1.msra.mxu0 0.0
  %485 = vmatprep.subr.mxu0 0.0
  %486 = vmatpush1.msra.mxu0 0.0
  %487 = vmatprep.subr.mxu0 0.0
  %488 = vmatpush1.msra.mxu0 0.0
  %489 = vmatprep.subr.mxu0 0.0
  %490 = vmatpush1.msra.mxu0 0.0
  %491 = vmatprep.subr.mxu0 0.0
  %492 = vmatpush1.msra.mxu0 0.0
  %493 = vmatprep.subr.mxu0 0.0
  %494 = vmatpush1.msra.mxu0 0.0
  %495 = vmatprep.subr.mxu0 0.0
  %496 = vmatpush1.msra.mxu0 0.0
  %497 = vmatprep.subr.mxu0 0.0
  %498 = vmatpush1.msra.mxu0 0.0
  %499 = vmatprep.subr.mxu0 0.0
  %500 = vmatpush1.msra.mxu0 0.0
  %501 = vmatprep.subr.mxu0 0.0
  %502 = vmatpush1.msra.mxu0 0.0
  %503 = vmatprep.subr.mxu0 0.0
  %504 = vmatpush1.msra.mxu0 0.0
  %505 = vmatprep.subr.mxu0 0.0
  %506 = vmatpush1.msra.mxu0 0.0
  %507 = vmatprep.subr.mxu0 0.0
  %508 = vmatpush1.msra.mxu0 0.0
  %509 = vmatprep.subr.mxu0 0.0
  %510 = vmatpush1.msra.mxu0 0.0
  %511 = vmatprep.subr.mxu0 0.0
  %512 = vmatpush1.msra.mxu0 0.0
  %513 = vmatprep.subr.mxu0 0.0
  %514 = vmatpush1.msra.mxu0 0.0
  %515 = vmatprep.subr.mxu0 0.0
  %516 = vmatpush1.msra.mxu0 0.0
  %517 = vmatprep.subr.mxu0 0.0
  %518 = vmatpush1.msra.mxu0 0.0
  %519 = vmatprep.mubr.f32.mxu0 0.0
  %520 = vmatmul.mubr.f32.gmra.mrb[0].mxu0 %v434
  %v521 = vpop.f32.mrb[0].mxu0
  %v522 = vadd.f32 0.0, %v521
  %v523 = vpop.f32.mrb[0].mxu0
  %524 = vmatprep.mubr.f32.mxu0 0.0
  %525 = vmatmul.mubr.f32.gmra.mrb[0].mxu0 %v437
  %v526 = vpop.f32.mrb[0].mxu0
  %v527 = vadd.f32 0.0, %v526
  %v528 = vpop.f32.mrb[0].mxu0
  %529 = vmatprep.mubr.f32.mxu0 0.0
  %530 = vmatmul.mubr.f32.gmra.mrb[0].mxu0 %v440
  %v531 = vpop.f32.mrb[0].mxu0
  %v532 = vadd.f32 0.0, %v531
  %v533 = vpop.f32.mrb[0].mxu0
  %534 = vmatprep.mubr.f32.mxu0 0.0
  %535 = vmatmul.mubr.f32.gmra.mrb[0].mxu0 %v443
  %v536 = vpop.f32.mrb[0].mxu0
  %v537 = vadd.f32 0.0, %v536
  %v538 = vpop.f32.mrb[0].mxu0
  %539 = vmatprep.mubr.f32.mxu0 0.0
  %540 = vmatmul.mubr.f32.gmra.mrb[0].mxu0 %v446
  %v541 = vpop.f32.mrb[0].mxu0
  %v542 = vadd.f32 0.0, %v541
  %v543 = vpop.f32.mrb[0].mxu0
  %544 = vmatprep.mubr.f32.mxu0 0.0
  %545 = vmatmul.mubr.f32.gmra.mrb[0].mxu0 %v449
  %v546 = vpop.f32.mrb[0].mxu0
  %v547 = vadd.f32 0.0, %v546
  %v548 = vpop.f32.mrb[0].mxu0
  %549 = vdwg.mxu0
  %v551 = vsel %vm79, %v522, 0
  %v554 = vsel %vm79, %v527, 0
  %v557 = vsel %vm79, %v532, 0
  %v560 = vsel %vm79, %v537, 0
  %v563 = vsel %vm79, %v542, 0
  %v566 = vsel %vm79, %v547, 0
  %568 = vmatprep.subr.mxu0 0.0
  %569 = vmatpush1.msra.mxu0 %v255
  %570 = vmatprep.subr.mxu0 0.0
  %571 = vmatpush1.msra.mxu0 %v256
  %572 = vmatprep.subr.mxu0 0.0
  %573 = vmatpush1.msra.mxu0 0.0
  %574 = vmatprep.subr.mxu0 0.0
  %575 = vmatpush1.msra.mxu0 0.0
  %576 = vmatprep.subr.mxu0 0.0
  %577 = vmatpush1.msra.mxu0 0.0
  %578 = vmatprep.subr.mxu0 0.0
  %579 = vmatpush1.msra.mxu0 0.0
  %580 = vmatprep.subr.mxu0 0.0
  %581 = vmatpush1.msra.mxu0 0.0
  %582 = vmatprep.subr.mxu0 0.0
  %583 = vmatpush1.msra.mxu0 0.0
  %584 = vmatprep.subr.mxu0 0.0
  %585 = vmatpush1.msra.mxu0 0.0
  %586 = vmatprep.subr.mxu0 0.0
  %587 = vmatpush1.msra.mxu0 0.0
  %588 = vmatprep.subr.mxu0 0.0
  %589 = vmatpush1.msra.mxu0 0.0
  %590 = vmatprep.subr.mxu0 0.0
  %591 = vmatpush1.msra.mxu0 0.0
  %592 = vmatprep.subr.mxu0 0.0
  %593 = vmatpush1.msra.mxu0 0.0
  %594 = vmatprep.subr.mxu0 0.0
  %595 = vmatpush1.msra.mxu0 0.0
  %596 = vmatprep.subr.mxu0 0.0
  %597 = vmatpush1.msra.mxu0 0.0
  %598 = vmatprep.subr.mxu0 0.0
  %599 = vmatpush1.msra.mxu0 0.0
  %600 = vmatprep.subr.mxu0 0.0
  %601 = vmatpush1.msra.mxu0 0.0
  %602 = vmatprep.subr.mxu0 0.0
  %603 = vmatpush1.msra.mxu0 0.0
  %604 = vmatprep.subr.mxu0 0.0
  %605 = vmatpush1.msra.mxu0 0.0
  %606 = vmatprep.subr.mxu0 0.0
  %607 = vmatpush1.msra.mxu0 0.0
  %608 = vmatprep.subr.mxu0 0.0
  %609 = vmatpush1.msra.mxu0 0.0
  %610 = vmatprep.subr.mxu0 0.0
  %611 = vmatpush1.msra.mxu0 0.0
  %612 = vmatprep.subr.mxu0 0.0
  %613 = vmatpush1.msra.mxu0 0.0
  %614 = vmatprep.subr.mxu0 0.0
  %615 = vmatpush1.msra.mxu0 0.0
  %616 = vmatprep.subr.mxu0 0.0
  %617 = vmatpush1.msra.mxu0 0.0
  %618 = vmatprep.subr.mxu0 0.0
  %619 = vmatpush1.msra.mxu0 0.0
  %620 = vmatprep.subr.mxu0 0.0
  %621 = vmatpush1.msra.mxu0 0.0
  %622 = vmatprep.subr.mxu0 0.0
  %623 = vmatpush1.msra.mxu0 0.0
  %624 = vmatprep.subr.mxu0 0.0
  %625 = vmatpush1.msra.mxu0 0.0
  %626 = vmatprep.subr.mxu0 0.0
  %627 = vmatpush1.msra.mxu0 0.0
  %628 = vmatprep.subr.mxu0 0.0
  %629 = vmatpush1.msra.mxu0 0.0
  %630 = vmatprep.subr.mxu0 0.0
  %631 = vmatpush1.msra.mxu0 0.0
  %632 = vmatprep.mubr.f32.mxu0 0.0
  %633 = vmatmul.mubr.f32.gmra.mrb[0].mxu0 %v551
  %v634 = vpop.f32.mrb[0].mxu0
  %v635 = vadd.f32 0.0, %v634
  %v636 = vpop.f32.mrb[0].mxu0
  %637 = vmatprep.mubr.f32.mxu0 0.0
  %638 = vmatmul.mubr.f32.gmra.mrb[0].mxu0 %v554
  %v639 = vpop.f32.mrb[0].mxu0
  %v640 = vadd.f32 0.0, %v639
  %v641 = vpop.f32.mrb[0].mxu0
  %642 = vmatprep.mubr.f32.mxu0 0.0
  %643 = vmatmul.mubr.f32.gmra.mrb[0].mxu0 %v557
  %v644 = vpop.f32.mrb[0].mxu0
  %v645 = vadd.f32 0.0, %v644
  %v646 = vpop.f32.mrb[0].mxu0
  %647 = vmatprep.mubr.f32.mxu0 0.0
  %648 = vmatmul.mubr.f32.gmra.mrb[0].mxu0 %v560
  %v649 = vpop.f32.mrb[0].mxu0
  %v650 = vadd.f32 0.0, %v649
  %v651 = vpop.f32.mrb[0].mxu0
  %652 = vmatprep.mubr.f32.mxu0 0.0
  %653 = vmatmul.mubr.f32.gmra.mrb[0].mxu0 %v563
  %v654 = vpop.f32.mrb[0].mxu0
  %v655 = vadd.f32 0.0, %v654
  %v656 = vpop.f32.mrb[0].mxu0
  %657 = vmatprep.mubr.f32.mxu0 0.0
  %658 = vmatmul.mubr.f32.gmra.mrb[0].mxu0 %v566
  %v659 = vpop.f32.mrb[0].mxu0
  %v660 = vadd.f32 0.0, %v659
  %v661 = vpop.f32.mrb[0].mxu0
  %662 = vdwg.mxu0
  %v663 = vsub.f32 %v241, %v635
  %v664 = vsub.f32 %v242, %v640
  %v665 = vsub.f32 %v243, %v645
  %v666 = vsub.f32 %v244, %v650
  %v667 = vsub.f32 %v245, %v655
  %v668 = vsub.f32 %v246, %v660
  %v669 = vmul.f32 %v663, %v663
  %v670 = vmul.f32 %v664, %v664
  %v671 = vmul.f32 %v665, %v665
  %v672 = vmul.f32 %v666, %v666
  %v673 = vmul.f32 %v667, %v667
  %v674 = vmul.f32 %v668, %v668
  %675 = vmatprep.subr.mxu0 0.0
  %676 = vmatpush1.msra.mxu0 %v669
  %677 = vmatprep.subr.mxu0 0.0
  %678 = vmatpush1.msra.mxu0 %v670
  %679 = vmatprep.subr.mxu0 0.0
  %680 = vmatpush1.msra.mxu0 %v671
  %681 = vmatprep.subr.mxu0 0.0
  %682 = vmatpush1.msra.mxu0 %v672
  %683 = vmatprep.subr.mxu0 0.0
  %684 = vmatpush1.msra.mxu0 %v673
  %685 = vmatprep.subr.mxu0 0.0
  %686 = vmatpush1.msra.mxu0 %v674
  %687 = vmatprep.subr.mxu0 0.0
  %688 = vmatpush1.msra.mxu0 0.0
  %689 = vmatprep.subr.mxu0 0.0
  %690 = vmatpush1.msra.mxu0 0.0
  %691 = vmatprep.subr.mxu0 0.0
  %692 = vmatpush1.msra.mxu0 0.0
  %693 = vmatprep.subr.mxu0 0.0
  %694 = vmatpush1.msra.mxu0 0.0
  %695 = vmatprep.subr.mxu0 0.0
  %696 = vmatpush1.msra.mxu0 0.0
  %697 = vmatprep.subr.mxu0 0.0
  %698 = vmatpush1.msra.mxu0 0.0
  %699 = vmatprep.subr.mxu0 0.0
  %700 = vmatpush1.msra.mxu0 0.0
  %701 = vmatprep.subr.mxu0 0.0
  %702 = vmatpush1.msra.mxu0 0.0
  %703 = vmatprep.subr.mxu0 0.0
  %704 = vmatpush1.msra.mxu0 0.0
  %705 = vmatprep.subr.mxu0 0.0
  %706 = vmatpush1.msra.mxu0 0.0
  %707 = vmatprep.subr.mxu0 0.0
  %708 = vmatpush1.msra.mxu0 0.0
  %709 = vmatprep.subr.mxu0 0.0
  %710 = vmatpush1.msra.mxu0 0.0
  %711 = vmatprep.subr.mxu0 0.0
  %712 = vmatpush1.msra.mxu0 0.0
  %713 = vmatprep.subr.mxu0 0.0
  %714 = vmatpush1.msra.mxu0 0.0
  %715 = vmatprep.subr.mxu0 0.0
  %716 = vmatpush1.msra.mxu0 0.0
  %717 = vmatprep.subr.mxu0 0.0
  %718 = vmatpush1.msra.mxu0 0.0
  %719 = vmatprep.subr.mxu0 0.0
  %720 = vmatpush1.msra.mxu0 0.0
  %721 = vmatprep.subr.mxu0 0.0
  %722 = vmatpush1.msra.mxu0 0.0
  %723 = vmatprep.subr.mxu0 0.0
  %724 = vmatpush1.msra.mxu0 0.0
  %725 = vmatprep.subr.mxu0 0.0
  %726 = vmatpush1.msra.mxu0 0.0
  %727 = vmatprep.subr.mxu0 0.0
  %728 = vmatpush1.msra.mxu0 0.0
  %729 = vmatprep.subr.mxu0 0.0
  %730 = vmatpush1.msra.mxu0 0.0
  %731 = vmatprep.subr.mxu0 0.0
  %732 = vmatpush1.msra.mxu0 0.0
  %733 = vmatprep.subr.mxu0 0.0
  %734 = vmatpush1.msra.mxu0 0.0
  %735 = vmatprep.subr.mxu0 0.0
  %736 = vmatpush1.msra.mxu0 0.0
  %737 = vmatprep.subr.mxu0 0.0
  %738 = vmatpush1.msra.mxu0 0.0
  %739 = vmatprep.mubr.f32.mxu0 0.0
  %740 = vmatmul.mubr.f32.gmra.mrb[0].mxu0 %v275
  %v741 = vpop.f32.mrb[0].mxu0
  %v742 = vadd.f32 0.0, %v741
  %v743 = vpop.f32.mrb[0].mxu0
  %744 = vmatprep.mubr.f32.mxu0 0.0
  %745 = vmatmul.mubr.f32.gmra.mrb[0].mxu0 %v278
  %v746 = vpop.f32.mrb[0].mxu0
  %v747 = vadd.f32 0.0, %v746
  %v748 = vpop.f32.mrb[0].mxu0
  %749 = vdwg.mxu0
  %750 = vmatprep.subr.mxu0 0.0
  %751 = vmatpush1.msra.mxu0 %v257
  %752 = vmatprep.subr.mxu0 0.0
  %753 = vmatpush1.msra.mxu0 %v258
  %754 = vmatprep.subr.mxu0 0.0
  %755 = vmatpush1.msra.mxu0 %v259
  %756 = vmatprep.subr.mxu0 0.0
  %757 = vmatpush1.msra.mxu0 %v260
  %758 = vmatprep.subr.mxu0 0.0
  %759 = vmatpush1.msra.mxu0 %v261
  %760 = vmatprep.subr.mxu0 0.0
  %761 = vmatpush1.msra.mxu0 %v262
  %762 = vmatprep.subr.mxu0 0.0
  %763 = vmatpush1.msra.mxu0 %v263
  %764 = vmatprep.subr.mxu0 0.0
  %765 = vmatpush1.msra.mxu0 %v264
  %766 = vmatprep.subr.mxu0 0.0
  %767 = vmatpush1.msra.mxu0 %v265
  %768 = vmatprep.subr.mxu0 0.0
  %769 = vmatpush1.msra.mxu0 %v266
  %770 = vmatprep.subr.mxu0 0.0
  %771 = vmatpush1.msra.mxu0 %v267
  %772 = vmatprep.subr.mxu0 0.0
  %773 = vmatpush1.msra.mxu0 %v268
  %774 = vmatprep.subr.mxu0 0.0
  %775 = vmatpush1.msra.mxu0 %v269
  %776 = vmatprep.subr.mxu0 0.0
  %777 = vmatpush1.msra.mxu0 %v270
  %778 = vmatprep.subr.mxu0 0.0
  %779 = vmatpush1.msra.mxu0 %v271
  %780 = vmatprep.subr.mxu0 0.0
  %781 = vmatpush1.msra.mxu0 %v272
  %782 = vmatprep.subr.mxu0 0.0
  %783 = vmatpush1.msra.mxu0 0.0
  %784 = vmatprep.subr.mxu0 0.0
  %785 = vmatpush1.msra.mxu0 0.0
  %786 = vmatprep.subr.mxu0 0.0
  %787 = vmatpush1.msra.mxu0 0.0
  %788 = vmatprep.subr.mxu0 0.0
  %789 = vmatpush1.msra.mxu0 0.0
  %790 = vmatprep.subr.mxu0 0.0
  %791 = vmatpush1.msra.mxu0 0.0
  %792 = vmatprep.subr.mxu0 0.0
  %793 = vmatpush1.msra.mxu0 0.0
  %794 = vmatprep.subr.mxu0 0.0
  %795 = vmatpush1.msra.mxu0 0.0
  %796 = vmatprep.subr.mxu0 0.0
  %797 = vmatpush1.msra.mxu0 0.0
  %798 = vmatprep.subr.mxu0 0.0
  %799 = vmatpush1.msra.mxu0 0.0
  %800 = vmatprep.subr.mxu0 0.0
  %801 = vmatpush1.msra.mxu0 0.0
  %802 = vmatprep.subr.mxu0 0.0
  %803 = vmatpush1.msra.mxu0 0.0
  %804 = vmatprep.subr.mxu0 0.0
  %805 = vmatpush1.msra.mxu0 0.0
  %806 = vmatprep.subr.mxu0 0.0
  %807 = vmatpush1.msra.mxu0 0.0
  %808 = vmatprep.subr.mxu0 0.0
  %809 = vmatpush1.msra.mxu0 0.0
  %810 = vmatprep.subr.mxu0 0.0
  %811 = vmatpush1.msra.mxu0 0.0
  %812 = vmatprep.subr.mxu0 0.0
  %813 = vmatpush1.msra.mxu0 0.0
  %814 = vmatprep.mubr.f32.mxu0 0.0
  %815 = vmatmul.mubr.f32.gmra.mrb[0].mxu0 %v742
  %v816 = vpop.f32.mrb[0].mxu0
  %v817 = vadd.f32 0.0, %v816
  %v818 = vpop.f32.mrb[0].mxu0
  %819 = vmatprep.mubr.f32.mxu0 0.0
  %820 = vmatmul.mubr.f32.gmra.mrb[0].mxu0 %v747
  %v821 = vpop.f32.mrb[0].mxu0
  %v822 = vadd.f32 0.0, %v821
  %v823 = vpop.f32.mrb[0].mxu0
  %824 = vdwg.mxu0
  %v825 = vmul.f32 %v817, 0.03125
  %v826 = vmul.f32 %v822, 0.03125
  %v828 = vsel %vm451, %v826, 0
  %830 = vmatprep.subr.mxu0 0.0
  %831 = vmatpush1.msra.mxu0 %v825
  %832 = vmatprep.subr.mxu0 0.0
  %833 = vmatpush1.msra.mxu0 %v828
  %834 = vmatprep.subr.mxu0 0.0
  %835 = vmatpush1.msra.mxu0 0.0
  %836 = vmatprep.subr.mxu0 0.0
  %837 = vmatpush1.msra.mxu0 0.0
  %838 = vmatprep.subr.mxu0 0.0
  %839 = vmatpush1.msra.mxu0 0.0
  %840 = vmatprep.subr.mxu0 0.0
  %841 = vmatpush1.msra.mxu0 0.0
  %842 = vmatprep.subr.mxu0 0.0
  %843 = vmatpush1.msra.mxu0 0.0
  %844 = vmatprep.subr.mxu0 0.0
  %845 = vmatpush1.msra.mxu0 0.0
  %846 = vmatprep.subr.mxu0 0.0
  %847 = vmatpush1.msra.mxu0 0.0
  %848 = vmatprep.subr.mxu0 0.0
  %849 = vmatpush1.msra.mxu0 0.0
  %850 = vmatprep.subr.mxu0 0.0
  %851 = vmatpush1.msra.mxu0 0.0
  %852 = vmatprep.subr.mxu0 0.0
  %853 = vmatpush1.msra.mxu0 0.0
  %854 = vmatprep.subr.mxu0 0.0
  %855 = vmatpush1.msra.mxu0 0.0
  %856 = vmatprep.subr.mxu0 0.0
  %857 = vmatpush1.msra.mxu0 0.0
  %858 = vmatprep.subr.mxu0 0.0
  %859 = vmatpush1.msra.mxu0 0.0
  %860 = vmatprep.subr.mxu0 0.0
  %861 = vmatpush1.msra.mxu0 0.0
  %862 = vmatprep.subr.mxu0 0.0
  %863 = vmatpush1.msra.mxu0 0.0
  %864 = vmatprep.subr.mxu0 0.0
  %865 = vmatpush1.msra.mxu0 0.0
  %866 = vmatprep.subr.mxu0 0.0
  %867 = vmatpush1.msra.mxu0 0.0
  %868 = vmatprep.subr.mxu0 0.0
  %869 = vmatpush1.msra.mxu0 0.0
  %870 = vmatprep.subr.mxu0 0.0
  %871 = vmatpush1.msra.mxu0 0.0
  %872 = vmatprep.subr.mxu0 0.0
  %873 = vmatpush1.msra.mxu0 0.0
  %874 = vmatprep.subr.mxu0 0.0
  %875 = vmatpush1.msra.mxu0 0.0
  %876 = vmatprep.subr.mxu0 0.0
  %877 = vmatpush1.msra.mxu0 0.0
  %878 = vmatprep.subr.mxu0 0.0
  %879 = vmatpush1.msra.mxu0 0.0
  %880 = vmatprep.subr.mxu0 0.0
  %881 = vmatpush1.msra.mxu0 0.0
  %882 = vmatprep.subr.mxu0 0.0
  %883 = vmatpush1.msra.mxu0 0.0
  %884 = vmatprep.subr.mxu0 0.0
  %885 = vmatpush1.msra.mxu0 0.0
  %886 = vmatprep.subr.mxu0 0.0
  %887 = vmatpush1.msra.mxu0 0.0
  %888 = vmatprep.subr.mxu0 0.0
  %889 = vmatpush1.msra.mxu0 0.0
  %890 = vmatprep.subr.mxu0 0.0
  %891 = vmatpush1.msra.mxu0 0.0
  %892 = vmatprep.subr.mxu0 0.0
  %893 = vmatpush1.msra.mxu0 0.0
  %894 = vmatprep.mubr.f32.mxu0 0.0
  %895 = vmatmul.mubr.f32.gmra.mrb[0].mxu0 %v434
  %v896 = vpop.f32.mrb[0].mxu0
  %v897 = vadd.f32 0.0, %v896
  %v898 = vpop.f32.mrb[0].mxu0
  %899 = vmatprep.mubr.f32.mxu0 0.0
  %900 = vmatmul.mubr.f32.gmra.mrb[0].mxu0 %v437
  %v901 = vpop.f32.mrb[0].mxu0
  %v902 = vadd.f32 0.0, %v901
  %v903 = vpop.f32.mrb[0].mxu0
  %904 = vmatprep.mubr.f32.mxu0 0.0
  %905 = vmatmul.mubr.f32.gmra.mrb[0].mxu0 %v440
  %v906 = vpop.f32.mrb[0].mxu0
  %v907 = vadd.f32 0.0, %v906
  %v908 = vpop.f32.mrb[0].mxu0
  %909 = vmatprep.mubr.f32.mxu0 0.0
  %910 = vmatmul.mubr.f32.gmra.mrb[0].mxu0 %v443
  %v911 = vpop.f32.mrb[0].mxu0
  %v912 = vadd.f32 0.0, %v911
  %v913 = vpop.f32.mrb[0].mxu0
  %914 = vmatprep.mubr.f32.mxu0 0.0
  %915 = vmatmul.mubr.f32.gmra.mrb[0].mxu0 %v446
  %v916 = vpop.f32.mrb[0].mxu0
  %v917 = vadd.f32 0.0, %v916
  %v918 = vpop.f32.mrb[0].mxu0
  %919 = vmatprep.mubr.f32.mxu0 0.0
  %920 = vmatmul.mubr.f32.gmra.mrb[0].mxu0 %v449
  %v921 = vpop.f32.mrb[0].mxu0
  %v922 = vadd.f32 0.0, %v921
  %v923 = vpop.f32.mrb[0].mxu0
  %924 = vdwg.mxu0
  %v926 = vsel %vm79, %v897, 0
  %v929 = vsel %vm79, %v902, 0
  %v932 = vsel %vm79, %v907, 0
  %v935 = vsel %vm79, %v912, 0
  %v938 = vsel %vm79, %v917, 0
  %v941 = vsel %vm79, %v922, 0
  %943 = vmatprep.subr.mxu0 0.0
  %944 = vmatpush1.msra.mxu0 %v255
  %945 = vmatprep.subr.mxu0 0.0
  %946 = vmatpush1.msra.mxu0 %v256
  %947 = vmatprep.subr.mxu0 0.0
  %948 = vmatpush1.msra.mxu0 0.0
  %949 = vmatprep.subr.mxu0 0.0
  %950 = vmatpush1.msra.mxu0 0.0
  %951 = vmatprep.subr.mxu0 0.0
  %952 = vmatpush1.msra.mxu0 0.0
  %953 = vmatprep.subr.mxu0 0.0
  %954 = vmatpush1.msra.mxu0 0.0
  %955 = vmatprep.subr.mxu0 0.0
  %956 = vmatpush1.msra.mxu0 0.0
  %957 = vmatprep.subr.mxu0 0.0
  %958 = vmatpush1.msra.mxu0 0.0
  %959 = vmatprep.subr.mxu0 0.0
  %960 = vmatpush1.msra.mxu0 0.0
  %961 = vmatprep.subr.mxu0 0.0
  %962 = vmatpush1.msra.mxu0 0.0
  %963 = vmatprep.subr.mxu0 0.0
  %964 = vmatpush1.msra.mxu0 0.0
  %965 = vmatprep.subr.mxu0 0.0
  %966 = vmatpush1.msra.mxu0 0.0
  %967 = vmatprep.subr.mxu0 0.0
  %968 = vmatpush1.msra.mxu0 0.0
  %969 = vmatprep.subr.mxu0 0.0
  %970 = vmatpush1.msra.mxu0 0.0
  %971 = vmatprep.subr.mxu0 0.0
  %972 = vmatpush1.msra.mxu0 0.0
  %973 = vmatprep.subr.mxu0 0.0
  %974 = vmatpush1.msra.mxu0 0.0
  %975 = vmatprep.subr.mxu0 0.0
  %976 = vmatpush1.msra.mxu0 0.0
  %977 = vmatprep.subr.mxu0 0.0
  %978 = vmatpush1.msra.mxu0 0.0
  %979 = vmatprep.subr.mxu0 0.0
  %980 = vmatpush1.msra.mxu0 0.0
  %981 = vmatprep.subr.mxu0 0.0
  %982 = vmatpush1.msra.mxu0 0.0
  %983 = vmatprep.subr.mxu0 0.0
  %984 = vmatpush1.msra.mxu0 0.0
  %985 = vmatprep.subr.mxu0 0.0
  %986 = vmatpush1.msra.mxu0 0.0
  %987 = vmatprep.subr.mxu0 0.0
  %988 = vmatpush1.msra.mxu0 0.0
  %989 = vmatprep.subr.mxu0 0.0
  %990 = vmatpush1.msra.mxu0 0.0
  %991 = vmatprep.subr.mxu0 0.0
  %992 = vmatpush1.msra.mxu0 0.0
  %993 = vmatprep.subr.mxu0 0.0
  %994 = vmatpush1.msra.mxu0 0.0
  %995 = vmatprep.subr.mxu0 0.0
  %996 = vmatpush1.msra.mxu0 0.0
  %997 = vmatprep.subr.mxu0 0.0
  %998 = vmatpush1.msra.mxu0 0.0
  %999 = vmatprep.subr.mxu0 0.0
  %1000 = vmatpush1.msra.mxu0 0.0
  %1001 = vmatprep.subr.mxu0 0.0
  %1002 = vmatpush1.msra.mxu0 0.0
  %1003 = vmatprep.subr.mxu0 0.0
  %1004 = vmatpush1.msra.mxu0 0.0
  %1005 = vmatprep.subr.mxu0 0.0
  %1006 = vmatpush1.msra.mxu0 0.0
  %1007 = vmatprep.mubr.f32.mxu0 0.0
  %1008 = vmatmul.mubr.f32.gmra.mrb[0].mxu0 %v926
  %v1009 = vpop.f32.mrb[0].mxu0
  %v1010 = vadd.f32 1e-05, %v1009
  %v1011 = vpop.f32.mrb[0].mxu0
  %1012 = vmatprep.mubr.f32.mxu0 0.0
  %1013 = vmatmul.mubr.f32.gmra.mrb[0].mxu0 %v929
  %v1014 = vpop.f32.mrb[0].mxu0
  %v1015 = vadd.f32 1e-05, %v1014
  %v1016 = vpop.f32.mrb[0].mxu0
  %1017 = vmatprep.mubr.f32.mxu0 0.0
  %1018 = vmatmul.mubr.f32.gmra.mrb[0].mxu0 %v932
  %v1019 = vpop.f32.mrb[0].mxu0
  %v1020 = vadd.f32 1e-05, %v1019
  %v1021 = vpop.f32.mrb[0].mxu0
  %1022 = vmatprep.mubr.f32.mxu0 0.0
  %1023 = vmatmul.mubr.f32.gmra.mrb[0].mxu0 %v935
  %v1024 = vpop.f32.mrb[0].mxu0
  %v1025 = vadd.f32 1e-05, %v1024
  %v1026 = vpop.f32.mrb[0].mxu0
  %1027 = vmatprep.mubr.f32.mxu0 0.0
  %1028 = vmatmul.mubr.f32.gmra.mrb[0].mxu0 %v938
  %v1029 = vpop.f32.mrb[0].mxu0
  %v1030 = vadd.f32 1e-05, %v1029
  %v1031 = vpop.f32.mrb[0].mxu0
  %1032 = vmatprep.mubr.f32.mxu0 0.0
  %1033 = vmatmul.mubr.f32.gmra.mrb[0].mxu0 %v941
  %v1034 = vpop.f32.mrb[0].mxu0
  %v1035 = vadd.f32 1e-05, %v1034
  %v1036 = vpop.f32.mrb[0].mxu0
  %1037 = vdwg.mxu0
  %v1038 = vrsqrt.pop %v1010
  %v1039 = vmul.f32 %v1010, %v1038
  %vm1040 = vcmp.eq.f32.partialorder %v1010, inf
  %v1041 = vsel %vm1040, %v1010, %v1039
  %vm1042 = vcmp.eq.f32.partialorder %v1010, 0.0
  %v1043 = vand.u32 %v1010, 2147483648
  %v1044 = vsel %vm1042, %v1043, %v1041
  %v1045 = vrsqrt.pop %v1015
  %v1046 = vmul.f32 %v1015, %v1045
  %vm1047 = vcmp.eq.f32.partialorder %v1015, inf
  %v1048 = vsel %vm1047, %v1015, %v1046
  %vm1049 = vcmp.eq.f32.partialorder %v1015, 0.0
  %v1050 = vand.u32 %v1015, 2147483648
  %v1051 = vsel %vm1049, %v1050, %v1048
  %v1052 = vrsqrt.pop %v1020
  %v1053 = vmul.f32 %v1020, %v1052
  %vm1054 = vcmp.eq.f32.partialorder %v1020, inf
  %v1055 = vsel %vm1054, %v1020, %v1053
  %vm1056 = vcmp.eq.f32.partialorder %v1020, 0.0
  %v1057 = vand.u32 %v1020, 2147483648
  %v1058 = vsel %vm1056, %v1057, %v1055
  %v1059 = vrsqrt.pop %v1025
  %v1060 = vmul.f32 %v1025, %v1059
  %vm1061 = vcmp.eq.f32.partialorder %v1025, inf
  %v1062 = vsel %vm1061, %v1025, %v1060
  %vm1063 = vcmp.eq.f32.partialorder %v1025, 0.0
  %v1064 = vand.u32 %v1025, 2147483648
  %v1065 = vsel %vm1063, %v1064, %v1062
  %v1066 = vrsqrt.pop %v1030
  %v1067 = vmul.f32 %v1030, %v1066
  %vm1068 = vcmp.eq.f32.partialorder %v1030, inf
  %v1069 = vsel %vm1068, %v1030, %v1067
  %vm1070 = vcmp.eq.f32.partialorder %v1030, 0.0
  %v1071 = vand.u32 %v1030, 2147483648
  %v1072 = vsel %vm1070, %v1071, %v1069
  %v1073 = vrsqrt.pop %v1035
  %v1074 = vmul.f32 %v1035, %v1073
  %vm1075 = vcmp.eq.f32.partialorder %v1035, inf
  %v1076 = vsel %vm1075, %v1035, %v1074
  %vm1077 = vcmp.eq.f32.partialorder %v1035, 0.0
  %v1078 = vand.u32 %v1035, 2147483648
  %v1079 = vsel %vm1077, %v1078, %v1076
  %v1080 = vadd.f32 %v1044, 1e-05
  %v1081 = vadd.f32 %v1051, 1e-05
  %v1082 = vadd.f32 %v1058, 1e-05
  %v1083 = vadd.f32 %v1065, 1e-05
  %v1084 = vadd.f32 %v1072, 1e-05
  %v1085 = vadd.f32 %v1079, 1e-05
  %v1086 = vrcp.pop %v1080
  %v1087 = vmul.f32 %v663, %v1086
  %v1088 = vrcp.pop %v1081
  %v1089 = vmul.f32 %v664, %v1088
  %v1090 = vrcp.pop %v1082
  %v1091 = vmul.f32 %v665, %v1090
  %v1092 = vrcp.pop %v1083
  %v1093 = vmul.f32 %v666, %v1092
  %v1094 = vrcp.pop %v1084
  %v1095 = vmul.f32 %v667, %v1094
  %v1096 = vrcp.pop %v1085
  %v1097 = vmul.f32 %v668, %v1096
  %v1098 = vld [vmem:[%s8] sm:$0xff]
  %v1099 = vld [vmem:[%s8 + $0x8] sm:$0xff]
  %v1100 = vld [vmem:[%s8 + $0x10] sm:$0xff]
  %v1101 = vld [vmem:[%s8 + $0x18] sm:$0xff]
  %v1102 = vld [vmem:[%s8 + $0x20] sm:$0xff]
  %v1103 = vld [vmem:[%s8 + $0x28] sm:$0xff]
  %v1104 = vmul.f32 %v1087, %v1098
  %v1105 = vmul.f32 %v1089, %v1099
  %v1106 = vmul.f32 %v1091, %v1100
  %v1107 = vmul.f32 %v1093, %v1101
  %v1108 = vmul.f32 %v1095, %v1102
  %v1109 = vmul.f32 %v1097, %v1103
  %v1110 = vld [vmem:[%s9] sm:$0xff]
  %v1111 = vld [vmem:[%s9 + $0x8] sm:$0xff]
  %v1112 = vld [vmem:[%s9 + $0x10] sm:$0xff]
  %v1113 = vld [vmem:[%s9 + $0x18] sm:$0xff]
  %v1114 = vld [vmem:[%s9 + $0x20] sm:$0xff]
  %v1115 = vld [vmem:[%s9 + $0x28] sm:$0xff]
  %v1116 = vadd.f32 %v1104, %v1110
  %v1117 = vadd.f32 %v1105, %v1111
  %v1118 = vadd.f32 %v1106, %v1112
  %v1119 = vadd.f32 %v1107, %v1113
  %v1120 = vadd.f32 %v1108, %v1114
  %v1121 = vadd.f32 %v1109, %v1115
  %1122 = vst [vmem:[%s10] sm:$0xff] %v1116
  %1123 = vst [vmem:[%s10 + $0x8] sm:$0xff] %v1117
  %1124 = vst [vmem:[%s10 + $0x10] sm:$0xff] %v1118
  %1125 = vst [vmem:[%s10 + $0x18] sm:$0xff] %v1119
  %1126 = vst [vmem:[%s10 + $0x20] sm:$0xff] %v1120
  %1127 = vst [vmem:[%s10 + $0x28] sm:$0xff] %v1121
  // Predicated region
  $region42: #{stream_gridnet_block.19} parent=0 // pred_check
    _
  $region43: #{stream_gridnet_block.19} parent=0 // pred_check_branch
    %1129 = sbr.rel (0) target = $region45
  $region44: #{stream_gridnet_block.19} parent=0 // pred_region
    _
  $region45: #{stream_gridnet_block.19} parent=0 // pred_fallthru
    _
  // Predicated region
  $region46: #{stream_gridnet_block.19} parent=0 // pred_check
    _
  $region47: #{stream_gridnet_block.19} parent=0 // pred_check_branch
    %1131 = sbr.rel (0) target = $region49
  $region48: #{stream_gridnet_block.19} parent=0 // pred_region
    _
  $region49: #{stream_gridnet_block.19} parent=0 // pred_fallthru
    _

// kernel: stream_gridnet_block.20
$region0: #{stream_gridnet_block.20}
  #allocation0 [shape = 'u32[]', space=smem, size = 0x4, offset = 0x4, fixed_abs, tag = 'smem constant byte address 0x4 - core index']
  #allocation1 [shape = 'u32[144,128]{1,0:T(1,128)}', space=vmem, size = 0x12000, scoped, tag = 'internal scratch']
  %s0 = inlined_call_operand.vmem [shape: f32[8,8,32], index: 0, kind: input, shape index: {}]
  %s1 = inlined_call_operand.vmem [shape: f32[8,32,24], index: 1, kind: input, shape index: {}]
  %s2 = inlined_call_operand.vmem [shape: f32[8,24,32], index: 2, kind: input, shape index: {}]
  %s3 = inlined_call_operand.vmem [shape: f32[8,8,32], index: 3, kind: output, shape index: {}]
  %s4 = sld [smem:[#allocation0]]
  $region45: #{stream_gridnet_block.20} parent=0
    _
  %s6 = ssub.s32 1, %s4
  %s7 = scalar_select 0, %s6, %s4
  loop: start=0, step=1, limit=4
  $region2: #{stream_gridnet_block.20} parent=0 // loop_pre_header
    _
  $region3: #{stream_gridnet_block.20} parent=0 // loop_header
    %s9 = sphi 0, %s13
    %p10 = scmp.ge.s32.totalorder %s9, 4
    %s19 = sphi 0, %s21
    %s22 = sphi 0, %s19
    %s23 = sphi 0, %s22
    %s39 = sphi 0, %s23
    %s45 = sphi 0, %s47
    %s48 = sphi 0, %s45
    %s49 = sphi 0, %s48
    %s65 = sphi 0, %s49
    %s71 = sphi 0, %s73
    %s74 = sphi 0, %s71
    %s75 = sphi 0, %s74
    %s91 = sphi 0, %s75
    %s97 = sphi 0, %s99
    %s100 = sphi 0, %s97
    %s101 = sphi 0, %s100
    %s117 = sphi 0, %s101
  $region4: #{stream_gridnet_block.20} parent=0 // loop_header_branch
    %12 = sbr.rel (%p10) target = $region8
  $region5: #{stream_gridnet_block.20} parent=0 // loop_body
    %s14 = ssub.s32 %s9, 1
    %s15 = ssub.s32 %s9, 2
    %s16 = sadd.s32 %s9, 1
    %s17 = ssub.s32 %s9, %s16
    %p18 = scmp.eq.s32.totalorder %s17, 0
    %s20 = sadd.s32 %s19, 1
    %s21 = scalar_select %p18, %s19, %s20
    %p24 = pneg %p18
    %p25 = scmp.eq.s32.totalorder %s9, 1
    %p26 = por %p24, %p25
    %p27 = scmp.ne.s32.totalorder %s19, %s22
    %p28 = scmp.eq.s32.totalorder %s9, 0
    %p29 = por %p27, %p28
    %p30 = scmp.ne.s32.totalorder %s19, %s22
    %p31 = scmp.eq.s32.totalorder %s14, 1
    %p32 = por %p30, %p31
    %p33 = scmp.ne.s32.totalorder %s22, %s23
    %p34 = scmp.eq.s32.totalorder %s14, 0
    %p35 = por %p33, %p34
    %p36 = scmp.ne.s32.totalorder %s22, %s23
    %p37 = scmp.eq.s32.totalorder %s15, 1
    %p38 = por %p36, %p37
    %p40 = scmp.ne.s32.totalorder %s23, %s39
    %p41 = scmp.eq.s32.totalorder %s15, 0
    %p42 = por %p40, %p41
    %s43 = ssub.s32 %s9, %s16
    %p44 = scmp.eq.s32.totalorder %s43, 0
    %s46 = sadd.s32 %s45, 1
    %s47 = scalar_select %p44, %s45, %s46
    %p50 = pneg %p44
    %p51 = scmp.eq.s32.totalorder %s9, 1
    %p52 = por %p50, %p51
    %p53 = scmp.ne.s32.totalorder %s45, %s48
    %p54 = scmp.eq.s32.totalorder %s9, 0
    %p55 = por %p53, %p54
    %p56 = scmp.ne.s32.totalorder %s45, %s48
    %p57 = scmp.eq.s32.totalorder %s14, 1
    %p58 = por %p56, %p57
    %p59 = scmp.ne.s32.totalorder %s48, %s49
    %p60 = scmp.eq.s32.totalorder %s14, 0
    %p61 = por %p59, %p60
    %p62 = scmp.ne.s32.totalorder %s48, %s49
    %p63 = scmp.eq.s32.totalorder %s15, 1
    %p64 = por %p62, %p63
    %p66 = scmp.ne.s32.totalorder %s49, %s65
    %p67 = scmp.eq.s32.totalorder %s15, 0
    %p68 = por %p66, %p67
    %s69 = ssub.s32 %s9, %s16
    %p70 = scmp.eq.s32.totalorder %s69, 0
    %s72 = sadd.s32 %s71, 1
    %s73 = scalar_select %p70, %s71, %s72
    %p76 = pneg %p70
    %p77 = scmp.eq.s32.totalorder %s9, 1
    %p78 = por %p76, %p77
    %p79 = scmp.ne.s32.totalorder %s71, %s74
    %p80 = scmp.eq.s32.totalorder %s9, 0
    %p81 = por %p79, %p80
    %p82 = scmp.ne.s32.totalorder %s71, %s74
    %p83 = scmp.eq.s32.totalorder %s14, 1
    %p84 = por %p82, %p83
    %p85 = scmp.ne.s32.totalorder %s74, %s75
    %p86 = scmp.eq.s32.totalorder %s14, 0
    %p87 = por %p85, %p86
    %p88 = scmp.ne.s32.totalorder %s74, %s75
    %p89 = scmp.eq.s32.totalorder %s15, 1
    %p90 = por %p88, %p89
    %p92 = scmp.ne.s32.totalorder %s75, %s91
    %p93 = scmp.eq.s32.totalorder %s15, 0
    %p94 = por %p92, %p93
    %s95 = ssub.s32 %s9, %s16
    %p96 = scmp.eq.s32.totalorder %s95, 0
    %s98 = sadd.s32 %s97, 1
    %s99 = scalar_select %p96, %s97, %s98
    %p102 = pneg %p96
    %p103 = scmp.eq.s32.totalorder %s9, 1
    %p104 = por %p102, %p103
    %p105 = scmp.ne.s32.totalorder %s97, %s100
    %p106 = scmp.eq.s32.totalorder %s9, 0
    %p107 = por %p105, %p106
    %p108 = scmp.ne.s32.totalorder %s97, %s100
    %p109 = scmp.eq.s32.totalorder %s14, 1
    %p110 = por %p108, %p109
    %p111 = scmp.ne.s32.totalorder %s100, %s101
    %p112 = scmp.eq.s32.totalorder %s14, 0
    %p113 = por %p111, %p112
    %p114 = scmp.ne.s32.totalorder %s100, %s101
    %p115 = scmp.eq.s32.totalorder %s15, 1
    %p116 = por %p114, %p115
    %p118 = scmp.ne.s32.totalorder %s101, %s117
    %p119 = scmp.eq.s32.totalorder %s15, 0
    %p120 = por %p118, %p119
    %p121 = scmp.le.s32.totalorder 1, %s9
    %p122 = scmp.lt.s32.totalorder %s9, 3
    %p123 = pnand %p121, %p122
    %p124 = pneg %p123
    // Predicated region
    $region9: #{stream_gridnet_block.20} parent=5 // pred_check
      _
    $region10: #{stream_gridnet_block.20} parent=5 // pred_check_branch
      %126 = sbr.rel (%p123) target = $region12
    $region11: #{stream_gridnet_block.20} parent=5 // pred_region
      %s127 = ssub.s32 %s9, 1
    $region12: #{stream_gridnet_block.20} parent=5 // pred_fallthru
      _
    %p128 = scmp.lt.s32.totalorder %s9, 2
    // Predicated region
    $region13: #{stream_gridnet_block.20} parent=5 // pred_check
      %p129 = pneg %p128
    $region14: #{stream_gridnet_block.20} parent=5 // pred_check_branch
      %131 = sbr.rel (%p129) target = $region16
    $region15: #{stream_gridnet_block.20} parent=5 // pred_region
      // Predicated region
      $region17: #{stream_gridnet_block.20} parent=15 // pred_check
        %p132 = pneg %p29
      $region18: #{stream_gridnet_block.20} parent=15 // pred_check_branch
        %134 = sbr.rel (%p132) target = $region20
      $region19: #{stream_gridnet_block.20} parent=15 // pred_region
        %s135 = smul.u32 4, %s9
        %p136 = scmp.lt.s32.totalorder %s135, 7
        %s137 = scalar_select %p136, %s135, 7
        %s138 = smul.addr %s137, 8
        %s139 = scalar_lea.vmem %s0, %s138
        %s140 = smul.u32 4, %s9
      $region20: #{stream_gridnet_block.20} parent=15 // pred_fallthru
        _
      // Predicated region
      $region21: #{stream_gridnet_block.20} parent=15 // pred_check
        %p141 = pneg %p55
      $region22: #{stream_gridnet_block.20} parent=15 // pred_check_branch
        %143 = sbr.rel (%p141) target = $region24
      $region23: #{stream_gridnet_block.20} parent=15 // pred_region
        %s144 = smul.u32 4, %s9
        %p145 = scmp.lt.s32.totalorder %s144, 7
        %s146 = scalar_select %p145, %s144, 7
        %s147 = smul.addr %s146, 4
        %s148 = smul.addr %s147, 8
        %s149 = scalar_lea.vmem %s1, %s148
        %s150 = smul.u32 4, %s9
      $region24: #{stream_gridnet_block.20} parent=15 // pred_fallthru
        _
      // Predicated region
      $region25: #{stream_gridnet_block.20} parent=15 // pred_check
        %p151 = pneg %p81
      $region26: #{stream_gridnet_block.20} parent=15 // pred_check_branch
        %153 = sbr.rel (%p151) target = $region28
      $region27: #{stream_gridnet_block.20} parent=15 // pred_region
        %s154 = smul.u32 4, %s9
        %p155 = scmp.lt.s32.totalorder %s154, 7
        %s156 = scalar_select %p155, %s154, 7
        %s157 = smul.addr %s156, 3
        %s158 = smul.addr %s157, 8
        %s159 = scalar_lea.vmem %s2, %s158
        %s160 = smul.u32 4, %s9
      $region28: #{stream_gridnet_block.20} parent=15 // pred_fallthru
        _
    $region16: #{stream_gridnet_block.20} parent=5 // pred_fallthru
      _
    %p161 = scmp.le.s32.totalorder 1, %s9
    %p162 = scmp.lt.s32.totalorder %s9, 3
    %p163 = pnand %p161, %p162
    %p164 = pneg %p163
    // Predicated region
    $region29: #{stream_gridnet_block.20} parent=5 // pred_check
      _
    $region30: #{stream_gridnet_block.20} parent=5 // pred_check_branch
      %166 = sbr.rel (%p163) target = $region32
    $region31: #{stream_gridnet_block.20} parent=5 // pred_region
      %s167 = ssub.s32 %s9, 1
      %s168 = smul.u32 4, %s14
      %p169 = scmp.lt.s32.totalorder %s168, 7
      %s170 = scalar_select %p169, %s168, 7
      %s171 = smul.addr %s170, 8
      %s172 = scalar_lea.vmem %s0, %s171
      %p173 = pneg %p35
      %p174 = pneg %p32
      %s175 = smul.u32 4, %s14
      %p176 = scmp.lt.s32.totalorder %s175, 7
      %s177 = scalar_select %p176, %s175, 7
      %s178 = smul.addr %s177, 4
      %s179 = smul.addr %s178, 8
      %s180 = scalar_lea.vmem %s1, %s179
      %p181 = pneg %p61
      %p182 = pneg %p58
      %s183 = smul.u32 4, %s14
      %p184 = scmp.lt.s32.totalorder %s183, 7
      %s185 = scalar_select %p184, %s183, 7
      %s186 = smul.addr %s185, 3
      %s187 = smul.addr %s186, 8
      %s188 = scalar_lea.vmem %s2, %s187
      %p189 = pneg %p87
      %p190 = pneg %p84
      %p191 = pneg %p113
      %p192 = pneg %p110
      %s193 = smul.u32 4, %s14
      %p194 = scmp.lt.s32.totalorder %s193, 7
      %s195 = scalar_select %p194, %s193, 7
      %s196 = smul.addr %s195, 8
      %s197 = scalar_lea.vmem %s3, %s196
      %s198 = smul.u32 4, %s14
      %p199 = scmp.lt.s32.totalorder %s198, 7
      %s200 = scalar_select %p199, %s198, 7
      %s201 = smul.addr %s200, 8
      %s202 = scalar_lea.vmem %s0, %s201
      %s203 = smul.u32 4, %s14
      %s204 = smul.u32 4, %s14
      %p205 = scmp.lt.s32.totalorder %s204, 7
      %s206 = scalar_select %p205, %s204, 7
      %s207 = smul.addr %s206, 4
      %s208 = smul.addr %s207, 8
      %s209 = scalar_lea.vmem %s1, %s208
      %s210 = smul.u32 4, %s14
      %s211 = smul.u32 4, %s14
      %p212 = scmp.lt.s32.totalorder %s211, 7
      %s213 = scalar_select %p212, %s211, 7
      %s214 = smul.addr %s213, 3
      %s215 = smul.addr %s214, 8
      %s216 = scalar_lea.vmem %s2, %s215
      %s217 = smul.u32 4, %s14
      %s218 = smul.u32 4, %s14
      %p219 = scmp.lt.s32.totalorder %s218, 7
      %s220 = scalar_select %p219, %s218, 7
      %s221 = smul.addr %s220, 8
      %s222 = scalar_lea.vmem %s3, %s221
      %s223 = smul.u32 4, %s14
      %v224 = vld [vmem:[%s202] sm:$0xff]
      %v225 = vld [vmem:[%s202 + $0x8] sm:$0xff]
      %v226 = vld [vmem:[%s202 + $0x10] sm:$0xff]
      %v227 = vld [vmem:[%s202 + $0x18] sm:$0xff]
      %v228 = vld [vmem:[%s209] sm:$0xff]
      %v229 = vld [vmem:[%s209 + $0x8] sm:$0xff]
      %v230 = vld [vmem:[%s209 + $0x10] sm:$0xff]
      %v231 = vld [vmem:[%s209 + $0x18] sm:$0xff]
      %v232 = vld [vmem:[%s209 + $0x20] sm:$0xff]
      %v233 = vld [vmem:[%s209 + $0x28] sm:$0xff]
      %v234 = vld [vmem:[%s209 + $0x30] sm:$0xff]
      %v235 = vld [vmem:[%s209 + $0x38] sm:$0xff]
      %v236 = vld [vmem:[%s209 + $0x40] sm:$0xff]
      %v237 = vld [vmem:[%s209 + $0x48] sm:$0xff]
      %v238 = vld [vmem:[%s209 + $0x50] sm:$0xff]
      %v239 = vld [vmem:[%s209 + $0x58] sm:$0xff]
      %v240 = vld [vmem:[%s209 + $0x60] sm:$0xff]
      %v241 = vld [vmem:[%s209 + $0x68] sm:$0xff]
      %v242 = vld [vmem:[%s209 + $0x70] sm:$0xff]
      %v243 = vld [vmem:[%s209 + $0x78] sm:$0xff]
      %vm244 = vcmask 261120
      %v246 = vsel %vm244, %v224, 0
      %248 = vmatprep.subr.mxu0 0.0
      %249 = vmatpush1.msra.mxu0 %v228
      %250 = vmatprep.subr.mxu0 0.0
      %251 = vmatpush1.msra.mxu0 %v229
      %252 = vmatprep.subr.mxu0 0.0
      %253 = vmatpush1.msra.mxu0 %v230
      %254 = vmatprep.subr.mxu0 0.0
      %255 = vmatpush1.msra.mxu0 %v231
      %256 = vmatprep.subr.mxu0 0.0
      %257 = vmatpush1.msra.mxu0 0.0
      %258 = vmatprep.subr.mxu0 0.0
      %259 = vmatpush1.msra.mxu0 0.0
      %260 = vmatprep.subr.mxu0 0.0
      %261 = vmatpush1.msra.mxu0 0.0
      %262 = vmatprep.subr.mxu0 0.0
      %263 = vmatpush1.msra.mxu0 0.0
      %264 = vmatprep.subr.mxu0 0.0
      %265 = vmatpush1.msra.mxu0 0.0
      %266 = vmatprep.subr.mxu0 0.0
      %267 = vmatpush1.msra.mxu0 0.0
      %268 = vmatprep.subr.mxu0 0.0
      %269 = vmatpush1.msra.mxu0 0.0
      %270 = vmatprep.subr.mxu0 0.0
      %271 = vmatpush1.msra.mxu0 0.0
      %272 = vmatprep.subr.mxu0 0.0
      %273 = vmatpush1.msra.mxu0 0.0
      %274 = vmatprep.subr.mxu0 0.0
      %275 = vmatpush1.msra.mxu0 0.0
      %276 = vmatprep.subr.mxu0 0.0
      %277 = vmatpush1.msra.mxu0 0.0
      %278 = vmatprep.subr.mxu0 0.0
      %279 = vmatpush1.msra.mxu0 0.0
      %280 = vmatprep.subr.mxu0 0.0
      %281 = vmatpush1.msra.mxu0 0.0
      %282 = vmatprep.subr.mxu0 0.0
      %283 = vmatpush1.msra.mxu0 0.0
      %284 = vmatprep.subr.mxu0 0.0
      %285 = vmatpush1.msra.mxu0 0.0
      %286 = vmatprep.subr.mxu0 0.0
      %287 = vmatpush1.msra.mxu0 0.0
      %288 = vmatprep.subr.mxu0 0.0
      %289 = vmatpush1.msra.mxu0 0.0
      %290 = vmatprep.subr.mxu0 0.0
      %291 = vmatpush1.msra.mxu0 0.0
      %292 = vmatprep.subr.mxu0 0.0
      %293 = vmatpush1.msra.mxu0 0.0
      %294 = vmatprep.subr.mxu0 0.0
      %295 = vmatpush1.msra.mxu0 0.0
      %296 = vmatprep.subr.mxu0 0.0
      %297 = vmatpush1.msra.mxu0 0.0
      %298 = vmatprep.subr.mxu0 0.0
      %299 = vmatpush1.msra.mxu0 0.0
      %300 = vmatprep.subr.mxu0 0.0
      %301 = vmatpush1.msra.mxu0 0.0
      %302 = vmatprep.subr.mxu0 0.0
      %303 = vmatpush1.msra.mxu0 0.0
      %304 = vmatprep.subr.mxu0 0.0
      %305 = vmatpush1.msra.mxu0 0.0
      %306 = vmatprep.subr.mxu0 0.0
      %307 = vmatpush1.msra.mxu0 0.0
      %308 = vmatprep.subr.mxu0 0.0
      %309 = vmatpush1.msra.mxu0 0.0
      %310 = vmatprep.subr.mxu0 0.0
      %311 = vmatpush1.msra.mxu0 0.0
      %312 = vmatprep.mubr.f32.mxu0 0.0
      %313 = vmatmul.mubr.f32.gmra.mrb[0].mxu0 %v246
      %v314 = vpop.f32.mrb[0].mxu0
      %v315 = vadd.f32 0.0, %v314
      %v316 = vpop.f32.mrb[0].mxu0
      %317 = vdwg.mxu0
      %v319 = vsel %vm244, %v225, 0
      %321 = vmatprep.subr.mxu0 0.0
      %322 = vmatpush1.msra.mxu0 %v232
      %323 = vmatprep.subr.mxu0 0.0
      %324 = vmatpush1.msra.mxu0 %v233
      %325 = vmatprep.subr.mxu0 0.0
      %326 = vmatpush1.msra.mxu0 %v234
      %327 = vmatprep.subr.mxu0 0.0
      %328 = vmatpush1.msra.mxu0 %v235
      %329 = vmatprep.subr.mxu0 0.0
      %330 = vmatpush1.msra.mxu0 0.0
      %331 = vmatprep.subr.mxu0 0.0
      %332 = vmatpush1.msra.mxu0 0.0
      %333 = vmatprep.subr.mxu0 0.0
      %334 = vmatpush1.msra.mxu0 0.0
      %335 = vmatprep.subr.mxu0 0.0
      %336 = vmatpush1.msra.mxu0 0.0
      %337 = vmatprep.subr.mxu0 0.0
      %338 = vmatpush1.msra.mxu0 0.0
      %339 = vmatprep.subr.mxu0 0.0
      %340 = vmatpush1.msra.mxu0 0.0
      %341 = vmatprep.subr.mxu0 0.0
      %342 = vmatpush1.msra.mxu0 0.0
      %343 = vmatprep.subr.mxu0 0.0
      %344 = vmatpush1.msra.mxu0 0.0
      %345 = vmatprep.subr.mxu0 0.0
      %346 = vmatpush1.msra.mxu0 0.0
      %347 = vmatprep.subr.mxu0 0.0
      %348 = vmatpush1.msra.mxu0 0.0
      %349 = vmatprep.subr.mxu0 0.0
      %350 = vmatpush1.msra.mxu0 0.0
      %351 = vmatprep.subr.mxu0 0.0
      %352 = vmatpush1.msra.mxu0 0.0
      %353 = vmatprep.subr.mxu0 0.0
      %354 = vmatpush1.msra.mxu0 0.0
      %355 = vmatprep.subr.mxu0 0.0
      %356 = vmatpush1.msra.mxu0 0.0
      %357 = vmatprep.subr.mxu0 0.0
      %358 = vmatpush1.msra.mxu0 0.0
      %359 = vmatprep.subr.mxu0 0.0
      %360 = vmatpush1.msra.mxu0 0.0
      %361 = vmatprep.subr.mxu0 0.0
      %362 = vmatpush1.msra.mxu0 0.0
      %363 = vmatprep.subr.mxu0 0.0
      %364 = vmatpush1.msra.mxu0 0.0
      %365 = vmatprep.subr.mxu0 0.0
      %366 = vmatpush1.msra.mxu0 0.0
      %367 = vmatprep.subr.mxu0 0.0
      %368 = vmatpush1.msra.mxu0 0.0
      %369 = vmatprep.subr.mxu0 0.0
      %370 = vmatpush1.msra.mxu0 0.0
      %371 = vmatprep.subr.mxu0 0.0
      %372 = vmatpush1.msra.mxu0 0.0
      %373 = vmatprep.subr.mxu0 0.0
      %374 = vmatpush1.msra.mxu0 0.0
      %375 = vmatprep.subr.mxu0 0.0
      %376 = vmatpush1.msra.mxu0 0.0
      %377 = vmatprep.subr.mxu0 0.0
      %378 = vmatpush1.msra.mxu0 0.0
      %379 = vmatprep.subr.mxu0 0.0
      %380 = vmatpush1.msra.mxu0 0.0
      %381 = vmatprep.subr.mxu0 0.0
      %382 = vmatpush1.msra.mxu0 0.0
      %383 = vmatprep.subr.mxu0 0.0
      %384 = vmatpush1.msra.mxu0 0.0
      %385 = vmatprep.mubr.f32.mxu0 0.0
      %386 = vmatmul.mubr.f32.gmra.mrb[0].mxu0 %v319
      %v387 = vpop.f32.mrb[0].mxu0
      %v388 = vadd.f32 0.0, %v387
      %v389 = vpop.f32.mrb[0].mxu0
      %390 = vdwg.mxu0
      %v392 = vsel %vm244, %v226, 0
      %394 = vmatprep.subr.mxu0 0.0
      %395 = vmatpush1.msra.mxu0 %v236
      %396 = vmatprep.subr.mxu0 0.0
      %397 = vmatpush1.msra.mxu0 %v237
      %398 = vmatprep.subr.mxu0 0.0
      %399 = vmatpush1.msra.mxu0 %v238
      %400 = vmatprep.subr.mxu0 0.0
      %401 = vmatpush1.msra.mxu0 %v239
      %402 = vmatprep.subr.mxu0 0.0
      %403 = vmatpush1.msra.mxu0 0.0
      %404 = vmatprep.subr.mxu0 0.0
      %405 = vmatpush1.msra.mxu0 0.0
      %406 = vmatprep.subr.mxu0 0.0
      %407 = vmatpush1.msra.mxu0 0.0
      %408 = vmatprep.subr.mxu0 0.0
      %409 = vmatpush1.msra.mxu0 0.0
      %410 = vmatprep.subr.mxu0 0.0
      %411 = vmatpush1.msra.mxu0 0.0
      %412 = vmatprep.subr.mxu0 0.0
      %413 = vmatpush1.msra.mxu0 0.0
      %414 = vmatprep.subr.mxu0 0.0
      %415 = vmatpush1.msra.mxu0 0.0
      %416 = vmatprep.subr.mxu0 0.0
      %417 = vmatpush1.msra.mxu0 0.0
      %418 = vmatprep.subr.mxu0 0.0
      %419 = vmatpush1.msra.mxu0 0.0
      %420 = vmatprep.subr.mxu0 0.0
      %421 = vmatpush1.msra.mxu0 0.0
      %422 = vmatprep.subr.mxu0 0.0
      %423 = vmatpush1.msra.mxu0 0.0
      %424 = vmatprep.subr.mxu0 0.0
      %425 = vmatpush1.msra.mxu0 0.0
      %426 = vmatprep.subr.mxu0 0.0
      %427 = vmatpush1.msra.mxu0 0.0
      %428 = vmatprep.subr.mxu0 0.0
      %429 = vmatpush1.msra.mxu0 0.0
      %430 = vmatprep.subr.mxu0 0.0
      %431 = vmatpush1.msra.mxu0 0.0
      %432 = vmatprep.subr.mxu0 0.0
      %433 = vmatpush1.msra.mxu0 0.0
      %434 = vmatprep.subr.mxu0 0.0
      %435 = vmatpush1.msra.mxu0 0.0
      %436 = vmatprep.subr.mxu0 0.0
      %437 = vmatpush1.msra.mxu0 0.0
      %438 = vmatprep.subr.mxu0 0.0
      %439 = vmatpush1.msra.mxu0 0.0
      %440 = vmatprep.subr.mxu0 0.0
      %441 = vmatpush1.msra.mxu0 0.0
      %442 = vmatprep.subr.mxu0 0.0
      %443 = vmatpush1.msra.mxu0 0.0
      %444 = vmatprep.subr.mxu0 0.0
      %445 = vmatpush1.msra.mxu0 0.0
      %446 = vmatprep.subr.mxu0 0.0
      %447 = vmatpush1.msra.mxu0 0.0
      %448 = vmatprep.subr.mxu0 0.0
      %449 = vmatpush1.msra.mxu0 0.0
      %450 = vmatprep.subr.mxu0 0.0
      %451 = vmatpush1.msra.mxu0 0.0
      %452 = vmatprep.subr.mxu0 0.0
      %453 = vmatpush1.msra.mxu0 0.0
      %454 = vmatprep.subr.mxu0 0.0
      %455 = vmatpush1.msra.mxu0 0.0
      %456 = vmatprep.subr.mxu0 0.0
      %457 = vmatpush1.msra.mxu0 0.0
      %458 = vmatprep.mubr.f32.mxu0 0.0
      %459 = vmatmul.mubr.f32.gmra.mrb[0].mxu0 %v392
      %v460 = vpop.f32.mrb[0].mxu0
      %v461 = vadd.f32 0.0, %v460
      %v462 = vpop.f32.mrb[0].mxu0
      %463 = vdwg.mxu0
      %v465 = vsel %vm244, %v227, 0
      %467 = vmatprep.subr.mxu0 0.0
      %468 = vmatpush1.msra.mxu0 %v240
      %469 = vmatprep.subr.mxu0 0.0
      %470 = vmatpush1.msra.mxu0 %v241
      %471 = vmatprep.subr.mxu0 0.0
      %472 = vmatpush1.msra.mxu0 %v242
      %473 = vmatprep.subr.mxu0 0.0
      %474 = vmatpush1.msra.mxu0 %v243
      %475 = vmatprep.subr.mxu0 0.0
      %476 = vmatpush1.msra.mxu0 0.0
      %477 = vmatprep.subr.mxu0 0.0
      %478 = vmatpush1.msra.mxu0 0.0
      %479 = vmatprep.subr.mxu0 0.0
      %480 = vmatpush1.msra.mxu0 0.0
      %481 = vmatprep.subr.mxu0 0.0
      %482 = vmatpush1.msra.mxu0 0.0
      %483 = vmatprep.subr.mxu0 0.0
      %484 = vmatpush1.msra.mxu0 0.0
      %485 = vmatprep.subr.mxu0 0.0
      %486 = vmatpush1.msra.mxu0 0.0
      %487 = vmatprep.subr.mxu0 0.0
      %488 = vmatpush1.msra.mxu0 0.0
      %489 = vmatprep.subr.mxu0 0.0
      %490 = vmatpush1.msra.mxu0 0.0
      %491 = vmatprep.subr.mxu0 0.0
      %492 = vmatpush1.msra.mxu0 0.0
      %493 = vmatprep.subr.mxu0 0.0
      %494 = vmatpush1.msra.mxu0 0.0
      %495 = vmatprep.subr.mxu0 0.0
      %496 = vmatpush1.msra.mxu0 0.0
      %497 = vmatprep.subr.mxu0 0.0
      %498 = vmatpush1.msra.mxu0 0.0
      %499 = vmatprep.subr.mxu0 0.0
      %500 = vmatpush1.msra.mxu0 0.0
      %501 = vmatprep.subr.mxu0 0.0
      %502 = vmatpush1.msra.mxu0 0.0
      %503 = vmatprep.subr.mxu0 0.0
      %504 = vmatpush1.msra.mxu0 0.0
      %505 = vmatprep.subr.mxu0 0.0
      %506 = vmatpush1.msra.mxu0 0.0
      %507 = vmatprep.subr.mxu0 0.0
      %508 = vmatpush1.msra.mxu0 0.0
      %509 = vmatprep.subr.mxu0 0.0
      %510 = vmatpush1.msra.mxu0 0.0
      %511 = vmatprep.subr.mxu0 0.0
      %512 = vmatpush1.msra.mxu0 0.0
      %513 = vmatprep.subr.mxu0 0.0
      %514 = vmatpush1.msra.mxu0 0.0
      %515 = vmatprep.subr.mxu0 0.0
      %516 = vmatpush1.msra.mxu0 0.0
      %517 = vmatprep.subr.mxu0 0.0
      %518 = vmatpush1.msra.mxu0 0.0
      %519 = vmatprep.subr.mxu0 0.0
      %520 = vmatpush1.msra.mxu0 0.0
      %521 = vmatprep.subr.mxu0 0.0
      %522 = vmatpush1.msra.mxu0 0.0
      %523 = vmatprep.subr.mxu0 0.0
      %524 = vmatpush1.msra.mxu0 0.0
      %525 = vmatprep.subr.mxu0 0.0
      %526 = vmatpush1.msra.mxu0 0.0
      %527 = vmatprep.subr.mxu0 0.0
      %528 = vmatpush1.msra.mxu0 0.0
      %529 = vmatprep.subr.mxu0 0.0
      %530 = vmatpush1.msra.mxu0 0.0
      %531 = vmatprep.mubr.f32.mxu0 0.0
      %532 = vmatmul.mubr.f32.gmra.mrb[0].mxu0 %v465
      %v533 = vpop.f32.mrb[0].mxu0
      %v534 = vadd.f32 0.0, %v533
      %v535 = vpop.f32.mrb[0].mxu0
      %536 = vdwg.mxu0
      %v537 = vmul.f32 %v315, 0.17677669
      %v538 = vmul.f32 %v388, 0.17677669
      %v539 = vmul.f32 %v461, 0.17677669
      %v540 = vmul.f32 %v534, 0.17677669
      %vm541 = vcmask 195584
      %v542 = vsel %vm541, %v537, -inf
      %543 = vmax.xlane.f32.xlu0 %v542
      %v544 = vpop.xlane.xlu0 %543
      %v545 = vsel %vm541, %v538, -inf
      %546 = vmax.xlane.f32.xlu0 %v545
      %v547 = vpop.xlane.xlu0 %546
      %v548 = vsel %vm541, %v539, -inf
      %549 = vmax.xlane.f32.xlu0 %v548
      %v550 = vpop.xlane.xlu0 %549
      %v551 = vsel %vm541, %v540, -inf
      %552 = vmax.xlane.f32.xlu0 %v551
      %v553 = vpop.xlane.xlu0 %552
      %v554 = vsub.f32 %v537, %v544
      %v555 = vsub.f32 %v538, %v547
      %v556 = vsub.f32 %v539, %v550
      %v557 = vsub.f32 %v540, %v553
      %v558 = vmul.f32 %v554, 1.442695
      %v559 = vpow.pop %v558
      %v560 = vmul.f32 %v555, 1.442695
      %v561 = vpow.pop %v560
      %v562 = vmul.f32 %v556, 1.442695
      %v563 = vpow.pop %v562
      %v564 = vmul.f32 %v557, 1.442695
      %v565 = vpow.pop %v564
      %v566 = vsel %vm541, %v559, 0.0
      %567 = vadd.xlane.f32.xlu0 %v566
      %v568 = vpop.xlane.xlu0 %567
      %v569 = vsel %vm541, %v561, 0.0
      %570 = vadd.xlane.f32.xlu0 %v569
      %v571 = vpop.xlane.xlu0 %570
      %v572 = vsel %vm541, %v563, 0.0
      %573 = vadd.xlane.f32.xlu0 %v572
      %v574 = vpop.xlane.xlu0 %573
      %v575 = vsel %vm541, %v565, 0.0
      %576 = vadd.xlane.f32.xlu0 %v575
      %v577 = vpop.xlane.xlu0 %576
      %v578 = vrcp.pop %v568
      %v579 = vrcp.pop %v571
      %v580 = vrcp.pop %v574
      %v581 = vrcp.pop %v577
      %v582 = vmul.f32 %v559, %v578
      %v583 = vmul.f32 %v561, %v579
      %v584 = vmul.f32 %v563, %v580
      %v585 = vmul.f32 %v565, %v581
      %v586 = vld [vmem:[%s216] sm:$0xff]
      %v587 = vld [vmem:[%s216 + $0x8] sm:$0xff]
      %v588 = vld [vmem:[%s216 + $0x10] sm:$0xff]
      %v589 = vld [vmem:[%s216 + $0x18] sm:$0xff]
      %v590 = vld [vmem:[%s216 + $0x20] sm:$0xff]
      %v591 = vld [vmem:[%s216 + $0x28] sm:$0xff]
      %v592 = vld [vmem:[%s216 + $0x30] sm:$0xff]
      %v593 = vld [vmem:[%s216 + $0x38] sm:$0xff]
      %v594 = vld [vmem:[%s216 + $0x40] sm:$0xff]
      %v595 = vld [vmem:[%s216 + $0x48] sm:$0xff]
      %v596 = vld [vmem:[%s216 + $0x50] sm:$0xff]
      %v597 = vld [vmem:[%s216 + $0x58] sm:$0xff]
      %v599 = vsel %vm541, %v582, 0
      %601 = vmatprep.subr.mxu0 0.0
      %602 = vmatpush1.msra.mxu0 %v586
      %603 = vmatprep.subr.mxu0 0.0
      %604 = vmatpush1.msra.mxu0 %v587
      %605 = vmatprep.subr.mxu0 0.0
      %606 = vmatpush1.msra.mxu0 %v588
      %607 = vmatprep.subr.mxu0 0.0
      %608 = vmatpush1.msra.mxu0 0.0
      %609 = vmatprep.subr.mxu0 0.0
      %610 = vmatpush1.msra.mxu0 0.0
      %611 = vmatprep.subr.mxu0 0.0
      %612 = vmatpush1.msra.mxu0 0.0
      %613 = vmatprep.subr.mxu0 0.0
      %614 = vmatpush1.msra.mxu0 0.0
      %615 = vmatprep.subr.mxu0 0.0
      %616 = vmatpush1.msra.mxu0 0.0
      %617 = vmatprep.subr.mxu0 0.0
      %618 = vmatpush1.msra.mxu0 0.0
      %619 = vmatprep.subr.mxu0 0.0
      %620 = vmatpush1.msra.mxu0 0.0
      %621 = vmatprep.subr.mxu0 0.0
      %622 = vmatpush1.msra.mxu0 0.0
      %623 = vmatprep.subr.mxu0 0.0
      %624 = vmatpush1.msra.mxu0 0.0
      %625 = vmatprep.subr.mxu0 0.0
      %626 = vmatpush1.msra.mxu0 0.0
      %627 = vmatprep.subr.mxu0 0.0
      %628 = vmatpush1.msra.mxu0 0.0
      %629 = vmatprep.subr.mxu0 0.0
      %630 = vmatpush1.msra.mxu0 0.0
      %631 = vmatprep.subr.mxu0 0.0
      %632 = vmatpush1.msra.mxu0 0.0
      %633 = vmatprep.subr.mxu0 0.0
      %634 = vmatpush1.msra.mxu0 0.0
      %635 = vmatprep.subr.mxu0 0.0
      %636 = vmatpush1.msra.mxu0 0.0
      %637 = vmatprep.subr.mxu0 0.0
      %638 = vmatpush1.msra.mxu0 0.0
      %639 = vmatprep.subr.mxu0 0.0
      %640 = vmatpush1.msra.mxu0 0.0
      %641 = vmatprep.subr.mxu0 0.0
      %642 = vmatpush1.msra.mxu0 0.0
      %643 = vmatprep.subr.mxu0 0.0
      %644 = vmatpush1.msra.mxu0 0.0
      %645 = vmatprep.subr.mxu0 0.0
      %646 = vmatpush1.msra.mxu0 0.0
      %647 = vmatprep.subr.mxu0 0.0
      %648 = vmatpush1.msra.mxu0 0.0
      %649 = vmatprep.subr.mxu0 0.0
      %650 = vmatpush1.msra.mxu0 0.0
      %651 = vmatprep.subr.mxu0 0.0
      %652 = vmatpush1.msra.mxu0 0.0
      %653 = vmatprep.subr.mxu0 0.0
      %654 = vmatpush1.msra.mxu0 0.0
      %655 = vmatprep.subr.mxu0 0.0
      %656 = vmatpush1.msra.mxu0 0.0
      %657 = vmatprep.subr.mxu0 0.0
      %658 = vmatpush1.msra.mxu0 0.0
      %659 = vmatprep.subr.mxu0 0.0
      %660 = vmatpush1.msra.mxu0 0.0
      %661 = vmatprep.subr.mxu0 0.0
      %662 = vmatpush1.msra.mxu0 0.0
      %663 = vmatprep.subr.mxu0 0.0
      %664 = vmatpush1.msra.mxu0 0.0
      %665 = vmatprep.mubr.f32.mxu0 0.0
      %666 = vmatmul.mubr.f32.gmra.mrb[0].mxu0 %v599
      %v667 = vpop.f32.mrb[0].mxu0
      %v668 = vadd.f32 0.0, %v667
      %v669 = vpop.f32.mrb[0].mxu0
      %670 = vdwg.mxu0
      %v672 = vsel %vm541, %v583, 0
      %674 = vmatprep.subr.mxu0 0.0
      %675 = vmatpush1.msra.mxu0 %v589
      %676 = vmatprep.subr.mxu0 0.0
      %677 = vmatpush1.msra.mxu0 %v590
      %678 = vmatprep.subr.mxu0 0.0
      %679 = vmatpush1.msra.mxu0 %v591
      %680 = vmatprep.subr.mxu0 0.0
      %681 = vmatpush1.msra.mxu0 0.0
      %682 = vmatprep.subr.mxu0 0.0
      %683 = vmatpush1.msra.mxu0 0.0
      %684 = vmatprep.subr.mxu0 0.0
      %685 = vmatpush1.msra.mxu0 0.0
      %686 = vmatprep.subr.mxu0 0.0
      %687 = vmatpush1.msra.mxu0 0.0
      %688 = vmatprep.subr.mxu0 0.0
      %689 = vmatpush1.msra.mxu0 0.0
      %690 = vmatprep.subr.mxu0 0.0
      %691 = vmatpush1.msra.mxu0 0.0
      %692 = vmatprep.subr.mxu0 0.0
      %693 = vmatpush1.msra.mxu0 0.0
      %694 = vmatprep.subr.mxu0 0.0
      %695 = vmatpush1.msra.mxu0 0.0
      %696 = vmatprep.subr.mxu0 0.0
      %697 = vmatpush1.msra.mxu0 0.0
      %698 = vmatprep.subr.mxu0 0.0
      %699 = vmatpush1.msra.mxu0 0.0
      %700 = vmatprep.subr.mxu0 0.0
      %701 = vmatpush1.msra.mxu0 0.0
      %702 = vmatprep.subr.mxu0 0.0
      %703 = vmatpush1.msra.mxu0 0.0
      %704 = vmatprep.subr.mxu0 0.0
      %705 = vmatpush1.msra.mxu0 0.0
      %706 = vmatprep.subr.mxu0 0.0
      %707 = vmatpush1.msra.mxu0 0.0
      %708 = vmatprep.subr.mxu0 0.0
      %709 = vmatpush1.msra.mxu0 0.0
      %710 = vmatprep.subr.mxu0 0.0
      %711 = vmatpush1.msra.mxu0 0.0
      %712 = vmatprep.subr.mxu0 0.0
      %713 = vmatpush1.msra.mxu0 0.0
      %714 = vmatprep.subr.mxu0 0.0
      %715 = vmatpush1.msra.mxu0 0.0
      %716 = vmatprep.subr.mxu0 0.0
      %717 = vmatpush1.msra.mxu0 0.0
      %718 = vmatprep.subr.mxu0 0.0
      %719 = vmatpush1.msra.mxu0 0.0
      %720 = vmatprep.subr.mxu0 0.0
      %721 = vmatpush1.msra.mxu0 0.0
      %722 = vmatprep.subr.mxu0 0.0
      %723 = vmatpush1.msra.mxu0 0.0
      %724 = vmatprep.subr.mxu0 0.0
      %725 = vmatpush1.msra.mxu0 0.0
      %726 = vmatprep.subr.mxu0 0.0
      %727 = vmatpush1.msra.mxu0 0.0
      %728 = vmatprep.subr.mxu0 0.0
      %729 = vmatpush1.msra.mxu0 0.0
      %730 = vmatprep.subr.mxu0 0.0
      %731 = vmatpush1.msra.mxu0 0.0
      %732 = vmatprep.subr.mxu0 0.0
      %733 = vmatpush1.msra.mxu0 0.0
      %734 = vmatprep.subr.mxu0 0.0
      %735 = vmatpush1.msra.mxu0 0.0
      %736 = vmatprep.subr.mxu0 0.0
      %737 = vmatpush1.msra.mxu0 0.0
      %738 = vmatprep.mubr.f32.mxu0 0.0
      %739 = vmatmul.mubr.f32.gmra.mrb[0].mxu0 %v672
      %v740 = vpop.f32.mrb[0].mxu0
      %v741 = vadd.f32 0.0, %v740
      %v742 = vpop.f32.mrb[0].mxu0
      %743 = vdwg.mxu0
      %v745 = vsel %vm541, %v584, 0
      %747 = vmatprep.subr.mxu0 0.0
      %748 = vmatpush1.msra.mxu0 %v592
      %749 = vmatprep.subr.mxu0 0.0
      %750 = vmatpush1.msra.mxu0 %v593
      %751 = vmatprep.subr.mxu0 0.0
      %752 = vmatpush1.msra.mxu0 %v594
      %753 = vmatprep.subr.mxu0 0.0
      %754 = vmatpush1.msra.mxu0 0.0
      %755 = vmatprep.subr.mxu0 0.0
      %756 = vmatpush1.msra.mxu0 0.0
      %757 = vmatprep.subr.mxu0 0.0
      %758 = vmatpush1.msra.mxu0 0.0
      %759 = vmatprep.subr.mxu0 0.0
      %760 = vmatpush1.msra.mxu0 0.0
      %761 = vmatprep.subr.mxu0 0.0
      %762 = vmatpush1.msra.mxu0 0.0
      %763 = vmatprep.subr.mxu0 0.0
      %764 = vmatpush1.msra.mxu0 0.0
      %765 = vmatprep.subr.mxu0 0.0
      %766 = vmatpush1.msra.mxu0 0.0
      %767 = vmatprep.subr.mxu0 0.0
      %768 = vmatpush1.msra.mxu0 0.0
      %769 = vmatprep.subr.mxu0 0.0
      %770 = vmatpush1.msra.mxu0 0.0
      %771 = vmatprep.subr.mxu0 0.0
      %772 = vmatpush1.msra.mxu0 0.0
      %773 = vmatprep.subr.mxu0 0.0
      %774 = vmatpush1.msra.mxu0 0.0
      %775 = vmatprep.subr.mxu0 0.0
      %776 = vmatpush1.msra.mxu0 0.0
      %777 = vmatprep.subr.mxu0 0.0
      %778 = vmatpush1.msra.mxu0 0.0
      %779 = vmatprep.subr.mxu0 0.0
      %780 = vmatpush1.msra.mxu0 0.0
      %781 = vmatprep.subr.mxu0 0.0
      %782 = vmatpush1.msra.mxu0 0.0
      %783 = vmatprep.subr.mxu0 0.0
      %784 = vmatpush1.msra.mxu0 0.0
      %785 = vmatprep.subr.mxu0 0.0
      %786 = vmatpush1.msra.mxu0 0.0
      %787 = vmatprep.subr.mxu0 0.0
      %788 = vmatpush1.msra.mxu0 0.0
      %789 = vmatprep.subr.mxu0 0.0
      %790 = vmatpush1.msra.mxu0 0.0
      %791 = vmatprep.subr.mxu0 0.0
      %792 = vmatpush1.msra.mxu0 0.0
      %793 = vmatprep.subr.mxu0 0.0
      %794 = vmatpush1.msra.mxu0 0.0
      %795 = vmatprep.subr.mxu0 0.0
      %796 = vmatpush1.msra.mxu0 0.0
      %797 = vmatprep.subr.mxu0 0.0
      %798 = vmatpush1.msra.mxu0 0.0
      %799 = vmatprep.subr.mxu0 0.0
      %800 = vmatpush1.msra.mxu0 0.0
      %801 = vmatprep.subr.mxu0 0.0
      %802 = vmatpush1.msra.mxu0 0.0
      %803 = vmatprep.subr.mxu0 0.0
      %804 = vmatpush1.msra.mxu0 0.0
      %805 = vmatprep.subr.mxu0 0.0
      %806 = vmatpush1.msra.mxu0 0.0
      %807 = vmatprep.subr.mxu0 0.0
      %808 = vmatpush1.msra.mxu0 0.0
      %809 = vmatprep.subr.mxu0 0.0
      %810 = vmatpush1.msra.mxu0 0.0
      %811 = vmatprep.mubr.f32.mxu0 0.0
      %812 = vmatmul.mubr.f32.gmra.mrb[0].mxu0 %v745
      %v813 = vpop.f32.mrb[0].mxu0
      %v814 = vadd.f32 0.0, %v813
      %v815 = vpop.f32.mrb[0].mxu0
      %816 = vdwg.mxu0
      %v818 = vsel %vm541, %v585, 0
      %820 = vmatprep.subr.mxu0 0.0
      %821 = vmatpush1.msra.mxu0 %v595
      %822 = vmatprep.subr.mxu0 0.0
      %823 = vmatpush1.msra.mxu0 %v596
      %824 = vmatprep.subr.mxu0 0.0
      %825 = vmatpush1.msra.mxu0 %v597
      %826 = vmatprep.subr.mxu0 0.0
      %827 = vmatpush1.msra.mxu0 0.0
      %828 = vmatprep.subr.mxu0 0.0
      %829 = vmatpush1.msra.mxu0 0.0
      %830 = vmatprep.subr.mxu0 0.0
      %831 = vmatpush1.msra.mxu0 0.0
      %832 = vmatprep.subr.mxu0 0.0
      %833 = vmatpush1.msra.mxu0 0.0
      %834 = vmatprep.subr.mxu0 0.0
      %835 = vmatpush1.msra.mxu0 0.0
      %836 = vmatprep.subr.mxu0 0.0
      %837 = vmatpush1.msra.mxu0 0.0
      %838 = vmatprep.subr.mxu0 0.0
      %839 = vmatpush1.msra.mxu0 0.0
      %840 = vmatprep.subr.mxu0 0.0
      %841 = vmatpush1.msra.mxu0 0.0
      %842 = vmatprep.subr.mxu0 0.0
      %843 = vmatpush1.msra.mxu0 0.0
      %844 = vmatprep.subr.mxu0 0.0
      %845 = vmatpush1.msra.mxu0 0.0
      %846 = vmatprep.subr.mxu0 0.0
      %847 = vmatpush1.msra.mxu0 0.0
      %848 = vmatprep.subr.mxu0 0.0
      %849 = vmatpush1.msra.mxu0 0.0
      %850 = vmatprep.subr.mxu0 0.0
      %851 = vmatpush1.msra.mxu0 0.0
      %852 = vmatprep.subr.mxu0 0.0
      %853 = vmatpush1.msra.mxu0 0.0
      %854 = vmatprep.subr.mxu0 0.0
      %855 = vmatpush1.msra.mxu0 0.0
      %856 = vmatprep.subr.mxu0 0.0
      %857 = vmatpush1.msra.mxu0 0.0
      %858 = vmatprep.subr.mxu0 0.0
      %859 = vmatpush1.msra.mxu0 0.0
      %860 = vmatprep.subr.mxu0 0.0
      %861 = vmatpush1.msra.mxu0 0.0
      %862 = vmatprep.subr.mxu0 0.0
      %863 = vmatpush1.msra.mxu0 0.0
      %864 = vmatprep.subr.mxu0 0.0
      %865 = vmatpush1.msra.mxu0 0.0
      %866 = vmatprep.subr.mxu0 0.0
      %867 = vmatpush1.msra.mxu0 0.0
      %868 = vmatprep.subr.mxu0 0.0
      %869 = vmatpush1.msra.mxu0 0.0
      %870 = vmatprep.subr.mxu0 0.0
      %871 = vmatpush1.msra.mxu0 0.0
      %872 = vmatprep.subr.mxu0 0.0
      %873 = vmatpush1.msra.mxu0 0.0
      %874 = vmatprep.subr.mxu0 0.0
      %875 = vmatpush1.msra.mxu0 0.0
      %876 = vmatprep.subr.mxu0 0.0
      %877 = vmatpush1.msra.mxu0 0.0
      %878 = vmatprep.subr.mxu0 0.0
      %879 = vmatpush1.msra.mxu0 0.0
      %880 = vmatprep.subr.mxu0 0.0
      %881 = vmatpush1.msra.mxu0 0.0
      %882 = vmatprep.subr.mxu0 0.0
      %883 = vmatpush1.msra.mxu0 0.0
      %884 = vmatprep.mubr.f32.mxu0 0.0
      %885 = vmatmul.mubr.f32.gmra.mrb[0].mxu0 %v818
      %v886 = vpop.f32.mrb[0].mxu0
      %v887 = vadd.f32 0.0, %v886
      %v888 = vpop.f32.mrb[0].mxu0
      %889 = vdwg.mxu0
      %890 = vst.msk [vmem:[%s222] sm:$0xff] %vm244, %v668
      %891 = vst.msk [vmem:[%s222 + $0x8] sm:$0xff] %vm244, %v741
      %892 = vst.msk [vmem:[%s222 + $0x10] sm:$0xff] %vm244, %v814
      %893 = vst.msk [vmem:[%s222 + $0x18] sm:$0xff] %vm244, %v887
      %s894 = smul.u32 4, %s14
      %p895 = scmp.lt.s32.totalorder %s894, 7
      %s896 = scalar_select %p895, %s894, 7
      %s897 = smul.addr %s896, 8
      %s898 = scalar_lea.vmem %s3, %s897
      // Predicated region
      $region33: #{stream_gridnet_block.20} parent=31 // pred_check
        %p899 = pneg %p110
      $region34: #{stream_gridnet_block.20} parent=31 // pred_check_branch
        %901 = sbr.rel (%p899) target = $region36
      $region35: #{stream_gridnet_block.20} parent=31 // pred_region
        %s902 = smul.u32 4, %s14
      $region36: #{stream_gridnet_block.20} parent=31 // pred_fallthru
        _
    $region32: #{stream_gridnet_block.20} parent=5 // pred_fallthru
      _
    %p903 = scmp.le.s32.totalorder 2, %s9
    // Predicated region
    $region37: #{stream_gridnet_block.20} parent=5 // pred_check
      %p904 = pneg %p903
    $region38: #{stream_gridnet_block.20} parent=5 // pred_check_branch
      %906 = sbr.rel (%p904) target = $region40
    $region39: #{stream_gridnet_block.20} parent=5 // pred_region
      %s907 = ssub.s32 %s9, 2
      // Predicated region
      $region41: #{stream_gridnet_block.20} parent=39 // pred_check
        %p908 = pneg %p116
      $region42: #{stream_gridnet_block.20} parent=39 // pred_check_branch
        %910 = sbr.rel (%p908) target = $region44
      $region43: #{stream_gridnet_block.20} parent=39 // pred_region
        %s911 = smul.u32 4, %s15
        %p912 = scmp.lt.s32.totalorder %s911, 7
        %s913 = scalar_select %p912, %s911, 7
        %s914 = smul.addr %s913, 8
        %s915 = scalar_lea.vmem %s3, %s914
      $region44: #{stream_gridnet_block.20} parent=39 // pred_fallthru
        _
    $region40: #{stream_gridnet_block.20} parent=5 // pred_fallthru
      _
  $region6: #{stream_gridnet_block.20} parent=0 // loop_footer
    %s13 = sadd.s32 1, %s9
  $region7: #{stream_gridnet_block.20} parent=0 // loop_footer_branch
    %8 = sbr.rel target = $region3
  $region8: #{stream_gridnet_block.20} parent=0 // loop_exit
    _

// kernel: stream_gridnet_block.21
$region0: #{stream_gridnet_block.21}
  #allocation0 [shape = 'u32[]', space=smem, size = 0x4, offset = 0x4, fixed_abs, tag = 'smem constant byte address 0x4 - core index']
  #allocation1 [shape = 'u32[144,128]{1,0:T(1,128)}', space=vmem, size = 0x12000, scoped, tag = 'internal scratch']
  %s0 = inlined_call_operand.vmem [shape: f32[16,128], index: 0, kind: input, shape index: {}]
  %s1 = inlined_call_operand.vmem [shape: f32[16,16], index: 1, kind: input, shape index: {}]
  %s2 = inlined_call_operand.vmem [shape: f32[16,1], index: 2, kind: input, shape index: {}]
  %s3 = inlined_call_operand.vmem [shape: f32[16,1], index: 3, kind: input, shape index: {}]
  %s4 = inlined_call_operand.vmem [shape: f32[1,16], index: 4, kind: input, shape index: {}]
  %s5 = inlined_call_operand.vmem [shape: f32[16,1], index: 5, kind: input, shape index: {}]
  %s6 = inlined_call_operand.vmem [shape: f32[16,128], index: 6, kind: input, shape index: {}]
  %s7 = inlined_call_operand.vmem [shape: f32[128,16], index: 7, kind: input, shape index: {}]
  %s8 = inlined_call_operand.vmem [shape: f32[16,128], index: 8, kind: input, shape index: {}]
  %s9 = inlined_call_operand.vmem [shape: f32[16,128], index: 9, kind: input, shape index: {}]
  %s10 = inlined_call_operand.vmem [shape: f32[16,128], index: 10, kind: output, shape index: {}]
  %s11 = sld [smem:[#allocation0]]
  $region50: #{stream_gridnet_block.21} parent=0
    _
  %s13 = ssub.s32 1, %s11
  %s14 = scalar_select 0, %s13, %s11
  // Predicated region
  $region2: #{stream_gridnet_block.21} parent=0 // pred_check
    _
  $region3: #{stream_gridnet_block.21} parent=0 // pred_check_branch
    %16 = sbr.rel (0) target = $region5
  $region4: #{stream_gridnet_block.21} parent=0 // pred_region
    _
  $region5: #{stream_gridnet_block.21} parent=0 // pred_fallthru
    _
  // Predicated region
  $region6: #{stream_gridnet_block.21} parent=0 // pred_check
    _
  $region7: #{stream_gridnet_block.21} parent=0 // pred_check_branch
    %18 = sbr.rel (0) target = $region9
  $region8: #{stream_gridnet_block.21} parent=0 // pred_region
    _
  $region9: #{stream_gridnet_block.21} parent=0 // pred_fallthru
    _
  // Predicated region
  $region10: #{stream_gridnet_block.21} parent=0 // pred_check
    _
  $region11: #{stream_gridnet_block.21} parent=0 // pred_check_branch
    %20 = sbr.rel (0) target = $region13
  $region12: #{stream_gridnet_block.21} parent=0 // pred_region
    _
  $region13: #{stream_gridnet_block.21} parent=0 // pred_fallthru
    _
  // Predicated region
  $region14: #{stream_gridnet_block.21} parent=0 // pred_check
    _
  $region15: #{stream_gridnet_block.21} parent=0 // pred_check_branch
    %22 = sbr.rel (0) target = $region17
  $region16: #{stream_gridnet_block.21} parent=0 // pred_region
    _
  $region17: #{stream_gridnet_block.21} parent=0 // pred_fallthru
    _
  // Predicated region
  $region18: #{stream_gridnet_block.21} parent=0 // pred_check
    _
  $region19: #{stream_gridnet_block.21} parent=0 // pred_check_branch
    %24 = sbr.rel (0) target = $region21
  $region20: #{stream_gridnet_block.21} parent=0 // pred_region
    _
  $region21: #{stream_gridnet_block.21} parent=0 // pred_fallthru
    _
  // Predicated region
  $region22: #{stream_gridnet_block.21} parent=0 // pred_check
    _
  $region23: #{stream_gridnet_block.21} parent=0 // pred_check_branch
    %26 = sbr.rel (0) target = $region25
  $region24: #{stream_gridnet_block.21} parent=0 // pred_region
    _
  $region25: #{stream_gridnet_block.21} parent=0 // pred_fallthru
    _
  // Predicated region
  $region26: #{stream_gridnet_block.21} parent=0 // pred_check
    _
  $region27: #{stream_gridnet_block.21} parent=0 // pred_check_branch
    %28 = sbr.rel (0) target = $region29
  $region28: #{stream_gridnet_block.21} parent=0 // pred_region
    _
  $region29: #{stream_gridnet_block.21} parent=0 // pred_fallthru
    _
  // Predicated region
  $region30: #{stream_gridnet_block.21} parent=0 // pred_check
    _
  $region31: #{stream_gridnet_block.21} parent=0 // pred_check_branch
    %30 = sbr.rel (0) target = $region33
  $region32: #{stream_gridnet_block.21} parent=0 // pred_region
    _
  $region33: #{stream_gridnet_block.21} parent=0 // pred_fallthru
    _
  // Predicated region
  $region34: #{stream_gridnet_block.21} parent=0 // pred_check
    _
  $region35: #{stream_gridnet_block.21} parent=0 // pred_check_branch
    %32 = sbr.rel (0) target = $region37
  $region36: #{stream_gridnet_block.21} parent=0 // pred_region
    _
  $region37: #{stream_gridnet_block.21} parent=0 // pred_fallthru
    _
  // Predicated region
  $region38: #{stream_gridnet_block.21} parent=0 // pred_check
    _
  $region39: #{stream_gridnet_block.21} parent=0 // pred_check_branch
    %34 = sbr.rel (0) target = $region41
  $region40: #{stream_gridnet_block.21} parent=0 // pred_region
    _
  $region41: #{stream_gridnet_block.21} parent=0 // pred_fallthru
    _
  %v35 = vld [vmem:[%s1] sm:$0xff]
  %v36 = vld [vmem:[%s1 + $0x8] sm:$0xff]
  %v37 = vld [vmem:[%s0] sm:$0xff]
  %v38 = vld [vmem:[%s0 + $0x8] sm:$0xff]
  %v39 = vld [vmem:[%s2] sm:$0xff]
  %v40 = vld [vmem:[%s2 + $0x8] sm:$0xff]
  %42 = vset.pattern.permute.xlu0 0
  %43 = vperm.xlu0 %42, %v39
  %v44 = vpop.permute.xlu0 %43
  %47 = vset.pattern.permute.xlu0 0
  %48 = vperm.xlu0 %47, %v40
  %v49 = vpop.permute.xlu0 %48
  %vm51 = vcmask 130048
  %v53 = vsel %vm51, %v35, 0
  %v56 = vsel %vm51, %v36, 0
  %58 = vmatprep.subr.mxu0 0.0
  %59 = vmatpush1.msra.mxu0 %v37
  %60 = vmatprep.subr.mxu0 0.0
  %61 = vmatpush1.msra.mxu0 %v38
  %62 = vmatprep.subr.mxu0 0.0
  %63 = vmatpush1.msra.mxu0 0.0
  %64 = vmatprep.subr.mxu0 0.0
  %65 = vmatpush1.msra.mxu0 0.0
  %66 = vmatprep.subr.mxu0 0.0
  %67 = vmatpush1.msra.mxu0 0.0
  %68 = vmatprep.subr.mxu0 0.0
  %69 = vmatpush1.msra.mxu0 0.0
  %70 = vmatprep.subr.mxu0 0.0
  %71 = vmatpush1.msra.mxu0 0.0
  %72 = vmatprep.subr.mxu0 0.0
  %73 = vmatpush1.msra.mxu0 0.0
  %74 = vmatprep.subr.mxu0 0.0
  %75 = vmatpush1.msra.mxu0 0.0
  %76 = vmatprep.subr.mxu0 0.0
  %77 = vmatpush1.msra.mxu0 0.0
  %78 = vmatprep.subr.mxu0 0.0
  %79 = vmatpush1.msra.mxu0 0.0
  %80 = vmatprep.subr.mxu0 0.0
  %81 = vmatpush1.msra.mxu0 0.0
  %82 = vmatprep.subr.mxu0 0.0
  %83 = vmatpush1.msra.mxu0 0.0
  %84 = vmatprep.subr.mxu0 0.0
  %85 = vmatpush1.msra.mxu0 0.0
  %86 = vmatprep.subr.mxu0 0.0
  %87 = vmatpush1.msra.mxu0 0.0
  %88 = vmatprep.subr.mxu0 0.0
  %89 = vmatpush1.msra.mxu0 0.0
  %90 = vmatprep.subr.mxu0 0.0
  %91 = vmatpush1.msra.mxu0 0.0
  %92 = vmatprep.subr.mxu0 0.0
  %93 = vmatpush1.msra.mxu0 0.0
  %94 = vmatprep.subr.mxu0 0.0
  %95 = vmatpush1.msra.mxu0 0.0
  %96 = vmatprep.subr.mxu0 0.0
  %97 = vmatpush1.msra.mxu0 0.0
  %98 = vmatprep.subr.mxu0 0.0
  %99 = vmatpush1.msra.mxu0 0.0
  %100 = vmatprep.subr.mxu0 0.0
  %101 = vmatpush1.msra.mxu0 0.0
  %102 = vmatprep.subr.mxu0 0.0
  %103 = vmatpush1.msra.mxu0 0.0
  %104 = vmatprep.subr.mxu0 0.0
  %105 = vmatpush1.msra.mxu0 0.0
  %106 = vmatprep.subr.mxu0 0.0
  %107 = vmatpush1.msra.mxu0 0.0
  %108 = vmatprep.subr.mxu0 0.0
  %109 = vmatpush1.msra.mxu0 0.0
  %110 = vmatprep.subr.mxu0 0.0
  %111 = vmatpush1.msra.mxu0 0.0
  %112 = vmatprep.subr.mxu0 0.0
  %113 = vmatpush1.msra.mxu0 0.0
  %114 = vmatprep.subr.mxu0 0.0
  %115 = vmatpush1.msra.mxu0 0.0
  %116 = vmatprep.subr.mxu0 0.0
  %117 = vmatpush1.msra.mxu0 0.0
  %118 = vmatprep.subr.mxu0 0.0
  %119 = vmatpush1.msra.mxu0 0.0
  %120 = vmatprep.subr.mxu0 0.0
  %121 = vmatpush1.msra.mxu0 0.0
  %122 = vmatprep.mubr.f32.mxu0 0.0
  %123 = vmatmul.mubr.f32.gmra.mrb[0].mxu0 %v53
  %v124 = vpop.f32.mrb[0].mxu0
  %v125 = vadd.f32 %v44, %v124
  %v126 = vpop.f32.mrb[0].mxu0
  %127 = vmatprep.mubr.f32.mxu0 0.0
  %128 = vmatmul.mubr.f32.gmra.mrb[0].mxu0 %v56
  %v129 = vpop.f32.mrb[0].mxu0
  %v130 = vadd.f32 %v49, %v129
  %v131 = vpop.f32.mrb[0].mxu0
  %132 = vdwg.mxu0
  %vm133 = vcmp.ge.f32.partialorder %v125, 0.0
  %vm134 = vcmp.ge.f32.partialorder %v130, 0.0
  %v135 = vld [vmem:[%s3] sm:$0xff]
  %v136 = vld [vmem:[%s3 + $0x8] sm:$0xff]
  %138 = vset.pattern.permute.xlu0 0
  %139 = vperm.xlu0 %138, %v135
  %v140 = vpop.permute.xlu0 %139
  %143 = vset.pattern.permute.xlu0 0
  %144 = vperm.xlu0 %143, %v136
  %v145 = vpop.permute.xlu0 %144
  %v147 = vmul.f32 %v140, %v125
  %v148 = vmul.f32 %v145, %v130
  %v149 = vsel %vm133, %v125, %v147
  %v150 = vsel %vm134, %v130, %v148
  %v151 = vld [vmem:[%s4] sm:$0x1]
  %v152 = vld [vmem:[%s5] sm:$0xff]
  %v153 = vld [vmem:[%s5 + $0x8] sm:$0xff]
  %v154 = vld [vmem:[%s6] sm:$0xff]
  %v155 = vld [vmem:[%s6 + $0x8] sm:$0xff]
  %v156 = vld [vmem:[%s7] sm:$0xff]
  %v157 = vld [vmem:[%s7 + $0x8] sm:$0xff]
  %v158 = vld [vmem:[%s7 + $0x10] sm:$0xff]
  %v159 = vld [vmem:[%s7 + $0x18] sm:$0xff]
  %v160 = vld [vmem:[%s7 + $0x20] sm:$0xff]
  %v161 = vld [vmem:[%s7 + $0x28] sm:$0xff]
  %v162 = vld [vmem:[%s7 + $0x30] sm:$0xff]
  %v163 = vld [vmem:[%s7 + $0x38] sm:$0xff]
  %v164 = vld [vmem:[%s7 + $0x40] sm:$0xff]
  %v165 = vld [vmem:[%s7 + $0x48] sm:$0xff]
  %v166 = vld [vmem:[%s7 + $0x50] sm:$0xff]
  %v167 = vld [vmem:[%s7 + $0x58] sm:$0xff]
  %v168 = vld [vmem:[%s7 + $0x60] sm:$0xff]
  %v169 = vld [vmem:[%s7 + $0x68] sm:$0xff]
  %v170 = vld [vmem:[%s7 + $0x70] sm:$0xff]
  %v171 = vld [vmem:[%s7 + $0x78] sm:$0xff]
  %v173 = vsel %vm51, %v151, 0
  %175 = vmatprep.subr.mxu0 0.0
  %176 = vmatpush1.msra.mxu0 %v149
  %177 = vmatprep.subr.mxu0 0.0
  %178 = vmatpush1.msra.mxu0 %v150
  %179 = vmatprep.subr.mxu0 0.0
  %180 = vmatpush1.msra.mxu0 0.0
  %181 = vmatprep.subr.mxu0 0.0
  %182 = vmatpush1.msra.mxu0 0.0
  %183 = vmatprep.subr.mxu0 0.0
  %184 = vmatpush1.msra.mxu0 0.0
  %185 = vmatprep.subr.mxu0 0.0
  %186 = vmatpush1.msra.mxu0 0.0
  %187 = vmatprep.subr.mxu0 0.0
  %188 = vmatpush1.msra.mxu0 0.0
  %189 = vmatprep.subr.mxu0 0.0
  %190 = vmatpush1.msra.mxu0 0.0
  %191 = vmatprep.subr.mxu0 0.0
  %192 = vmatpush1.msra.mxu0 0.0
  %193 = vmatprep.subr.mxu0 0.0
  %194 = vmatpush1.msra.mxu0 0.0
  %195 = vmatprep.subr.mxu0 0.0
  %196 = vmatpush1.msra.mxu0 0.0
  %197 = vmatprep.subr.mxu0 0.0
  %198 = vmatpush1.msra.mxu0 0.0
  %199 = vmatprep.subr.mxu0 0.0
  %200 = vmatpush1.msra.mxu0 0.0
  %201 = vmatprep.subr.mxu0 0.0
  %202 = vmatpush1.msra.mxu0 0.0
  %203 = vmatprep.subr.mxu0 0.0
  %204 = vmatpush1.msra.mxu0 0.0
  %205 = vmatprep.subr.mxu0 0.0
  %206 = vmatpush1.msra.mxu0 0.0
  %207 = vmatprep.subr.mxu0 0.0
  %208 = vmatpush1.msra.mxu0 0.0
  %209 = vmatprep.subr.mxu0 0.0
  %210 = vmatpush1.msra.mxu0 0.0
  %211 = vmatprep.subr.mxu0 0.0
  %212 = vmatpush1.msra.mxu0 0.0
  %213 = vmatprep.subr.mxu0 0.0
  %214 = vmatpush1.msra.mxu0 0.0
  %215 = vmatprep.subr.mxu0 0.0
  %216 = vmatpush1.msra.mxu0 0.0
  %217 = vmatprep.subr.mxu0 0.0
  %218 = vmatpush1.msra.mxu0 0.0
  %219 = vmatprep.subr.mxu0 0.0
  %220 = vmatpush1.msra.mxu0 0.0
  %221 = vmatprep.subr.mxu0 0.0
  %222 = vmatpush1.msra.mxu0 0.0
  %223 = vmatprep.subr.mxu0 0.0
  %224 = vmatpush1.msra.mxu0 0.0
  %225 = vmatprep.subr.mxu0 0.0
  %226 = vmatpush1.msra.mxu0 0.0
  %227 = vmatprep.subr.mxu0 0.0
  %228 = vmatpush1.msra.mxu0 0.0
  %229 = vmatprep.subr.mxu0 0.0
  %230 = vmatpush1.msra.mxu0 0.0
  %231 = vmatprep.subr.mxu0 0.0
  %232 = vmatpush1.msra.mxu0 0.0
  %233 = vmatprep.subr.mxu0 0.0
  %234 = vmatpush1.msra.mxu0 0.0
  %235 = vmatprep.subr.mxu0 0.0
  %236 = vmatpush1.msra.mxu0 0.0
  %237 = vmatprep.subr.mxu0 0.0
  %238 = vmatpush1.msra.mxu0 0.0
  %239 = vmatprep.mubr.f32.mxu0 0.0
  %240 = vmatmul.mubr.f32.gmra.mrb[0].mxu0 %v173
  %v241 = vpop.f32.mrb[0].mxu0
  %v242 = vadd.f32 0.0, %v241
  %v243 = vpop.f32.mrb[0].mxu0
  %244 = vdwg.mxu0
  %245 = vmatprep.subr.mxu0 0.0
  %246 = vmatpush1.msra.mxu0 %v156
  %247 = vmatprep.subr.mxu0 0.0
  %248 = vmatpush1.msra.mxu0 %v157
  %249 = vmatprep.subr.mxu0 0.0
  %250 = vmatpush1.msra.mxu0 %v158
  %251 = vmatprep.subr.mxu0 0.0
  %252 = vmatpush1.msra.mxu0 %v159
  %253 = vmatprep.subr.mxu0 0.0
  %254 = vmatpush1.msra.mxu0 %v160
  %255 = vmatprep.subr.mxu0 0.0
  %256 = vmatpush1.msra.mxu0 %v161
  %257 = vmatprep.subr.mxu0 0.0
  %258 = vmatpush1.msra.mxu0 %v162
  %259 = vmatprep.subr.mxu0 0.0
  %260 = vmatpush1.msra.mxu0 %v163
  %261 = vmatprep.subr.mxu0 0.0
  %262 = vmatpush1.msra.mxu0 %v164
  %263 = vmatprep.subr.mxu0 0.0
  %264 = vmatpush1.msra.mxu0 %v165
  %265 = vmatprep.subr.mxu0 0.0
  %266 = vmatpush1.msra.mxu0 %v166
  %267 = vmatprep.subr.mxu0 0.0
  %268 = vmatpush1.msra.mxu0 %v167
  %269 = vmatprep.subr.mxu0 0.0
  %270 = vmatpush1.msra.mxu0 %v168
  %271 = vmatprep.subr.mxu0 0.0
  %272 = vmatpush1.msra.mxu0 %v169
  %273 = vmatprep.subr.mxu0 0.0
  %274 = vmatpush1.msra.mxu0 %v170
  %275 = vmatprep.subr.mxu0 0.0
  %276 = vmatpush1.msra.mxu0 %v171
  %277 = vmatprep.subr.mxu0 0.0
  %278 = vmatpush1.msra.mxu0 0.0
  %279 = vmatprep.subr.mxu0 0.0
  %280 = vmatpush1.msra.mxu0 0.0
  %281 = vmatprep.subr.mxu0 0.0
  %282 = vmatpush1.msra.mxu0 0.0
  %283 = vmatprep.subr.mxu0 0.0
  %284 = vmatpush1.msra.mxu0 0.0
  %285 = vmatprep.subr.mxu0 0.0
  %286 = vmatpush1.msra.mxu0 0.0
  %287 = vmatprep.subr.mxu0 0.0
  %288 = vmatpush1.msra.mxu0 0.0
  %289 = vmatprep.subr.mxu0 0.0
  %290 = vmatpush1.msra.mxu0 0.0
  %291 = vmatprep.subr.mxu0 0.0
  %292 = vmatpush1.msra.mxu0 0.0
  %293 = vmatprep.subr.mxu0 0.0
  %294 = vmatpush1.msra.mxu0 0.0
  %295 = vmatprep.subr.mxu0 0.0
  %296 = vmatpush1.msra.mxu0 0.0
  %297 = vmatprep.subr.mxu0 0.0
  %298 = vmatpush1.msra.mxu0 0.0
  %299 = vmatprep.subr.mxu0 0.0
  %300 = vmatpush1.msra.mxu0 0.0
  %301 = vmatprep.subr.mxu0 0.0
  %302 = vmatpush1.msra.mxu0 0.0
  %303 = vmatprep.subr.mxu0 0.0
  %304 = vmatpush1.msra.mxu0 0.0
  %305 = vmatprep.subr.mxu0 0.0
  %306 = vmatpush1.msra.mxu0 0.0
  %307 = vmatprep.subr.mxu0 0.0
  %308 = vmatpush1.msra.mxu0 0.0
  %309 = vmatprep.mubr.f32.mxu0 0.0
  %310 = vmatmul.mubr.f32.gmra.mrb[0].mxu0 %v242
  %v311 = vpop.f32.mrb[0].mxu0
  %v312 = vadd.f32 0.0, %v311
  %v313 = vpop.f32.mrb[0].mxu0
  %314 = vdwg.mxu0
  %v315 = vmul.f32 %v312, 0.0078125
  %vm316 = vcmask 7168
  %v318 = vsel %vm316, %v152, 0
  %v321 = vsel %vm316, %v153, 0
  %vm323 = vcmask 1040384
  %v325 = vsel %vm323, %v315, 0
  %327 = vmatprep.subr.mxu0 0.0
  %328 = vmatpush1.msra.mxu0 %v325
  %329 = vmatprep.subr.mxu0 0.0
  %330 = vmatpush1.msra.mxu0 0.0
  %331 = vmatprep.subr.mxu0 0.0
  %332 = vmatpush1.msra.mxu0 0.0
  %333 = vmatprep.subr.mxu0 0.0
  %334 = vmatpush1.msra.mxu0 0.0
  %335 = vmatprep.subr.mxu0 0.0
  %336 = vmatpush1.msra.mxu0 0.0
  %337 = vmatprep.subr.mxu0 0.0
  %338 = vmatpush1.msra.mxu0 0.0
  %339 = vmatprep.subr.mxu0 0.0
  %340 = vmatpush1.msra.mxu0 0.0
  %341 = vmatprep.subr.mxu0 0.0
  %342 = vmatpush1.msra.mxu0 0.0
  %343 = vmatprep.subr.mxu0 0.0
  %344 = vmatpush1.msra.mxu0 0.0
  %345 = vmatprep.subr.mxu0 0.0
  %346 = vmatpush1.msra.mxu0 0.0
  %347 = vmatprep.subr.mxu0 0.0
  %348 = vmatpush1.msra.mxu0 0.0
  %349 = vmatprep.subr.mxu0 0.0
  %350 = vmatpush1.msra.mxu0 0.0
  %351 = vmatprep.subr.mxu0 0.0
  %352 = vmatpush1.msra.mxu0 0.0
  %353 = vmatprep.subr.mxu0 0.0
  %354 = vmatpush1.msra.mxu0 0.0
  %355 = vmatprep.subr.mxu0 0.0
  %356 = vmatpush1.msra.mxu0 0.0
  %357 = vmatprep.subr.mxu0 0.0
  %358 = vmatpush1.msra.mxu0 0.0
  %359 = vmatprep.subr.mxu0 0.0
  %360 = vmatpush1.msra.mxu0 0.0
  %361 = vmatprep.subr.mxu0 0.0
  %362 = vmatpush1.msra.mxu0 0.0
  %363 = vmatprep.subr.mxu0 0.0
  %364 = vmatpush1.msra.mxu0 0.0
  %365 = vmatprep.subr.mxu0 0.0
  %366 = vmatpush1.msra.mxu0 0.0
  %367 = vmatprep.subr.mxu0 0.0
  %368 = vmatpush1.msra.mxu0 0.0
  %369 = vmatprep.subr.mxu0 0.0
  %370 = vmatpush1.msra.mxu0 0.0
  %371 = vmatprep.subr.mxu0 0.0
  %372 = vmatpush1.msra.mxu0 0.0
  %373 = vmatprep.subr.mxu0 0.0
  %374 = vmatpush1.msra.mxu0 0.0
  %375 = vmatprep.subr.mxu0 0.0
  %376 = vmatpush1.msra.mxu0 0.0
  %377 = vmatprep.subr.mxu0 0.0
  %378 = vmatpush1.msra.mxu0 0.0
  %379 = vmatprep.subr.mxu0 0.0
  %380 = vmatpush1.msra.mxu0 0.0
  %381 = vmatprep.subr.mxu0 0.0
  %382 = vmatpush1.msra.mxu0 0.0
  %383 = vmatprep.subr.mxu0 0.0
  %384 = vmatpush1.msra.mxu0 0.0
  %385 = vmatprep.subr.mxu0 0.0
  %386 = vmatpush1.msra.mxu0 0.0
  %387 = vmatprep.subr.mxu0 0.0
  %388 = vmatpush1.msra.mxu0 0.0
  %389 = vmatprep.subr.mxu0 0.0
  %390 = vmatpush1.msra.mxu0 0.0
  %391 = vmatprep.mubr.f32.mxu0 0.0
  %392 = vmatmul.mubr.f32.gmra.mrb[0].mxu0 %v318
  %v393 = vpop.f32.mrb[0].mxu0
  %v394 = vadd.f32 0.0, %v393
  %v395 = vpop.f32.mrb[0].mxu0
  %396 = vmatprep.mubr.f32.mxu0 0.0
  %397 = vmatmul.mubr.f32.gmra.mrb[0].mxu0 %v321
  %v398 = vpop.f32.mrb[0].mxu0
  %v399 = vadd.f32 0.0, %v398
  %v400 = vpop.f32.mrb[0].mxu0
  %401 = vdwg.mxu0
  %v403 = vsel %vm51, %v394, 0
  %v406 = vsel %vm51, %v399, 0
  %408 = vmatprep.subr.mxu0 0.0
  %409 = vmatpush1.msra.mxu0 %v154
  %410 = vmatprep.subr.mxu0 0.0
  %411 = vmatpush1.msra.mxu0 %v155
  %412 = vmatprep.subr.mxu0 0.0
  %413 = vmatpush1.msra.mxu0 0.0
  %414 = vmatprep.subr.mxu0 0.0
  %415 = vmatpush1.msra.mxu0 0.0
  %416 = vmatprep.subr.mxu0 0.0
  %417 = vmatpush1.msra.mxu0 0.0
  %418 = vmatprep.subr.mxu0 0.0
  %419 = vmatpush1.msra.mxu0 0.0
  %420 = vmatprep.subr.mxu0 0.0
  %421 = vmatpush1.msra.mxu0 0.0
  %422 = vmatprep.subr.mxu0 0.0
  %423 = vmatpush1.msra.mxu0 0.0
  %424 = vmatprep.subr.mxu0 0.0
  %425 = vmatpush1.msra.mxu0 0.0
  %426 = vmatprep.subr.mxu0 0.0
  %427 = vmatpush1.msra.mxu0 0.0
  %428 = vmatprep.subr.mxu0 0.0
  %429 = vmatpush1.msra.mxu0 0.0
  %430 = vmatprep.subr.mxu0 0.0
  %431 = vmatpush1.msra.mxu0 0.0
  %432 = vmatprep.subr.mxu0 0.0
  %433 = vmatpush1.msra.mxu0 0.0
  %434 = vmatprep.subr.mxu0 0.0
  %435 = vmatpush1.msra.mxu0 0.0
  %436 = vmatprep.subr.mxu0 0.0
  %437 = vmatpush1.msra.mxu0 0.0
  %438 = vmatprep.subr.mxu0 0.0
  %439 = vmatpush1.msra.mxu0 0.0
  %440 = vmatprep.subr.mxu0 0.0
  %441 = vmatpush1.msra.mxu0 0.0
  %442 = vmatprep.subr.mxu0 0.0
  %443 = vmatpush1.msra.mxu0 0.0
  %444 = vmatprep.subr.mxu0 0.0
  %445 = vmatpush1.msra.mxu0 0.0
  %446 = vmatprep.subr.mxu0 0.0
  %447 = vmatpush1.msra.mxu0 0.0
  %448 = vmatprep.subr.mxu0 0.0
  %449 = vmatpush1.msra.mxu0 0.0
  %450 = vmatprep.subr.mxu0 0.0
  %451 = vmatpush1.msra.mxu0 0.0
  %452 = vmatprep.subr.mxu0 0.0
  %453 = vmatpush1.msra.mxu0 0.0
  %454 = vmatprep.subr.mxu0 0.0
  %455 = vmatpush1.msra.mxu0 0.0
  %456 = vmatprep.subr.mxu0 0.0
  %457 = vmatpush1.msra.mxu0 0.0
  %458 = vmatprep.subr.mxu0 0.0
  %459 = vmatpush1.msra.mxu0 0.0
  %460 = vmatprep.subr.mxu0 0.0
  %461 = vmatpush1.msra.mxu0 0.0
  %462 = vmatprep.subr.mxu0 0.0
  %463 = vmatpush1.msra.mxu0 0.0
  %464 = vmatprep.subr.mxu0 0.0
  %465 = vmatpush1.msra.mxu0 0.0
  %466 = vmatprep.subr.mxu0 0.0
  %467 = vmatpush1.msra.mxu0 0.0
  %468 = vmatprep.subr.mxu0 0.0
  %469 = vmatpush1.msra.mxu0 0.0
  %470 = vmatprep.subr.mxu0 0.0
  %471 = vmatpush1.msra.mxu0 0.0
  %472 = vmatprep.mubr.f32.mxu0 0.0
  %473 = vmatmul.mubr.f32.gmra.mrb[0].mxu0 %v403
  %v474 = vpop.f32.mrb[0].mxu0
  %v475 = vadd.f32 0.0, %v474
  %v476 = vpop.f32.mrb[0].mxu0
  %477 = vmatprep.mubr.f32.mxu0 0.0
  %478 = vmatmul.mubr.f32.gmra.mrb[0].mxu0 %v406
  %v479 = vpop.f32.mrb[0].mxu0
  %v480 = vadd.f32 0.0, %v479
  %v481 = vpop.f32.mrb[0].mxu0
  %482 = vdwg.mxu0
  %v483 = vsub.f32 %v149, %v475
  %v484 = vsub.f32 %v150, %v480
  %v485 = vmul.f32 %v483, %v483
  %v486 = vmul.f32 %v484, %v484
  %487 = vmatprep.subr.mxu0 0.0
  %488 = vmatpush1.msra.mxu0 %v485
  %489 = vmatprep.subr.mxu0 0.0
  %490 = vmatpush1.msra.mxu0 %v486
  %491 = vmatprep.subr.mxu0 0.0
  %492 = vmatpush1.msra.mxu0 0.0
  %493 = vmatprep.subr.mxu0 0.0
  %494 = vmatpush1.msra.mxu0 0.0
  %495 = vmatprep.subr.mxu0 0.0
  %496 = vmatpush1.msra.mxu0 0.0
  %497 = vmatprep.subr.mxu0 0.0
  %498 = vmatpush1.msra.mxu0 0.0
  %499 = vmatprep.subr.mxu0 0.0
  %500 = vmatpush1.msra.mxu0 0.0
  %501 = vmatprep.subr.mxu0 0.0
  %502 = vmatpush1.msra.mxu0 0.0
  %503 = vmatprep.subr.mxu0 0.0
  %504 = vmatpush1.msra.mxu0 0.0
  %505 = vmatprep.subr.mxu0 0.0
  %506 = vmatpush1.msra.mxu0 0.0
  %507 = vmatprep.subr.mxu0 0.0
  %508 = vmatpush1.msra.mxu0 0.0
  %509 = vmatprep.subr.mxu0 0.0
  %510 = vmatpush1.msra.mxu0 0.0
  %511 = vmatprep.subr.mxu0 0.0
  %512 = vmatpush1.msra.mxu0 0.0
  %513 = vmatprep.subr.mxu0 0.0
  %514 = vmatpush1.msra.mxu0 0.0
  %515 = vmatprep.subr.mxu0 0.0
  %516 = vmatpush1.msra.mxu0 0.0
  %517 = vmatprep.subr.mxu0 0.0
  %518 = vmatpush1.msra.mxu0 0.0
  %519 = vmatprep.subr.mxu0 0.0
  %520 = vmatpush1.msra.mxu0 0.0
  %521 = vmatprep.subr.mxu0 0.0
  %522 = vmatpush1.msra.mxu0 0.0
  %523 = vmatprep.subr.mxu0 0.0
  %524 = vmatpush1.msra.mxu0 0.0
  %525 = vmatprep.subr.mxu0 0.0
  %526 = vmatpush1.msra.mxu0 0.0
  %527 = vmatprep.subr.mxu0 0.0
  %528 = vmatpush1.msra.mxu0 0.0
  %529 = vmatprep.subr.mxu0 0.0
  %530 = vmatpush1.msra.mxu0 0.0
  %531 = vmatprep.subr.mxu0 0.0
  %532 = vmatpush1.msra.mxu0 0.0
  %533 = vmatprep.subr.mxu0 0.0
  %534 = vmatpush1.msra.mxu0 0.0
  %535 = vmatprep.subr.mxu0 0.0
  %536 = vmatpush1.msra.mxu0 0.0
  %537 = vmatprep.subr.mxu0 0.0
  %538 = vmatpush1.msra.mxu0 0.0
  %539 = vmatprep.subr.mxu0 0.0
  %540 = vmatpush1.msra.mxu0 0.0
  %541 = vmatprep.subr.mxu0 0.0
  %542 = vmatpush1.msra.mxu0 0.0
  %543 = vmatprep.subr.mxu0 0.0
  %544 = vmatpush1.msra.mxu0 0.0
  %545 = vmatprep.subr.mxu0 0.0
  %546 = vmatpush1.msra.mxu0 0.0
  %547 = vmatprep.subr.mxu0 0.0
  %548 = vmatpush1.msra.mxu0 0.0
  %549 = vmatprep.subr.mxu0 0.0
  %550 = vmatpush1.msra.mxu0 0.0
  %551 = vmatprep.mubr.f32.mxu0 0.0
  %552 = vmatmul.mubr.f32.gmra.mrb[0].mxu0 %v173
  %v553 = vpop.f32.mrb[0].mxu0
  %v554 = vadd.f32 0.0, %v553
  %v555 = vpop.f32.mrb[0].mxu0
  %556 = vdwg.mxu0
  %557 = vmatprep.subr.mxu0 0.0
  %558 = vmatpush1.msra.mxu0 %v156
  %559 = vmatprep.subr.mxu0 0.0
  %560 = vmatpush1.msra.mxu0 %v157
  %561 = vmatprep.subr.mxu0 0.0
  %562 = vmatpush1.msra.mxu0 %v158
  %563 = vmatprep.subr.mxu0 0.0
  %564 = vmatpush1.msra.mxu0 %v159
  %565 = vmatprep.subr.mxu0 0.0
  %566 = vmatpush1.msra.mxu0 %v160
  %567 = vmatprep.subr.mxu0 0.0
  %568 = vmatpush1.msra.mxu0 %v161
  %569 = vmatprep.subr.mxu0 0.0
  %570 = vmatpush1.msra.mxu0 %v162
  %571 = vmatprep.subr.mxu0 0.0
  %572 = vmatpush1.msra.mxu0 %v163
  %573 = vmatprep.subr.mxu0 0.0
  %574 = vmatpush1.msra.mxu0 %v164
  %575 = vmatprep.subr.mxu0 0.0
  %576 = vmatpush1.msra.mxu0 %v165
  %577 = vmatprep.subr.mxu0 0.0
  %578 = vmatpush1.msra.mxu0 %v166
  %579 = vmatprep.subr.mxu0 0.0
  %580 = vmatpush1.msra.mxu0 %v167
  %581 = vmatprep.subr.mxu0 0.0
  %582 = vmatpush1.msra.mxu0 %v168
  %583 = vmatprep.subr.mxu0 0.0
  %584 = vmatpush1.msra.mxu0 %v169
  %585 = vmatprep.subr.mxu0 0.0
  %586 = vmatpush1.msra.mxu0 %v170
  %587 = vmatprep.subr.mxu0 0.0
  %588 = vmatpush1.msra.mxu0 %v171
  %589 = vmatprep.subr.mxu0 0.0
  %590 = vmatpush1.msra.mxu0 0.0
  %591 = vmatprep.subr.mxu0 0.0
  %592 = vmatpush1.msra.mxu0 0.0
  %593 = vmatprep.subr.mxu0 0.0
  %594 = vmatpush1.msra.mxu0 0.0
  %595 = vmatprep.subr.mxu0 0.0
  %596 = vmatpush1.msra.mxu0 0.0
  %597 = vmatprep.subr.mxu0 0.0
  %598 = vmatpush1.msra.mxu0 0.0
  %599 = vmatprep.subr.mxu0 0.0
  %600 = vmatpush1.msra.mxu0 0.0
  %601 = vmatprep.subr.mxu0 0.0
  %602 = vmatpush1.msra.mxu0 0.0
  %603 = vmatprep.subr.mxu0 0.0
  %604 = vmatpush1.msra.mxu0 0.0
  %605 = vmatprep.subr.mxu0 0.0
  %606 = vmatpush1.msra.mxu0 0.0
  %607 = vmatprep.subr.mxu0 0.0
  %608 = vmatpush1.msra.mxu0 0.0
  %609 = vmatprep.subr.mxu0 0.0
  %610 = vmatpush1.msra.mxu0 0.0
  %611 = vmatprep.subr.mxu0 0.0
  %612 = vmatpush1.msra.mxu0 0.0
  %613 = vmatprep.subr.mxu0 0.0
  %614 = vmatpush1.msra.mxu0 0.0
  %615 = vmatprep.subr.mxu0 0.0
  %616 = vmatpush1.msra.mxu0 0.0
  %617 = vmatprep.subr.mxu0 0.0
  %618 = vmatpush1.msra.mxu0 0.0
  %619 = vmatprep.subr.mxu0 0.0
  %620 = vmatpush1.msra.mxu0 0.0
  %621 = vmatprep.mubr.f32.mxu0 0.0
  %622 = vmatmul.mubr.f32.gmra.mrb[0].mxu0 %v554
  %v623 = vpop.f32.mrb[0].mxu0
  %v624 = vadd.f32 0.0, %v623
  %v625 = vpop.f32.mrb[0].mxu0
  %626 = vdwg.mxu0
  %v627 = vmul.f32 %v624, 0.0078125
  %v629 = vsel %vm323, %v627, 0
  %631 = vmatprep.subr.mxu0 0.0
  %632 = vmatpush1.msra.mxu0 %v629
  %633 = vmatprep.subr.mxu0 0.0
  %634 = vmatpush1.msra.mxu0 0.0
  %635 = vmatprep.subr.mxu0 0.0
  %636 = vmatpush1.msra.mxu0 0.0
  %637 = vmatprep.subr.mxu0 0.0
  %638 = vmatpush1.msra.mxu0 0.0
  %639 = vmatprep.subr.mxu0 0.0
  %640 = vmatpush1.msra.mxu0 0.0
  %641 = vmatprep.subr.mxu0 0.0
  %642 = vmatpush1.msra.mxu0 0.0
  %643 = vmatprep.subr.mxu0 0.0
  %644 = vmatpush1.msra.mxu0 0.0
  %645 = vmatprep.subr.mxu0 0.0
  %646 = vmatpush1.msra.mxu0 0.0
  %647 = vmatprep.subr.mxu0 0.0
  %648 = vmatpush1.msra.mxu0 0.0
  %649 = vmatprep.subr.mxu0 0.0
  %650 = vmatpush1.msra.mxu0 0.0
  %651 = vmatprep.subr.mxu0 0.0
  %652 = vmatpush1.msra.mxu0 0.0
  %653 = vmatprep.subr.mxu0 0.0
  %654 = vmatpush1.msra.mxu0 0.0
  %655 = vmatprep.subr.mxu0 0.0
  %656 = vmatpush1.msra.mxu0 0.0
  %657 = vmatprep.subr.mxu0 0.0
  %658 = vmatpush1.msra.mxu0 0.0
  %659 = vmatprep.subr.mxu0 0.0
  %660 = vmatpush1.msra.mxu0 0.0
  %661 = vmatprep.subr.mxu0 0.0
  %662 = vmatpush1.msra.mxu0 0.0
  %663 = vmatprep.subr.mxu0 0.0
  %664 = vmatpush1.msra.mxu0 0.0
  %665 = vmatprep.subr.mxu0 0.0
  %666 = vmatpush1.msra.mxu0 0.0
  %667 = vmatprep.subr.mxu0 0.0
  %668 = vmatpush1.msra.mxu0 0.0
  %669 = vmatprep.subr.mxu0 0.0
  %670 = vmatpush1.msra.mxu0 0.0
  %671 = vmatprep.subr.mxu0 0.0
  %672 = vmatpush1.msra.mxu0 0.0
  %673 = vmatprep.subr.mxu0 0.0
  %674 = vmatpush1.msra.mxu0 0.0
  %675 = vmatprep.subr.mxu0 0.0
  %676 = vmatpush1.msra.mxu0 0.0
  %677 = vmatprep.subr.mxu0 0.0
  %678 = vmatpush1.msra.mxu0 0.0
  %679 = vmatprep.subr.mxu0 0.0
  %680 = vmatpush1.msra.mxu0 0.0
  %681 = vmatprep.subr.mxu0 0.0
  %682 = vmatpush1.msra.mxu0 0.0
  %683 = vmatprep.subr.mxu0 0.0
  %684 = vmatpush1.msra.mxu0 0.0
  %685 = vmatprep.subr.mxu0 0.0
  %686 = vmatpush1.msra.mxu0 0.0
  %687 = vmatprep.subr.mxu0 0.0
  %688 = vmatpush1.msra.mxu0 0.0
  %689 = vmatprep.subr.mxu0 0.0
  %690 = vmatpush1.msra.mxu0 0.0
  %691 = vmatprep.subr.mxu0 0.0
  %692 = vmatpush1.msra.mxu0 0.0
  %693 = vmatprep.subr.mxu0 0.0
  %694 = vmatpush1.msra.mxu0 0.0
  %695 = vmatprep.mubr.f32.mxu0 0.0
  %696 = vmatmul.mubr.f32.gmra.mrb[0].mxu0 %v318
  %v697 = vpop.f32.mrb[0].mxu0
  %v698 = vadd.f32 0.0, %v697
  %v699 = vpop.f32.mrb[0].mxu0
  %700 = vmatprep.mubr.f32.mxu0 0.0
  %701 = vmatmul.mubr.f32.gmra.mrb[0].mxu0 %v321
  %v702 = vpop.f32.mrb[0].mxu0
  %v703 = vadd.f32 0.0, %v702
  %v704 = vpop.f32.mrb[0].mxu0
  %705 = vdwg.mxu0
  %v707 = vsel %vm51, %v698, 0
  %v710 = vsel %vm51, %v703, 0
  %712 = vmatprep.subr.mxu0 0.0
  %713 = vmatpush1.msra.mxu0 %v154
  %714 = vmatprep.subr.mxu0 0.0
  %715 = vmatpush1.msra.mxu0 %v155
  %716 = vmatprep.subr.mxu0 0.0
  %717 = vmatpush1.msra.mxu0 0.0
  %718 = vmatprep.subr.mxu0 0.0
  %719 = vmatpush1.msra.mxu0 0.0
  %720 = vmatprep.subr.mxu0 0.0
  %721 = vmatpush1.msra.mxu0 0.0
  %722 = vmatprep.subr.mxu0 0.0
  %723 = vmatpush1.msra.mxu0 0.0
  %724 = vmatprep.subr.mxu0 0.0
  %725 = vmatpush1.msra.mxu0 0.0
  %726 = vmatprep.subr.mxu0 0.0
  %727 = vmatpush1.msra.mxu0 0.0
  %728 = vmatprep.subr.mxu0 0.0
  %729 = vmatpush1.msra.mxu0 0.0
  %730 = vmatprep.subr.mxu0 0.0
  %731 = vmatpush1.msra.mxu0 0.0
  %732 = vmatprep.subr.mxu0 0.0
  %733 = vmatpush1.msra.mxu0 0.0
  %734 = vmatprep.subr.mxu0 0.0
  %735 = vmatpush1.msra.mxu0 0.0
  %736 = vmatprep.subr.mxu0 0.0
  %737 = vmatpush1.msra.mxu0 0.0
  %738 = vmatprep.subr.mxu0 0.0
  %739 = vmatpush1.msra.mxu0 0.0
  %740 = vmatprep.subr.mxu0 0.0
  %741 = vmatpush1.msra.mxu0 0.0
  %742 = vmatprep.subr.mxu0 0.0
  %743 = vmatpush1.msra.mxu0 0.0
  %744 = vmatprep.subr.mxu0 0.0
  %745 = vmatpush1.msra.mxu0 0.0
  %746 = vmatprep.subr.mxu0 0.0
  %747 = vmatpush1.msra.mxu0 0.0
  %748 = vmatprep.subr.mxu0 0.0
  %749 = vmatpush1.msra.mxu0 0.0
  %750 = vmatprep.subr.mxu0 0.0
  %751 = vmatpush1.msra.mxu0 0.0
  %752 = vmatprep.subr.mxu0 0.0
  %753 = vmatpush1.msra.mxu0 0.0
  %754 = vmatprep.subr.mxu0 0.0
  %755 = vmatpush1.msra.mxu0 0.0
  %756 = vmatprep.subr.mxu0 0.0
  %757 = vmatpush1.msra.mxu0 0.0
  %758 = vmatprep.subr.mxu0 0.0
  %759 = vmatpush1.msra.mxu0 0.0
  %760 = vmatprep.subr.mxu0 0.0
  %761 = vmatpush1.msra.mxu0 0.0
  %762 = vmatprep.subr.mxu0 0.0
  %763 = vmatpush1.msra.mxu0 0.0
  %764 = vmatprep.subr.mxu0 0.0
  %765 = vmatpush1.msra.mxu0 0.0
  %766 = vmatprep.subr.mxu0 0.0
  %767 = vmatpush1.msra.mxu0 0.0
  %768 = vmatprep.subr.mxu0 0.0
  %769 = vmatpush1.msra.mxu0 0.0
  %770 = vmatprep.subr.mxu0 0.0
  %771 = vmatpush1.msra.mxu0 0.0
  %772 = vmatprep.subr.mxu0 0.0
  %773 = vmatpush1.msra.mxu0 0.0
  %774 = vmatprep.subr.mxu0 0.0
  %775 = vmatpush1.msra.mxu0 0.0
  %776 = vmatprep.mubr.f32.mxu0 0.0
  %777 = vmatmul.mubr.f32.gmra.mrb[0].mxu0 %v707
  %v778 = vpop.f32.mrb[0].mxu0
  %v779 = vadd.f32 1e-05, %v778
  %v780 = vpop.f32.mrb[0].mxu0
  %781 = vmatprep.mubr.f32.mxu0 0.0
  %782 = vmatmul.mubr.f32.gmra.mrb[0].mxu0 %v710
  %v783 = vpop.f32.mrb[0].mxu0
  %v784 = vadd.f32 1e-05, %v783
  %v785 = vpop.f32.mrb[0].mxu0
  %786 = vdwg.mxu0
  %v787 = vrsqrt.pop %v779
  %v788 = vmul.f32 %v779, %v787
  %vm789 = vcmp.eq.f32.partialorder %v779, inf
  %v790 = vsel %vm789, %v779, %v788
  %vm791 = vcmp.eq.f32.partialorder %v779, 0.0
  %v792 = vand.u32 %v779, 2147483648
  %v793 = vsel %vm791, %v792, %v790
  %v794 = vrsqrt.pop %v784
  %v795 = vmul.f32 %v784, %v794
  %vm796 = vcmp.eq.f32.partialorder %v784, inf
  %v797 = vsel %vm796, %v784, %v795
  %vm798 = vcmp.eq.f32.partialorder %v784, 0.0
  %v799 = vand.u32 %v784, 2147483648
  %v800 = vsel %vm798, %v799, %v797
  %v801 = vadd.f32 %v793, 1e-05
  %v802 = vadd.f32 %v800, 1e-05
  %v803 = vrcp.pop %v801
  %v804 = vmul.f32 %v483, %v803
  %v805 = vrcp.pop %v802
  %v806 = vmul.f32 %v484, %v805
  %v807 = vld [vmem:[%s8] sm:$0xff]
  %v808 = vld [vmem:[%s8 + $0x8] sm:$0xff]
  %v809 = vmul.f32 %v804, %v807
  %v810 = vmul.f32 %v806, %v808
  %v811 = vld [vmem:[%s9] sm:$0xff]
  %v812 = vld [vmem:[%s9 + $0x8] sm:$0xff]
  %v813 = vadd.f32 %v809, %v811
  %v814 = vadd.f32 %v810, %v812
  %815 = vst [vmem:[%s10] sm:$0xff] %v813
  %816 = vst [vmem:[%s10 + $0x8] sm:$0xff] %v814
  // Predicated region
  $region42: #{stream_gridnet_block.21} parent=0 // pred_check
    _
  $region43: #{stream_gridnet_block.21} parent=0 // pred_check_branch
    %818 = sbr.rel (0) target = $region45
  $region44: #{stream_gridnet_block.21} parent=0 // pred_region
    _
  $region45: #{stream_gridnet_block.21} parent=0 // pred_fallthru
    _
  // Predicated region
  $region46: #{stream_gridnet_block.21} parent=0 // pred_check
    _
  $region47: #{stream_gridnet_block.21} parent=0 // pred_check_branch
    %820 = sbr.rel (0) target = $region49
  $region48: #{stream_gridnet_block.21} parent=0 // pred_region
    _
  $region49: #{stream_gridnet_block.21} parent=0 // pred_fallthru
    _

</llo_original>
